<compile_context>
chip_gen: v7x
topology: tpu7x:2x2x1
jax: 0.10.0
libtpu: 0.0.40
codegen_flags: <defaults>
</compile_context>

<pallas_src>
import jax
import jax.numpy as jnp
import numpy as np
from jax import lax
from jax.experimental import pallas as pl
from jax.experimental.pallas import tpu as pltpu


def _round_up(x, m):
    return (x + m - 1) // m * m


def fold_bn(w, gamma, beta, mean, var, eps=1e-5):
    """Fold eval-mode BatchNorm into the (bias-free) conv weight + an additive bias."""
    scale = gamma / jnp.sqrt(var + eps)
    w_f = (w * scale).astype(jnp.float32)
    b_f = (beta - mean * scale).astype(jnp.float32)
    return w_f, b_f


def triple_conv_pallas(x_nchw, w1f, b1f, w2f, b2f, w3f, b3f, th=None):
    """Forward pass matching Triple_Conv (eval-mode BN, no ReLU).  x is NCHW like PyTorch."""
    N, Cin, H, W = x_nchw.shape
    Cout = w1f.shape[1]
    LANE = 128
    Cpo = _round_up(Cout, LANE)      # lane-dense output channels
    Wp = W + 2                       # width incl. the two zero-pad columns

    if th is None:
        th = next((t for t in (16, 8, 4, 2) if H % t == 0), H)
    TH = th
    assert H % TH == 0, "strip height must divide H"
    S = H // TH
    if S > 1:
        assert TH >= 2, "strips must be at least 2 rows tall"

    # Static row counts of the flattened (row-major over (rows, Wp)) buffers.
    R1 = (TH + 4) * Wp               # layer-1 domain: strip + 2-row halo each side
    M2 = (TH + 1) * Wp + W           # layer-2 rows computed (stored into pad2 at offset 1)
    R2 = (TH + 2) * Wp               # layer-2 padded-buffer rows (+8 rows of zeroed slack)
    M3 = TH * Wp                     # layer-3 rows computed (junk pad cols sliced later)

    # --- wrapper-side layout plumbing (XLA fuses this into one producer pass) ---
    # NCHW -> NHWC, zero pad (2 rows top/bottom, 1 col left/right), cut into S overlapping
    # strips of TH+4 rows, flatten (rows, Wp) and cast to bf16.
    x = jnp.transpose(x_nchw, (0, 2, 3, 1)).astype(jnp.float32)
    x = jnp.pad(x, ((0, 0), (2, 2), (1, 1), (0, 0)))                        # (N, H+4, Wp, Cin)
    x = jnp.stack([x[:, s * TH:s * TH + TH + 4] for s in range(S)], axis=1)  # (N,S,TH+4,Wp,Cin)
    x = x.reshape(N, S, R1, Cin).astype(jnp.bfloat16)
    # TODO(synk): accept NHWC input / use CompilerParams(allow_input_fusion) to fuse the
    # transpose+pad into the kernel's input DMA and avoid this HBM round trip of x.

    # --- weights: BN-folded, channel padded lane-dense, bf16 for the MXU; biases f32 ---
    w1p = jnp.zeros((Cin, Cpo), jnp.float32).at[:, :Cout].set(w1f).astype(jnp.bfloat16)
    b1p = jnp.zeros((1, Cpo), jnp.float32).at[0, :Cout].set(b1f)

    def prep3x3(w, b):
        wp = jnp.zeros((3, 3, Cpo, Cpo), jnp.float32).at[:, :, :Cout, :Cout].set(w)
        wp = wp.reshape(9 * Cpo, Cpo).astype(jnp.bfloat16)    # row = (dy*3+dx)*Cpo + cin
        bp = jnp.zeros((1, Cpo), jnp.float32).at[0, :Cout].set(b)
        return wp, bp

    w2p, b2p = prep3x3(w2f, b2f)
    w3p, b3p = prep3x3(w3f, b3f)

    # --- column-validity masks (strip independent, tiny, constant blocks) ---
    # layer-1 rows are indexed by the PADDED column c: keep 1 <= c <= W (kills bias in pad cols)
    col1 = jnp.tile(jnp.arange(Wp, dtype=jnp.int32), TH + 4)
    mask1 = ((col1 >= 1) & (col1 <= W)).astype(jnp.float32).reshape(R1, 1)
    # layer-2 rows are indexed by the OUTPUT column j: keep j < W (kills wrap-around junk)
    col2 = jnp.tile(jnp.arange(Wp, dtype=jnp.int32), TH + 2)[:M2]
    mask2 = (col2 < W).astype(jnp.float32).reshape(M2, 1)

    def kernel(x_ref, w1_ref, b1_ref, w2_ref, b2_ref, w3_ref, b3_ref,
               m1_ref, m2_ref, out_ref, pad1_ref, pad2_ref, col_ref):
        s = pl.program_id(1)

        # ---- layer 1: 1x1 conv (+ folded BN) over the whole width-padded strip ----
        y1 = jnp.dot(x_ref[0, 0], w1_ref[...],
                     preferred_element_type=jnp.float32) + b1_ref[...]       # (R1, Cpo) f32
        pad1_ref[...] = y1 * m1_ref[...]

        # zero the out-of-image halo rows (the 3x3 conv's zero padding at the image border)
        @pl.when(s == 0)
        def _():
            pad1_ref[0:2 * Wp, :] = jnp.zeros((2 * Wp, Cpo), jnp.float32)

        @pl.when(s == S - 1)
        def _():
            pad1_ref[(TH + 2) * Wp:(TH + 4) * Wp, :] = jnp.zeros((2 * Wp, Cpo), jnp.float32)

        # ---- 3x3 conv (padding=1) as ONE fat im2col matmul ----
        # Buffers are flattened row-major over (rows, Wp), so the slab for tap (dy, dx) is the
        # CONTIGUOUS row window starting at dy*Wp+dx: a plain copy, no strided reshape shuffles.
        def conv3x3(src_ref, n_rows, w_ref, b_ref):
            for kk in range(9):
                dy, dx = divmod(kk, 3)
                off = dy * Wp + dx
                col_ref[0:n_rows, kk * Cpo:(kk + 1) * Cpo] = (
                    src_ref[off:off + n_rows, :].astype(jnp.bfloat16))
            return jnp.dot(col_ref[0:n_rows, :], w_ref[...],
                           preferred_element_type=jnp.float32) + b_ref[...]

        # ---- layer 2 ----
        y2 = conv3x3(pad1_ref, M2, w2_ref, b2_ref)                           # (M2, Cpo) f32
        pad2_ref[1:1 + M2, :] = y2 * m2_ref[...]          # offset 1 => left pad column of row 0
        pad2_ref[0:1, :] = jnp.zeros((1, Cpo), jnp.float32)                  # (row 0, col 0)
        pad2_ref[1 + M2:R2 + 8, :] = jnp.zeros((R2 + 8 - 1 - M2, Cpo), jnp.float32)  # tail+slack

        @pl.when(s == 0)
        def _():
            pad2_ref[0:Wp, :] = jnp.zeros((Wp, Cpo), jnp.float32)

        @pl.when(s == S - 1)
        def _():
            pad2_ref[(TH + 1) * Wp:(TH + 2) * Wp, :] = jnp.zeros((Wp, Cpo), jnp.float32)

        # ---- layer 3 -> output (junk pad columns are sliced off wrapper-side) ----
        y3 = conv3x3(pad2_ref, M3, w3_ref, b3_ref)                           # (M3, Cpo) f32
        out_ref[0, 0] = y3.astype(out_ref.dtype)

    out = pl.pallas_call(
        kernel,
        out_shape=jax.ShapeDtypeStruct((N, S, M3, Cpo), jnp.float32),
        grid_spec=pltpu.PrefetchScalarGridSpec(
            num_scalar_prefetch=0,
            grid=(N, S),
            in_specs=[
                pl.BlockSpec((1, 1, R1, Cin), lambda n, s: (n, s, 0, 0)),
                # constant blocks (weights / biases / masks)
                # TODO(synk): pipeline_mode=pl.Buffered(1) to single-buffer these on v7x.
                pl.BlockSpec((Cin, Cpo), lambda n, s: (0, 0)),
                pl.BlockSpec((1, Cpo), lambda n, s: (0, 0)),
                pl.BlockSpec((9 * Cpo, Cpo), lambda n, s: (0, 0)),
                pl.BlockSpec((1, Cpo), lambda n, s: (0, 0)),
                pl.BlockSpec((9 * Cpo, Cpo), lambda n, s: (0, 0)),
                pl.BlockSpec((1, Cpo), lambda n, s: (0, 0)),
                pl.BlockSpec((R1, 1), lambda n, s: (0, 0)),
                pl.BlockSpec((M2, 1), lambda n, s: (0, 0)),
            ],
            out_specs=pl.BlockSpec((1, 1, M3, Cpo), lambda n, s: (n, s, 0, 0)),
            scratch_shapes=[
                pltpu.VMEM((R1, Cpo), jnp.float32),        # pad1: layer-1 output (padded layout)
                pltpu.VMEM((R2 + 8, Cpo), jnp.float32),    # pad2: layer-2 output (padded layout)
                pltpu.VMEM((M2, 9 * Cpo), jnp.bfloat16),   # im2col scratch (bf16 MXU feed)
            ],
        ),
        compiler_params=pltpu.CompilerParams(
            dimension_semantics=("parallel", "parallel")),
    )(x, w1p, b1p, w2p, b2p, w3p, b3p, mask1, mask2)

    # unpad: drop junk pad columns + padded channels, back to NCHW
    out = out.reshape(N, S, TH, Wp, Cpo)[:, :, :, :W, :Cout]
    out = out.reshape(N, H, W, Cout)
    return jnp.transpose(out, (0, 3, 1, 2))


def reference_forward(x_nchw, w1f, b1f, w2f, b2f, w3f, b3f):
    """Plain-JAX reference (NCHW in / NCHW out).  Operands are rounded to bf16 before each
    conv to mirror the kernel's bf16-MXU / f32-accumulation numerics exactly."""
    dn = ('NCHW', 'HWIO', 'NCHW')
    bf = lambda v: v.astype(jnp.bfloat16).astype(jnp.float32)
    Cin, Cout = w1f.shape
    y = lax.conv_general_dilated(bf(x_nchw), bf(w1f).reshape(1, 1, Cin, Cout),
                                 (1, 1), 'VALID', dimension_numbers=dn)
    y = y + b1f.reshape(1, -1, 1, 1)
    y = lax.conv_general_dilated(bf(y), bf(w2f), (1, 1), ((1, 1), (1, 1)),
                                 dimension_numbers=dn) + b2f.reshape(1, -1, 1, 1)
    y = lax.conv_general_dilated(bf(y), bf(w3f), (1, 1), ((1, 1), (1, 1)),
                                 dimension_numbers=dn) + b3f.reshape(1, -1, 1, 1)
    return y


if __name__ == "__main__":
    # Small shapes consistent with Triple_Conv(in_channel=4, out_channel=8)
    N, Cin, Cout, H, W = 2, 4, 8, 16, 16

    key = jax.random.PRNGKey(0)
    k_x, k_w1, k_w2, k_w3 = jax.random.split(key, 4)

    # Input in PyTorch's NCHW layout.
    x_nchw = jax.random.normal(k_x, (N, Cin, H, W), dtype=jnp.float32)

    # Deterministic parameter init matching weight_init semantics:
    #   Conv2d: kaiming_normal_(fan_in, relu) -> std = sqrt(2 / fan_in), bias-free
    #   BatchNorm2d: weight=1, bias=0, running_mean=0, running_var=1, eps=1e-5
    w1 = jax.random.normal(k_w1, (Cin, Cout), jnp.float32) * np.sqrt(2.0 / (Cin * 1 * 1))
    w2 = jax.random.normal(k_w2, (3, 3, Cout, Cout), jnp.float32) * np.sqrt(2.0 / (Cout * 3 * 3))
    w3 = jax.random.normal(k_w3, (3, 3, Cout, Cout), jnp.float32) * np.sqrt(2.0 / (Cout * 3 * 3))

    gamma = jnp.ones((Cout,), jnp.float32)
    beta = jnp.zeros((Cout,), jnp.float32)
    r_mean = jnp.zeros((Cout,), jnp.float32)
    r_var = jnp.ones((Cout,), jnp.float32)

    w1f, b1f = fold_bn(w1, gamma, beta, r_mean, r_var)
    w2f, b2f = fold_bn(w2, gamma, beta, r_mean, r_var)
    w3f, b3f = fold_bn(w3, gamma, beta, r_mean, r_var)

    ref = jax.block_until_ready(
        reference_forward(x_nchw, w1f, b1f, w2f, b2f, w3f, b3f))

    # Exercise both the multi-strip (th=8 -> 2 strips) and single-strip (th=16) paths.
    for th in (8, 16):
        out = jax.jit(triple_conv_pallas, static_argnames=("th",))(
            x_nchw, w1f, b1f, w2f, b2f, w3f, b3f, th=th)
        out = jax.block_until_ready(out)
        np.testing.assert_allclose(np.asarray(out), np.asarray(ref),
                                   rtol=2e-3, atol=2e-3)

    print("KERNEL_OK")
</pallas_src>

<mosaic_0001>
module attributes {stable_mosaic.version = 11 : i64} {
  func.func @kernel(%arg0: i32, %arg1: i32, %arg2: memref<1x1x216x4xbf16, #tpu.memory_space<vmem>>, %arg3: memref<4x128xbf16, #tpu.memory_space<vmem>>, %arg4: memref<1x128xf32, #tpu.memory_space<vmem>>, %arg5: memref<1152x128xbf16, #tpu.memory_space<vmem>>, %arg6: memref<1x128xf32, #tpu.memory_space<vmem>>, %arg7: memref<1152x128xbf16, #tpu.memory_space<vmem>>, %arg8: memref<1x128xf32, #tpu.memory_space<vmem>>, %arg9: memref<216x1xf32, #tpu.memory_space<vmem>>, %arg10: memref<178x1xf32, #tpu.memory_space<vmem>>, %arg11: memref<1x1x144x128xf32, #tpu.memory_space<vmem>>, %arg12: memref<216x128xf32, #tpu.memory_space<vmem>>, %arg13: memref<188x128xf32, #tpu.memory_space<vmem>>, %arg14: memref<178x1152xbf16, #tpu.memory_space<vmem>>) attributes {dimension_semantics = [#tpu.dimension_semantics<parallel>, #tpu.dimension_semantics<parallel>], iteration_bounds = array<i64: 2, 2>, scalar_prefetch = 0 : i64, scratch_operands = 3 : i64, tpu.core_type = #tpu.core_type<tc>, window_params = [{transform_indices = @transform_0, window_bounds = array<i64: 1, 1, 216, 4>}, {pipeline_mode = #tpu.pipeline_mode<synchronous>, transform_indices = @transform_1, window_bounds = array<i64: 4, 128>}, {pipeline_mode = #tpu.pipeline_mode<synchronous>, transform_indices = @transform_2, window_bounds = array<i64: 1, 128>}, {pipeline_mode = #tpu.pipeline_mode<synchronous>, transform_indices = @transform_3, window_bounds = array<i64: 1152, 128>}, {pipeline_mode = #tpu.pipeline_mode<synchronous>, transform_indices = @transform_4, window_bounds = array<i64: 1, 128>}, {pipeline_mode = #tpu.pipeline_mode<synchronous>, transform_indices = @transform_5, window_bounds = array<i64: 1152, 128>}, {pipeline_mode = #tpu.pipeline_mode<synchronous>, transform_indices = @transform_6, window_bounds = array<i64: 1, 128>}, {pipeline_mode = #tpu.pipeline_mode<synchronous>, transform_indices = @transform_7, window_bounds = array<i64: 216, 1>}, {pipeline_mode = #tpu.pipeline_mode<synchronous>, transform_indices = @transform_8, window_bounds = array<i64: 178, 1>}, {transform_indices = @transform_9, window_bounds = array<i64: 1, 1, 144, 128>}]} {
    %c0 = arith.constant 0 : index
    %c0_0 = arith.constant 0 : index
    %c0_1 = arith.constant 0 : index
    %c0_2 = arith.constant 0 : index
    %0 = vector.load %arg2[%c0, %c0_0, %c0_1, %c0_2] : memref<1x1x216x4xbf16, #tpu.memory_space<vmem>>, vector<1x1x216x4xbf16>
    %1 = vector.shape_cast %0 : vector<1x1x216x4xbf16> to vector<216x4xbf16>
    %c0_3 = arith.constant 0 : index
    %c0_4 = arith.constant 0 : index
    %2 = vector.load %arg3[%c0_3, %c0_4] : memref<4x128xbf16, #tpu.memory_space<vmem>>, vector<4x128xbf16>
    %cst = arith.constant dense<0.000000e+00> : vector<216x128xf32>
    %3 = tpu.matmul %1, %2, %cst {dimension_numbers = #tpu.dot_dimension_numbers<[1], [0], [0], [1], [0, 0, 1, 1], [], []>} : vector<216x4xbf16>, vector<4x128xbf16>, vector<216x128xf32> -> vector<216x128xf32>
    %c0_5 = arith.constant 0 : index
    %c0_6 = arith.constant 0 : index
    %4 = vector.load %arg4[%c0_5, %c0_6] : memref<1x128xf32, #tpu.memory_space<vmem>>, vector<1x128xf32>
    %5 = vector.broadcast %4 : vector<1x128xf32> to vector<216x128xf32>
    %6 = arith.addf %3, %5 : vector<216x128xf32>
    %c0_7 = arith.constant 0 : index
    %c0_8 = arith.constant 0 : index
    %7 = vector.load %arg9[%c0_7, %c0_8] : memref<216x1xf32, #tpu.memory_space<vmem>>, vector<216x1xf32>
    %8 = vector.broadcast %7 : vector<216x1xf32> to vector<216x128xf32>
    %9 = arith.mulf %6, %8 : vector<216x128xf32>
    %c0_9 = arith.constant 0 : index
    %c0_10 = arith.constant 0 : index
    %10 = vector.load %arg12[%c0_9, %c0_10] : memref<216x128xf32, #tpu.memory_space<vmem>>, vector<216x128xf32>
    tpu.vector_store %arg12[%c0_9, %c0_10], %9 {strides = array<i32>} : memref<216x128xf32, #tpu.memory_space<vmem>>, vector<216x128xf32>,
    %c0_i32 = arith.constant 0 : i32
    %11 = arith.cmpi eq, %arg1, %c0_i32 : i32
    %12 = arith.extui %11 : i1 to i32
    %c0_i32_11 = arith.constant 0 : i32
    %13 = arith.cmpi ne, %12, %c0_i32_11 : i32
    scf.if %13 {
      %cst_100 = arith.constant 0.000000e+00 : f32
      %100 = vector.broadcast %cst_100 : f32 to vector<36x128xf32>
      %c0_101 = arith.constant 0 : index
      %c0_102 = arith.constant 0 : index
      %101 = vector.load %arg12[%c0_101, %c0_102] : memref<216x128xf32, #tpu.memory_space<vmem>>, vector<36x128xf32>
      tpu.vector_store %arg12[%c0_101, %c0_102], %100 {strides = array<i32>} : memref<216x128xf32, #tpu.memory_space<vmem>>, vector<36x128xf32>,
    } else {
    }
    %c1_i32 = arith.constant 1 : i32
    %14 = arith.cmpi eq, %arg1, %c1_i32 : i32
    %15 = arith.extui %14 : i1 to i32
    %c0_i32_12 = arith.constant 0 : i32
    %16 = arith.cmpi ne, %15, %c0_i32_12 : i32
    scf.if %16 {
      %cst_100 = arith.constant 0.000000e+00 : f32
      %100 = vector.broadcast %cst_100 : f32 to vector<36x128xf32>
      %c180 = arith.constant 180 : index
      %c0_101 = arith.constant 0 : index
      %101 = vector.load %arg12[%c180, %c0_101] : memref<216x128xf32, #tpu.memory_space<vmem>>, vector<36x128xf32>
      tpu.vector_store %arg12[%c180, %c0_101], %100 {strides = array<i32>} : memref<216x128xf32, #tpu.memory_space<vmem>>, vector<36x128xf32>,
    } else {
    }
    %c0_13 = arith.constant 0 : index
    %c0_14 = arith.constant 0 : index
    %17 = vector.load %arg12[%c0_13, %c0_14] : memref<216x128xf32, #tpu.memory_space<vmem>>, vector<178x128xf32>
    %18 = arith.truncf %17 : vector<178x128xf32> to vector<178x128xbf16>
    %c0_15 = arith.constant 0 : index
    %c0_16 = arith.constant 0 : index
    %19 = vector.load %arg14[%c0_15, %c0_16] : memref<178x1152xbf16, #tpu.memory_space<vmem>>, vector<178x128xbf16>
    tpu.vector_store %arg14[%c0_15, %c0_16], %18 {strides = array<i32>} : memref<178x1152xbf16, #tpu.memory_space<vmem>>, vector<178x128xbf16>,
    %c1 = arith.constant 1 : index
    %c0_17 = arith.constant 0 : index
    %20 = vector.load %arg12[%c1, %c0_17] : memref<216x128xf32, #tpu.memory_space<vmem>>, vector<178x128xf32>
    %21 = arith.truncf %20 : vector<178x128xf32> to vector<178x128xbf16>
    %c0_18 = arith.constant 0 : index
    %c128 = arith.constant 128 : index
    %22 = vector.load %arg14[%c0_18, %c128] : memref<178x1152xbf16, #tpu.memory_space<vmem>>, vector<178x128xbf16>
    tpu.vector_store %arg14[%c0_18, %c128], %21 {strides = array<i32>} : memref<178x1152xbf16, #tpu.memory_space<vmem>>, vector<178x128xbf16>,
    %c2 = arith.constant 2 : index
    %c0_19 = arith.constant 0 : index
    %23 = vector.load %arg12[%c2, %c0_19] : memref<216x128xf32, #tpu.memory_space<vmem>>, vector<178x128xf32>
    %24 = arith.truncf %23 : vector<178x128xf32> to vector<178x128xbf16>
    %c0_20 = arith.constant 0 : index
    %c256 = arith.constant 256 : index
    %25 = vector.load %arg14[%c0_20, %c256] : memref<178x1152xbf16, #tpu.memory_space<vmem>>, vector<178x128xbf16>
    tpu.vector_store %arg14[%c0_20, %c256], %24 {strides = array<i32>} : memref<178x1152xbf16, #tpu.memory_space<vmem>>, vector<178x128xbf16>,
    %c18 = arith.constant 18 : index
    %c0_21 = arith.constant 0 : index
    %26 = vector.load %arg12[%c18, %c0_21] : memref<216x128xf32, #tpu.memory_space<vmem>>, vector<178x128xf32>
    %27 = arith.truncf %26 : vector<178x128xf32> to vector<178x128xbf16>
    %c0_22 = arith.constant 0 : index
    %c384 = arith.constant 384 : index
    %28 = vector.load %arg14[%c0_22, %c384] : memref<178x1152xbf16, #tpu.memory_space<vmem>>, vector<178x128xbf16>
    tpu.vector_store %arg14[%c0_22, %c384], %27 {strides = array<i32>} : memref<178x1152xbf16, #tpu.memory_space<vmem>>, vector<178x128xbf16>,
    %c19 = arith.constant 19 : index
    %c0_23 = arith.constant 0 : index
    %29 = vector.load %arg12[%c19, %c0_23] : memref<216x128xf32, #tpu.memory_space<vmem>>, vector<178x128xf32>
    %30 = arith.truncf %29 : vector<178x128xf32> to vector<178x128xbf16>
    %c0_24 = arith.constant 0 : index
    %c512 = arith.constant 512 : index
    %31 = vector.load %arg14[%c0_24, %c512] : memref<178x1152xbf16, #tpu.memory_space<vmem>>, vector<178x128xbf16>
    tpu.vector_store %arg14[%c0_24, %c512], %30 {strides = array<i32>} : memref<178x1152xbf16, #tpu.memory_space<vmem>>, vector<178x128xbf16>,
    %c20 = arith.constant 20 : index
    %c0_25 = arith.constant 0 : index
    %32 = vector.load %arg12[%c20, %c0_25] : memref<216x128xf32, #tpu.memory_space<vmem>>, vector<178x128xf32>
    %33 = arith.truncf %32 : vector<178x128xf32> to vector<178x128xbf16>
    %c0_26 = arith.constant 0 : index
    %c640 = arith.constant 640 : index
    %34 = vector.load %arg14[%c0_26, %c640] : memref<178x1152xbf16, #tpu.memory_space<vmem>>, vector<178x128xbf16>
    tpu.vector_store %arg14[%c0_26, %c640], %33 {strides = array<i32>} : memref<178x1152xbf16, #tpu.memory_space<vmem>>, vector<178x128xbf16>,
    %c36 = arith.constant 36 : index
    %c0_27 = arith.constant 0 : index
    %35 = vector.load %arg12[%c36, %c0_27] : memref<216x128xf32, #tpu.memory_space<vmem>>, vector<178x128xf32>
    %36 = arith.truncf %35 : vector<178x128xf32> to vector<178x128xbf16>
    %c0_28 = arith.constant 0 : index
    %c768 = arith.constant 768 : index
    %37 = vector.load %arg14[%c0_28, %c768] : memref<178x1152xbf16, #tpu.memory_space<vmem>>, vector<178x128xbf16>
    tpu.vector_store %arg14[%c0_28, %c768], %36 {strides = array<i32>} : memref<178x1152xbf16, #tpu.memory_space<vmem>>, vector<178x128xbf16>,
    %c37 = arith.constant 37 : index
    %c0_29 = arith.constant 0 : index
    %38 = vector.load %arg12[%c37, %c0_29] : memref<216x128xf32, #tpu.memory_space<vmem>>, vector<178x128xf32>
    %39 = arith.truncf %38 : vector<178x128xf32> to vector<178x128xbf16>
    %c0_30 = arith.constant 0 : index
    %c896 = arith.constant 896 : index
    %40 = vector.load %arg14[%c0_30, %c896] : memref<178x1152xbf16, #tpu.memory_space<vmem>>, vector<178x128xbf16>
    tpu.vector_store %arg14[%c0_30, %c896], %39 {strides = array<i32>} : memref<178x1152xbf16, #tpu.memory_space<vmem>>, vector<178x128xbf16>,
    %c38 = arith.constant 38 : index
    %c0_31 = arith.constant 0 : index
    %41 = vector.load %arg12[%c38, %c0_31] : memref<216x128xf32, #tpu.memory_space<vmem>>, vector<178x128xf32>
    %42 = arith.truncf %41 : vector<178x128xf32> to vector<178x128xbf16>
    %c0_32 = arith.constant 0 : index
    %c1024 = arith.constant 1024 : index
    %43 = vector.load %arg14[%c0_32, %c1024] : memref<178x1152xbf16, #tpu.memory_space<vmem>>, vector<178x128xbf16>
    tpu.vector_store %arg14[%c0_32, %c1024], %42 {strides = array<i32>} : memref<178x1152xbf16, #tpu.memory_space<vmem>>, vector<178x128xbf16>,
    %c0_33 = arith.constant 0 : index
    %c0_34 = arith.constant 0 : index
    %44 = vector.load %arg14[%c0_33, %c0_34] : memref<178x1152xbf16, #tpu.memory_space<vmem>>, vector<178x1152xbf16>
    %c0_35 = arith.constant 0 : index
    %c0_36 = arith.constant 0 : index
    %45 = vector.load %arg5[%c0_35, %c0_36] : memref<1152x128xbf16, #tpu.memory_space<vmem>>, vector<1152x128xbf16>
    %cst_37 = arith.constant dense<0.000000e+00> : vector<178x128xf32>
    %46 = tpu.matmul %44, %45, %cst_37 {dimension_numbers = #tpu.dot_dimension_numbers<[1], [0], [0], [1], [0, 0, 1, 1], [], []>} : vector<178x1152xbf16>, vector<1152x128xbf16>, vector<178x128xf32> -> vector<178x128xf32>
    %c0_38 = arith.constant 0 : index
    %c0_39 = arith.constant 0 : index
    %47 = vector.load %arg6[%c0_38, %c0_39] : memref<1x128xf32, #tpu.memory_space<vmem>>, vector<1x128xf32>
    %48 = vector.broadcast %47 : vector<1x128xf32> to vector<178x128xf32>
    %49 = arith.addf %46, %48 : vector<178x128xf32>
    %c0_40 = arith.constant 0 : index
    %c0_41 = arith.constant 0 : index
    %50 = vector.load %arg10[%c0_40, %c0_41] : memref<178x1xf32, #tpu.memory_space<vmem>>, vector<178x1xf32>
    %51 = vector.broadcast %50 : vector<178x1xf32> to vector<178x128xf32>
    %52 = arith.mulf %49, %51 : vector<178x128xf32>
    %c1_42 = arith.constant 1 : index
    %c0_43 = arith.constant 0 : index
    %53 = vector.load %arg13[%c1_42, %c0_43] : memref<188x128xf32, #tpu.memory_space<vmem>>, vector<178x128xf32>
    tpu.vector_store %arg13[%c1_42, %c0_43], %52 {strides = array<i32>} : memref<188x128xf32, #tpu.memory_space<vmem>>, vector<178x128xf32>,
    %cst_44 = arith.constant 0.000000e+00 : f32
    %54 = vector.broadcast %cst_44 : f32 to vector<1x128xf32>
    %c0_45 = arith.constant 0 : index
    %c0_46 = arith.constant 0 : index
    %55 = vector.load %arg13[%c0_45, %c0_46] : memref<188x128xf32, #tpu.memory_space<vmem>>, vector<1x128xf32>
    tpu.vector_store %arg13[%c0_45, %c0_46], %54 {strides = array<i32>} : memref<188x128xf32, #tpu.memory_space<vmem>>, vector<1x128xf32>,
    %cst_47 = arith.constant 0.000000e+00 : f32
    %56 = vector.broadcast %cst_47 : f32 to vector<9x128xf32>
    %c179 = arith.constant 179 : index
    %c0_48 = arith.constant 0 : index
    %57 = vector.load %arg13[%c179, %c0_48] : memref<188x128xf32, #tpu.memory_space<vmem>>, vector<9x128xf32>
    tpu.vector_store %arg13[%c179, %c0_48], %56 {strides = array<i32>} : memref<188x128xf32, #tpu.memory_space<vmem>>, vector<9x128xf32>,
    %c0_i32_49 = arith.constant 0 : i32
    %58 = arith.cmpi eq, %arg1, %c0_i32_49 : i32
    %59 = arith.extui %58 : i1 to i32
    %c0_i32_50 = arith.constant 0 : i32
    %60 = arith.cmpi ne, %59, %c0_i32_50 : i32
    scf.if %60 {
      %cst_100 = arith.constant 0.000000e+00 : f32
      %100 = vector.broadcast %cst_100 : f32 to vector<18x128xf32>
      %c0_101 = arith.constant 0 : index
      %c0_102 = arith.constant 0 : index
      %101 = vector.load %arg13[%c0_101, %c0_102] : memref<188x128xf32, #tpu.memory_space<vmem>>, vector<18x128xf32>
      tpu.vector_store %arg13[%c0_101, %c0_102], %100 {strides = array<i32>} : memref<188x128xf32, #tpu.memory_space<vmem>>, vector<18x128xf32>,
    } else {
    }
    %c1_i32_51 = arith.constant 1 : i32
    %61 = arith.cmpi eq, %arg1, %c1_i32_51 : i32
    %62 = arith.extui %61 : i1 to i32
    %c0_i32_52 = arith.constant 0 : i32
    %63 = arith.cmpi ne, %62, %c0_i32_52 : i32
    scf.if %63 {
      %cst_100 = arith.constant 0.000000e+00 : f32
      %100 = vector.broadcast %cst_100 : f32 to vector<18x128xf32>
      %c162 = arith.constant 162 : index
      %c0_101 = arith.constant 0 : index
      %101 = vector.load %arg13[%c162, %c0_101] : memref<188x128xf32, #tpu.memory_space<vmem>>, vector<18x128xf32>
      tpu.vector_store %arg13[%c162, %c0_101], %100 {strides = array<i32>} : memref<188x128xf32, #tpu.memory_space<vmem>>, vector<18x128xf32>,
    } else {
    }
    %c0_53 = arith.constant 0 : index
    %c0_54 = arith.constant 0 : index
    %64 = vector.load %arg13[%c0_53, %c0_54] : memref<188x128xf32, #tpu.memory_space<vmem>>, vector<144x128xf32>
    %65 = arith.truncf %64 : vector<144x128xf32> to vector<144x128xbf16>
    %c0_55 = arith.constant 0 : index
    %c0_56 = arith.constant 0 : index
    %66 = vector.load %arg14[%c0_55, %c0_56] : memref<178x1152xbf16, #tpu.memory_space<vmem>>, vector<144x128xbf16>
    tpu.vector_store %arg14[%c0_55, %c0_56], %65 {strides = array<i32>} : memref<178x1152xbf16, #tpu.memory_space<vmem>>, vector<144x128xbf16>,
    %c1_57 = arith.constant 1 : index
    %c0_58 = arith.constant 0 : index
    %67 = vector.load %arg13[%c1_57, %c0_58] : memref<188x128xf32, #tpu.memory_space<vmem>>, vector<144x128xf32>
    %68 = arith.truncf %67 : vector<144x128xf32> to vector<144x128xbf16>
    %c0_59 = arith.constant 0 : index
    %c128_60 = arith.constant 128 : index
    %69 = vector.load %arg14[%c0_59, %c128_60] : memref<178x1152xbf16, #tpu.memory_space<vmem>>, vector<144x128xbf16>
    tpu.vector_store %arg14[%c0_59, %c128_60], %68 {strides = array<i32>} : memref<178x1152xbf16, #tpu.memory_space<vmem>>, vector<144x128xbf16>,
    %c2_61 = arith.constant 2 : index
    %c0_62 = arith.constant 0 : index
    %70 = vector.load %arg13[%c2_61, %c0_62] : memref<188x128xf32, #tpu.memory_space<vmem>>, vector<144x128xf32>
    %71 = arith.truncf %70 : vector<144x128xf32> to vector<144x128xbf16>
    %c0_63 = arith.constant 0 : index
    %c256_64 = arith.constant 256 : index
    %72 = vector.load %arg14[%c0_63, %c256_64] : memref<178x1152xbf16, #tpu.memory_space<vmem>>, vector<144x128xbf16>
    tpu.vector_store %arg14[%c0_63, %c256_64], %71 {strides = array<i32>} : memref<178x1152xbf16, #tpu.memory_space<vmem>>, vector<144x128xbf16>,
    %c18_65 = arith.constant 18 : index
    %c0_66 = arith.constant 0 : index
    %73 = vector.load %arg13[%c18_65, %c0_66] : memref<188x128xf32, #tpu.memory_space<vmem>>, vector<144x128xf32>
    %74 = arith.truncf %73 : vector<144x128xf32> to vector<144x128xbf16>
    %c0_67 = arith.constant 0 : index
    %c384_68 = arith.constant 384 : index
    %75 = vector.load %arg14[%c0_67, %c384_68] : memref<178x1152xbf16, #tpu.memory_space<vmem>>, vector<144x128xbf16>
    tpu.vector_store %arg14[%c0_67, %c384_68], %74 {strides = array<i32>} : memref<178x1152xbf16, #tpu.memory_space<vmem>>, vector<144x128xbf16>,
    %c19_69 = arith.constant 19 : index
    %c0_70 = arith.constant 0 : index
    %76 = vector.load %arg13[%c19_69, %c0_70] : memref<188x128xf32, #tpu.memory_space<vmem>>, vector<144x128xf32>
    %77 = arith.truncf %76 : vector<144x128xf32> to vector<144x128xbf16>
    %c0_71 = arith.constant 0 : index
    %c512_72 = arith.constant 512 : index
    %78 = vector.load %arg14[%c0_71, %c512_72] : memref<178x1152xbf16, #tpu.memory_space<vmem>>, vector<144x128xbf16>
    tpu.vector_store %arg14[%c0_71, %c512_72], %77 {strides = array<i32>} : memref<178x1152xbf16, #tpu.memory_space<vmem>>, vector<144x128xbf16>,
    %c20_73 = arith.constant 20 : index
    %c0_74 = arith.constant 0 : index
    %79 = vector.load %arg13[%c20_73, %c0_74] : memref<188x128xf32, #tpu.memory_space<vmem>>, vector<144x128xf32>
    %80 = arith.truncf %79 : vector<144x128xf32> to vector<144x128xbf16>
    %c0_75 = arith.constant 0 : index
    %c640_76 = arith.constant 640 : index
    %81 = vector.load %arg14[%c0_75, %c640_76] : memref<178x1152xbf16, #tpu.memory_space<vmem>>, vector<144x128xbf16>
    tpu.vector_store %arg14[%c0_75, %c640_76], %80 {strides = array<i32>} : memref<178x1152xbf16, #tpu.memory_space<vmem>>, vector<144x128xbf16>,
    %c36_77 = arith.constant 36 : index
    %c0_78 = arith.constant 0 : index
    %82 = vector.load %arg13[%c36_77, %c0_78] : memref<188x128xf32, #tpu.memory_space<vmem>>, vector<144x128xf32>
    %83 = arith.truncf %82 : vector<144x128xf32> to vector<144x128xbf16>
    %c0_79 = arith.constant 0 : index
    %c768_80 = arith.constant 768 : index
    %84 = vector.load %arg14[%c0_79, %c768_80] : memref<178x1152xbf16, #tpu.memory_space<vmem>>, vector<144x128xbf16>
    tpu.vector_store %arg14[%c0_79, %c768_80], %83 {strides = array<i32>} : memref<178x1152xbf16, #tpu.memory_space<vmem>>, vector<144x128xbf16>,
    %c37_81 = arith.constant 37 : index
    %c0_82 = arith.constant 0 : index
    %85 = vector.load %arg13[%c37_81, %c0_82] : memref<188x128xf32, #tpu.memory_space<vmem>>, vector<144x128xf32>
    %86 = arith.truncf %85 : vector<144x128xf32> to vector<144x128xbf16>
    %c0_83 = arith.constant 0 : index
    %c896_84 = arith.constant 896 : index
    %87 = vector.load %arg14[%c0_83, %c896_84] : memref<178x1152xbf16, #tpu.memory_space<vmem>>, vector<144x128xbf16>
    tpu.vector_store %arg14[%c0_83, %c896_84], %86 {strides = array<i32>} : memref<178x1152xbf16, #tpu.memory_space<vmem>>, vector<144x128xbf16>,
    %c38_85 = arith.constant 38 : index
    %c0_86 = arith.constant 0 : index
    %88 = vector.load %arg13[%c38_85, %c0_86] : memref<188x128xf32, #tpu.memory_space<vmem>>, vector<144x128xf32>
    %89 = arith.truncf %88 : vector<144x128xf32> to vector<144x128xbf16>
    %c0_87 = arith.constant 0 : index
    %c1024_88 = arith.constant 1024 : index
    %90 = vector.load %arg14[%c0_87, %c1024_88] : memref<178x1152xbf16, #tpu.memory_space<vmem>>, vector<144x128xbf16>
    tpu.vector_store %arg14[%c0_87, %c1024_88], %89 {strides = array<i32>} : memref<178x1152xbf16, #tpu.memory_space<vmem>>, vector<144x128xbf16>,
    %c0_89 = arith.constant 0 : index
    %c0_90 = arith.constant 0 : index
    %91 = vector.load %arg14[%c0_89, %c0_90] : memref<178x1152xbf16, #tpu.memory_space<vmem>>, vector<144x1152xbf16>
    %c0_91 = arith.constant 0 : index
    %c0_92 = arith.constant 0 : index
    %92 = vector.load %arg7[%c0_91, %c0_92] : memref<1152x128xbf16, #tpu.memory_space<vmem>>, vector<1152x128xbf16>
    %cst_93 = arith.constant dense<0.000000e+00> : vector<144x128xf32>
    %93 = tpu.matmul %91, %92, %cst_93 {dimension_numbers = #tpu.dot_dimension_numbers<[1], [0], [0], [1], [0, 0, 1, 1], [], []>} : vector<144x1152xbf16>, vector<1152x128xbf16>, vector<144x128xf32> -> vector<144x128xf32>
    %c0_94 = arith.constant 0 : index
    %c0_95 = arith.constant 0 : index
    %94 = vector.load %arg8[%c0_94, %c0_95] : memref<1x128xf32, #tpu.memory_space<vmem>>, vector<1x128xf32>
    %95 = vector.broadcast %94 : vector<1x128xf32> to vector<144x128xf32>
    %96 = arith.addf %93, %95 : vector<144x128xf32>
    %c0_96 = arith.constant 0 : index
    %c0_97 = arith.constant 0 : index
    %c0_98 = arith.constant 0 : index
    %c0_99 = arith.constant 0 : index
    %97 = vector.load %arg11[%c0_96, %c0_97, %c0_98, %c0_99] : memref<1x1x144x128xf32, #tpu.memory_space<vmem>>, vector<1x1x144x128xf32>
    %98 = vector.shape_cast %97 : vector<1x1x144x128xf32> to vector<144x128xf32>
    %99 = vector.shape_cast %96 : vector<144x128xf32> to vector<1x1x144x128xf32>
    tpu.vector_store %arg11[%c0_96, %c0_97, %c0_98, %c0_99], %99 {strides = array<i32>} : memref<1x1x144x128xf32, #tpu.memory_space<vmem>>, vector<1x1x144x128xf32>,
    return
  }
  func.func @transform_0(%arg0: i32, %arg1: i32) -> (i32, i32, i32, i32) {
    %c0_i32 = arith.constant 0 : i32
    %c0_i32_0 = arith.constant 0 : i32
    %c0_i32_1 = arith.constant 0 : i32
    return %arg0, %arg1, %c0_i32, %c0_i32_0 : i32, i32, i32, i32
  }
  func.func @transform_1(%arg0: i32, %arg1: i32) -> (i32, i32) {
    %c0_i32 = arith.constant 0 : i32
    %c0_i32_0 = arith.constant 0 : i32
    %c0_i32_1 = arith.constant 0 : i32
    return %c0_i32, %c0_i32_0 : i32, i32
  }
  func.func @transform_2(%arg0: i32, %arg1: i32) -> (i32, i32) {
    %c0_i32 = arith.constant 0 : i32
    %c0_i32_0 = arith.constant 0 : i32
    %c0_i32_1 = arith.constant 0 : i32
    return %c0_i32, %c0_i32_0 : i32, i32
  }
  func.func @transform_3(%arg0: i32, %arg1: i32) -> (i32, i32) {
    %c0_i32 = arith.constant 0 : i32
    %c0_i32_0 = arith.constant 0 : i32
    %c0_i32_1 = arith.constant 0 : i32
    return %c0_i32, %c0_i32_0 : i32, i32
  }
  func.func @transform_4(%arg0: i32, %arg1: i32) -> (i32, i32) {
    %c0_i32 = arith.constant 0 : i32
    %c0_i32_0 = arith.constant 0 : i32
    %c0_i32_1 = arith.constant 0 : i32
    return %c0_i32, %c0_i32_0 : i32, i32
  }
  func.func @transform_5(%arg0: i32, %arg1: i32) -> (i32, i32) {
    %c0_i32 = arith.constant 0 : i32
    %c0_i32_0 = arith.constant 0 : i32
    %c0_i32_1 = arith.constant 0 : i32
    return %c0_i32, %c0_i32_0 : i32, i32
  }
  func.func @transform_6(%arg0: i32, %arg1: i32) -> (i32, i32) {
    %c0_i32 = arith.constant 0 : i32
    %c0_i32_0 = arith.constant 0 : i32
    %c0_i32_1 = arith.constant 0 : i32
    return %c0_i32, %c0_i32_0 : i32, i32
  }
  func.func @transform_7(%arg0: i32, %arg1: i32) -> (i32, i32) {
    %c0_i32 = arith.constant 0 : i32
    %c0_i32_0 = arith.constant 0 : i32
    %c0_i32_1 = arith.constant 0 : i32
    return %c0_i32, %c0_i32_0 : i32, i32
  }
  func.func @transform_8(%arg0: i32, %arg1: i32) -> (i32, i32) {
    %c0_i32 = arith.constant 0 : i32
    %c0_i32_0 = arith.constant 0 : i32
    %c0_i32_1 = arith.constant 0 : i32
    return %c0_i32, %c0_i32_0 : i32, i32
  }
  func.func @transform_9(%arg0: i32, %arg1: i32) -> (i32, i32, i32, i32) {
    %c0_i32 = arith.constant 0 : i32
    %c0_i32_0 = arith.constant 0 : i32
    %c0_i32_1 = arith.constant 0 : i32
    return %arg0, %arg1, %c0_i32, %c0_i32_0 : i32, i32, i32, i32
  }
}

</mosaic_0001>

<llo_original>
// kernel: tile.19
$region0: #{tile.19}
  %s0 = inlined_call_operand.vmem [shape: s32[10,18], index: 0, kind: input, shape index: {}]
  %s1 = inlined_call_operand.vmem [shape: s32[180], index: 1, kind: output, shape index: {}]
  $region1: #{tile.19} parent=0
    #allocation0 [shape = 'u8[4096]{0}', space=vmem, size = 0x1000, scoped, tag = 'scoped mem for output reshape']
    %v2 = vld [vmem:[%s0] sm:$0x1]
    %vm3 = vcmask 146432
    %4 = vst.msk [vmem:[#allocation0] sm:$0x1] %vm3, %v2
    %s5 = scalar_lea.vmem %s0, 7
    %v6 = vld [vmem:[%s5] sm:$0x1]
    %s7 = scalar_lea.vmem %s0, 7
    %v8 = vld [vmem:[%s7] sm:$0x1]
    %vm9 = vcmask 15360
    %v10 = vsel %vm9, %v8, %v6
    %11 = vrot.lane.b32.xlu0 %v10, 126
    %v12 = vpop.permute.xlu0 %11
    %vm13 = vcmask 130048
    %s14 = scalar_lea.vmem [#allocation0], 1
    %15 = vst.msk [vmem:[%s14] sm:$0x1] %vm13, %v12
    %vm16 = vcmask 1048560
    %17 = vst.msk [vmem:[#allocation0] sm:$0x1] %vm16, %v12
    %s18 = scalar_lea.vmem %s0, 6
    %v19 = vld [vmem:[%s18] sm:$0x1]
    %20 = vrot.lane.b32.xlu0 %v19, 108
    %v21 = vpop.permute.xlu0 %20
    %vm22 = vcmask 1032032
    %23 = vst.msk [vmem:[#allocation0] sm:$0x1] %vm22, %v21
    %s24 = scalar_lea.vmem %s0, 5
    %v25 = vld [vmem:[%s24] sm:$0x1]
    %26 = vrot.lane.b32.xlu0 %v25, 90
    %v27 = vpop.permute.xlu0 %26
    %vm28 = vcmask 884432
    %29 = vst.msk [vmem:[#allocation0] sm:$0x1] %vm28, %v27
    %s30 = scalar_lea.vmem %s0, 4
    %v31 = vld [vmem:[%s30] sm:$0x1]
    %32 = vrot.lane.b32.xlu0 %v31, 72
    %v33 = vpop.permute.xlu0 %32
    %vm34 = vcmask 736832
    %35 = vst.msk [vmem:[#allocation0] sm:$0x1] %vm34, %v33
    %s36 = scalar_lea.vmem %s0, 3
    %v37 = vld [vmem:[%s36] sm:$0x1]
    %38 = vrot.lane.b32.xlu0 %v37, 54
    %v39 = vpop.permute.xlu0 %38
    %vm40 = vcmask 589232
    %41 = vst.msk [vmem:[#allocation0] sm:$0x1] %vm40, %v39
    %s42 = scalar_lea.vmem %s0, 2
    %v43 = vld [vmem:[%s42] sm:$0x1]
    %44 = vrot.lane.b32.xlu0 %v43, 36
    %v45 = vpop.permute.xlu0 %44
    %vm46 = vcmask 441632
    %47 = vst.msk [vmem:[#allocation0] sm:$0x1] %vm46, %v45
    %s48 = scalar_lea.vmem %s0, 9
    %v49 = vld [vmem:[%s48] sm:$0x1]
    %50 = vrot.lane.b32.xlu0 %v49, 34
    %v51 = vpop.permute.xlu0 %50
    %vm52 = vcmask 425232
    %s53 = scalar_lea.vmem [#allocation0], 1
    %54 = vst.msk [vmem:[%s53] sm:$0x1] %vm52, %v51
    %s55 = scalar_lea.vmem %s0, 1
    %v56 = vld [vmem:[%s55] sm:$0x1]
    %57 = vrot.lane.b32.xlu0 %v56, 18
    %v58 = vpop.permute.xlu0 %57
    %vm59 = vcmask 294032
    %60 = vst.msk [vmem:[#allocation0] sm:$0x1] %vm59, %v58
    %s61 = scalar_lea.vmem %s0, 8
    %v62 = vld [vmem:[%s61] sm:$0x1]
    %63 = vrot.lane.b32.xlu0 %v62, 16
    %v64 = vpop.permute.xlu0 %63
    %vm65 = vcmask 277632
    %s66 = scalar_lea.vmem [#allocation0], 1
    %67 = vst.msk [vmem:[%s66] sm:$0x1] %vm65, %v64
    %s69 = sshllo.u32 0, 2
    %v71 = vld [vmem:[#allocation0] sm:%s69]
    %s72 = sshllo.u32 0, 2
    %73 = vst [vmem:[%s1] sm:%s72] %v71

// kernel: triple_conv_pallas.1
$region0: #{triple_conv_pallas.1}
  #allocation0 [shape = 'u32[]', space=smem, size = 0x4, offset = 0x4, fixed_abs, tag = 'smem constant byte address 0x4 - core index']
  #allocation1 [shape = 'u32[144,128]{1,0:T(1,128)}', space=vmem, size = 0x12000, scoped, tag = 'internal scratch']
  #allocation2 [shape = 'f32[216,128]{1,0:T(8,128)}', space=vmem, size = 0x1b000, scoped, tag = 'scratch operand']
  #allocation3 [shape = 'f32[188,128]{1,0:T(8,128)}', space=vmem, size = 0x18000, scoped, tag = 'scratch operand']
  #allocation4 [shape = 'bf16[178,1152]{1,0:T(8,128)(2,1)}', space=vmem, size = 0x67800, scoped, tag = 'scratch operand']
  %s0 = inlined_call_operand.vmem [shape: bf16[2,2,216,4], index: 0, kind: input, shape index: {}]
  %s1 = inlined_call_operand.vmem [shape: bf16[4,128], index: 1, kind: input, shape index: {}]
  %s2 = inlined_call_operand.vmem [shape: f32[1,128], index: 2, kind: input, shape index: {}]
  %s3 = inlined_call_operand.vmem [shape: bf16[1152,128], index: 3, kind: input, shape index: {}]
  %s4 = inlined_call_operand.vmem [shape: f32[1,128], index: 4, kind: input, shape index: {}]
  %s5 = inlined_call_operand.vmem [shape: bf16[1152,128], index: 5, kind: input, shape index: {}]
  %s6 = inlined_call_operand.vmem [shape: f32[1,128], index: 6, kind: input, shape index: {}]
  %s7 = inlined_call_operand.vmem [shape: f32[216,1], index: 7, kind: input, shape index: {}]
  %s8 = inlined_call_operand.vmem [shape: f32[178,1], index: 8, kind: input, shape index: {}]
  %s9 = inlined_call_operand.vmem [shape: f32[2,2,144,128], index: 9, kind: output, shape index: {}]
  %s10 = sld [smem:[#allocation0]]
  $region85: #{triple_conv_pallas.1} parent=0
    _
  %s12 = ssub.s32 1, %s10
  %s13 = scalar_select 0, %s12, %s10
  loop: start=0, step=1, limit=6
  $region2: #{triple_conv_pallas.1} parent=0 // loop_pre_header
    _
  $region3: #{triple_conv_pallas.1} parent=0 // loop_header
    %s15 = sphi 0, %s19
    %p16 = scmp.ge.s32.totalorder %s15, 6
    %s22 = sphi 0, %s34
    %s23 = sphi 0, %s30
    %s24 = sphi 0, %s22
    %s25 = sphi 0, %s23
    %s26 = sphi 0, %s24
    %s27 = sphi 0, %s25
    %s39 = sphi 0, %s41
    %s42 = sphi 0, %s39
    %s43 = sphi 0, %s42
    %s59 = sphi 0, %s43
    %s63 = sphi 0, %s63
    %s65 = sphi 0, %s63
    %s66 = sphi 0, %s65
    %s80 = sphi 0, %s66
    %s84 = sphi 0, %s84
    %s86 = sphi 0, %s84
    %s87 = sphi 0, %s86
    %s101 = sphi 0, %s87
    %s105 = sphi 0, %s105
    %s107 = sphi 0, %s105
    %s108 = sphi 0, %s107
    %s122 = sphi 0, %s108
    %s126 = sphi 0, %s126
    %s128 = sphi 0, %s126
    %s129 = sphi 0, %s128
    %s143 = sphi 0, %s129
    %s147 = sphi 0, %s147
    %s149 = sphi 0, %s147
    %s150 = sphi 0, %s149
    %s164 = sphi 0, %s150
    %s168 = sphi 0, %s168
    %s170 = sphi 0, %s168
    %s171 = sphi 0, %s170
    %s185 = sphi 0, %s171
    %s189 = sphi 0, %s189
    %s191 = sphi 0, %s189
    %s192 = sphi 0, %s191
    %s206 = sphi 0, %s192
    %s210 = sphi 0, %s210
    %s212 = sphi 0, %s210
    %s213 = sphi 0, %s212
    %s227 = sphi 0, %s213
    %s235 = sphi 0, %s237
    %s238 = sphi 0, %s235
    %s239 = sphi 0, %s238
    %s255 = sphi 0, %s239
  $region4: #{triple_conv_pallas.1} parent=0 // loop_header_branch
    %18 = sbr.rel (%p16) target = $region8
  $region5: #{triple_conv_pallas.1} parent=0 // loop_body
    %s20 = ssub.s32 %s15, 1
    %s21 = ssub.s32 %s15, 2
    %s28 = sadd.s32 1, %s23
    %p29 = scmp.ge.s32.totalorder %s28, 2
    %s30 = scalar_select %p29, 0, %s28
    %s31 = sadd.s32 1, %s22
    %s32 = scalar_select %p29, %s31, %s22
    %p33 = scmp.ge.s32.totalorder %s32, 2
    %s34 = scalar_select %p33, 0, %s32
    %s35 = ssub.s32 %s22, %s34
    %s36 = ssub.s32 %s23, %s30
    %s37 = sor.u32 %s35, %s36
    %p38 = scmp.eq.s32.totalorder %s37, 0
    %s40 = sadd.s32 %s39, 1
    %s41 = scalar_select %p38, %s39, %s40
    %p44 = pneg %p38
    %p45 = scmp.eq.s32.totalorder %s15, 3
    %p46 = por %p44, %p45
    %p47 = scmp.ne.s32.totalorder %s39, %s42
    %p48 = scmp.eq.s32.totalorder %s15, 0
    %p49 = por %p47, %p48
    %p50 = scmp.ne.s32.totalorder %s39, %s42
    %p51 = scmp.eq.s32.totalorder %s20, 3
    %p52 = por %p50, %p51
    %p53 = scmp.ne.s32.totalorder %s42, %s43
    %p54 = scmp.eq.s32.totalorder %s20, 0
    %p55 = por %p53, %p54
    %p56 = scmp.ne.s32.totalorder %s42, %s43
    %p57 = scmp.eq.s32.totalorder %s21, 3
    %p58 = por %p56, %p57
    %p60 = scmp.ne.s32.totalorder %s43, %s59
    %p61 = scmp.eq.s32.totalorder %s21, 0
    %p62 = por %p60, %p61
    %s64 = sadd.s32 %s63, 1
    %p67 = scmp.eq.s32.totalorder %s15, 3
    %p68 = scmp.ne.s32.totalorder %s63, %s65
    %p69 = scmp.eq.s32.totalorder %s15, 0
    %p70 = por %p68, %p69
    %p71 = scmp.ne.s32.totalorder %s63, %s65
    %p72 = scmp.eq.s32.totalorder %s20, 3
    %p73 = por %p71, %p72
    %p74 = scmp.ne.s32.totalorder %s65, %s66
    %p75 = scmp.eq.s32.totalorder %s20, 0
    %p76 = por %p74, %p75
    %p77 = scmp.ne.s32.totalorder %s65, %s66
    %p78 = scmp.eq.s32.totalorder %s21, 3
    %p79 = por %p77, %p78
    %p81 = scmp.ne.s32.totalorder %s66, %s80
    %p82 = scmp.eq.s32.totalorder %s21, 0
    %p83 = por %p81, %p82
    %s85 = sadd.s32 %s84, 1
    %p88 = scmp.eq.s32.totalorder %s15, 3
    %p89 = scmp.ne.s32.totalorder %s84, %s86
    %p90 = scmp.eq.s32.totalorder %s15, 0
    %p91 = por %p89, %p90
    %p92 = scmp.ne.s32.totalorder %s84, %s86
    %p93 = scmp.eq.s32.totalorder %s20, 3
    %p94 = por %p92, %p93
    %p95 = scmp.ne.s32.totalorder %s86, %s87
    %p96 = scmp.eq.s32.totalorder %s20, 0
    %p97 = por %p95, %p96
    %p98 = scmp.ne.s32.totalorder %s86, %s87
    %p99 = scmp.eq.s32.totalorder %s21, 3
    %p100 = por %p98, %p99
    %p102 = scmp.ne.s32.totalorder %s87, %s101
    %p103 = scmp.eq.s32.totalorder %s21, 0
    %p104 = por %p102, %p103
    %s106 = sadd.s32 %s105, 1
    %p109 = scmp.eq.s32.totalorder %s15, 3
    %p110 = scmp.ne.s32.totalorder %s105, %s107
    %p111 = scmp.eq.s32.totalorder %s15, 0
    %p112 = por %p110, %p111
    %p113 = scmp.ne.s32.totalorder %s105, %s107
    %p114 = scmp.eq.s32.totalorder %s20, 3
    %p115 = por %p113, %p114
    %p116 = scmp.ne.s32.totalorder %s107, %s108
    %p117 = scmp.eq.s32.totalorder %s20, 0
    %p118 = por %p116, %p117
    %p119 = scmp.ne.s32.totalorder %s107, %s108
    %p120 = scmp.eq.s32.totalorder %s21, 3
    %p121 = por %p119, %p120
    %p123 = scmp.ne.s32.totalorder %s108, %s122
    %p124 = scmp.eq.s32.totalorder %s21, 0
    %p125 = por %p123, %p124
    %s127 = sadd.s32 %s126, 1
    %p130 = scmp.eq.s32.totalorder %s15, 3
    %p131 = scmp.ne.s32.totalorder %s126, %s128
    %p132 = scmp.eq.s32.totalorder %s15, 0
    %p133 = por %p131, %p132
    %p134 = scmp.ne.s32.totalorder %s126, %s128
    %p135 = scmp.eq.s32.totalorder %s20, 3
    %p136 = por %p134, %p135
    %p137 = scmp.ne.s32.totalorder %s128, %s129
    %p138 = scmp.eq.s32.totalorder %s20, 0
    %p139 = por %p137, %p138
    %p140 = scmp.ne.s32.totalorder %s128, %s129
    %p141 = scmp.eq.s32.totalorder %s21, 3
    %p142 = por %p140, %p141
    %p144 = scmp.ne.s32.totalorder %s129, %s143
    %p145 = scmp.eq.s32.totalorder %s21, 0
    %p146 = por %p144, %p145
    %s148 = sadd.s32 %s147, 1
    %p151 = scmp.eq.s32.totalorder %s15, 3
    %p152 = scmp.ne.s32.totalorder %s147, %s149
    %p153 = scmp.eq.s32.totalorder %s15, 0
    %p154 = por %p152, %p153
    %p155 = scmp.ne.s32.totalorder %s147, %s149
    %p156 = scmp.eq.s32.totalorder %s20, 3
    %p157 = por %p155, %p156
    %p158 = scmp.ne.s32.totalorder %s149, %s150
    %p159 = scmp.eq.s32.totalorder %s20, 0
    %p160 = por %p158, %p159
    %p161 = scmp.ne.s32.totalorder %s149, %s150
    %p162 = scmp.eq.s32.totalorder %s21, 3
    %p163 = por %p161, %p162
    %p165 = scmp.ne.s32.totalorder %s150, %s164
    %p166 = scmp.eq.s32.totalorder %s21, 0
    %p167 = por %p165, %p166
    %s169 = sadd.s32 %s168, 1
    %p172 = scmp.eq.s32.totalorder %s15, 3
    %p173 = scmp.ne.s32.totalorder %s168, %s170
    %p174 = scmp.eq.s32.totalorder %s15, 0
    %p175 = por %p173, %p174
    %p176 = scmp.ne.s32.totalorder %s168, %s170
    %p177 = scmp.eq.s32.totalorder %s20, 3
    %p178 = por %p176, %p177
    %p179 = scmp.ne.s32.totalorder %s170, %s171
    %p180 = scmp.eq.s32.totalorder %s20, 0
    %p181 = por %p179, %p180
    %p182 = scmp.ne.s32.totalorder %s170, %s171
    %p183 = scmp.eq.s32.totalorder %s21, 3
    %p184 = por %p182, %p183
    %p186 = scmp.ne.s32.totalorder %s171, %s185
    %p187 = scmp.eq.s32.totalorder %s21, 0
    %p188 = por %p186, %p187
    %s190 = sadd.s32 %s189, 1
    %p193 = scmp.eq.s32.totalorder %s15, 3
    %p194 = scmp.ne.s32.totalorder %s189, %s191
    %p195 = scmp.eq.s32.totalorder %s15, 0
    %p196 = por %p194, %p195
    %p197 = scmp.ne.s32.totalorder %s189, %s191
    %p198 = scmp.eq.s32.totalorder %s20, 3
    %p199 = por %p197, %p198
    %p200 = scmp.ne.s32.totalorder %s191, %s192
    %p201 = scmp.eq.s32.totalorder %s20, 0
    %p202 = por %p200, %p201
    %p203 = scmp.ne.s32.totalorder %s191, %s192
    %p204 = scmp.eq.s32.totalorder %s21, 3
    %p205 = por %p203, %p204
    %p207 = scmp.ne.s32.totalorder %s192, %s206
    %p208 = scmp.eq.s32.totalorder %s21, 0
    %p209 = por %p207, %p208
    %s211 = sadd.s32 %s210, 1
    %p214 = scmp.eq.s32.totalorder %s15, 3
    %p215 = scmp.ne.s32.totalorder %s210, %s212
    %p216 = scmp.eq.s32.totalorder %s15, 0
    %p217 = por %p215, %p216
    %p218 = scmp.ne.s32.totalorder %s210, %s212
    %p219 = scmp.eq.s32.totalorder %s20, 3
    %p220 = por %p218, %p219
    %p221 = scmp.ne.s32.totalorder %s212, %s213
    %p222 = scmp.eq.s32.totalorder %s20, 0
    %p223 = por %p221, %p222
    %p224 = scmp.ne.s32.totalorder %s212, %s213
    %p225 = scmp.eq.s32.totalorder %s21, 3
    %p226 = por %p224, %p225
    %p228 = scmp.ne.s32.totalorder %s213, %s227
    %p229 = scmp.eq.s32.totalorder %s21, 0
    %p230 = por %p228, %p229
    %s231 = ssub.s32 %s22, %s34
    %s232 = ssub.s32 %s23, %s30
    %s233 = sor.u32 %s231, %s232
    %p234 = scmp.eq.s32.totalorder %s233, 0
    %s236 = sadd.s32 %s235, 1
    %s237 = scalar_select %p234, %s235, %s236
    %p240 = pneg %p234
    %p241 = scmp.eq.s32.totalorder %s15, 3
    %p242 = por %p240, %p241
    %p243 = scmp.ne.s32.totalorder %s235, %s238
    %p244 = scmp.eq.s32.totalorder %s15, 0
    %p245 = por %p243, %p244
    %p246 = scmp.ne.s32.totalorder %s235, %s238
    %p247 = scmp.eq.s32.totalorder %s20, 3
    %p248 = por %p246, %p247
    %p249 = scmp.ne.s32.totalorder %s238, %s239
    %p250 = scmp.eq.s32.totalorder %s20, 0
    %p251 = por %p249, %p250
    %p252 = scmp.ne.s32.totalorder %s238, %s239
    %p253 = scmp.eq.s32.totalorder %s21, 3
    %p254 = por %p252, %p253
    %p256 = scmp.ne.s32.totalorder %s239, %s255
    %p257 = scmp.eq.s32.totalorder %s21, 0
    %p258 = por %p256, %p257
    %p259 = scmp.le.s32.totalorder 1, %s15
    %p260 = scmp.lt.s32.totalorder %s15, 5
    %p261 = pnand %p259, %p260
    %p262 = pneg %p261
    // Predicated region
    $region9: #{triple_conv_pallas.1} parent=5 // pred_check
      _
    $region10: #{triple_conv_pallas.1} parent=5 // pred_check_branch
      %264 = sbr.rel (%p261) target = $region12
    $region11: #{triple_conv_pallas.1} parent=5 // pred_region
      %s265 = ssub.s32 %s15, 1
      // Predicated region
      $region13: #{triple_conv_pallas.1} parent=11 // pred_check
        %p266 = pneg %p76
      $region14: #{triple_conv_pallas.1} parent=11 // pred_check_branch
        %268 = sbr.rel (%p266) target = $region16
      $region15: #{triple_conv_pallas.1} parent=11 // pred_region
        _
      $region16: #{triple_conv_pallas.1} parent=11 // pred_fallthru
        _
      // Predicated region
      $region17: #{triple_conv_pallas.1} parent=11 // pred_check
        %p269 = pneg %p97
      $region18: #{triple_conv_pallas.1} parent=11 // pred_check_branch
        %271 = sbr.rel (%p269) target = $region20
      $region19: #{triple_conv_pallas.1} parent=11 // pred_region
        _
      $region20: #{triple_conv_pallas.1} parent=11 // pred_fallthru
        _
      // Predicated region
      $region21: #{triple_conv_pallas.1} parent=11 // pred_check
        %p272 = pneg %p118
      $region22: #{triple_conv_pallas.1} parent=11 // pred_check_branch
        %274 = sbr.rel (%p272) target = $region24
      $region23: #{triple_conv_pallas.1} parent=11 // pred_region
        _
      $region24: #{triple_conv_pallas.1} parent=11 // pred_fallthru
        _
      // Predicated region
      $region25: #{triple_conv_pallas.1} parent=11 // pred_check
        %p275 = pneg %p139
      $region26: #{triple_conv_pallas.1} parent=11 // pred_check_branch
        %277 = sbr.rel (%p275) target = $region28
      $region27: #{triple_conv_pallas.1} parent=11 // pred_region
        _
      $region28: #{triple_conv_pallas.1} parent=11 // pred_fallthru
        _
      // Predicated region
      $region29: #{triple_conv_pallas.1} parent=11 // pred_check
        %p278 = pneg %p160
      $region30: #{triple_conv_pallas.1} parent=11 // pred_check_branch
        %280 = sbr.rel (%p278) target = $region32
      $region31: #{triple_conv_pallas.1} parent=11 // pred_region
        _
      $region32: #{triple_conv_pallas.1} parent=11 // pred_fallthru
        _
      // Predicated region
      $region33: #{triple_conv_pallas.1} parent=11 // pred_check
        %p281 = pneg %p181
      $region34: #{triple_conv_pallas.1} parent=11 // pred_check_branch
        %283 = sbr.rel (%p281) target = $region36
      $region35: #{triple_conv_pallas.1} parent=11 // pred_region
        _
      $region36: #{triple_conv_pallas.1} parent=11 // pred_fallthru
        _
      // Predicated region
      $region37: #{triple_conv_pallas.1} parent=11 // pred_check
        %p284 = pneg %p202
      $region38: #{triple_conv_pallas.1} parent=11 // pred_check_branch
        %286 = sbr.rel (%p284) target = $region40
      $region39: #{triple_conv_pallas.1} parent=11 // pred_region
        _
      $region40: #{triple_conv_pallas.1} parent=11 // pred_fallthru
        _
      // Predicated region
      $region41: #{triple_conv_pallas.1} parent=11 // pred_check
        %p287 = pneg %p223
      $region42: #{triple_conv_pallas.1} parent=11 // pred_check_branch
        %289 = sbr.rel (%p287) target = $region44
      $region43: #{triple_conv_pallas.1} parent=11 // pred_region
        _
      $region44: #{triple_conv_pallas.1} parent=11 // pred_fallthru
        _
    $region12: #{triple_conv_pallas.1} parent=5 // pred_fallthru
      _
    %p290 = scmp.lt.s32.totalorder %s15, 4
    // Predicated region
    $region45: #{triple_conv_pallas.1} parent=5 // pred_check
      %p291 = pneg %p290
    $region46: #{triple_conv_pallas.1} parent=5 // pred_check_branch
      %293 = sbr.rel (%p291) target = $region48
    $region47: #{triple_conv_pallas.1} parent=5 // pred_region
      // Predicated region
      $region49: #{triple_conv_pallas.1} parent=47 // pred_check
        %p294 = pneg %p49
      $region50: #{triple_conv_pallas.1} parent=47 // pred_check_branch
        %296 = sbr.rel (%p294) target = $region52
      $region51: #{triple_conv_pallas.1} parent=47 // pred_region
        %p297 = scmp.lt.s32.totalorder %s22, 1
        %s298 = scalar_select %p297, %s22, 1
        %p299 = scmp.lt.s32.totalorder %s23, 1
        %s300 = scalar_select %p299, %s23, 1
        %s301 = smul.addr %s300, 27
        %s302 = smul.addr %s298, 54
        %s303 = sadd.s32 %s301, %s302
        %s304 = smul.addr %s303, 4
        %s305 = scalar_lea.vmem %s0, %s304
      $region52: #{triple_conv_pallas.1} parent=47 // pred_fallthru
        _
    $region48: #{triple_conv_pallas.1} parent=5 // pred_fallthru
      _
    %p306 = scmp.le.s32.totalorder 1, %s15
    %p307 = scmp.lt.s32.totalorder %s15, 5
    %p308 = pnand %p306, %p307
    %p309 = pneg %p308
    // Predicated region
    $region53: #{triple_conv_pallas.1} parent=5 // pred_check
      _
    $region54: #{triple_conv_pallas.1} parent=5 // pred_check_branch
      %311 = sbr.rel (%p308) target = $region56
    $region55: #{triple_conv_pallas.1} parent=5 // pred_region
      %s312 = ssub.s32 %s15, 1
      %p313 = scmp.lt.s32.totalorder %s24, 1
      %s314 = scalar_select %p313, %s24, 1
      %p315 = scmp.lt.s32.totalorder %s25, 1
      %s316 = scalar_select %p315, %s25, 1
      %s317 = smul.addr %s316, 27
      %s318 = smul.addr %s314, 54
      %s319 = sadd.s32 %s317, %s318
      %s320 = smul.addr %s319, 4
      %s321 = scalar_lea.vmem %s0, %s320
      %p322 = pneg %p55
      %p323 = pneg %p52
      %p324 = pneg %p76
      %p325 = pneg %p73
      %p326 = pneg %p97
      %p327 = pneg %p94
      %p328 = pneg %p118
      %p329 = pneg %p115
      %p330 = pneg %p139
      %p331 = pneg %p136
      %p332 = pneg %p160
      %p333 = pneg %p157
      %p334 = pneg %p181
      %p335 = pneg %p178
      %p336 = pneg %p202
      %p337 = pneg %p199
      %p338 = pneg %p223
      %p339 = pneg %p220
      %p340 = pneg %p251
      %p341 = pneg %p248
      %p342 = scmp.lt.s32.totalorder %s24, 1
      %s343 = scalar_select %p342, %s24, 1
      %p344 = scmp.lt.s32.totalorder %s25, 1
      %s345 = scalar_select %p344, %s25, 1
      %s346 = smul.addr %s345, 18
      %s347 = smul.addr %s343, 36
      %s348 = sadd.s32 %s346, %s347
      %s349 = smul.addr %s348, 8
      %s350 = scalar_lea.vmem %s9, %s349
      %p351 = scmp.lt.s32.totalorder %s24, 1
      %s352 = scalar_select %p351, %s24, 1
      %p353 = scmp.lt.s32.totalorder %s25, 1
      %s354 = scalar_select %p353, %s25, 1
      %s355 = smul.addr %s354, 27
      %s356 = smul.addr %s352, 54
      %s357 = sadd.s32 %s355, %s356
      %s358 = smul.addr %s357, 4
      %s359 = scalar_lea.vmem %s0, %s358
      %p360 = scmp.lt.s32.totalorder %s24, 1
      %s361 = scalar_select %p360, %s24, 1
      %p362 = scmp.lt.s32.totalorder %s25, 1
      %s363 = scalar_select %p362, %s25, 1
      %s364 = smul.addr %s363, 18
      %s365 = smul.addr %s361, 36
      %s366 = sadd.s32 %s364, %s365
      %s367 = smul.addr %s366, 8
      %s368 = scalar_lea.vmem %s9, %s367
      %v370 = vld [vmem:[%s359] sm:$0xf]
      %v371 = vld [vmem:[%s359 + $0x4] sm:$0xf]
      %v372 = vld [vmem:[%s359 + $0x8] sm:$0xf]
      %v373 = vld [vmem:[%s359 + $0xc] sm:$0xf]
      %v374 = vld [vmem:[%s359 + $0x10] sm:$0xf]
      %v375 = vld [vmem:[%s359 + $0x14] sm:$0xf]
      %v376 = vld [vmem:[%s359 + $0x18] sm:$0xf]
      %v377 = vld [vmem:[%s359 + $0x1c] sm:$0xf]
      %v378 = vld [vmem:[%s359 + $0x20] sm:$0xf]
      %v379 = vld [vmem:[%s359 + $0x24] sm:$0xf]
      %v380 = vld [vmem:[%s359 + $0x28] sm:$0xf]
      %v381 = vld [vmem:[%s359 + $0x2c] sm:$0xf]
      %v382 = vld [vmem:[%s359 + $0x30] sm:$0xf]
      %v383 = vld [vmem:[%s359 + $0x34] sm:$0xf]
      %v384 = vld [vmem:[%s359 + $0x38] sm:$0xf]
      %v385 = vld [vmem:[%s359 + $0x3c] sm:$0xf]
      %v386 = vld [vmem:[%s359 + $0x40] sm:$0xf]
      %v387 = vld [vmem:[%s359 + $0x44] sm:$0xf]
      %v388 = vld [vmem:[%s359 + $0x48] sm:$0xf]
      %v389 = vld [vmem:[%s359 + $0x4c] sm:$0xf]
      %v390 = vld [vmem:[%s359 + $0x50] sm:$0xf]
      %v391 = vld [vmem:[%s359 + $0x54] sm:$0xf]
      %v392 = vld [vmem:[%s359 + $0x58] sm:$0xf]
      %v393 = vld [vmem:[%s359 + $0x5c] sm:$0xf]
      %v394 = vld [vmem:[%s359 + $0x60] sm:$0xf]
      %v395 = vld [vmem:[%s359 + $0x64] sm:$0xf]
      %v396 = vld [vmem:[%s359 + $0x68] sm:$0xf]
      %v397 = vld [vmem:[%s1] sm:$0x3]
      %v398 = vld [vmem:[%s2] sm:$0x1]
      %v400 = vlaneseq
      %v401 = vshrl.u32 %v400, 7
      %v402 = vsub.s32 0, %v401
      %v403 = vrot.slane %v398, %v402
      %v432 = vunpack.c.l.b16 %v370
      %v433 = vunpack.c.l.b16 %v371
      %v434 = vunpack.c.l.b16 %v372
      %v435 = vunpack.c.l.b16 %v373
      %v436 = vunpack.c.l.b16 %v374
      %v437 = vunpack.c.l.b16 %v375
      %v438 = vunpack.c.l.b16 %v376
      %v439 = vunpack.c.l.b16 %v377
      %v440 = vunpack.c.l.b16 %v378
      %v441 = vunpack.c.l.b16 %v379
      %v442 = vunpack.c.l.b16 %v380
      %v443 = vunpack.c.l.b16 %v381
      %v444 = vunpack.c.l.b16 %v382
      %v445 = vunpack.c.l.b16 %v383
      %v446 = vunpack.c.l.b16 %v384
      %v447 = vunpack.c.l.b16 %v385
      %v448 = vunpack.c.l.b16 %v386
      %v449 = vunpack.c.l.b16 %v387
      %v450 = vunpack.c.l.b16 %v388
      %v451 = vunpack.c.l.b16 %v389
      %v452 = vunpack.c.l.b16 %v390
      %v453 = vunpack.c.l.b16 %v391
      %v454 = vunpack.c.l.b16 %v392
      %v455 = vunpack.c.l.b16 %v393
      %v456 = vunpack.c.l.b16 %v394
      %v457 = vunpack.c.l.b16 %v395
      %v458 = vunpack.c.l.b16 %v396
      %v459 = vpack.c.b16 %v433, %v432
      %v460 = vpack.c.b16 %v435, %v434
      %v461 = vpack.c.b16 %v437, %v436
      %v462 = vpack.c.b16 %v439, %v438
      %v463 = vpack.c.b16 %v441, %v440
      %v464 = vpack.c.b16 %v443, %v442
      %v465 = vpack.c.b16 %v445, %v444
      %v466 = vpack.c.b16 %v447, %v446
      %v467 = vpack.c.b16 %v449, %v448
      %v468 = vpack.c.b16 %v451, %v450
      %v469 = vpack.c.b16 %v453, %v452
      %v470 = vpack.c.b16 %v455, %v454
      %v471 = vpack.c.b16 %v457, %v456
      %v472 = vpack.c.b16 %v458, %v458
      %vm473 = vcmask 31744
      %v475 = vsel %vm473, %v459, 0
      %v478 = vsel %vm473, %v460, 0
      %v481 = vsel %vm473, %v461, 0
      %v484 = vsel %vm473, %v462, 0
      %v487 = vsel %vm473, %v463, 0
      %v490 = vsel %vm473, %v464, 0
      %v493 = vsel %vm473, %v465, 0
      %v496 = vsel %vm473, %v466, 0
      %v499 = vsel %vm473, %v467, 0
      %v502 = vsel %vm473, %v468, 0
      %v505 = vsel %vm473, %v469, 0
      %v508 = vsel %vm473, %v470, 0
      %v511 = vsel %vm473, %v471, 0
      %v514 = vsel %vm473, %v472, 0
      %vm516 = vcmask 1041408
      %v518 = vsel %vm516, %v397, 0
      %520 = vmatprep.subr.bf16.mxu0 0
      %521 = vmatpush1.bf16.msra.mxu0 %v518
      %522 = vmatprep.subr.bf16.mxu0 0
      %523 = vmatpush1.bf16.msra.mxu0 0
      %524 = vmatprep.subr.bf16.mxu0 0
      %525 = vmatpush1.bf16.msra.mxu0 0
      %526 = vmatprep.subr.bf16.mxu0 0
      %527 = vmatpush1.bf16.msra.mxu0 0
      %528 = vmatprep.subr.bf16.mxu0 0
      %529 = vmatpush1.bf16.msra.mxu0 0
      %530 = vmatprep.subr.bf16.mxu0 0
      %531 = vmatpush1.bf16.msra.mxu0 0
      %532 = vmatprep.subr.bf16.mxu0 0
      %533 = vmatpush1.bf16.msra.mxu0 0
      %534 = vmatprep.subr.bf16.mxu0 0
      %535 = vmatpush1.bf16.msra.mxu0 0
      %536 = vmatprep.subr.bf16.mxu0 0
      %537 = vmatpush1.bf16.msra.mxu0 0
      %538 = vmatprep.subr.bf16.mxu0 0
      %539 = vmatpush1.bf16.msra.mxu0 0
      %540 = vmatprep.subr.bf16.mxu0 0
      %541 = vmatpush1.bf16.msra.mxu0 0
      %542 = vmatprep.subr.bf16.mxu0 0
      %543 = vmatpush1.bf16.msra.mxu0 0
      %544 = vmatprep.subr.bf16.mxu0 0
      %545 = vmatpush1.bf16.msra.mxu0 0
      %546 = vmatprep.subr.bf16.mxu0 0
      %547 = vmatpush1.bf16.msra.mxu0 0
      %548 = vmatprep.subr.bf16.mxu0 0
      %549 = vmatpush1.bf16.msra.mxu0 0
      %550 = vmatprep.subr.bf16.mxu0 0
      %551 = vmatpush1.bf16.msra.mxu0 0
      %552 = vmatprep.mubr.bf16.mxu0 0
      %553 = vmatmul.mubr.bf16.gmra.mrb[0].mxu0 %v475
      %v554 = vpop.f32.mrb[0].mxu0
      %v555 = vadd.f32 %v403, %v554
      %v556 = vpop.f32.mrb[0].mxu0
      %v557 = vpop.f32.mrb[0].mxu0
      %v558 = vadd.f32 %v403, %v557
      %v559 = vpop.f32.mrb[0].mxu0
      %560 = vmatprep.mubr.bf16.mxu0 0
      %561 = vmatmul.mubr.bf16.gmra.mrb[0].mxu0 %v478
      %v562 = vpop.f32.mrb[0].mxu0
      %v563 = vadd.f32 %v403, %v562
      %v564 = vpop.f32.mrb[0].mxu0
      %v565 = vpop.f32.mrb[0].mxu0
      %v566 = vadd.f32 %v403, %v565
      %v567 = vpop.f32.mrb[0].mxu0
      %568 = vmatprep.mubr.bf16.mxu0 0
      %569 = vmatmul.mubr.bf16.gmra.mrb[0].mxu0 %v481
      %v570 = vpop.f32.mrb[0].mxu0
      %v571 = vadd.f32 %v403, %v570
      %v572 = vpop.f32.mrb[0].mxu0
      %v573 = vpop.f32.mrb[0].mxu0
      %v574 = vadd.f32 %v403, %v573
      %v575 = vpop.f32.mrb[0].mxu0
      %576 = vmatprep.mubr.bf16.mxu0 0
      %577 = vmatmul.mubr.bf16.gmra.mrb[0].mxu0 %v484
      %v578 = vpop.f32.mrb[0].mxu0
      %v579 = vadd.f32 %v403, %v578
      %v580 = vpop.f32.mrb[0].mxu0
      %v581 = vpop.f32.mrb[0].mxu0
      %v582 = vadd.f32 %v403, %v581
      %v583 = vpop.f32.mrb[0].mxu0
      %584 = vmatprep.mubr.bf16.mxu0 0
      %585 = vmatmul.mubr.bf16.gmra.mrb[0].mxu0 %v487
      %v586 = vpop.f32.mrb[0].mxu0
      %v587 = vadd.f32 %v403, %v586
      %v588 = vpop.f32.mrb[0].mxu0
      %v589 = vpop.f32.mrb[0].mxu0
      %v590 = vadd.f32 %v403, %v589
      %v591 = vpop.f32.mrb[0].mxu0
      %592 = vmatprep.mubr.bf16.mxu0 0
      %593 = vmatmul.mubr.bf16.gmra.mrb[0].mxu0 %v490
      %v594 = vpop.f32.mrb[0].mxu0
      %v595 = vadd.f32 %v403, %v594
      %v596 = vpop.f32.mrb[0].mxu0
      %v597 = vpop.f32.mrb[0].mxu0
      %v598 = vadd.f32 %v403, %v597
      %v599 = vpop.f32.mrb[0].mxu0
      %600 = vmatprep.mubr.bf16.mxu0 0
      %601 = vmatmul.mubr.bf16.gmra.mrb[0].mxu0 %v493
      %v602 = vpop.f32.mrb[0].mxu0
      %v603 = vadd.f32 %v403, %v602
      %v604 = vpop.f32.mrb[0].mxu0
      %v605 = vpop.f32.mrb[0].mxu0
      %v606 = vadd.f32 %v403, %v605
      %v607 = vpop.f32.mrb[0].mxu0
      %608 = vmatprep.mubr.bf16.mxu0 0
      %609 = vmatmul.mubr.bf16.gmra.mrb[0].mxu0 %v496
      %v610 = vpop.f32.mrb[0].mxu0
      %v611 = vadd.f32 %v403, %v610
      %v612 = vpop.f32.mrb[0].mxu0
      %v613 = vpop.f32.mrb[0].mxu0
      %v614 = vadd.f32 %v403, %v613
      %v615 = vpop.f32.mrb[0].mxu0
      %616 = vmatprep.mubr.bf16.mxu0 0
      %617 = vmatmul.mubr.bf16.gmra.mrb[0].mxu0 %v499
      %v618 = vpop.f32.mrb[0].mxu0
      %v619 = vadd.f32 %v403, %v618
      %v620 = vpop.f32.mrb[0].mxu0
      %v621 = vpop.f32.mrb[0].mxu0
      %v622 = vadd.f32 %v403, %v621
      %v623 = vpop.f32.mrb[0].mxu0
      %624 = vmatprep.mubr.bf16.mxu0 0
      %625 = vmatmul.mubr.bf16.gmra.mrb[0].mxu0 %v502
      %v626 = vpop.f32.mrb[0].mxu0
      %v627 = vadd.f32 %v403, %v626
      %v628 = vpop.f32.mrb[0].mxu0
      %v629 = vpop.f32.mrb[0].mxu0
      %v630 = vadd.f32 %v403, %v629
      %v631 = vpop.f32.mrb[0].mxu0
      %632 = vmatprep.mubr.bf16.mxu0 0
      %633 = vmatmul.mubr.bf16.gmra.mrb[0].mxu0 %v505
      %v634 = vpop.f32.mrb[0].mxu0
      %v635 = vadd.f32 %v403, %v634
      %v636 = vpop.f32.mrb[0].mxu0
      %v637 = vpop.f32.mrb[0].mxu0
      %v638 = vadd.f32 %v403, %v637
      %v639 = vpop.f32.mrb[0].mxu0
      %640 = vmatprep.mubr.bf16.mxu0 0
      %641 = vmatmul.mubr.bf16.gmra.mrb[0].mxu0 %v508
      %v642 = vpop.f32.mrb[0].mxu0
      %v643 = vadd.f32 %v403, %v642
      %v644 = vpop.f32.mrb[0].mxu0
      %v645 = vpop.f32.mrb[0].mxu0
      %v646 = vadd.f32 %v403, %v645
      %v647 = vpop.f32.mrb[0].mxu0
      %648 = vmatprep.mubr.bf16.mxu0 0
      %649 = vmatmul.mubr.bf16.gmra.mrb[0].mxu0 %v511
      %v650 = vpop.f32.mrb[0].mxu0
      %v651 = vadd.f32 %v403, %v650
      %v652 = vpop.f32.mrb[0].mxu0
      %v653 = vpop.f32.mrb[0].mxu0
      %v654 = vadd.f32 %v403, %v653
      %v655 = vpop.f32.mrb[0].mxu0
      %656 = vmatprep.mubr.bf16.mxu0 0
      %657 = vmatmul.mubr.bf16.gmra.mrb[0].mxu0 %v514
      %v658 = vpop.f32.mrb[0].mxu0
      %v659 = vadd.f32 %v403, %v658
      %v660 = vpop.f32.mrb[0].mxu0
      %v661 = vpop.f32.mrb[0].mxu0
      %v662 = vpop.f32.mrb[0].mxu0
      %663 = vdwg.mxu0
      %v664 = vld [vmem:[%s7] sm:$0xff]
      %v665 = vld [vmem:[%s7 + $0x8] sm:$0xff]
      %v666 = vld [vmem:[%s7 + $0x10] sm:$0xff]
      %v667 = vld [vmem:[%s7 + $0x18] sm:$0xff]
      %v668 = vld [vmem:[%s7 + $0x20] sm:$0xff]
      %v669 = vld [vmem:[%s7 + $0x28] sm:$0xff]
      %v670 = vld [vmem:[%s7 + $0x30] sm:$0xff]
      %v671 = vld [vmem:[%s7 + $0x38] sm:$0xff]
      %v672 = vld [vmem:[%s7 + $0x40] sm:$0xff]
      %v673 = vld [vmem:[%s7 + $0x48] sm:$0xff]
      %v674 = vld [vmem:[%s7 + $0x50] sm:$0xff]
      %v675 = vld [vmem:[%s7 + $0x58] sm:$0xff]
      %v676 = vld [vmem:[%s7 + $0x60] sm:$0xff]
      %v677 = vld [vmem:[%s7 + $0x68] sm:$0xff]
      %v678 = vld [vmem:[%s7 + $0x70] sm:$0xff]
      %v679 = vld [vmem:[%s7 + $0x78] sm:$0xff]
      %v680 = vld [vmem:[%s7 + $0x80] sm:$0xff]
      %v681 = vld [vmem:[%s7 + $0x88] sm:$0xff]
      %v682 = vld [vmem:[%s7 + $0x90] sm:$0xff]
      %v683 = vld [vmem:[%s7 + $0x98] sm:$0xff]
      %v684 = vld [vmem:[%s7 + $0xa0] sm:$0xff]
      %v685 = vld [vmem:[%s7 + $0xa8] sm:$0xff]
      %v686 = vld [vmem:[%s7 + $0xb0] sm:$0xff]
      %v687 = vld [vmem:[%s7 + $0xb8] sm:$0xff]
      %v688 = vld [vmem:[%s7 + $0xc0] sm:$0xff]
      %v689 = vld [vmem:[%s7 + $0xc8] sm:$0xff]
      %v690 = vld [vmem:[%s7 + $0xd0] sm:$0xff]
      %692 = vset.pattern.permute.xlu0 0
      %693 = vperm.xlu0 %692, %v664
      %v694 = vpop.permute.xlu0 %693
      %697 = vset.pattern.permute.xlu0 0
      %698 = vperm.xlu0 %697, %v665
      %v699 = vpop.permute.xlu0 %698
      %702 = vset.pattern.permute.xlu0 0
      %703 = vperm.xlu0 %702, %v666
      %v704 = vpop.permute.xlu0 %703
      %707 = vset.pattern.permute.xlu0 0
      %708 = vperm.xlu0 %707, %v667
      %v709 = vpop.permute.xlu0 %708
      %712 = vset.pattern.permute.xlu0 0
      %713 = vperm.xlu0 %712, %v668
      %v714 = vpop.permute.xlu0 %713
      %717 = vset.pattern.permute.xlu0 0
      %718 = vperm.xlu0 %717, %v669
      %v719 = vpop.permute.xlu0 %718
      %722 = vset.pattern.permute.xlu0 0
      %723 = vperm.xlu0 %722, %v670
      %v724 = vpop.permute.xlu0 %723
      %727 = vset.pattern.permute.xlu0 0
      %728 = vperm.xlu0 %727, %v671
      %v729 = vpop.permute.xlu0 %728
      %732 = vset.pattern.permute.xlu0 0
      %733 = vperm.xlu0 %732, %v672
      %v734 = vpop.permute.xlu0 %733
      %737 = vset.pattern.permute.xlu0 0
      %738 = vperm.xlu0 %737, %v673
      %v739 = vpop.permute.xlu0 %738
      %742 = vset.pattern.permute.xlu0 0
      %743 = vperm.xlu0 %742, %v674
      %v744 = vpop.permute.xlu0 %743
      %747 = vset.pattern.permute.xlu0 0
      %748 = vperm.xlu0 %747, %v675
      %v749 = vpop.permute.xlu0 %748
      %752 = vset.pattern.permute.xlu0 0
      %753 = vperm.xlu0 %752, %v676
      %v754 = vpop.permute.xlu0 %753
      %757 = vset.pattern.permute.xlu0 0
      %758 = vperm.xlu0 %757, %v677
      %v759 = vpop.permute.xlu0 %758
      %762 = vset.pattern.permute.xlu0 0
      %763 = vperm.xlu0 %762, %v678
      %v764 = vpop.permute.xlu0 %763
      %767 = vset.pattern.permute.xlu0 0
      %768 = vperm.xlu0 %767, %v679
      %v769 = vpop.permute.xlu0 %768
      %772 = vset.pattern.permute.xlu0 0
      %773 = vperm.xlu0 %772, %v680
      %v774 = vpop.permute.xlu0 %773
      %777 = vset.pattern.permute.xlu0 0
      %778 = vperm.xlu0 %777, %v681
      %v779 = vpop.permute.xlu0 %778
      %782 = vset.pattern.permute.xlu0 0
      %783 = vperm.xlu0 %782, %v682
      %v784 = vpop.permute.xlu0 %783
      %787 = vset.pattern.permute.xlu0 0
      %788 = vperm.xlu0 %787, %v683
      %v789 = vpop.permute.xlu0 %788
      %792 = vset.pattern.permute.xlu0 0
      %793 = vperm.xlu0 %792, %v684
      %v794 = vpop.permute.xlu0 %793
      %797 = vset.pattern.permute.xlu0 0
      %798 = vperm.xlu0 %797, %v685
      %v799 = vpop.permute.xlu0 %798
      %802 = vset.pattern.permute.xlu0 0
      %803 = vperm.xlu0 %802, %v686
      %v804 = vpop.permute.xlu0 %803
      %807 = vset.pattern.permute.xlu0 0
      %808 = vperm.xlu0 %807, %v687
      %v809 = vpop.permute.xlu0 %808
      %812 = vset.pattern.permute.xlu0 0
      %813 = vperm.xlu0 %812, %v688
      %v814 = vpop.permute.xlu0 %813
      %817 = vset.pattern.permute.xlu0 0
      %818 = vperm.xlu0 %817, %v689
      %v819 = vpop.permute.xlu0 %818
      %822 = vset.pattern.permute.xlu0 0
      %823 = vperm.xlu0 %822, %v690
      %v824 = vpop.permute.xlu0 %823
      %v826 = vmul.f32 %v555, %v694
      %v827 = vmul.f32 %v558, %v699
      %v828 = vmul.f32 %v563, %v704
      %v829 = vmul.f32 %v566, %v709
      %v830 = vmul.f32 %v571, %v714
      %v831 = vmul.f32 %v574, %v719
      %v832 = vmul.f32 %v579, %v724
      %v833 = vmul.f32 %v582, %v729
      %v834 = vmul.f32 %v587, %v734
      %v835 = vmul.f32 %v590, %v739
      %v836 = vmul.f32 %v595, %v744
      %v837 = vmul.f32 %v598, %v749
      %v838 = vmul.f32 %v603, %v754
      %v839 = vmul.f32 %v606, %v759
      %v840 = vmul.f32 %v611, %v764
      %v841 = vmul.f32 %v614, %v769
      %v842 = vmul.f32 %v619, %v774
      %v843 = vmul.f32 %v622, %v779
      %v844 = vmul.f32 %v627, %v784
      %v845 = vmul.f32 %v630, %v789
      %v846 = vmul.f32 %v635, %v794
      %v847 = vmul.f32 %v638, %v799
      %v848 = vmul.f32 %v643, %v804
      %v849 = vmul.f32 %v646, %v809
      %v850 = vmul.f32 %v651, %v814
      %v851 = vmul.f32 %v654, %v819
      %v852 = vmul.f32 %v659, %v824
      %853 = vst [vmem:[#allocation2] sm:$0xff] %v826
      %854 = vst [vmem:[#allocation2 + $0x8] sm:$0xff] %v827
      %855 = vst [vmem:[#allocation2 + $0x10] sm:$0xff] %v828
      %856 = vst [vmem:[#allocation2 + $0x18] sm:$0xff] %v829
      %857 = vst [vmem:[#allocation2 + $0x20] sm:$0xff] %v830
      %858 = vst [vmem:[#allocation2 + $0x28] sm:$0xff] %v831
      %859 = vst [vmem:[#allocation2 + $0x30] sm:$0xff] %v832
      %860 = vst [vmem:[#allocation2 + $0x38] sm:$0xff] %v833
      %861 = vst [vmem:[#allocation2 + $0x40] sm:$0xff] %v834
      %862 = vst [vmem:[#allocation2 + $0x48] sm:$0xff] %v835
      %863 = vst [vmem:[#allocation2 + $0x50] sm:$0xff] %v836
      %864 = vst [vmem:[#allocation2 + $0x58] sm:$0xff] %v837
      %865 = vst [vmem:[#allocation2 + $0x60] sm:$0xff] %v838
      %866 = vst [vmem:[#allocation2 + $0x68] sm:$0xff] %v839
      %867 = vst [vmem:[#allocation2 + $0x70] sm:$0xff] %v840
      %868 = vst [vmem:[#allocation2 + $0x78] sm:$0xff] %v841
      %869 = vst [vmem:[#allocation2 + $0x80] sm:$0xff] %v842
      %870 = vst [vmem:[#allocation2 + $0x88] sm:$0xff] %v843
      %871 = vst [vmem:[#allocation2 + $0x90] sm:$0xff] %v844
      %872 = vst [vmem:[#allocation2 + $0x98] sm:$0xff] %v845
      %873 = vst [vmem:[#allocation2 + $0xa0] sm:$0xff] %v846
      %874 = vst [vmem:[#allocation2 + $0xa8] sm:$0xff] %v847
      %875 = vst [vmem:[#allocation2 + $0xb0] sm:$0xff] %v848
      %876 = vst [vmem:[#allocation2 + $0xb8] sm:$0xff] %v849
      %877 = vst [vmem:[#allocation2 + $0xc0] sm:$0xff] %v850
      %878 = vst [vmem:[#allocation2 + $0xc8] sm:$0xff] %v851
      %879 = vst [vmem:[#allocation2 + $0xd0] sm:$0xff] %v852
      %p880 = scmp.eq.s32.totalorder %s25, 0
      // Predicated region
      $region57: #{triple_conv_pallas.1} parent=55 // pred_check
        %p881 = pneg %p880
      $region58: #{triple_conv_pallas.1} parent=55 // pred_check_branch
        %883 = sbr.rel (%p881) target = $region60
      $region59: #{triple_conv_pallas.1} parent=55 // pred_region
        %884 = vst [vmem:[#allocation2] sm:$0xff] 0.0
        %885 = vst [vmem:[#allocation2 + $0x8] sm:$0xff] 0.0
        %886 = vst [vmem:[#allocation2 + $0x10] sm:$0xff] 0.0
        %887 = vst [vmem:[#allocation2 + $0x18] sm:$0xff] 0.0
        %888 = vst [vmem:[#allocation2 + $0x20] sm:$0xf] 0.0
      $region60: #{triple_conv_pallas.1} parent=55 // pred_fallthru
        _
      %p889 = scmp.eq.s32.totalorder %s25, 1
      // Predicated region
      $region61: #{triple_conv_pallas.1} parent=55 // pred_check
        %p890 = pneg %p889
      $region62: #{triple_conv_pallas.1} parent=55 // pred_check_branch
        %892 = sbr.rel (%p890) target = $region64
      $region63: #{triple_conv_pallas.1} parent=55 // pred_region
        %893 = vst [vmem:[#allocation2 + $0xb4] sm:$0xff] 0.0
        %894 = vst [vmem:[#allocation2 + $0xbc] sm:$0xff] 0.0
        %895 = vst [vmem:[#allocation2 + $0xc4] sm:$0xff] 0.0
        %896 = vst [vmem:[#allocation2 + $0xcc] sm:$0xff] 0.0
        %897 = vst [vmem:[#allocation2 + $0xd4] sm:$0xf] 0.0
      $region64: #{triple_conv_pallas.1} parent=55 // pred_fallthru
        _
      %v898 = vld [vmem:[#allocation2] sm:$0xff]
      %v899 = vld [vmem:[#allocation2 + $0x8] sm:$0xff]
      %v900 = vld [vmem:[#allocation2 + $0x10] sm:$0xff]
      %v901 = vld [vmem:[#allocation2 + $0x18] sm:$0xff]
      %v902 = vld [vmem:[#allocation2 + $0x20] sm:$0xff]
      %v903 = vld [vmem:[#allocation2 + $0x28] sm:$0xff]
      %v904 = vld [vmem:[#allocation2 + $0x30] sm:$0xff]
      %v905 = vld [vmem:[#allocation2 + $0x38] sm:$0xff]
      %v906 = vld [vmem:[#allocation2 + $0x40] sm:$0xff]
      %v907 = vld [vmem:[#allocation2 + $0x48] sm:$0xff]
      %v908 = vld [vmem:[#allocation2 + $0x50] sm:$0xff]
      %v909 = vld [vmem:[#allocation2 + $0x58] sm:$0xff]
      %v910 = vld [vmem:[#allocation2 + $0x60] sm:$0xff]
      %v911 = vld [vmem:[#allocation2 + $0x68] sm:$0xff]
      %v912 = vld [vmem:[#allocation2 + $0x70] sm:$0xff]
      %v913 = vld [vmem:[#allocation2 + $0x78] sm:$0xff]
      %v914 = vld [vmem:[#allocation2 + $0x80] sm:$0xff]
      %v915 = vld [vmem:[#allocation2 + $0x88] sm:$0xff]
      %v916 = vld [vmem:[#allocation2 + $0x90] sm:$0xff]
      %v917 = vld [vmem:[#allocation2 + $0x98] sm:$0xff]
      %v918 = vld [vmem:[#allocation2 + $0xa0] sm:$0xff]
      %v919 = vld [vmem:[#allocation2 + $0xa8] sm:$0xff]
      %v920 = vld [vmem:[#allocation2 + $0xb0] sm:$0x3]
      %v921 = vpack.c.bf16 %v899, %v898
      %v922 = vpack.c.bf16 %v901, %v900
      %v923 = vpack.c.bf16 %v903, %v902
      %v924 = vpack.c.bf16 %v905, %v904
      %v925 = vpack.c.bf16 %v907, %v906
      %v926 = vpack.c.bf16 %v909, %v908
      %v927 = vpack.c.bf16 %v911, %v910
      %v928 = vpack.c.bf16 %v913, %v912
      %v929 = vpack.c.bf16 %v915, %v914
      %v930 = vpack.c.bf16 %v917, %v916
      %v931 = vpack.c.bf16 %v919, %v918
      %v932 = vpack.c.bf16 %v920, %v920
      %v945 = vunpack.c.l.b16 %v921
      %v946 = vunpack.c.h.b16 %v921
      %v947 = vunpack.c.l.b16 %v922
      %v948 = vunpack.c.h.b16 %v922
      %v949 = vunpack.c.l.b16 %v923
      %v950 = vunpack.c.h.b16 %v923
      %v951 = vunpack.c.l.b16 %v924
      %v952 = vunpack.c.h.b16 %v924
      %v953 = vunpack.c.l.b16 %v925
      %v954 = vunpack.c.h.b16 %v925
      %v955 = vunpack.c.l.b16 %v926
      %v956 = vunpack.c.h.b16 %v926
      %v957 = vunpack.c.l.b16 %v927
      %v958 = vunpack.c.h.b16 %v927
      %v959 = vunpack.c.l.b16 %v928
      %v960 = vunpack.c.h.b16 %v928
      %v961 = vunpack.c.l.b16 %v929
      %v962 = vunpack.c.h.b16 %v929
      %v963 = vunpack.c.l.b16 %v930
      %v964 = vunpack.c.h.b16 %v930
      %v965 = vunpack.c.l.b16 %v931
      %v966 = vunpack.c.h.b16 %v931
      %v967 = vunpack.c.l.b16 %v932
      %v968 = vpack.c.b16 %v945, %v945
      %v969 = vpack.c.b16 %v946, %v946
      %v970 = vpack.c.b16 %v947, %v947
      %v971 = vpack.c.b16 %v948, %v948
      %v972 = vpack.c.b16 %v949, %v949
      %v973 = vpack.c.b16 %v950, %v950
      %v974 = vpack.c.b16 %v951, %v951
      %v975 = vpack.c.b16 %v952, %v952
      %v976 = vpack.c.b16 %v953, %v953
      %v977 = vpack.c.b16 %v954, %v954
      %v978 = vpack.c.b16 %v955, %v955
      %v979 = vpack.c.b16 %v956, %v956
      %v980 = vpack.c.b16 %v957, %v957
      %v981 = vpack.c.b16 %v958, %v958
      %v982 = vpack.c.b16 %v959, %v959
      %v983 = vpack.c.b16 %v960, %v960
      %v984 = vpack.c.b16 %v961, %v961
      %v985 = vpack.c.b16 %v962, %v962
      %v986 = vpack.c.b16 %v963, %v963
      %v987 = vpack.c.b16 %v964, %v964
      %v988 = vpack.c.b16 %v965, %v965
      %v989 = vpack.c.b16 %v966, %v966
      %v990 = vpack.c.b16 %v967, %v967
      %1014 = vst [vmem:[#allocation4] sm:$0xf] %v968
      %1015 = vst [vmem:[#allocation4 + $0x24] sm:$0xf] %v969
      %1016 = vst [vmem:[#allocation4 + $0x48] sm:$0xf] %v970
      %1017 = vst [vmem:[#allocation4 + $0x6c] sm:$0xf] %v971
      %1018 = vst [vmem:[#allocation4 + $0x90] sm:$0xf] %v972
      %1019 = vst [vmem:[#allocation4 + $0xb4] sm:$0xf] %v973
      %1020 = vst [vmem:[#allocation4 + $0xd8] sm:$0xf] %v974
      %1021 = vst [vmem:[#allocation4 + $0xfc] sm:$0xf] %v975
      %1022 = vst [vmem:[#allocation4 + $0x120] sm:$0xf] %v976
      %1023 = vst [vmem:[#allocation4 + $0x144] sm:$0xf] %v977
      %1024 = vst [vmem:[#allocation4 + $0x168] sm:$0xf] %v978
      %1025 = vst [vmem:[#allocation4 + $0x18c] sm:$0xf] %v979
      %1026 = vst [vmem:[#allocation4 + $0x1b0] sm:$0xf] %v980
      %1027 = vst [vmem:[#allocation4 + $0x1d4] sm:$0xf] %v981
      %1028 = vst [vmem:[#allocation4 + $0x1f8] sm:$0xf] %v982
      %1029 = vst [vmem:[#allocation4 + $0x21c] sm:$0xf] %v983
      %1030 = vst [vmem:[#allocation4 + $0x240] sm:$0xf] %v984
      %1031 = vst [vmem:[#allocation4 + $0x264] sm:$0xf] %v985
      %1032 = vst [vmem:[#allocation4 + $0x288] sm:$0xf] %v986
      %1033 = vst [vmem:[#allocation4 + $0x2ac] sm:$0xf] %v987
      %1034 = vst [vmem:[#allocation4 + $0x2d0] sm:$0xf] %v988
      %1035 = vst [vmem:[#allocation4 + $0x2f4] sm:$0xf] %v989
      %1036 = vst [vmem:[#allocation4 + $0x318] sm:$0x1] %v990
      %v1037 = vld [vmem:[#allocation2 + $0x1] sm:$0xff]
      %v1038 = vld [vmem:[#allocation2 + $0x9] sm:$0xff]
      %v1039 = vld [vmem:[#allocation2 + $0x11] sm:$0xff]
      %v1040 = vld [vmem:[#allocation2 + $0x19] sm:$0xff]
      %v1041 = vld [vmem:[#allocation2 + $0x21] sm:$0xff]
      %v1042 = vld [vmem:[#allocation2 + $0x29] sm:$0xff]
      %v1043 = vld [vmem:[#allocation2 + $0x31] sm:$0xff]
      %v1044 = vld [vmem:[#allocation2 + $0x39] sm:$0xff]
      %v1045 = vld [vmem:[#allocation2 + $0x41] sm:$0xff]
      %v1046 = vld [vmem:[#allocation2 + $0x49] sm:$0xff]
      %v1047 = vld [vmem:[#allocation2 + $0x51] sm:$0xff]
      %v1048 = vld [vmem:[#allocation2 + $0x59] sm:$0xff]
      %v1049 = vld [vmem:[#allocation2 + $0x61] sm:$0xff]
      %v1050 = vld [vmem:[#allocation2 + $0x69] sm:$0xff]
      %v1051 = vld [vmem:[#allocation2 + $0x71] sm:$0xff]
      %v1052 = vld [vmem:[#allocation2 + $0x79] sm:$0xff]
      %v1053 = vld [vmem:[#allocation2 + $0x81] sm:$0xff]
      %v1054 = vld [vmem:[#allocation2 + $0x89] sm:$0xff]
      %v1055 = vld [vmem:[#allocation2 + $0x91] sm:$0xff]
      %v1056 = vld [vmem:[#allocation2 + $0x99] sm:$0xff]
      %v1057 = vld [vmem:[#allocation2 + $0xa1] sm:$0xff]
      %v1058 = vld [vmem:[#allocation2 + $0xa9] sm:$0xff]
      %v1059 = vld [vmem:[#allocation2 + $0xb1] sm:$0x3]
      %v1060 = vpack.c.bf16 %v1038, %v1037
      %v1061 = vpack.c.bf16 %v1040, %v1039
      %v1062 = vpack.c.bf16 %v1042, %v1041
      %v1063 = vpack.c.bf16 %v1044, %v1043
      %v1064 = vpack.c.bf16 %v1046, %v1045
      %v1065 = vpack.c.bf16 %v1048, %v1047
      %v1066 = vpack.c.bf16 %v1050, %v1049
      %v1067 = vpack.c.bf16 %v1052, %v1051
      %v1068 = vpack.c.bf16 %v1054, %v1053
      %v1069 = vpack.c.bf16 %v1056, %v1055
      %v1070 = vpack.c.bf16 %v1058, %v1057
      %v1071 = vpack.c.bf16 %v1059, %v1059
      %v1084 = vunpack.c.l.b16 %v1060
      %v1085 = vunpack.c.h.b16 %v1060
      %v1086 = vunpack.c.l.b16 %v1061
      %v1087 = vunpack.c.h.b16 %v1061
      %v1088 = vunpack.c.l.b16 %v1062
      %v1089 = vunpack.c.h.b16 %v1062
      %v1090 = vunpack.c.l.b16 %v1063
      %v1091 = vunpack.c.h.b16 %v1063
      %v1092 = vunpack.c.l.b16 %v1064
      %v1093 = vunpack.c.h.b16 %v1064
      %v1094 = vunpack.c.l.b16 %v1065
      %v1095 = vunpack.c.h.b16 %v1065
      %v1096 = vunpack.c.l.b16 %v1066
      %v1097 = vunpack.c.h.b16 %v1066
      %v1098 = vunpack.c.l.b16 %v1067
      %v1099 = vunpack.c.h.b16 %v1067
      %v1100 = vunpack.c.l.b16 %v1068
      %v1101 = vunpack.c.h.b16 %v1068
      %v1102 = vunpack.c.l.b16 %v1069
      %v1103 = vunpack.c.h.b16 %v1069
      %v1104 = vunpack.c.l.b16 %v1070
      %v1105 = vunpack.c.h.b16 %v1070
      %v1106 = vunpack.c.l.b16 %v1071
      %v1107 = vpack.c.b16 %v1084, %v1084
      %v1108 = vpack.c.b16 %v1085, %v1085
      %v1109 = vpack.c.b16 %v1086, %v1086
      %v1110 = vpack.c.b16 %v1087, %v1087
      %v1111 = vpack.c.b16 %v1088, %v1088
      %v1112 = vpack.c.b16 %v1089, %v1089
      %v1113 = vpack.c.b16 %v1090, %v1090
      %v1114 = vpack.c.b16 %v1091, %v1091
      %v1115 = vpack.c.b16 %v1092, %v1092
      %v1116 = vpack.c.b16 %v1093, %v1093
      %v1117 = vpack.c.b16 %v1094, %v1094
      %v1118 = vpack.c.b16 %v1095, %v1095
      %v1119 = vpack.c.b16 %v1096, %v1096
      %v1120 = vpack.c.b16 %v1097, %v1097
      %v1121 = vpack.c.b16 %v1098, %v1098
      %v1122 = vpack.c.b16 %v1099, %v1099
      %v1123 = vpack.c.b16 %v1100, %v1100
      %v1124 = vpack.c.b16 %v1101, %v1101
      %v1125 = vpack.c.b16 %v1102, %v1102
      %v1126 = vpack.c.b16 %v1103, %v1103
      %v1127 = vpack.c.b16 %v1104, %v1104
      %v1128 = vpack.c.b16 %v1105, %v1105
      %v1129 = vpack.c.b16 %v1106, %v1106
      %1153 = vst [vmem:[#allocation4 + $0x4] sm:$0xf] %v1107
      %1154 = vst [vmem:[#allocation4 + $0x28] sm:$0xf] %v1108
      %1155 = vst [vmem:[#allocation4 + $0x4c] sm:$0xf] %v1109
      %1156 = vst [vmem:[#allocation4 + $0x70] sm:$0xf] %v1110
      %1157 = vst [vmem:[#allocation4 + $0x94] sm:$0xf] %v1111
      %1158 = vst [vmem:[#allocation4 + $0xb8] sm:$0xf] %v1112
      %1159 = vst [vmem:[#allocation4 + $0xdc] sm:$0xf] %v1113
      %1160 = vst [vmem:[#allocation4 + $0x100] sm:$0xf] %v1114
      %1161 = vst [vmem:[#allocation4 + $0x124] sm:$0xf] %v1115
      %1162 = vst [vmem:[#allocation4 + $0x148] sm:$0xf] %v1116
      %1163 = vst [vmem:[#allocation4 + $0x16c] sm:$0xf] %v1117
      %1164 = vst [vmem:[#allocation4 + $0x190] sm:$0xf] %v1118
      %1165 = vst [vmem:[#allocation4 + $0x1b4] sm:$0xf] %v1119
      %1166 = vst [vmem:[#allocation4 + $0x1d8] sm:$0xf] %v1120
      %1167 = vst [vmem:[#allocation4 + $0x1fc] sm:$0xf] %v1121
      %1168 = vst [vmem:[#allocation4 + $0x220] sm:$0xf] %v1122
      %1169 = vst [vmem:[#allocation4 + $0x244] sm:$0xf] %v1123
      %1170 = vst [vmem:[#allocation4 + $0x268] sm:$0xf] %v1124
      %1171 = vst [vmem:[#allocation4 + $0x28c] sm:$0xf] %v1125
      %1172 = vst [vmem:[#allocation4 + $0x2b0] sm:$0xf] %v1126
      %1173 = vst [vmem:[#allocation4 + $0x2d4] sm:$0xf] %v1127
      %1174 = vst [vmem:[#allocation4 + $0x2f8] sm:$0xf] %v1128
      %1175 = vst [vmem:[#allocation4 + $0x31c] sm:$0x1] %v1129
      %v1176 = vld [vmem:[#allocation2 + $0x2] sm:$0xff]
      %v1177 = vld [vmem:[#allocation2 + $0xa] sm:$0xff]
      %v1178 = vld [vmem:[#allocation2 + $0x12] sm:$0xff]
      %v1179 = vld [vmem:[#allocation2 + $0x1a] sm:$0xff]
      %v1180 = vld [vmem:[#allocation2 + $0x22] sm:$0xff]
      %v1181 = vld [vmem:[#allocation2 + $0x2a] sm:$0xff]
      %v1182 = vld [vmem:[#allocation2 + $0x32] sm:$0xff]
      %v1183 = vld [vmem:[#allocation2 + $0x3a] sm:$0xff]
      %v1184 = vld [vmem:[#allocation2 + $0x42] sm:$0xff]
      %v1185 = vld [vmem:[#allocation2 + $0x4a] sm:$0xff]
      %v1186 = vld [vmem:[#allocation2 + $0x52] sm:$0xff]
      %v1187 = vld [vmem:[#allocation2 + $0x5a] sm:$0xff]
      %v1188 = vld [vmem:[#allocation2 + $0x62] sm:$0xff]
      %v1189 = vld [vmem:[#allocation2 + $0x6a] sm:$0xff]
      %v1190 = vld [vmem:[#allocation2 + $0x72] sm:$0xff]
      %v1191 = vld [vmem:[#allocation2 + $0x7a] sm:$0xff]
      %v1192 = vld [vmem:[#allocation2 + $0x82] sm:$0xff]
      %v1193 = vld [vmem:[#allocation2 + $0x8a] sm:$0xff]
      %v1194 = vld [vmem:[#allocation2 + $0x92] sm:$0xff]
      %v1195 = vld [vmem:[#allocation2 + $0x9a] sm:$0xff]
      %v1196 = vld [vmem:[#allocation2 + $0xa2] sm:$0xff]
      %v1197 = vld [vmem:[#allocation2 + $0xaa] sm:$0xff]
      %v1198 = vld [vmem:[#allocation2 + $0xb2] sm:$0x3]
      %v1199 = vpack.c.bf16 %v1177, %v1176
      %v1200 = vpack.c.bf16 %v1179, %v1178
      %v1201 = vpack.c.bf16 %v1181, %v1180
      %v1202 = vpack.c.bf16 %v1183, %v1182
      %v1203 = vpack.c.bf16 %v1185, %v1184
      %v1204 = vpack.c.bf16 %v1187, %v1186
      %v1205 = vpack.c.bf16 %v1189, %v1188
      %v1206 = vpack.c.bf16 %v1191, %v1190
      %v1207 = vpack.c.bf16 %v1193, %v1192
      %v1208 = vpack.c.bf16 %v1195, %v1194
      %v1209 = vpack.c.bf16 %v1197, %v1196
      %v1210 = vpack.c.bf16 %v1198, %v1198
      %v1223 = vunpack.c.l.b16 %v1199
      %v1224 = vunpack.c.h.b16 %v1199
      %v1225 = vunpack.c.l.b16 %v1200
      %v1226 = vunpack.c.h.b16 %v1200
      %v1227 = vunpack.c.l.b16 %v1201
      %v1228 = vunpack.c.h.b16 %v1201
      %v1229 = vunpack.c.l.b16 %v1202
      %v1230 = vunpack.c.h.b16 %v1202
      %v1231 = vunpack.c.l.b16 %v1203
      %v1232 = vunpack.c.h.b16 %v1203
      %v1233 = vunpack.c.l.b16 %v1204
      %v1234 = vunpack.c.h.b16 %v1204
      %v1235 = vunpack.c.l.b16 %v1205
      %v1236 = vunpack.c.h.b16 %v1205
      %v1237 = vunpack.c.l.b16 %v1206
      %v1238 = vunpack.c.h.b16 %v1206
      %v1239 = vunpack.c.l.b16 %v1207
      %v1240 = vunpack.c.h.b16 %v1207
      %v1241 = vunpack.c.l.b16 %v1208
      %v1242 = vunpack.c.h.b16 %v1208
      %v1243 = vunpack.c.l.b16 %v1209
      %v1244 = vunpack.c.h.b16 %v1209
      %v1245 = vunpack.c.l.b16 %v1210
      %v1246 = vpack.c.b16 %v1223, %v1223
      %v1247 = vpack.c.b16 %v1224, %v1224
      %v1248 = vpack.c.b16 %v1225, %v1225
      %v1249 = vpack.c.b16 %v1226, %v1226
      %v1250 = vpack.c.b16 %v1227, %v1227
      %v1251 = vpack.c.b16 %v1228, %v1228
      %v1252 = vpack.c.b16 %v1229, %v1229
      %v1253 = vpack.c.b16 %v1230, %v1230
      %v1254 = vpack.c.b16 %v1231, %v1231
      %v1255 = vpack.c.b16 %v1232, %v1232
      %v1256 = vpack.c.b16 %v1233, %v1233
      %v1257 = vpack.c.b16 %v1234, %v1234
      %v1258 = vpack.c.b16 %v1235, %v1235
      %v1259 = vpack.c.b16 %v1236, %v1236
      %v1260 = vpack.c.b16 %v1237, %v1237
      %v1261 = vpack.c.b16 %v1238, %v1238
      %v1262 = vpack.c.b16 %v1239, %v1239
      %v1263 = vpack.c.b16 %v1240, %v1240
      %v1264 = vpack.c.b16 %v1241, %v1241
      %v1265 = vpack.c.b16 %v1242, %v1242
      %v1266 = vpack.c.b16 %v1243, %v1243
      %v1267 = vpack.c.b16 %v1244, %v1244
      %v1268 = vpack.c.b16 %v1245, %v1245
      %1292 = vst [vmem:[#allocation4 + $0x8] sm:$0xf] %v1246
      %1293 = vst [vmem:[#allocation4 + $0x2c] sm:$0xf] %v1247
      %1294 = vst [vmem:[#allocation4 + $0x50] sm:$0xf] %v1248
      %1295 = vst [vmem:[#allocation4 + $0x74] sm:$0xf] %v1249
      %1296 = vst [vmem:[#allocation4 + $0x98] sm:$0xf] %v1250
      %1297 = vst [vmem:[#allocation4 + $0xbc] sm:$0xf] %v1251
      %1298 = vst [vmem:[#allocation4 + $0xe0] sm:$0xf] %v1252
      %1299 = vst [vmem:[#allocation4 + $0x104] sm:$0xf] %v1253
      %1300 = vst [vmem:[#allocation4 + $0x128] sm:$0xf] %v1254
      %1301 = vst [vmem:[#allocation4 + $0x14c] sm:$0xf] %v1255
      %1302 = vst [vmem:[#allocation4 + $0x170] sm:$0xf] %v1256
      %1303 = vst [vmem:[#allocation4 + $0x194] sm:$0xf] %v1257
      %1304 = vst [vmem:[#allocation4 + $0x1b8] sm:$0xf] %v1258
      %1305 = vst [vmem:[#allocation4 + $0x1dc] sm:$0xf] %v1259
      %1306 = vst [vmem:[#allocation4 + $0x200] sm:$0xf] %v1260
      %1307 = vst [vmem:[#allocation4 + $0x224] sm:$0xf] %v1261
      %1308 = vst [vmem:[#allocation4 + $0x248] sm:$0xf] %v1262
      %1309 = vst [vmem:[#allocation4 + $0x26c] sm:$0xf] %v1263
      %1310 = vst [vmem:[#allocation4 + $0x290] sm:$0xf] %v1264
      %1311 = vst [vmem:[#allocation4 + $0x2b4] sm:$0xf] %v1265
      %1312 = vst [vmem:[#allocation4 + $0x2d8] sm:$0xf] %v1266
      %1313 = vst [vmem:[#allocation4 + $0x2fc] sm:$0xf] %v1267
      %1314 = vst [vmem:[#allocation4 + $0x320] sm:$0x1] %v1268
      %v1315 = vld [vmem:[#allocation2 + $0x12] sm:$0xff]
      %v1316 = vld [vmem:[#allocation2 + $0x1a] sm:$0xff]
      %v1317 = vld [vmem:[#allocation2 + $0x22] sm:$0xff]
      %v1318 = vld [vmem:[#allocation2 + $0x2a] sm:$0xff]
      %v1319 = vld [vmem:[#allocation2 + $0x32] sm:$0xff]
      %v1320 = vld [vmem:[#allocation2 + $0x3a] sm:$0xff]
      %v1321 = vld [vmem:[#allocation2 + $0x42] sm:$0xff]
      %v1322 = vld [vmem:[#allocation2 + $0x4a] sm:$0xff]
      %v1323 = vld [vmem:[#allocation2 + $0x52] sm:$0xff]
      %v1324 = vld [vmem:[#allocation2 + $0x5a] sm:$0xff]
      %v1325 = vld [vmem:[#allocation2 + $0x62] sm:$0xff]
      %v1326 = vld [vmem:[#allocation2 + $0x6a] sm:$0xff]
      %v1327 = vld [vmem:[#allocation2 + $0x72] sm:$0xff]
      %v1328 = vld [vmem:[#allocation2 + $0x7a] sm:$0xff]
      %v1329 = vld [vmem:[#allocation2 + $0x82] sm:$0xff]
      %v1330 = vld [vmem:[#allocation2 + $0x8a] sm:$0xff]
      %v1331 = vld [vmem:[#allocation2 + $0x92] sm:$0xff]
      %v1332 = vld [vmem:[#allocation2 + $0x9a] sm:$0xff]
      %v1333 = vld [vmem:[#allocation2 + $0xa2] sm:$0xff]
      %v1334 = vld [vmem:[#allocation2 + $0xaa] sm:$0xff]
      %v1335 = vld [vmem:[#allocation2 + $0xb2] sm:$0xff]
      %v1336 = vld [vmem:[#allocation2 + $0xba] sm:$0xff]
      %v1337 = vld [vmem:[#allocation2 + $0xc2] sm:$0x3]
      %v1338 = vpack.c.bf16 %v1316, %v1315
      %v1339 = vpack.c.bf16 %v1318, %v1317
      %v1340 = vpack.c.bf16 %v1320, %v1319
      %v1341 = vpack.c.bf16 %v1322, %v1321
      %v1342 = vpack.c.bf16 %v1324, %v1323
      %v1343 = vpack.c.bf16 %v1326, %v1325
      %v1344 = vpack.c.bf16 %v1328, %v1327
      %v1345 = vpack.c.bf16 %v1330, %v1329
      %v1346 = vpack.c.bf16 %v1332, %v1331
      %v1347 = vpack.c.bf16 %v1334, %v1333
      %v1348 = vpack.c.bf16 %v1336, %v1335
      %v1349 = vpack.c.bf16 %v1337, %v1337
      %v1362 = vunpack.c.l.b16 %v1338
      %v1363 = vunpack.c.h.b16 %v1338
      %v1364 = vunpack.c.l.b16 %v1339
      %v1365 = vunpack.c.h.b16 %v1339
      %v1366 = vunpack.c.l.b16 %v1340
      %v1367 = vunpack.c.h.b16 %v1340
      %v1368 = vunpack.c.l.b16 %v1341
      %v1369 = vunpack.c.h.b16 %v1341
      %v1370 = vunpack.c.l.b16 %v1342
      %v1371 = vunpack.c.h.b16 %v1342
      %v1372 = vunpack.c.l.b16 %v1343
      %v1373 = vunpack.c.h.b16 %v1343
      %v1374 = vunpack.c.l.b16 %v1344
      %v1375 = vunpack.c.h.b16 %v1344
      %v1376 = vunpack.c.l.b16 %v1345
      %v1377 = vunpack.c.h.b16 %v1345
      %v1378 = vunpack.c.l.b16 %v1346
      %v1379 = vunpack.c.h.b16 %v1346
      %v1380 = vunpack.c.l.b16 %v1347
      %v1381 = vunpack.c.h.b16 %v1347
      %v1382 = vunpack.c.l.b16 %v1348
      %v1383 = vunpack.c.h.b16 %v1348
      %v1384 = vunpack.c.l.b16 %v1349
      %v1385 = vpack.c.b16 %v1362, %v1362
      %v1386 = vpack.c.b16 %v1363, %v1363
      %v1387 = vpack.c.b16 %v1364, %v1364
      %v1388 = vpack.c.b16 %v1365, %v1365
      %v1389 = vpack.c.b16 %v1366, %v1366
      %v1390 = vpack.c.b16 %v1367, %v1367
      %v1391 = vpack.c.b16 %v1368, %v1368
      %v1392 = vpack.c.b16 %v1369, %v1369
      %v1393 = vpack.c.b16 %v1370, %v1370
      %v1394 = vpack.c.b16 %v1371, %v1371
      %v1395 = vpack.c.b16 %v1372, %v1372
      %v1396 = vpack.c.b16 %v1373, %v1373
      %v1397 = vpack.c.b16 %v1374, %v1374
      %v1398 = vpack.c.b16 %v1375, %v1375
      %v1399 = vpack.c.b16 %v1376, %v1376
      %v1400 = vpack.c.b16 %v1377, %v1377
      %v1401 = vpack.c.b16 %v1378, %v1378
      %v1402 = vpack.c.b16 %v1379, %v1379
      %v1403 = vpack.c.b16 %v1380, %v1380
      %v1404 = vpack.c.b16 %v1381, %v1381
      %v1405 = vpack.c.b16 %v1382, %v1382
      %v1406 = vpack.c.b16 %v1383, %v1383
      %v1407 = vpack.c.b16 %v1384, %v1384
      %1431 = vst [vmem:[#allocation4 + $0xc] sm:$0xf] %v1385
      %1432 = vst [vmem:[#allocation4 + $0x30] sm:$0xf] %v1386
      %1433 = vst [vmem:[#allocation4 + $0x54] sm:$0xf] %v1387
      %1434 = vst [vmem:[#allocation4 + $0x78] sm:$0xf] %v1388
      %1435 = vst [vmem:[#allocation4 + $0x9c] sm:$0xf] %v1389
      %1436 = vst [vmem:[#allocation4 + $0xc0] sm:$0xf] %v1390
      %1437 = vst [vmem:[#allocation4 + $0xe4] sm:$0xf] %v1391
      %1438 = vst [vmem:[#allocation4 + $0x108] sm:$0xf] %v1392
      %1439 = vst [vmem:[#allocation4 + $0x12c] sm:$0xf] %v1393
      %1440 = vst [vmem:[#allocation4 + $0x150] sm:$0xf] %v1394
      %1441 = vst [vmem:[#allocation4 + $0x174] sm:$0xf] %v1395
      %1442 = vst [vmem:[#allocation4 + $0x198] sm:$0xf] %v1396
      %1443 = vst [vmem:[#allocation4 + $0x1bc] sm:$0xf] %v1397
      %1444 = vst [vmem:[#allocation4 + $0x1e0] sm:$0xf] %v1398
      %1445 = vst [vmem:[#allocation4 + $0x204] sm:$0xf] %v1399
      %1446 = vst [vmem:[#allocation4 + $0x228] sm:$0xf] %v1400
      %1447 = vst [vmem:[#allocation4 + $0x24c] sm:$0xf] %v1401
      %1448 = vst [vmem:[#allocation4 + $0x270] sm:$0xf] %v1402
      %1449 = vst [vmem:[#allocation4 + $0x294] sm:$0xf] %v1403
      %1450 = vst [vmem:[#allocation4 + $0x2b8] sm:$0xf] %v1404
      %1451 = vst [vmem:[#allocation4 + $0x2dc] sm:$0xf] %v1405
      %1452 = vst [vmem:[#allocation4 + $0x300] sm:$0xf] %v1406
      %1453 = vst [vmem:[#allocation4 + $0x324] sm:$0x1] %v1407
      %v1454 = vld [vmem:[#allocation2 + $0x13] sm:$0xff]
      %v1455 = vld [vmem:[#allocation2 + $0x1b] sm:$0xff]
      %v1456 = vld [vmem:[#allocation2 + $0x23] sm:$0xff]
      %v1457 = vld [vmem:[#allocation2 + $0x2b] sm:$0xff]
      %v1458 = vld [vmem:[#allocation2 + $0x33] sm:$0xff]
      %v1459 = vld [vmem:[#allocation2 + $0x3b] sm:$0xff]
      %v1460 = vld [vmem:[#allocation2 + $0x43] sm:$0xff]
      %v1461 = vld [vmem:[#allocation2 + $0x4b] sm:$0xff]
      %v1462 = vld [vmem:[#allocation2 + $0x53] sm:$0xff]
      %v1463 = vld [vmem:[#allocation2 + $0x5b] sm:$0xff]
      %v1464 = vld [vmem:[#allocation2 + $0x63] sm:$0xff]
      %v1465 = vld [vmem:[#allocation2 + $0x6b] sm:$0xff]
      %v1466 = vld [vmem:[#allocation2 + $0x73] sm:$0xff]
      %v1467 = vld [vmem:[#allocation2 + $0x7b] sm:$0xff]
      %v1468 = vld [vmem:[#allocation2 + $0x83] sm:$0xff]
      %v1469 = vld [vmem:[#allocation2 + $0x8b] sm:$0xff]
      %v1470 = vld [vmem:[#allocation2 + $0x93] sm:$0xff]
      %v1471 = vld [vmem:[#allocation2 + $0x9b] sm:$0xff]
      %v1472 = vld [vmem:[#allocation2 + $0xa3] sm:$0xff]
      %v1473 = vld [vmem:[#allocation2 + $0xab] sm:$0xff]
      %v1474 = vld [vmem:[#allocation2 + $0xb3] sm:$0xff]
      %v1475 = vld [vmem:[#allocation2 + $0xbb] sm:$0xff]
      %v1476 = vld [vmem:[#allocation2 + $0xc3] sm:$0x3]
      %v1477 = vpack.c.bf16 %v1455, %v1454
      %v1478 = vpack.c.bf16 %v1457, %v1456
      %v1479 = vpack.c.bf16 %v1459, %v1458
      %v1480 = vpack.c.bf16 %v1461, %v1460
      %v1481 = vpack.c.bf16 %v1463, %v1462
      %v1482 = vpack.c.bf16 %v1465, %v1464
      %v1483 = vpack.c.bf16 %v1467, %v1466
      %v1484 = vpack.c.bf16 %v1469, %v1468
      %v1485 = vpack.c.bf16 %v1471, %v1470
      %v1486 = vpack.c.bf16 %v1473, %v1472
      %v1487 = vpack.c.bf16 %v1475, %v1474
      %v1488 = vpack.c.bf16 %v1476, %v1476
      %v1501 = vunpack.c.l.b16 %v1477
      %v1502 = vunpack.c.h.b16 %v1477
      %v1503 = vunpack.c.l.b16 %v1478
      %v1504 = vunpack.c.h.b16 %v1478
      %v1505 = vunpack.c.l.b16 %v1479
      %v1506 = vunpack.c.h.b16 %v1479
      %v1507 = vunpack.c.l.b16 %v1480
      %v1508 = vunpack.c.h.b16 %v1480
      %v1509 = vunpack.c.l.b16 %v1481
      %v1510 = vunpack.c.h.b16 %v1481
      %v1511 = vunpack.c.l.b16 %v1482
      %v1512 = vunpack.c.h.b16 %v1482
      %v1513 = vunpack.c.l.b16 %v1483
      %v1514 = vunpack.c.h.b16 %v1483
      %v1515 = vunpack.c.l.b16 %v1484
      %v1516 = vunpack.c.h.b16 %v1484
      %v1517 = vunpack.c.l.b16 %v1485
      %v1518 = vunpack.c.h.b16 %v1485
      %v1519 = vunpack.c.l.b16 %v1486
      %v1520 = vunpack.c.h.b16 %v1486
      %v1521 = vunpack.c.l.b16 %v1487
      %v1522 = vunpack.c.h.b16 %v1487
      %v1523 = vunpack.c.l.b16 %v1488
      %v1524 = vpack.c.b16 %v1501, %v1501
      %v1525 = vpack.c.b16 %v1502, %v1502
      %v1526 = vpack.c.b16 %v1503, %v1503
      %v1527 = vpack.c.b16 %v1504, %v1504
      %v1528 = vpack.c.b16 %v1505, %v1505
      %v1529 = vpack.c.b16 %v1506, %v1506
      %v1530 = vpack.c.b16 %v1507, %v1507
      %v1531 = vpack.c.b16 %v1508, %v1508
      %v1532 = vpack.c.b16 %v1509, %v1509
      %v1533 = vpack.c.b16 %v1510, %v1510
      %v1534 = vpack.c.b16 %v1511, %v1511
      %v1535 = vpack.c.b16 %v1512, %v1512
      %v1536 = vpack.c.b16 %v1513, %v1513
      %v1537 = vpack.c.b16 %v1514, %v1514
      %v1538 = vpack.c.b16 %v1515, %v1515
      %v1539 = vpack.c.b16 %v1516, %v1516
      %v1540 = vpack.c.b16 %v1517, %v1517
      %v1541 = vpack.c.b16 %v1518, %v1518
      %v1542 = vpack.c.b16 %v1519, %v1519
      %v1543 = vpack.c.b16 %v1520, %v1520
      %v1544 = vpack.c.b16 %v1521, %v1521
      %v1545 = vpack.c.b16 %v1522, %v1522
      %v1546 = vpack.c.b16 %v1523, %v1523
      %1570 = vst [vmem:[#allocation4 + $0x10] sm:$0xf] %v1524
      %1571 = vst [vmem:[#allocation4 + $0x34] sm:$0xf] %v1525
      %1572 = vst [vmem:[#allocation4 + $0x58] sm:$0xf] %v1526
      %1573 = vst [vmem:[#allocation4 + $0x7c] sm:$0xf] %v1527
      %1574 = vst [vmem:[#allocation4 + $0xa0] sm:$0xf] %v1528
      %1575 = vst [vmem:[#allocation4 + $0xc4] sm:$0xf] %v1529
      %1576 = vst [vmem:[#allocation4 + $0xe8] sm:$0xf] %v1530
      %1577 = vst [vmem:[#allocation4 + $0x10c] sm:$0xf] %v1531
      %1578 = vst [vmem:[#allocation4 + $0x130] sm:$0xf] %v1532
      %1579 = vst [vmem:[#allocation4 + $0x154] sm:$0xf] %v1533
      %1580 = vst [vmem:[#allocation4 + $0x178] sm:$0xf] %v1534
      %1581 = vst [vmem:[#allocation4 + $0x19c] sm:$0xf] %v1535
      %1582 = vst [vmem:[#allocation4 + $0x1c0] sm:$0xf] %v1536
      %1583 = vst [vmem:[#allocation4 + $0x1e4] sm:$0xf] %v1537
      %1584 = vst [vmem:[#allocation4 + $0x208] sm:$0xf] %v1538
      %1585 = vst [vmem:[#allocation4 + $0x22c] sm:$0xf] %v1539
      %1586 = vst [vmem:[#allocation4 + $0x250] sm:$0xf] %v1540
      %1587 = vst [vmem:[#allocation4 + $0x274] sm:$0xf] %v1541
      %1588 = vst [vmem:[#allocation4 + $0x298] sm:$0xf] %v1542
      %1589 = vst [vmem:[#allocation4 + $0x2bc] sm:$0xf] %v1543
      %1590 = vst [vmem:[#allocation4 + $0x2e0] sm:$0xf] %v1544
      %1591 = vst [vmem:[#allocation4 + $0x304] sm:$0xf] %v1545
      %1592 = vst [vmem:[#allocation4 + $0x328] sm:$0x1] %v1546
      %v1593 = vld [vmem:[#allocation2 + $0x14] sm:$0xff]
      %v1594 = vld [vmem:[#allocation2 + $0x1c] sm:$0xff]
      %v1595 = vld [vmem:[#allocation2 + $0x24] sm:$0xff]
      %v1596 = vld [vmem:[#allocation2 + $0x2c] sm:$0xff]
      %v1597 = vld [vmem:[#allocation2 + $0x34] sm:$0xff]
      %v1598 = vld [vmem:[#allocation2 + $0x3c] sm:$0xff]
      %v1599 = vld [vmem:[#allocation2 + $0x44] sm:$0xff]
      %v1600 = vld [vmem:[#allocation2 + $0x4c] sm:$0xff]
      %v1601 = vld [vmem:[#allocation2 + $0x54] sm:$0xff]
      %v1602 = vld [vmem:[#allocation2 + $0x5c] sm:$0xff]
      %v1603 = vld [vmem:[#allocation2 + $0x64] sm:$0xff]
      %v1604 = vld [vmem:[#allocation2 + $0x6c] sm:$0xff]
      %v1605 = vld [vmem:[#allocation2 + $0x74] sm:$0xff]
      %v1606 = vld [vmem:[#allocation2 + $0x7c] sm:$0xff]
      %v1607 = vld [vmem:[#allocation2 + $0x84] sm:$0xff]
      %v1608 = vld [vmem:[#allocation2 + $0x8c] sm:$0xff]
      %v1609 = vld [vmem:[#allocation2 + $0x94] sm:$0xff]
      %v1610 = vld [vmem:[#allocation2 + $0x9c] sm:$0xff]
      %v1611 = vld [vmem:[#allocation2 + $0xa4] sm:$0xff]
      %v1612 = vld [vmem:[#allocation2 + $0xac] sm:$0xff]
      %v1613 = vld [vmem:[#allocation2 + $0xb4] sm:$0xff]
      %v1614 = vld [vmem:[#allocation2 + $0xbc] sm:$0xff]
      %v1615 = vld [vmem:[#allocation2 + $0xc4] sm:$0x3]
      %v1616 = vpack.c.bf16 %v1594, %v1593
      %v1617 = vpack.c.bf16 %v1596, %v1595
      %v1618 = vpack.c.bf16 %v1598, %v1597
      %v1619 = vpack.c.bf16 %v1600, %v1599
      %v1620 = vpack.c.bf16 %v1602, %v1601
      %v1621 = vpack.c.bf16 %v1604, %v1603
      %v1622 = vpack.c.bf16 %v1606, %v1605
      %v1623 = vpack.c.bf16 %v1608, %v1607
      %v1624 = vpack.c.bf16 %v1610, %v1609
      %v1625 = vpack.c.bf16 %v1612, %v1611
      %v1626 = vpack.c.bf16 %v1614, %v1613
      %v1627 = vpack.c.bf16 %v1615, %v1615
      %v1640 = vunpack.c.l.b16 %v1616
      %v1641 = vunpack.c.h.b16 %v1616
      %v1642 = vunpack.c.l.b16 %v1617
      %v1643 = vunpack.c.h.b16 %v1617
      %v1644 = vunpack.c.l.b16 %v1618
      %v1645 = vunpack.c.h.b16 %v1618
      %v1646 = vunpack.c.l.b16 %v1619
      %v1647 = vunpack.c.h.b16 %v1619
      %v1648 = vunpack.c.l.b16 %v1620
      %v1649 = vunpack.c.h.b16 %v1620
      %v1650 = vunpack.c.l.b16 %v1621
      %v1651 = vunpack.c.h.b16 %v1621
      %v1652 = vunpack.c.l.b16 %v1622
      %v1653 = vunpack.c.h.b16 %v1622
      %v1654 = vunpack.c.l.b16 %v1623
      %v1655 = vunpack.c.h.b16 %v1623
      %v1656 = vunpack.c.l.b16 %v1624
      %v1657 = vunpack.c.h.b16 %v1624
      %v1658 = vunpack.c.l.b16 %v1625
      %v1659 = vunpack.c.h.b16 %v1625
      %v1660 = vunpack.c.l.b16 %v1626
      %v1661 = vunpack.c.h.b16 %v1626
      %v1662 = vunpack.c.l.b16 %v1627
      %v1663 = vpack.c.b16 %v1640, %v1640
      %v1664 = vpack.c.b16 %v1641, %v1641
      %v1665 = vpack.c.b16 %v1642, %v1642
      %v1666 = vpack.c.b16 %v1643, %v1643
      %v1667 = vpack.c.b16 %v1644, %v1644
      %v1668 = vpack.c.b16 %v1645, %v1645
      %v1669 = vpack.c.b16 %v1646, %v1646
      %v1670 = vpack.c.b16 %v1647, %v1647
      %v1671 = vpack.c.b16 %v1648, %v1648
      %v1672 = vpack.c.b16 %v1649, %v1649
      %v1673 = vpack.c.b16 %v1650, %v1650
      %v1674 = vpack.c.b16 %v1651, %v1651
      %v1675 = vpack.c.b16 %v1652, %v1652
      %v1676 = vpack.c.b16 %v1653, %v1653
      %v1677 = vpack.c.b16 %v1654, %v1654
      %v1678 = vpack.c.b16 %v1655, %v1655
      %v1679 = vpack.c.b16 %v1656, %v1656
      %v1680 = vpack.c.b16 %v1657, %v1657
      %v1681 = vpack.c.b16 %v1658, %v1658
      %v1682 = vpack.c.b16 %v1659, %v1659
      %v1683 = vpack.c.b16 %v1660, %v1660
      %v1684 = vpack.c.b16 %v1661, %v1661
      %v1685 = vpack.c.b16 %v1662, %v1662
      %1709 = vst [vmem:[#allocation4 + $0x14] sm:$0xf] %v1663
      %1710 = vst [vmem:[#allocation4 + $0x38] sm:$0xf] %v1664
      %1711 = vst [vmem:[#allocation4 + $0x5c] sm:$0xf] %v1665
      %1712 = vst [vmem:[#allocation4 + $0x80] sm:$0xf] %v1666
      %1713 = vst [vmem:[#allocation4 + $0xa4] sm:$0xf] %v1667
      %1714 = vst [vmem:[#allocation4 + $0xc8] sm:$0xf] %v1668
      %1715 = vst [vmem:[#allocation4 + $0xec] sm:$0xf] %v1669
      %1716 = vst [vmem:[#allocation4 + $0x110] sm:$0xf] %v1670
      %1717 = vst [vmem:[#allocation4 + $0x134] sm:$0xf] %v1671
      %1718 = vst [vmem:[#allocation4 + $0x158] sm:$0xf] %v1672
      %1719 = vst [vmem:[#allocation4 + $0x17c] sm:$0xf] %v1673
      %1720 = vst [vmem:[#allocation4 + $0x1a0] sm:$0xf] %v1674
      %1721 = vst [vmem:[#allocation4 + $0x1c4] sm:$0xf] %v1675
      %1722 = vst [vmem:[#allocation4 + $0x1e8] sm:$0xf] %v1676
      %1723 = vst [vmem:[#allocation4 + $0x20c] sm:$0xf] %v1677
      %1724 = vst [vmem:[#allocation4 + $0x230] sm:$0xf] %v1678
      %1725 = vst [vmem:[#allocation4 + $0x254] sm:$0xf] %v1679
      %1726 = vst [vmem:[#allocation4 + $0x278] sm:$0xf] %v1680
      %1727 = vst [vmem:[#allocation4 + $0x29c] sm:$0xf] %v1681
      %1728 = vst [vmem:[#allocation4 + $0x2c0] sm:$0xf] %v1682
      %1729 = vst [vmem:[#allocation4 + $0x2e4] sm:$0xf] %v1683
      %1730 = vst [vmem:[#allocation4 + $0x308] sm:$0xf] %v1684
      %1731 = vst [vmem:[#allocation4 + $0x32c] sm:$0x1] %v1685
      %v1732 = vld [vmem:[#allocation2 + $0x24] sm:$0xff]
      %v1733 = vld [vmem:[#allocation2 + $0x2c] sm:$0xff]
      %v1734 = vld [vmem:[#allocation2 + $0x34] sm:$0xff]
      %v1735 = vld [vmem:[#allocation2 + $0x3c] sm:$0xff]
      %v1736 = vld [vmem:[#allocation2 + $0x44] sm:$0xff]
      %v1737 = vld [vmem:[#allocation2 + $0x4c] sm:$0xff]
      %v1738 = vld [vmem:[#allocation2 + $0x54] sm:$0xff]
      %v1739 = vld [vmem:[#allocation2 + $0x5c] sm:$0xff]
      %v1740 = vld [vmem:[#allocation2 + $0x64] sm:$0xff]
      %v1741 = vld [vmem:[#allocation2 + $0x6c] sm:$0xff]
      %v1742 = vld [vmem:[#allocation2 + $0x74] sm:$0xff]
      %v1743 = vld [vmem:[#allocation2 + $0x7c] sm:$0xff]
      %v1744 = vld [vmem:[#allocation2 + $0x84] sm:$0xff]
      %v1745 = vld [vmem:[#allocation2 + $0x8c] sm:$0xff]
      %v1746 = vld [vmem:[#allocation2 + $0x94] sm:$0xff]
      %v1747 = vld [vmem:[#allocation2 + $0x9c] sm:$0xff]
      %v1748 = vld [vmem:[#allocation2 + $0xa4] sm:$0xff]
      %v1749 = vld [vmem:[#allocation2 + $0xac] sm:$0xff]
      %v1750 = vld [vmem:[#allocation2 + $0xb4] sm:$0xff]
      %v1751 = vld [vmem:[#allocation2 + $0xbc] sm:$0xff]
      %v1752 = vld [vmem:[#allocation2 + $0xc4] sm:$0xff]
      %v1753 = vld [vmem:[#allocation2 + $0xcc] sm:$0xff]
      %v1754 = vld [vmem:[#allocation2 + $0xd4] sm:$0x3]
      %v1755 = vpack.c.bf16 %v1733, %v1732
      %v1756 = vpack.c.bf16 %v1735, %v1734
      %v1757 = vpack.c.bf16 %v1737, %v1736
      %v1758 = vpack.c.bf16 %v1739, %v1738
      %v1759 = vpack.c.bf16 %v1741, %v1740
      %v1760 = vpack.c.bf16 %v1743, %v1742
      %v1761 = vpack.c.bf16 %v1745, %v1744
      %v1762 = vpack.c.bf16 %v1747, %v1746
      %v1763 = vpack.c.bf16 %v1749, %v1748
      %v1764 = vpack.c.bf16 %v1751, %v1750
      %v1765 = vpack.c.bf16 %v1753, %v1752
      %v1766 = vpack.c.bf16 %v1754, %v1754
      %v1779 = vunpack.c.l.b16 %v1755
      %v1780 = vunpack.c.h.b16 %v1755
      %v1781 = vunpack.c.l.b16 %v1756
      %v1782 = vunpack.c.h.b16 %v1756
      %v1783 = vunpack.c.l.b16 %v1757
      %v1784 = vunpack.c.h.b16 %v1757
      %v1785 = vunpack.c.l.b16 %v1758
      %v1786 = vunpack.c.h.b16 %v1758
      %v1787 = vunpack.c.l.b16 %v1759
      %v1788 = vunpack.c.h.b16 %v1759
      %v1789 = vunpack.c.l.b16 %v1760
      %v1790 = vunpack.c.h.b16 %v1760
      %v1791 = vunpack.c.l.b16 %v1761
      %v1792 = vunpack.c.h.b16 %v1761
      %v1793 = vunpack.c.l.b16 %v1762
      %v1794 = vunpack.c.h.b16 %v1762
      %v1795 = vunpack.c.l.b16 %v1763
      %v1796 = vunpack.c.h.b16 %v1763
      %v1797 = vunpack.c.l.b16 %v1764
      %v1798 = vunpack.c.h.b16 %v1764
      %v1799 = vunpack.c.l.b16 %v1765
      %v1800 = vunpack.c.h.b16 %v1765
      %v1801 = vunpack.c.l.b16 %v1766
      %v1802 = vpack.c.b16 %v1779, %v1779
      %v1803 = vpack.c.b16 %v1780, %v1780
      %v1804 = vpack.c.b16 %v1781, %v1781
      %v1805 = vpack.c.b16 %v1782, %v1782
      %v1806 = vpack.c.b16 %v1783, %v1783
      %v1807 = vpack.c.b16 %v1784, %v1784
      %v1808 = vpack.c.b16 %v1785, %v1785
      %v1809 = vpack.c.b16 %v1786, %v1786
      %v1810 = vpack.c.b16 %v1787, %v1787
      %v1811 = vpack.c.b16 %v1788, %v1788
      %v1812 = vpack.c.b16 %v1789, %v1789
      %v1813 = vpack.c.b16 %v1790, %v1790
      %v1814 = vpack.c.b16 %v1791, %v1791
      %v1815 = vpack.c.b16 %v1792, %v1792
      %v1816 = vpack.c.b16 %v1793, %v1793
      %v1817 = vpack.c.b16 %v1794, %v1794
      %v1818 = vpack.c.b16 %v1795, %v1795
      %v1819 = vpack.c.b16 %v1796, %v1796
      %v1820 = vpack.c.b16 %v1797, %v1797
      %v1821 = vpack.c.b16 %v1798, %v1798
      %v1822 = vpack.c.b16 %v1799, %v1799
      %v1823 = vpack.c.b16 %v1800, %v1800
      %v1824 = vpack.c.b16 %v1801, %v1801
      %1848 = vst [vmem:[#allocation4 + $0x18] sm:$0xf] %v1802
      %1849 = vst [vmem:[#allocation4 + $0x3c] sm:$0xf] %v1803
      %1850 = vst [vmem:[#allocation4 + $0x60] sm:$0xf] %v1804
      %1851 = vst [vmem:[#allocation4 + $0x84] sm:$0xf] %v1805
      %1852 = vst [vmem:[#allocation4 + $0xa8] sm:$0xf] %v1806
      %1853 = vst [vmem:[#allocation4 + $0xcc] sm:$0xf] %v1807
      %1854 = vst [vmem:[#allocation4 + $0xf0] sm:$0xf] %v1808
      %1855 = vst [vmem:[#allocation4 + $0x114] sm:$0xf] %v1809
      %1856 = vst [vmem:[#allocation4 + $0x138] sm:$0xf] %v1810
      %1857 = vst [vmem:[#allocation4 + $0x15c] sm:$0xf] %v1811
      %1858 = vst [vmem:[#allocation4 + $0x180] sm:$0xf] %v1812
      %1859 = vst [vmem:[#allocation4 + $0x1a4] sm:$0xf] %v1813
      %1860 = vst [vmem:[#allocation4 + $0x1c8] sm:$0xf] %v1814
      %1861 = vst [vmem:[#allocation4 + $0x1ec] sm:$0xf] %v1815
      %1862 = vst [vmem:[#allocation4 + $0x210] sm:$0xf] %v1816
      %1863 = vst [vmem:[#allocation4 + $0x234] sm:$0xf] %v1817
      %1864 = vst [vmem:[#allocation4 + $0x258] sm:$0xf] %v1818
      %1865 = vst [vmem:[#allocation4 + $0x27c] sm:$0xf] %v1819
      %1866 = vst [vmem:[#allocation4 + $0x2a0] sm:$0xf] %v1820
      %1867 = vst [vmem:[#allocation4 + $0x2c4] sm:$0xf] %v1821
      %1868 = vst [vmem:[#allocation4 + $0x2e8] sm:$0xf] %v1822
      %1869 = vst [vmem:[#allocation4 + $0x30c] sm:$0xf] %v1823
      %1870 = vst [vmem:[#allocation4 + $0x330] sm:$0x1] %v1824
      %v1871 = vld [vmem:[#allocation2 + $0x25] sm:$0xff]
      %v1872 = vld [vmem:[#allocation2 + $0x2d] sm:$0xff]
      %v1873 = vld [vmem:[#allocation2 + $0x35] sm:$0xff]
      %v1874 = vld [vmem:[#allocation2 + $0x3d] sm:$0xff]
      %v1875 = vld [vmem:[#allocation2 + $0x45] sm:$0xff]
      %v1876 = vld [vmem:[#allocation2 + $0x4d] sm:$0xff]
      %v1877 = vld [vmem:[#allocation2 + $0x55] sm:$0xff]
      %v1878 = vld [vmem:[#allocation2 + $0x5d] sm:$0xff]
      %v1879 = vld [vmem:[#allocation2 + $0x65] sm:$0xff]
      %v1880 = vld [vmem:[#allocation2 + $0x6d] sm:$0xff]
      %v1881 = vld [vmem:[#allocation2 + $0x75] sm:$0xff]
      %v1882 = vld [vmem:[#allocation2 + $0x7d] sm:$0xff]
      %v1883 = vld [vmem:[#allocation2 + $0x85] sm:$0xff]
      %v1884 = vld [vmem:[#allocation2 + $0x8d] sm:$0xff]
      %v1885 = vld [vmem:[#allocation2 + $0x95] sm:$0xff]
      %v1886 = vld [vmem:[#allocation2 + $0x9d] sm:$0xff]
      %v1887 = vld [vmem:[#allocation2 + $0xa5] sm:$0xff]
      %v1888 = vld [vmem:[#allocation2 + $0xad] sm:$0xff]
      %v1889 = vld [vmem:[#allocation2 + $0xb5] sm:$0xff]
      %v1890 = vld [vmem:[#allocation2 + $0xbd] sm:$0xff]
      %v1891 = vld [vmem:[#allocation2 + $0xc5] sm:$0xff]
      %v1892 = vld [vmem:[#allocation2 + $0xcd] sm:$0xff]
      %v1893 = vld [vmem:[#allocation2 + $0xd5] sm:$0x3]
      %v1894 = vpack.c.bf16 %v1872, %v1871
      %v1895 = vpack.c.bf16 %v1874, %v1873
      %v1896 = vpack.c.bf16 %v1876, %v1875
      %v1897 = vpack.c.bf16 %v1878, %v1877
      %v1898 = vpack.c.bf16 %v1880, %v1879
      %v1899 = vpack.c.bf16 %v1882, %v1881
      %v1900 = vpack.c.bf16 %v1884, %v1883
      %v1901 = vpack.c.bf16 %v1886, %v1885
      %v1902 = vpack.c.bf16 %v1888, %v1887
      %v1903 = vpack.c.bf16 %v1890, %v1889
      %v1904 = vpack.c.bf16 %v1892, %v1891
      %v1905 = vpack.c.bf16 %v1893, %v1893
      %v1918 = vunpack.c.l.b16 %v1894
      %v1919 = vunpack.c.h.b16 %v1894
      %v1920 = vunpack.c.l.b16 %v1895
      %v1921 = vunpack.c.h.b16 %v1895
      %v1922 = vunpack.c.l.b16 %v1896
      %v1923 = vunpack.c.h.b16 %v1896
      %v1924 = vunpack.c.l.b16 %v1897
      %v1925 = vunpack.c.h.b16 %v1897
      %v1926 = vunpack.c.l.b16 %v1898
      %v1927 = vunpack.c.h.b16 %v1898
      %v1928 = vunpack.c.l.b16 %v1899
      %v1929 = vunpack.c.h.b16 %v1899
      %v1930 = vunpack.c.l.b16 %v1900
      %v1931 = vunpack.c.h.b16 %v1900
      %v1932 = vunpack.c.l.b16 %v1901
      %v1933 = vunpack.c.h.b16 %v1901
      %v1934 = vunpack.c.l.b16 %v1902
      %v1935 = vunpack.c.h.b16 %v1902
      %v1936 = vunpack.c.l.b16 %v1903
      %v1937 = vunpack.c.h.b16 %v1903
      %v1938 = vunpack.c.l.b16 %v1904
      %v1939 = vunpack.c.h.b16 %v1904
      %v1940 = vunpack.c.l.b16 %v1905
      %v1941 = vpack.c.b16 %v1918, %v1918
      %v1942 = vpack.c.b16 %v1919, %v1919
      %v1943 = vpack.c.b16 %v1920, %v1920
      %v1944 = vpack.c.b16 %v1921, %v1921
      %v1945 = vpack.c.b16 %v1922, %v1922
      %v1946 = vpack.c.b16 %v1923, %v1923
      %v1947 = vpack.c.b16 %v1924, %v1924
      %v1948 = vpack.c.b16 %v1925, %v1925
      %v1949 = vpack.c.b16 %v1926, %v1926
      %v1950 = vpack.c.b16 %v1927, %v1927
      %v1951 = vpack.c.b16 %v1928, %v1928
      %v1952 = vpack.c.b16 %v1929, %v1929
      %v1953 = vpack.c.b16 %v1930, %v1930
      %v1954 = vpack.c.b16 %v1931, %v1931
      %v1955 = vpack.c.b16 %v1932, %v1932
      %v1956 = vpack.c.b16 %v1933, %v1933
      %v1957 = vpack.c.b16 %v1934, %v1934
      %v1958 = vpack.c.b16 %v1935, %v1935
      %v1959 = vpack.c.b16 %v1936, %v1936
      %v1960 = vpack.c.b16 %v1937, %v1937
      %v1961 = vpack.c.b16 %v1938, %v1938
      %v1962 = vpack.c.b16 %v1939, %v1939
      %v1963 = vpack.c.b16 %v1940, %v1940
      %1987 = vst [vmem:[#allocation4 + $0x1c] sm:$0xf] %v1941
      %1988 = vst [vmem:[#allocation4 + $0x40] sm:$0xf] %v1942
      %1989 = vst [vmem:[#allocation4 + $0x64] sm:$0xf] %v1943
      %1990 = vst [vmem:[#allocation4 + $0x88] sm:$0xf] %v1944
      %1991 = vst [vmem:[#allocation4 + $0xac] sm:$0xf] %v1945
      %1992 = vst [vmem:[#allocation4 + $0xd0] sm:$0xf] %v1946
      %1993 = vst [vmem:[#allocation4 + $0xf4] sm:$0xf] %v1947
      %1994 = vst [vmem:[#allocation4 + $0x118] sm:$0xf] %v1948
      %1995 = vst [vmem:[#allocation4 + $0x13c] sm:$0xf] %v1949
      %1996 = vst [vmem:[#allocation4 + $0x160] sm:$0xf] %v1950
      %1997 = vst [vmem:[#allocation4 + $0x184] sm:$0xf] %v1951
      %1998 = vst [vmem:[#allocation4 + $0x1a8] sm:$0xf] %v1952
      %1999 = vst [vmem:[#allocation4 + $0x1cc] sm:$0xf] %v1953
      %2000 = vst [vmem:[#allocation4 + $0x1f0] sm:$0xf] %v1954
      %2001 = vst [vmem:[#allocation4 + $0x214] sm:$0xf] %v1955
      %2002 = vst [vmem:[#allocation4 + $0x238] sm:$0xf] %v1956
      %2003 = vst [vmem:[#allocation4 + $0x25c] sm:$0xf] %v1957
      %2004 = vst [vmem:[#allocation4 + $0x280] sm:$0xf] %v1958
      %2005 = vst [vmem:[#allocation4 + $0x2a4] sm:$0xf] %v1959
      %2006 = vst [vmem:[#allocation4 + $0x2c8] sm:$0xf] %v1960
      %2007 = vst [vmem:[#allocation4 + $0x2ec] sm:$0xf] %v1961
      %2008 = vst [vmem:[#allocation4 + $0x310] sm:$0xf] %v1962
      %2009 = vst [vmem:[#allocation4 + $0x334] sm:$0x1] %v1963
      %v2010 = vld [vmem:[#allocation2 + $0x26] sm:$0xff]
      %v2011 = vld [vmem:[#allocation2 + $0x2e] sm:$0xff]
      %v2012 = vld [vmem:[#allocation2 + $0x36] sm:$0xff]
      %v2013 = vld [vmem:[#allocation2 + $0x3e] sm:$0xff]
      %v2014 = vld [vmem:[#allocation2 + $0x46] sm:$0xff]
      %v2015 = vld [vmem:[#allocation2 + $0x4e] sm:$0xff]
      %v2016 = vld [vmem:[#allocation2 + $0x56] sm:$0xff]
      %v2017 = vld [vmem:[#allocation2 + $0x5e] sm:$0xff]
      %v2018 = vld [vmem:[#allocation2 + $0x66] sm:$0xff]
      %v2019 = vld [vmem:[#allocation2 + $0x6e] sm:$0xff]
      %v2020 = vld [vmem:[#allocation2 + $0x76] sm:$0xff]
      %v2021 = vld [vmem:[#allocation2 + $0x7e] sm:$0xff]
      %v2022 = vld [vmem:[#allocation2 + $0x86] sm:$0xff]
      %v2023 = vld [vmem:[#allocation2 + $0x8e] sm:$0xff]
      %v2024 = vld [vmem:[#allocation2 + $0x96] sm:$0xff]
      %v2025 = vld [vmem:[#allocation2 + $0x9e] sm:$0xff]
      %v2026 = vld [vmem:[#allocation2 + $0xa6] sm:$0xff]
      %v2027 = vld [vmem:[#allocation2 + $0xae] sm:$0xff]
      %v2028 = vld [vmem:[#allocation2 + $0xb6] sm:$0xff]
      %v2029 = vld [vmem:[#allocation2 + $0xbe] sm:$0xff]
      %v2030 = vld [vmem:[#allocation2 + $0xc6] sm:$0xff]
      %v2031 = vld [vmem:[#allocation2 + $0xce] sm:$0xff]
      %v2032 = vld [vmem:[#allocation2 + $0xd6] sm:$0x3]
      %v2033 = vpack.c.bf16 %v2011, %v2010
      %v2034 = vpack.c.bf16 %v2013, %v2012
      %v2035 = vpack.c.bf16 %v2015, %v2014
      %v2036 = vpack.c.bf16 %v2017, %v2016
      %v2037 = vpack.c.bf16 %v2019, %v2018
      %v2038 = vpack.c.bf16 %v2021, %v2020
      %v2039 = vpack.c.bf16 %v2023, %v2022
      %v2040 = vpack.c.bf16 %v2025, %v2024
      %v2041 = vpack.c.bf16 %v2027, %v2026
      %v2042 = vpack.c.bf16 %v2029, %v2028
      %v2043 = vpack.c.bf16 %v2031, %v2030
      %v2044 = vpack.c.bf16 %v2032, %v2032
      %v2057 = vunpack.c.l.b16 %v2033
      %v2058 = vunpack.c.h.b16 %v2033
      %v2059 = vunpack.c.l.b16 %v2034
      %v2060 = vunpack.c.h.b16 %v2034
      %v2061 = vunpack.c.l.b16 %v2035
      %v2062 = vunpack.c.h.b16 %v2035
      %v2063 = vunpack.c.l.b16 %v2036
      %v2064 = vunpack.c.h.b16 %v2036
      %v2065 = vunpack.c.l.b16 %v2037
      %v2066 = vunpack.c.h.b16 %v2037
      %v2067 = vunpack.c.l.b16 %v2038
      %v2068 = vunpack.c.h.b16 %v2038
      %v2069 = vunpack.c.l.b16 %v2039
      %v2070 = vunpack.c.h.b16 %v2039
      %v2071 = vunpack.c.l.b16 %v2040
      %v2072 = vunpack.c.h.b16 %v2040
      %v2073 = vunpack.c.l.b16 %v2041
      %v2074 = vunpack.c.h.b16 %v2041
      %v2075 = vunpack.c.l.b16 %v2042
      %v2076 = vunpack.c.h.b16 %v2042
      %v2077 = vunpack.c.l.b16 %v2043
      %v2078 = vunpack.c.h.b16 %v2043
      %v2079 = vunpack.c.l.b16 %v2044
      %v2080 = vpack.c.b16 %v2057, %v2057
      %v2081 = vpack.c.b16 %v2058, %v2058
      %v2082 = vpack.c.b16 %v2059, %v2059
      %v2083 = vpack.c.b16 %v2060, %v2060
      %v2084 = vpack.c.b16 %v2061, %v2061
      %v2085 = vpack.c.b16 %v2062, %v2062
      %v2086 = vpack.c.b16 %v2063, %v2063
      %v2087 = vpack.c.b16 %v2064, %v2064
      %v2088 = vpack.c.b16 %v2065, %v2065
      %v2089 = vpack.c.b16 %v2066, %v2066
      %v2090 = vpack.c.b16 %v2067, %v2067
      %v2091 = vpack.c.b16 %v2068, %v2068
      %v2092 = vpack.c.b16 %v2069, %v2069
      %v2093 = vpack.c.b16 %v2070, %v2070
      %v2094 = vpack.c.b16 %v2071, %v2071
      %v2095 = vpack.c.b16 %v2072, %v2072
      %v2096 = vpack.c.b16 %v2073, %v2073
      %v2097 = vpack.c.b16 %v2074, %v2074
      %v2098 = vpack.c.b16 %v2075, %v2075
      %v2099 = vpack.c.b16 %v2076, %v2076
      %v2100 = vpack.c.b16 %v2077, %v2077
      %v2101 = vpack.c.b16 %v2078, %v2078
      %v2102 = vpack.c.b16 %v2079, %v2079
      %2126 = vst [vmem:[#allocation4 + $0x20] sm:$0xf] %v2080
      %2127 = vst [vmem:[#allocation4 + $0x44] sm:$0xf] %v2081
      %2128 = vst [vmem:[#allocation4 + $0x68] sm:$0xf] %v2082
      %2129 = vst [vmem:[#allocation4 + $0x8c] sm:$0xf] %v2083
      %2130 = vst [vmem:[#allocation4 + $0xb0] sm:$0xf] %v2084
      %2131 = vst [vmem:[#allocation4 + $0xd4] sm:$0xf] %v2085
      %2132 = vst [vmem:[#allocation4 + $0xf8] sm:$0xf] %v2086
      %2133 = vst [vmem:[#allocation4 + $0x11c] sm:$0xf] %v2087
      %2134 = vst [vmem:[#allocation4 + $0x140] sm:$0xf] %v2088
      %2135 = vst [vmem:[#allocation4 + $0x164] sm:$0xf] %v2089
      %2136 = vst [vmem:[#allocation4 + $0x188] sm:$0xf] %v2090
      %2137 = vst [vmem:[#allocation4 + $0x1ac] sm:$0xf] %v2091
      %2138 = vst [vmem:[#allocation4 + $0x1d0] sm:$0xf] %v2092
      %2139 = vst [vmem:[#allocation4 + $0x1f4] sm:$0xf] %v2093
      %2140 = vst [vmem:[#allocation4 + $0x218] sm:$0xf] %v2094
      %2141 = vst [vmem:[#allocation4 + $0x23c] sm:$0xf] %v2095
      %2142 = vst [vmem:[#allocation4 + $0x260] sm:$0xf] %v2096
      %2143 = vst [vmem:[#allocation4 + $0x284] sm:$0xf] %v2097
      %2144 = vst [vmem:[#allocation4 + $0x2a8] sm:$0xf] %v2098
      %2145 = vst [vmem:[#allocation4 + $0x2cc] sm:$0xf] %v2099
      %2146 = vst [vmem:[#allocation4 + $0x2f0] sm:$0xf] %v2100
      %2147 = vst [vmem:[#allocation4 + $0x314] sm:$0xf] %v2101
      %2148 = vst [vmem:[#allocation4 + $0x338] sm:$0x1] %v2102
      %v2149 = vld [vmem:[#allocation4] sm:$0xff]
      %v2150 = vld [vmem:[#allocation4 + $0x8] sm:$0xff]
      %v2151 = vld [vmem:[#allocation4 + $0x10] sm:$0xff]
      %v2152 = vld [vmem:[#allocation4 + $0x18] sm:$0xff]
      %v2153 = vld [vmem:[#allocation4 + $0x20] sm:$0xf]
      %v2154 = vld [vmem:[#allocation4 + $0x24] sm:$0xff]
      %v2155 = vld [vmem:[#allocation4 + $0x2c] sm:$0xff]
      %v2156 = vld [vmem:[#allocation4 + $0x34] sm:$0xff]
      %v2157 = vld [vmem:[#allocation4 + $0x3c] sm:$0xff]
      %v2158 = vld [vmem:[#allocation4 + $0x44] sm:$0xf]
      %v2159 = vld [vmem:[#allocation4 + $0x48] sm:$0xff]
      %v2160 = vld [vmem:[#allocation4 + $0x50] sm:$0xff]
      %v2161 = vld [vmem:[#allocation4 + $0x58] sm:$0xff]
      %v2162 = vld [vmem:[#allocation4 + $0x60] sm:$0xff]
      %v2163 = vld [vmem:[#allocation4 + $0x68] sm:$0xf]
      %v2164 = vld [vmem:[#allocation4 + $0x6c] sm:$0xff]
      %v2165 = vld [vmem:[#allocation4 + $0x74] sm:$0xff]
      %v2166 = vld [vmem:[#allocation4 + $0x7c] sm:$0xff]
      %v2167 = vld [vmem:[#allocation4 + $0x84] sm:$0xff]
      %v2168 = vld [vmem:[#allocation4 + $0x8c] sm:$0xf]
      %v2169 = vld [vmem:[#allocation4 + $0x90] sm:$0xff]
      %v2170 = vld [vmem:[#allocation4 + $0x98] sm:$0xff]
      %v2171 = vld [vmem:[#allocation4 + $0xa0] sm:$0xff]
      %v2172 = vld [vmem:[#allocation4 + $0xa8] sm:$0xff]
      %v2173 = vld [vmem:[#allocation4 + $0xb0] sm:$0xf]
      %v2174 = vld [vmem:[#allocation4 + $0xb4] sm:$0xff]
      %v2175 = vld [vmem:[#allocation4 + $0xbc] sm:$0xff]
      %v2176 = vld [vmem:[#allocation4 + $0xc4] sm:$0xff]
      %v2177 = vld [vmem:[#allocation4 + $0xcc] sm:$0xff]
      %v2178 = vld [vmem:[#allocation4 + $0xd4] sm:$0xf]
      %v2179 = vld [vmem:[#allocation4 + $0xd8] sm:$0xff]
      %v2180 = vld [vmem:[#allocation4 + $0xe0] sm:$0xff]
      %v2181 = vld [vmem:[#allocation4 + $0xe8] sm:$0xff]
      %v2182 = vld [vmem:[#allocation4 + $0xf0] sm:$0xff]
      %v2183 = vld [vmem:[#allocation4 + $0xf8] sm:$0xf]
      %v2184 = vld [vmem:[#allocation4 + $0xfc] sm:$0xff]
      %v2185 = vld [vmem:[#allocation4 + $0x104] sm:$0xff]
      %v2186 = vld [vmem:[#allocation4 + $0x10c] sm:$0xff]
      %v2187 = vld [vmem:[#allocation4 + $0x114] sm:$0xff]
      %v2188 = vld [vmem:[#allocation4 + $0x11c] sm:$0xf]
      %v2189 = vld [vmem:[#allocation4 + $0x120] sm:$0xff]
      %v2190 = vld [vmem:[#allocation4 + $0x128] sm:$0xff]
      %v2191 = vld [vmem:[#allocation4 + $0x130] sm:$0xff]
      %v2192 = vld [vmem:[#allocation4 + $0x138] sm:$0xff]
      %v2193 = vld [vmem:[#allocation4 + $0x140] sm:$0xf]
      %v2194 = vld [vmem:[#allocation4 + $0x144] sm:$0xff]
      %v2195 = vld [vmem:[#allocation4 + $0x14c] sm:$0xff]
      %v2196 = vld [vmem:[#allocation4 + $0x154] sm:$0xff]
      %v2197 = vld [vmem:[#allocation4 + $0x15c] sm:$0xff]
      %v2198 = vld [vmem:[#allocation4 + $0x164] sm:$0xf]
      %v2199 = vld [vmem:[#allocation4 + $0x168] sm:$0xff]
      %v2200 = vld [vmem:[#allocation4 + $0x170] sm:$0xff]
      %v2201 = vld [vmem:[#allocation4 + $0x178] sm:$0xff]
      %v2202 = vld [vmem:[#allocation4 + $0x180] sm:$0xff]
      %v2203 = vld [vmem:[#allocation4 + $0x188] sm:$0xf]
      %v2204 = vld [vmem:[#allocation4 + $0x18c] sm:$0xff]
      %v2205 = vld [vmem:[#allocation4 + $0x194] sm:$0xff]
      %v2206 = vld [vmem:[#allocation4 + $0x19c] sm:$0xff]
      %v2207 = vld [vmem:[#allocation4 + $0x1a4] sm:$0xff]
      %v2208 = vld [vmem:[#allocation4 + $0x1ac] sm:$0xf]
      %v2209 = vld [vmem:[#allocation4 + $0x1b0] sm:$0xff]
      %v2210 = vld [vmem:[#allocation4 + $0x1b8] sm:$0xff]
      %v2211 = vld [vmem:[#allocation4 + $0x1c0] sm:$0xff]
      %v2212 = vld [vmem:[#allocation4 + $0x1c8] sm:$0xff]
      %v2213 = vld [vmem:[#allocation4 + $0x1d0] sm:$0xf]
      %v2214 = vld [vmem:[#allocation4 + $0x1d4] sm:$0xff]
      %v2215 = vld [vmem:[#allocation4 + $0x1dc] sm:$0xff]
      %v2216 = vld [vmem:[#allocation4 + $0x1e4] sm:$0xff]
      %v2217 = vld [vmem:[#allocation4 + $0x1ec] sm:$0xff]
      %v2218 = vld [vmem:[#allocation4 + $0x1f4] sm:$0xf]
      %v2219 = vld [vmem:[#allocation4 + $0x1f8] sm:$0xff]
      %v2220 = vld [vmem:[#allocation4 + $0x200] sm:$0xff]
      %v2221 = vld [vmem:[#allocation4 + $0x208] sm:$0xff]
      %v2222 = vld [vmem:[#allocation4 + $0x210] sm:$0xff]
      %v2223 = vld [vmem:[#allocation4 + $0x218] sm:$0xf]
      %v2224 = vld [vmem:[#allocation4 + $0x21c] sm:$0xff]
      %v2225 = vld [vmem:[#allocation4 + $0x224] sm:$0xff]
      %v2226 = vld [vmem:[#allocation4 + $0x22c] sm:$0xff]
      %v2227 = vld [vmem:[#allocation4 + $0x234] sm:$0xff]
      %v2228 = vld [vmem:[#allocation4 + $0x23c] sm:$0xf]
      %v2229 = vld [vmem:[#allocation4 + $0x240] sm:$0xff]
      %v2230 = vld [vmem:[#allocation4 + $0x248] sm:$0xff]
      %v2231 = vld [vmem:[#allocation4 + $0x250] sm:$0xff]
      %v2232 = vld [vmem:[#allocation4 + $0x258] sm:$0xff]
      %v2233 = vld [vmem:[#allocation4 + $0x260] sm:$0xf]
      %v2234 = vld [vmem:[#allocation4 + $0x264] sm:$0xff]
      %v2235 = vld [vmem:[#allocation4 + $0x26c] sm:$0xff]
      %v2236 = vld [vmem:[#allocation4 + $0x274] sm:$0xff]
      %v2237 = vld [vmem:[#allocation4 + $0x27c] sm:$0xff]
      %v2238 = vld [vmem:[#allocation4 + $0x284] sm:$0xf]
      %v2239 = vld [vmem:[#allocation4 + $0x288] sm:$0xff]
      %v2240 = vld [vmem:[#allocation4 + $0x290] sm:$0xff]
      %v2241 = vld [vmem:[#allocation4 + $0x298] sm:$0xff]
      %v2242 = vld [vmem:[#allocation4 + $0x2a0] sm:$0xff]
      %v2243 = vld [vmem:[#allocation4 + $0x2a8] sm:$0xf]
      %v2244 = vld [vmem:[#allocation4 + $0x2ac] sm:$0xff]
      %v2245 = vld [vmem:[#allocation4 + $0x2b4] sm:$0xff]
      %v2246 = vld [vmem:[#allocation4 + $0x2bc] sm:$0xff]
      %v2247 = vld [vmem:[#allocation4 + $0x2c4] sm:$0xff]
      %v2248 = vld [vmem:[#allocation4 + $0x2cc] sm:$0xf]
      %v2249 = vld [vmem:[#allocation4 + $0x2d0] sm:$0xff]
      %v2250 = vld [vmem:[#allocation4 + $0x2d8] sm:$0xff]
      %v2251 = vld [vmem:[#allocation4 + $0x2e0] sm:$0xff]
      %v2252 = vld [vmem:[#allocation4 + $0x2e8] sm:$0xff]
      %v2253 = vld [vmem:[#allocation4 + $0x2f0] sm:$0xf]
      %v2254 = vld [vmem:[#allocation4 + $0x2f4] sm:$0xff]
      %v2255 = vld [vmem:[#allocation4 + $0x2fc] sm:$0xff]
      %v2256 = vld [vmem:[#allocation4 + $0x304] sm:$0xff]
      %v2257 = vld [vmem:[#allocation4 + $0x30c] sm:$0xff]
      %v2258 = vld [vmem:[#allocation4 + $0x314] sm:$0xf]
      %v2259 = vld [vmem:[#allocation4 + $0x318] sm:$0x11]
      %v2260 = vld [vmem:[#allocation4 + $0x320] sm:$0x11]
      %v2261 = vld [vmem:[#allocation4 + $0x328] sm:$0x11]
      %v2262 = vld [vmem:[#allocation4 + $0x330] sm:$0x11]
      %v2263 = vld [vmem:[#allocation4 + $0x338] sm:$0x1]
      %v2264 = vld [vmem:[%s3] sm:$0xf]
      %v2265 = vld [vmem:[%s3 + $0x4] sm:$0xf]
      %v2266 = vld [vmem:[%s3 + $0x8] sm:$0xf]
      %v2267 = vld [vmem:[%s3 + $0xc] sm:$0xf]
      %v2268 = vld [vmem:[%s3 + $0x10] sm:$0xf]
      %v2269 = vld [vmem:[%s3 + $0x14] sm:$0xf]
      %v2270 = vld [vmem:[%s3 + $0x18] sm:$0xf]
      %v2271 = vld [vmem:[%s3 + $0x1c] sm:$0xf]
      %v2272 = vld [vmem:[%s3 + $0x20] sm:$0xf]
      %v2273 = vld [vmem:[%s3 + $0x24] sm:$0xf]
      %v2274 = vld [vmem:[%s3 + $0x28] sm:$0xf]
      %v2275 = vld [vmem:[%s3 + $0x2c] sm:$0xf]
      %v2276 = vld [vmem:[%s3 + $0x30] sm:$0xf]
      %v2277 = vld [vmem:[%s3 + $0x34] sm:$0xf]
      %v2278 = vld [vmem:[%s3 + $0x38] sm:$0xf]
      %v2279 = vld [vmem:[%s3 + $0x3c] sm:$0xf]
      %v2280 = vld [vmem:[%s3 + $0x40] sm:$0xf]
      %v2281 = vld [vmem:[%s3 + $0x44] sm:$0xf]
      %v2282 = vld [vmem:[%s3 + $0x48] sm:$0xf]
      %v2283 = vld [vmem:[%s3 + $0x4c] sm:$0xf]
      %v2284 = vld [vmem:[%s3 + $0x50] sm:$0xf]
      %v2285 = vld [vmem:[%s3 + $0x54] sm:$0xf]
      %v2286 = vld [vmem:[%s3 + $0x58] sm:$0xf]
      %v2287 = vld [vmem:[%s3 + $0x5c] sm:$0xf]
      %v2288 = vld [vmem:[%s3 + $0x60] sm:$0xf]
      %v2289 = vld [vmem:[%s3 + $0x64] sm:$0xf]
      %v2290 = vld [vmem:[%s3 + $0x68] sm:$0xf]
      %v2291 = vld [vmem:[%s3 + $0x6c] sm:$0xf]
      %v2292 = vld [vmem:[%s3 + $0x70] sm:$0xf]
      %v2293 = vld [vmem:[%s3 + $0x74] sm:$0xf]
      %v2294 = vld [vmem:[%s3 + $0x78] sm:$0xf]
      %v2295 = vld [vmem:[%s3 + $0x7c] sm:$0xf]
      %v2296 = vld [vmem:[%s3 + $0x80] sm:$0xf]
      %v2297 = vld [vmem:[%s3 + $0x84] sm:$0xf]
      %v2298 = vld [vmem:[%s3 + $0x88] sm:$0xf]
      %v2299 = vld [vmem:[%s3 + $0x8c] sm:$0xf]
      %v2300 = vld [vmem:[%s3 + $0x90] sm:$0xf]
      %v2301 = vld [vmem:[%s3 + $0x94] sm:$0xf]
      %v2302 = vld [vmem:[%s3 + $0x98] sm:$0xf]
      %v2303 = vld [vmem:[%s3 + $0x9c] sm:$0xf]
      %v2304 = vld [vmem:[%s3 + $0xa0] sm:$0xf]
      %v2305 = vld [vmem:[%s3 + $0xa4] sm:$0xf]
      %v2306 = vld [vmem:[%s3 + $0xa8] sm:$0xf]
      %v2307 = vld [vmem:[%s3 + $0xac] sm:$0xf]
      %v2308 = vld [vmem:[%s3 + $0xb0] sm:$0xf]
      %v2309 = vld [vmem:[%s3 + $0xb4] sm:$0xf]
      %v2310 = vld [vmem:[%s3 + $0xb8] sm:$0xf]
      %v2311 = vld [vmem:[%s3 + $0xbc] sm:$0xf]
      %v2312 = vld [vmem:[%s3 + $0xc0] sm:$0xf]
      %v2313 = vld [vmem:[%s3 + $0xc4] sm:$0xf]
      %v2314 = vld [vmem:[%s3 + $0xc8] sm:$0xf]
      %v2315 = vld [vmem:[%s3 + $0xcc] sm:$0xf]
      %v2316 = vld [vmem:[%s3 + $0xd0] sm:$0xf]
      %v2317 = vld [vmem:[%s3 + $0xd4] sm:$0xf]
      %v2318 = vld [vmem:[%s3 + $0xd8] sm:$0xf]
      %v2319 = vld [vmem:[%s3 + $0xdc] sm:$0xf]
      %v2320 = vld [vmem:[%s3 + $0xe0] sm:$0xf]
      %v2321 = vld [vmem:[%s3 + $0xe4] sm:$0xf]
      %v2322 = vld [vmem:[%s3 + $0xe8] sm:$0xf]
      %v2323 = vld [vmem:[%s3 + $0xec] sm:$0xf]
      %v2324 = vld [vmem:[%s3 + $0xf0] sm:$0xf]
      %v2325 = vld [vmem:[%s3 + $0xf4] sm:$0xf]
      %v2326 = vld [vmem:[%s3 + $0xf8] sm:$0xf]
      %v2327 = vld [vmem:[%s3 + $0xfc] sm:$0xf]
      %v2328 = vld [vmem:[%s3 + $0x100] sm:$0xf]
      %v2329 = vld [vmem:[%s3 + $0x104] sm:$0xf]
      %v2330 = vld [vmem:[%s3 + $0x108] sm:$0xf]
      %v2331 = vld [vmem:[%s3 + $0x10c] sm:$0xf]
      %v2332 = vld [vmem:[%s3 + $0x110] sm:$0xf]
      %v2333 = vld [vmem:[%s3 + $0x114] sm:$0xf]
      %v2334 = vld [vmem:[%s3 + $0x118] sm:$0xf]
      %v2335 = vld [vmem:[%s3 + $0x11c] sm:$0xf]
      %v2336 = vld [vmem:[%s3 + $0x120] sm:$0xf]
      %v2337 = vld [vmem:[%s3 + $0x124] sm:$0xf]
      %v2338 = vld [vmem:[%s3 + $0x128] sm:$0xf]
      %v2339 = vld [vmem:[%s3 + $0x12c] sm:$0xf]
      %v2340 = vld [vmem:[%s3 + $0x130] sm:$0xf]
      %v2341 = vld [vmem:[%s3 + $0x134] sm:$0xf]
      %v2342 = vld [vmem:[%s3 + $0x138] sm:$0xf]
      %v2343 = vld [vmem:[%s3 + $0x13c] sm:$0xf]
      %v2344 = vld [vmem:[%s3 + $0x140] sm:$0xf]
      %v2345 = vld [vmem:[%s3 + $0x144] sm:$0xf]
      %v2346 = vld [vmem:[%s3 + $0x148] sm:$0xf]
      %v2347 = vld [vmem:[%s3 + $0x14c] sm:$0xf]
      %v2348 = vld [vmem:[%s3 + $0x150] sm:$0xf]
      %v2349 = vld [vmem:[%s3 + $0x154] sm:$0xf]
      %v2350 = vld [vmem:[%s3 + $0x158] sm:$0xf]
      %v2351 = vld [vmem:[%s3 + $0x15c] sm:$0xf]
      %v2352 = vld [vmem:[%s3 + $0x160] sm:$0xf]
      %v2353 = vld [vmem:[%s3 + $0x164] sm:$0xf]
      %v2354 = vld [vmem:[%s3 + $0x168] sm:$0xf]
      %v2355 = vld [vmem:[%s3 + $0x16c] sm:$0xf]
      %v2356 = vld [vmem:[%s3 + $0x170] sm:$0xf]
      %v2357 = vld [vmem:[%s3 + $0x174] sm:$0xf]
      %v2358 = vld [vmem:[%s3 + $0x178] sm:$0xf]
      %v2359 = vld [vmem:[%s3 + $0x17c] sm:$0xf]
      %v2360 = vld [vmem:[%s3 + $0x180] sm:$0xf]
      %v2361 = vld [vmem:[%s3 + $0x184] sm:$0xf]
      %v2362 = vld [vmem:[%s3 + $0x188] sm:$0xf]
      %v2363 = vld [vmem:[%s3 + $0x18c] sm:$0xf]
      %v2364 = vld [vmem:[%s3 + $0x190] sm:$0xf]
      %v2365 = vld [vmem:[%s3 + $0x194] sm:$0xf]
      %v2366 = vld [vmem:[%s3 + $0x198] sm:$0xf]
      %v2367 = vld [vmem:[%s3 + $0x19c] sm:$0xf]
      %v2368 = vld [vmem:[%s3 + $0x1a0] sm:$0xf]
      %v2369 = vld [vmem:[%s3 + $0x1a4] sm:$0xf]
      %v2370 = vld [vmem:[%s3 + $0x1a8] sm:$0xf]
      %v2371 = vld [vmem:[%s3 + $0x1ac] sm:$0xf]
      %v2372 = vld [vmem:[%s3 + $0x1b0] sm:$0xf]
      %v2373 = vld [vmem:[%s3 + $0x1b4] sm:$0xf]
      %v2374 = vld [vmem:[%s3 + $0x1b8] sm:$0xf]
      %v2375 = vld [vmem:[%s3 + $0x1bc] sm:$0xf]
      %v2376 = vld [vmem:[%s3 + $0x1c0] sm:$0xf]
      %v2377 = vld [vmem:[%s3 + $0x1c4] sm:$0xf]
      %v2378 = vld [vmem:[%s3 + $0x1c8] sm:$0xf]
      %v2379 = vld [vmem:[%s3 + $0x1cc] sm:$0xf]
      %v2380 = vld [vmem:[%s3 + $0x1d0] sm:$0xf]
      %v2381 = vld [vmem:[%s3 + $0x1d4] sm:$0xf]
      %v2382 = vld [vmem:[%s3 + $0x1d8] sm:$0xf]
      %v2383 = vld [vmem:[%s3 + $0x1dc] sm:$0xf]
      %v2384 = vld [vmem:[%s3 + $0x1e0] sm:$0xf]
      %v2385 = vld [vmem:[%s3 + $0x1e4] sm:$0xf]
      %v2386 = vld [vmem:[%s3 + $0x1e8] sm:$0xf]
      %v2387 = vld [vmem:[%s3 + $0x1ec] sm:$0xf]
      %v2388 = vld [vmem:[%s3 + $0x1f0] sm:$0xf]
      %v2389 = vld [vmem:[%s3 + $0x1f4] sm:$0xf]
      %v2390 = vld [vmem:[%s3 + $0x1f8] sm:$0xf]
      %v2391 = vld [vmem:[%s3 + $0x1fc] sm:$0xf]
      %v2392 = vld [vmem:[%s3 + $0x200] sm:$0xf]
      %v2393 = vld [vmem:[%s3 + $0x204] sm:$0xf]
      %v2394 = vld [vmem:[%s3 + $0x208] sm:$0xf]
      %v2395 = vld [vmem:[%s3 + $0x20c] sm:$0xf]
      %v2396 = vld [vmem:[%s3 + $0x210] sm:$0xf]
      %v2397 = vld [vmem:[%s3 + $0x214] sm:$0xf]
      %v2398 = vld [vmem:[%s3 + $0x218] sm:$0xf]
      %v2399 = vld [vmem:[%s3 + $0x21c] sm:$0xf]
      %v2400 = vld [vmem:[%s3 + $0x220] sm:$0xf]
      %v2401 = vld [vmem:[%s3 + $0x224] sm:$0xf]
      %v2402 = vld [vmem:[%s3 + $0x228] sm:$0xf]
      %v2403 = vld [vmem:[%s3 + $0x22c] sm:$0xf]
      %v2404 = vld [vmem:[%s3 + $0x230] sm:$0xf]
      %v2405 = vld [vmem:[%s3 + $0x234] sm:$0xf]
      %v2406 = vld [vmem:[%s3 + $0x238] sm:$0xf]
      %v2407 = vld [vmem:[%s3 + $0x23c] sm:$0xf]
      %v2408 = vld [vmem:[%s4] sm:$0x1]
      %v2410 = vlaneseq
      %v2411 = vshrl.u32 %v2410, 7
      %v2412 = vsub.s32 0, %v2411
      %v2413 = vrot.slane %v2408, %v2412
      %v2530 = vunpack.c.l.b16 %v2149
      %v2531 = vunpack.c.h.b16 %v2149
      %v2532 = vunpack.c.l.b16 %v2150
      %v2533 = vunpack.c.h.b16 %v2150
      %v2534 = vunpack.c.l.b16 %v2151
      %v2535 = vunpack.c.h.b16 %v2151
      %v2536 = vunpack.c.l.b16 %v2152
      %v2537 = vunpack.c.h.b16 %v2152
      %v2538 = vunpack.c.l.b16 %v2153
      %v2539 = vunpack.c.l.b16 %v2154
      %v2540 = vunpack.c.h.b16 %v2154
      %v2541 = vunpack.c.l.b16 %v2155
      %v2542 = vunpack.c.h.b16 %v2155
      %v2543 = vunpack.c.l.b16 %v2156
      %v2544 = vunpack.c.h.b16 %v2156
      %v2545 = vunpack.c.l.b16 %v2157
      %v2546 = vunpack.c.h.b16 %v2157
      %v2547 = vunpack.c.l.b16 %v2158
      %v2548 = vunpack.c.l.b16 %v2159
      %v2549 = vunpack.c.h.b16 %v2159
      %v2550 = vunpack.c.l.b16 %v2160
      %v2551 = vunpack.c.h.b16 %v2160
      %v2552 = vunpack.c.l.b16 %v2161
      %v2553 = vunpack.c.h.b16 %v2161
      %v2554 = vunpack.c.l.b16 %v2162
      %v2555 = vunpack.c.h.b16 %v2162
      %v2556 = vunpack.c.l.b16 %v2163
      %v2557 = vunpack.c.l.b16 %v2164
      %v2558 = vunpack.c.h.b16 %v2164
      %v2559 = vunpack.c.l.b16 %v2165
      %v2560 = vunpack.c.h.b16 %v2165
      %v2561 = vunpack.c.l.b16 %v2166
      %v2562 = vunpack.c.h.b16 %v2166
      %v2563 = vunpack.c.l.b16 %v2167
      %v2564 = vunpack.c.h.b16 %v2167
      %v2565 = vunpack.c.l.b16 %v2168
      %v2566 = vunpack.c.l.b16 %v2169
      %v2567 = vunpack.c.h.b16 %v2169
      %v2568 = vunpack.c.l.b16 %v2170
      %v2569 = vunpack.c.h.b16 %v2170
      %v2570 = vunpack.c.l.b16 %v2171
      %v2571 = vunpack.c.h.b16 %v2171
      %v2572 = vunpack.c.l.b16 %v2172
      %v2573 = vunpack.c.h.b16 %v2172
      %v2574 = vunpack.c.l.b16 %v2173
      %v2575 = vunpack.c.l.b16 %v2174
      %v2576 = vunpack.c.h.b16 %v2174
      %v2577 = vunpack.c.l.b16 %v2175
      %v2578 = vunpack.c.h.b16 %v2175
      %v2579 = vunpack.c.l.b16 %v2176
      %v2580 = vunpack.c.h.b16 %v2176
      %v2581 = vunpack.c.l.b16 %v2177
      %v2582 = vunpack.c.h.b16 %v2177
      %v2583 = vunpack.c.l.b16 %v2178
      %v2584 = vunpack.c.l.b16 %v2179
      %v2585 = vunpack.c.h.b16 %v2179
      %v2586 = vunpack.c.l.b16 %v2180
      %v2587 = vunpack.c.h.b16 %v2180
      %v2588 = vunpack.c.l.b16 %v2181
      %v2589 = vunpack.c.h.b16 %v2181
      %v2590 = vunpack.c.l.b16 %v2182
      %v2591 = vunpack.c.h.b16 %v2182
      %v2592 = vunpack.c.l.b16 %v2183
      %v2593 = vunpack.c.l.b16 %v2184
      %v2594 = vunpack.c.h.b16 %v2184
      %v2595 = vunpack.c.l.b16 %v2185
      %v2596 = vunpack.c.h.b16 %v2185
      %v2597 = vunpack.c.l.b16 %v2186
      %v2598 = vunpack.c.h.b16 %v2186
      %v2599 = vunpack.c.l.b16 %v2187
      %v2600 = vunpack.c.h.b16 %v2187
      %v2601 = vunpack.c.l.b16 %v2188
      %v2602 = vunpack.c.l.b16 %v2189
      %v2603 = vunpack.c.h.b16 %v2189
      %v2604 = vunpack.c.l.b16 %v2190
      %v2605 = vunpack.c.h.b16 %v2190
      %v2606 = vunpack.c.l.b16 %v2191
      %v2607 = vunpack.c.h.b16 %v2191
      %v2608 = vunpack.c.l.b16 %v2192
      %v2609 = vunpack.c.h.b16 %v2192
      %v2610 = vunpack.c.l.b16 %v2193
      %v2611 = vunpack.c.l.b16 %v2194
      %v2612 = vunpack.c.h.b16 %v2194
      %v2613 = vunpack.c.l.b16 %v2195
      %v2614 = vunpack.c.h.b16 %v2195
      %v2615 = vunpack.c.l.b16 %v2196
      %v2616 = vunpack.c.h.b16 %v2196
      %v2617 = vunpack.c.l.b16 %v2197
      %v2618 = vunpack.c.h.b16 %v2197
      %v2619 = vunpack.c.l.b16 %v2198
      %v2620 = vunpack.c.l.b16 %v2199
      %v2621 = vunpack.c.h.b16 %v2199
      %v2622 = vunpack.c.l.b16 %v2200
      %v2623 = vunpack.c.h.b16 %v2200
      %v2624 = vunpack.c.l.b16 %v2201
      %v2625 = vunpack.c.h.b16 %v2201
      %v2626 = vunpack.c.l.b16 %v2202
      %v2627 = vunpack.c.h.b16 %v2202
      %v2628 = vunpack.c.l.b16 %v2203
      %v2629 = vunpack.c.l.b16 %v2204
      %v2630 = vunpack.c.h.b16 %v2204
      %v2631 = vunpack.c.l.b16 %v2205
      %v2632 = vunpack.c.h.b16 %v2205
      %v2633 = vunpack.c.l.b16 %v2206
      %v2634 = vunpack.c.h.b16 %v2206
      %v2635 = vunpack.c.l.b16 %v2207
      %v2636 = vunpack.c.h.b16 %v2207
      %v2637 = vunpack.c.l.b16 %v2208
      %v2638 = vunpack.c.l.b16 %v2209
      %v2639 = vunpack.c.h.b16 %v2209
      %v2640 = vunpack.c.l.b16 %v2210
      %v2641 = vunpack.c.h.b16 %v2210
      %v2642 = vunpack.c.l.b16 %v2211
      %v2643 = vunpack.c.h.b16 %v2211
      %v2644 = vunpack.c.l.b16 %v2212
      %v2645 = vunpack.c.h.b16 %v2212
      %v2646 = vunpack.c.l.b16 %v2213
      %v2647 = vunpack.c.l.b16 %v2214
      %v2648 = vunpack.c.h.b16 %v2214
      %v2649 = vunpack.c.l.b16 %v2215
      %v2650 = vunpack.c.h.b16 %v2215
      %v2651 = vunpack.c.l.b16 %v2216
      %v2652 = vunpack.c.h.b16 %v2216
      %v2653 = vunpack.c.l.b16 %v2217
      %v2654 = vunpack.c.h.b16 %v2217
      %v2655 = vunpack.c.l.b16 %v2218
      %v2656 = vunpack.c.l.b16 %v2219
      %v2657 = vunpack.c.h.b16 %v2219
      %v2658 = vunpack.c.l.b16 %v2220
      %v2659 = vunpack.c.h.b16 %v2220
      %v2660 = vunpack.c.l.b16 %v2221
      %v2661 = vunpack.c.h.b16 %v2221
      %v2662 = vunpack.c.l.b16 %v2222
      %v2663 = vunpack.c.h.b16 %v2222
      %v2664 = vunpack.c.l.b16 %v2223
      %v2665 = vunpack.c.l.b16 %v2224
      %v2666 = vunpack.c.h.b16 %v2224
      %v2667 = vunpack.c.l.b16 %v2225
      %v2668 = vunpack.c.h.b16 %v2225
      %v2669 = vunpack.c.l.b16 %v2226
      %v2670 = vunpack.c.h.b16 %v2226
      %v2671 = vunpack.c.l.b16 %v2227
      %v2672 = vunpack.c.h.b16 %v2227
      %v2673 = vunpack.c.l.b16 %v2228
      %v2674 = vunpack.c.l.b16 %v2229
      %v2675 = vunpack.c.h.b16 %v2229
      %v2676 = vunpack.c.l.b16 %v2230
      %v2677 = vunpack.c.h.b16 %v2230
      %v2678 = vunpack.c.l.b16 %v2231
      %v2679 = vunpack.c.h.b16 %v2231
      %v2680 = vunpack.c.l.b16 %v2232
      %v2681 = vunpack.c.h.b16 %v2232
      %v2682 = vunpack.c.l.b16 %v2233
      %v2683 = vunpack.c.l.b16 %v2234
      %v2684 = vunpack.c.h.b16 %v2234
      %v2685 = vunpack.c.l.b16 %v2235
      %v2686 = vunpack.c.h.b16 %v2235
      %v2687 = vunpack.c.l.b16 %v2236
      %v2688 = vunpack.c.h.b16 %v2236
      %v2689 = vunpack.c.l.b16 %v2237
      %v2690 = vunpack.c.h.b16 %v2237
      %v2691 = vunpack.c.l.b16 %v2238
      %v2692 = vunpack.c.l.b16 %v2239
      %v2693 = vunpack.c.h.b16 %v2239
      %v2694 = vunpack.c.l.b16 %v2240
      %v2695 = vunpack.c.h.b16 %v2240
      %v2696 = vunpack.c.l.b16 %v2241
      %v2697 = vunpack.c.h.b16 %v2241
      %v2698 = vunpack.c.l.b16 %v2242
      %v2699 = vunpack.c.h.b16 %v2242
      %v2700 = vunpack.c.l.b16 %v2243
      %v2701 = vunpack.c.l.b16 %v2244
      %v2702 = vunpack.c.h.b16 %v2244
      %v2703 = vunpack.c.l.b16 %v2245
      %v2704 = vunpack.c.h.b16 %v2245
      %v2705 = vunpack.c.l.b16 %v2246
      %v2706 = vunpack.c.h.b16 %v2246
      %v2707 = vunpack.c.l.b16 %v2247
      %v2708 = vunpack.c.h.b16 %v2247
      %v2709 = vunpack.c.l.b16 %v2248
      %v2710 = vunpack.c.l.b16 %v2249
      %v2711 = vunpack.c.h.b16 %v2249
      %v2712 = vunpack.c.l.b16 %v2250
      %v2713 = vunpack.c.h.b16 %v2250
      %v2714 = vunpack.c.l.b16 %v2251
      %v2715 = vunpack.c.h.b16 %v2251
      %v2716 = vunpack.c.l.b16 %v2252
      %v2717 = vunpack.c.h.b16 %v2252
      %v2718 = vunpack.c.l.b16 %v2253
      %v2719 = vunpack.c.l.b16 %v2254
      %v2720 = vunpack.c.h.b16 %v2254
      %v2721 = vunpack.c.l.b16 %v2255
      %v2722 = vunpack.c.h.b16 %v2255
      %v2723 = vunpack.c.l.b16 %v2256
      %v2724 = vunpack.c.h.b16 %v2256
      %v2725 = vunpack.c.l.b16 %v2257
      %v2726 = vunpack.c.h.b16 %v2257
      %v2727 = vunpack.c.l.b16 %v2258
      %v2728 = vunpack.c.l.b16 %v2259
      %v2729 = vunpack.c.h.b16 %v2259
      %v2730 = vunpack.c.l.b16 %v2260
      %v2731 = vunpack.c.h.b16 %v2260
      %v2732 = vunpack.c.l.b16 %v2261
      %v2733 = vunpack.c.h.b16 %v2261
      %v2734 = vunpack.c.l.b16 %v2262
      %v2735 = vunpack.c.h.b16 %v2262
      %v2736 = vunpack.c.l.b16 %v2263
      %v2737 = vpack.c.b16 %v2539, %v2530
      %v2738 = vpack.c.b16 %v2540, %v2531
      %v2739 = vpack.c.b16 %v2541, %v2532
      %v2740 = vpack.c.b16 %v2542, %v2533
      %v2741 = vpack.c.b16 %v2543, %v2534
      %v2742 = vpack.c.b16 %v2544, %v2535
      %v2743 = vpack.c.b16 %v2545, %v2536
      %v2744 = vpack.c.b16 %v2546, %v2537
      %v2745 = vpack.c.b16 %v2547, %v2538
      %v2746 = vpack.c.b16 %v2557, %v2548
      %v2747 = vpack.c.b16 %v2558, %v2549
      %v2748 = vpack.c.b16 %v2559, %v2550
      %v2749 = vpack.c.b16 %v2560, %v2551
      %v2750 = vpack.c.b16 %v2561, %v2552
      %v2751 = vpack.c.b16 %v2562, %v2553
      %v2752 = vpack.c.b16 %v2563, %v2554
      %v2753 = vpack.c.b16 %v2564, %v2555
      %v2754 = vpack.c.b16 %v2565, %v2556
      %v2755 = vpack.c.b16 %v2575, %v2566
      %v2756 = vpack.c.b16 %v2576, %v2567
      %v2757 = vpack.c.b16 %v2577, %v2568
      %v2758 = vpack.c.b16 %v2578, %v2569
      %v2759 = vpack.c.b16 %v2579, %v2570
      %v2760 = vpack.c.b16 %v2580, %v2571
      %v2761 = vpack.c.b16 %v2581, %v2572
      %v2762 = vpack.c.b16 %v2582, %v2573
      %v2763 = vpack.c.b16 %v2583, %v2574
      %v2764 = vpack.c.b16 %v2593, %v2584
      %v2765 = vpack.c.b16 %v2594, %v2585
      %v2766 = vpack.c.b16 %v2595, %v2586
      %v2767 = vpack.c.b16 %v2596, %v2587
      %v2768 = vpack.c.b16 %v2597, %v2588
      %v2769 = vpack.c.b16 %v2598, %v2589
      %v2770 = vpack.c.b16 %v2599, %v2590
      %v2771 = vpack.c.b16 %v2600, %v2591
      %v2772 = vpack.c.b16 %v2601, %v2592
      %v2773 = vpack.c.b16 %v2611, %v2602
      %v2774 = vpack.c.b16 %v2612, %v2603
      %v2775 = vpack.c.b16 %v2613, %v2604
      %v2776 = vpack.c.b16 %v2614, %v2605
      %v2777 = vpack.c.b16 %v2615, %v2606
      %v2778 = vpack.c.b16 %v2616, %v2607
      %v2779 = vpack.c.b16 %v2617, %v2608
      %v2780 = vpack.c.b16 %v2618, %v2609
      %v2781 = vpack.c.b16 %v2619, %v2610
      %v2782 = vpack.c.b16 %v2629, %v2620
      %v2783 = vpack.c.b16 %v2630, %v2621
      %v2784 = vpack.c.b16 %v2631, %v2622
      %v2785 = vpack.c.b16 %v2632, %v2623
      %v2786 = vpack.c.b16 %v2633, %v2624
      %v2787 = vpack.c.b16 %v2634, %v2625
      %v2788 = vpack.c.b16 %v2635, %v2626
      %v2789 = vpack.c.b16 %v2636, %v2627
      %v2790 = vpack.c.b16 %v2637, %v2628
      %v2791 = vpack.c.b16 %v2647, %v2638
      %v2792 = vpack.c.b16 %v2648, %v2639
      %v2793 = vpack.c.b16 %v2649, %v2640
      %v2794 = vpack.c.b16 %v2650, %v2641
      %v2795 = vpack.c.b16 %v2651, %v2642
      %v2796 = vpack.c.b16 %v2652, %v2643
      %v2797 = vpack.c.b16 %v2653, %v2644
      %v2798 = vpack.c.b16 %v2654, %v2645
      %v2799 = vpack.c.b16 %v2655, %v2646
      %v2800 = vpack.c.b16 %v2665, %v2656
      %v2801 = vpack.c.b16 %v2666, %v2657
      %v2802 = vpack.c.b16 %v2667, %v2658
      %v2803 = vpack.c.b16 %v2668, %v2659
      %v2804 = vpack.c.b16 %v2669, %v2660
      %v2805 = vpack.c.b16 %v2670, %v2661
      %v2806 = vpack.c.b16 %v2671, %v2662
      %v2807 = vpack.c.b16 %v2672, %v2663
      %v2808 = vpack.c.b16 %v2673, %v2664
      %v2809 = vpack.c.b16 %v2683, %v2674
      %v2810 = vpack.c.b16 %v2684, %v2675
      %v2811 = vpack.c.b16 %v2685, %v2676
      %v2812 = vpack.c.b16 %v2686, %v2677
      %v2813 = vpack.c.b16 %v2687, %v2678
      %v2814 = vpack.c.b16 %v2688, %v2679
      %v2815 = vpack.c.b16 %v2689, %v2680
      %v2816 = vpack.c.b16 %v2690, %v2681
      %v2817 = vpack.c.b16 %v2691, %v2682
      %v2818 = vpack.c.b16 %v2701, %v2692
      %v2819 = vpack.c.b16 %v2702, %v2693
      %v2820 = vpack.c.b16 %v2703, %v2694
      %v2821 = vpack.c.b16 %v2704, %v2695
      %v2822 = vpack.c.b16 %v2705, %v2696
      %v2823 = vpack.c.b16 %v2706, %v2697
      %v2824 = vpack.c.b16 %v2707, %v2698
      %v2825 = vpack.c.b16 %v2708, %v2699
      %v2826 = vpack.c.b16 %v2709, %v2700
      %v2827 = vpack.c.b16 %v2719, %v2710
      %v2828 = vpack.c.b16 %v2720, %v2711
      %v2829 = vpack.c.b16 %v2721, %v2712
      %v2830 = vpack.c.b16 %v2722, %v2713
      %v2831 = vpack.c.b16 %v2723, %v2714
      %v2832 = vpack.c.b16 %v2724, %v2715
      %v2833 = vpack.c.b16 %v2725, %v2716
      %v2834 = vpack.c.b16 %v2726, %v2717
      %v2835 = vpack.c.b16 %v2727, %v2718
      %v2836 = vpack.c.b16 %v2728, %v2728
      %v2837 = vpack.c.b16 %v2729, %v2729
      %v2838 = vpack.c.b16 %v2730, %v2730
      %v2839 = vpack.c.b16 %v2731, %v2731
      %v2840 = vpack.c.b16 %v2732, %v2732
      %v2841 = vpack.c.b16 %v2733, %v2733
      %v2842 = vpack.c.b16 %v2734, %v2734
      %v2843 = vpack.c.b16 %v2735, %v2735
      %v2844 = vpack.c.b16 %v2736, %v2736
      %v3097 = vunpack.c.l.b16 %v2264
      %v3098 = vunpack.c.l.b16 %v2265
      %v3099 = vunpack.c.l.b16 %v2266
      %v3100 = vunpack.c.l.b16 %v2267
      %v3101 = vunpack.c.l.b16 %v2268
      %v3102 = vunpack.c.l.b16 %v2269
      %v3103 = vunpack.c.l.b16 %v2270
      %v3104 = vunpack.c.l.b16 %v2271
      %v3105 = vunpack.c.l.b16 %v2272
      %v3106 = vunpack.c.l.b16 %v2273
      %v3107 = vunpack.c.l.b16 %v2274
      %v3108 = vunpack.c.l.b16 %v2275
      %v3109 = vunpack.c.l.b16 %v2276
      %v3110 = vunpack.c.l.b16 %v2277
      %v3111 = vunpack.c.l.b16 %v2278
      %v3112 = vunpack.c.l.b16 %v2279
      %v3113 = vunpack.c.l.b16 %v2280
      %v3114 = vunpack.c.l.b16 %v2281
      %v3115 = vunpack.c.l.b16 %v2282
      %v3116 = vunpack.c.l.b16 %v2283
      %v3117 = vunpack.c.l.b16 %v2284
      %v3118 = vunpack.c.l.b16 %v2285
      %v3119 = vunpack.c.l.b16 %v2286
      %v3120 = vunpack.c.l.b16 %v2287
      %v3121 = vunpack.c.l.b16 %v2288
      %v3122 = vunpack.c.l.b16 %v2289
      %v3123 = vunpack.c.l.b16 %v2290
      %v3124 = vunpack.c.l.b16 %v2291
      %v3125 = vunpack.c.l.b16 %v2292
      %v3126 = vunpack.c.l.b16 %v2293
      %v3127 = vunpack.c.l.b16 %v2294
      %v3128 = vunpack.c.l.b16 %v2295
      %v3129 = vunpack.c.l.b16 %v2296
      %v3130 = vunpack.c.l.b16 %v2297
      %v3131 = vunpack.c.l.b16 %v2298
      %v3132 = vunpack.c.l.b16 %v2299
      %v3133 = vunpack.c.l.b16 %v2300
      %v3134 = vunpack.c.l.b16 %v2301
      %v3135 = vunpack.c.l.b16 %v2302
      %v3136 = vunpack.c.l.b16 %v2303
      %v3137 = vunpack.c.l.b16 %v2304
      %v3138 = vunpack.c.l.b16 %v2305
      %v3139 = vunpack.c.l.b16 %v2306
      %v3140 = vunpack.c.l.b16 %v2307
      %v3141 = vunpack.c.l.b16 %v2308
      %v3142 = vunpack.c.l.b16 %v2309
      %v3143 = vunpack.c.l.b16 %v2310
      %v3144 = vunpack.c.l.b16 %v2311
      %v3145 = vunpack.c.l.b16 %v2312
      %v3146 = vunpack.c.l.b16 %v2313
      %v3147 = vunpack.c.l.b16 %v2314
      %v3148 = vunpack.c.l.b16 %v2315
      %v3149 = vunpack.c.l.b16 %v2316
      %v3150 = vunpack.c.l.b16 %v2317
      %v3151 = vunpack.c.l.b16 %v2318
      %v3152 = vunpack.c.l.b16 %v2319
      %v3153 = vunpack.c.l.b16 %v2320
      %v3154 = vunpack.c.l.b16 %v2321
      %v3155 = vunpack.c.l.b16 %v2322
      %v3156 = vunpack.c.l.b16 %v2323
      %v3157 = vunpack.c.l.b16 %v2324
      %v3158 = vunpack.c.l.b16 %v2325
      %v3159 = vunpack.c.l.b16 %v2326
      %v3160 = vunpack.c.l.b16 %v2327
      %v3161 = vunpack.c.l.b16 %v2328
      %v3162 = vunpack.c.l.b16 %v2329
      %v3163 = vunpack.c.l.b16 %v2330
      %v3164 = vunpack.c.l.b16 %v2331
      %v3165 = vunpack.c.l.b16 %v2332
      %v3166 = vunpack.c.l.b16 %v2333
      %v3167 = vunpack.c.l.b16 %v2334
      %v3168 = vunpack.c.l.b16 %v2335
      %v3169 = vunpack.c.l.b16 %v2336
      %v3170 = vunpack.c.l.b16 %v2337
      %v3171 = vunpack.c.l.b16 %v2338
      %v3172 = vunpack.c.l.b16 %v2339
      %v3173 = vunpack.c.l.b16 %v2340
      %v3174 = vunpack.c.l.b16 %v2341
      %v3175 = vunpack.c.l.b16 %v2342
      %v3176 = vunpack.c.l.b16 %v2343
      %v3177 = vunpack.c.l.b16 %v2344
      %v3178 = vunpack.c.l.b16 %v2345
      %v3179 = vunpack.c.l.b16 %v2346
      %v3180 = vunpack.c.l.b16 %v2347
      %v3181 = vunpack.c.l.b16 %v2348
      %v3182 = vunpack.c.l.b16 %v2349
      %v3183 = vunpack.c.l.b16 %v2350
      %v3184 = vunpack.c.l.b16 %v2351
      %v3185 = vunpack.c.l.b16 %v2352
      %v3186 = vunpack.c.l.b16 %v2353
      %v3187 = vunpack.c.l.b16 %v2354
      %v3188 = vunpack.c.l.b16 %v2355
      %v3189 = vunpack.c.l.b16 %v2356
      %v3190 = vunpack.c.l.b16 %v2357
      %v3191 = vunpack.c.l.b16 %v2358
      %v3192 = vunpack.c.l.b16 %v2359
      %v3193 = vunpack.c.l.b16 %v2360
      %v3194 = vunpack.c.l.b16 %v2361
      %v3195 = vunpack.c.l.b16 %v2362
      %v3196 = vunpack.c.l.b16 %v2363
      %v3197 = vunpack.c.l.b16 %v2364
      %v3198 = vunpack.c.l.b16 %v2365
      %v3199 = vunpack.c.l.b16 %v2366
      %v3200 = vunpack.c.l.b16 %v2367
      %v3201 = vunpack.c.l.b16 %v2368
      %v3202 = vunpack.c.l.b16 %v2369
      %v3203 = vunpack.c.l.b16 %v2370
      %v3204 = vunpack.c.l.b16 %v2371
      %v3205 = vunpack.c.l.b16 %v2372
      %v3206 = vunpack.c.l.b16 %v2373
      %v3207 = vunpack.c.l.b16 %v2374
      %v3208 = vunpack.c.l.b16 %v2375
      %v3209 = vunpack.c.l.b16 %v2376
      %v3210 = vunpack.c.l.b16 %v2377
      %v3211 = vunpack.c.l.b16 %v2378
      %v3212 = vunpack.c.l.b16 %v2379
      %v3213 = vunpack.c.l.b16 %v2380
      %v3214 = vunpack.c.l.b16 %v2381
      %v3215 = vunpack.c.l.b16 %v2382
      %v3216 = vunpack.c.l.b16 %v2383
      %v3217 = vunpack.c.l.b16 %v2384
      %v3218 = vunpack.c.l.b16 %v2385
      %v3219 = vunpack.c.l.b16 %v2386
      %v3220 = vunpack.c.l.b16 %v2387
      %v3221 = vunpack.c.l.b16 %v2388
      %v3222 = vunpack.c.l.b16 %v2389
      %v3223 = vunpack.c.l.b16 %v2390
      %v3224 = vunpack.c.l.b16 %v2391
      %v3225 = vunpack.c.l.b16 %v2392
      %v3226 = vunpack.c.l.b16 %v2393
      %v3227 = vunpack.c.l.b16 %v2394
      %v3228 = vunpack.c.l.b16 %v2395
      %v3229 = vunpack.c.l.b16 %v2396
      %v3230 = vunpack.c.l.b16 %v2397
      %v3231 = vunpack.c.l.b16 %v2398
      %v3232 = vunpack.c.l.b16 %v2399
      %v3233 = vunpack.c.l.b16 %v2400
      %v3234 = vunpack.c.l.b16 %v2401
      %v3235 = vunpack.c.l.b16 %v2402
      %v3236 = vunpack.c.l.b16 %v2403
      %v3237 = vunpack.c.l.b16 %v2404
      %v3238 = vunpack.c.l.b16 %v2405
      %v3239 = vunpack.c.l.b16 %v2406
      %v3240 = vunpack.c.l.b16 %v2407
      %v3241 = vpack.c.b16 %v3098, %v3097
      %v3242 = vpack.c.b16 %v3100, %v3099
      %v3243 = vpack.c.b16 %v3102, %v3101
      %v3244 = vpack.c.b16 %v3104, %v3103
      %v3245 = vpack.c.b16 %v3106, %v3105
      %v3246 = vpack.c.b16 %v3108, %v3107
      %v3247 = vpack.c.b16 %v3110, %v3109
      %v3248 = vpack.c.b16 %v3112, %v3111
      %v3249 = vpack.c.b16 %v3114, %v3113
      %v3250 = vpack.c.b16 %v3116, %v3115
      %v3251 = vpack.c.b16 %v3118, %v3117
      %v3252 = vpack.c.b16 %v3120, %v3119
      %v3253 = vpack.c.b16 %v3122, %v3121
      %v3254 = vpack.c.b16 %v3124, %v3123
      %v3255 = vpack.c.b16 %v3126, %v3125
      %v3256 = vpack.c.b16 %v3128, %v3127
      %v3257 = vpack.c.b16 %v3130, %v3129
      %v3258 = vpack.c.b16 %v3132, %v3131
      %v3259 = vpack.c.b16 %v3134, %v3133
      %v3260 = vpack.c.b16 %v3136, %v3135
      %v3261 = vpack.c.b16 %v3138, %v3137
      %v3262 = vpack.c.b16 %v3140, %v3139
      %v3263 = vpack.c.b16 %v3142, %v3141
      %v3264 = vpack.c.b16 %v3144, %v3143
      %v3265 = vpack.c.b16 %v3146, %v3145
      %v3266 = vpack.c.b16 %v3148, %v3147
      %v3267 = vpack.c.b16 %v3150, %v3149
      %v3268 = vpack.c.b16 %v3152, %v3151
      %v3269 = vpack.c.b16 %v3154, %v3153
      %v3270 = vpack.c.b16 %v3156, %v3155
      %v3271 = vpack.c.b16 %v3158, %v3157
      %v3272 = vpack.c.b16 %v3160, %v3159
      %v3273 = vpack.c.b16 %v3162, %v3161
      %v3274 = vpack.c.b16 %v3164, %v3163
      %v3275 = vpack.c.b16 %v3166, %v3165
      %v3276 = vpack.c.b16 %v3168, %v3167
      %v3277 = vpack.c.b16 %v3170, %v3169
      %v3278 = vpack.c.b16 %v3172, %v3171
      %v3279 = vpack.c.b16 %v3174, %v3173
      %v3280 = vpack.c.b16 %v3176, %v3175
      %v3281 = vpack.c.b16 %v3178, %v3177
      %v3282 = vpack.c.b16 %v3180, %v3179
      %v3283 = vpack.c.b16 %v3182, %v3181
      %v3284 = vpack.c.b16 %v3184, %v3183
      %v3285 = vpack.c.b16 %v3186, %v3185
      %v3286 = vpack.c.b16 %v3188, %v3187
      %v3287 = vpack.c.b16 %v3190, %v3189
      %v3288 = vpack.c.b16 %v3192, %v3191
      %v3289 = vpack.c.b16 %v3194, %v3193
      %v3290 = vpack.c.b16 %v3196, %v3195
      %v3291 = vpack.c.b16 %v3198, %v3197
      %v3292 = vpack.c.b16 %v3200, %v3199
      %v3293 = vpack.c.b16 %v3202, %v3201
      %v3294 = vpack.c.b16 %v3204, %v3203
      %v3295 = vpack.c.b16 %v3206, %v3205
      %v3296 = vpack.c.b16 %v3208, %v3207
      %v3297 = vpack.c.b16 %v3210, %v3209
      %v3298 = vpack.c.b16 %v3212, %v3211
      %v3299 = vpack.c.b16 %v3214, %v3213
      %v3300 = vpack.c.b16 %v3216, %v3215
      %v3301 = vpack.c.b16 %v3218, %v3217
      %v3302 = vpack.c.b16 %v3220, %v3219
      %v3303 = vpack.c.b16 %v3222, %v3221
      %v3304 = vpack.c.b16 %v3224, %v3223
      %v3305 = vpack.c.b16 %v3226, %v3225
      %v3306 = vpack.c.b16 %v3228, %v3227
      %v3307 = vpack.c.b16 %v3230, %v3229
      %v3308 = vpack.c.b16 %v3232, %v3231
      %v3309 = vpack.c.b16 %v3234, %v3233
      %v3310 = vpack.c.b16 %v3236, %v3235
      %v3311 = vpack.c.b16 %v3238, %v3237
      %v3312 = vpack.c.b16 %v3240, %v3239
      %3385 = vmatprep.subr.bf16.mxu0 0
      %3386 = vmatpush1.bf16.msra.mxu0 %v3241
      %3387 = vmatprep.subr.bf16.mxu0 0
      %3388 = vmatpush1.bf16.msra.mxu0 %v3242
      %3389 = vmatprep.subr.bf16.mxu0 0
      %3390 = vmatpush1.bf16.msra.mxu0 %v3243
      %3391 = vmatprep.subr.bf16.mxu0 0
      %3392 = vmatpush1.bf16.msra.mxu0 %v3244
      %3393 = vmatprep.subr.bf16.mxu0 0
      %3394 = vmatpush1.bf16.msra.mxu0 %v3245
      %3395 = vmatprep.subr.bf16.mxu0 0
      %3396 = vmatpush1.bf16.msra.mxu0 %v3246
      %3397 = vmatprep.subr.bf16.mxu0 0
      %3398 = vmatpush1.bf16.msra.mxu0 %v3247
      %3399 = vmatprep.subr.bf16.mxu0 0
      %3400 = vmatpush1.bf16.msra.mxu0 %v3248
      %3401 = vmatprep.subr.bf16.mxu0 0
      %3402 = vmatpush1.bf16.msra.mxu0 %v3249
      %3403 = vmatprep.subr.bf16.mxu0 0
      %3404 = vmatpush1.bf16.msra.mxu0 %v3250
      %3405 = vmatprep.subr.bf16.mxu0 0
      %3406 = vmatpush1.bf16.msra.mxu0 %v3251
      %3407 = vmatprep.subr.bf16.mxu0 0
      %3408 = vmatpush1.bf16.msra.mxu0 %v3252
      %3409 = vmatprep.subr.bf16.mxu0 0
      %3410 = vmatpush1.bf16.msra.mxu0 %v3253
      %3411 = vmatprep.subr.bf16.mxu0 0
      %3412 = vmatpush1.bf16.msra.mxu0 %v3254
      %3413 = vmatprep.subr.bf16.mxu0 0
      %3414 = vmatpush1.bf16.msra.mxu0 %v3255
      %3415 = vmatprep.subr.bf16.mxu0 0
      %3416 = vmatpush1.bf16.msra.mxu0 %v3256
      %3417 = vmatprep.mubr.bf16.mxu0 %v2738
      %3418 = vmatmul.mubr.bf16.gmra.mrb[0].mxu0 %v2737
      %v3419 = vpop.f32.mrb[0].mxu0
      %v3420 = vadd.f32 %v2413, %v3419
      %v3421 = vpop.f32.mrb[0].mxu0
      %v3422 = vpop.f32.mrb[0].mxu0
      %v3423 = vadd.f32 %v2413, %v3422
      %v3424 = vpop.f32.mrb[0].mxu0
      %3425 = vmatprep.mubr.bf16.mxu0 %v2747
      %3426 = vmatmul.mubr.bf16.gmra.mrb[0].mxu0 %v2746
      %v3427 = vpop.f32.mrb[0].mxu0
      %v3428 = vadd.f32 %v2413, %v3427
      %v3429 = vpop.f32.mrb[0].mxu0
      %v3430 = vpop.f32.mrb[0].mxu0
      %v3431 = vadd.f32 %v2413, %v3430
      %v3432 = vpop.f32.mrb[0].mxu0
      %3433 = vmatprep.mubr.bf16.mxu0 %v2756
      %3434 = vmatmul.mubr.bf16.gmra.mrb[0].mxu0 %v2755
      %v3435 = vpop.f32.mrb[0].mxu0
      %v3436 = vadd.f32 %v2413, %v3435
      %v3437 = vpop.f32.mrb[0].mxu0
      %v3438 = vpop.f32.mrb[0].mxu0
      %v3439 = vadd.f32 %v2413, %v3438
      %v3440 = vpop.f32.mrb[0].mxu0
      %3441 = vmatprep.mubr.bf16.mxu0 %v2765
      %3442 = vmatmul.mubr.bf16.gmra.mrb[0].mxu0 %v2764
      %v3443 = vpop.f32.mrb[0].mxu0
      %v3444 = vadd.f32 %v2413, %v3443
      %v3445 = vpop.f32.mrb[0].mxu0
      %v3446 = vpop.f32.mrb[0].mxu0
      %v3447 = vadd.f32 %v2413, %v3446
      %v3448 = vpop.f32.mrb[0].mxu0
      %3449 = vmatprep.mubr.bf16.mxu0 %v2774
      %3450 = vmatmul.mubr.bf16.gmra.mrb[0].mxu0 %v2773
      %v3451 = vpop.f32.mrb[0].mxu0
      %v3452 = vadd.f32 %v2413, %v3451
      %v3453 = vpop.f32.mrb[0].mxu0
      %v3454 = vpop.f32.mrb[0].mxu0
      %v3455 = vadd.f32 %v2413, %v3454
      %v3456 = vpop.f32.mrb[0].mxu0
      %3457 = vmatprep.mubr.bf16.mxu0 %v2783
      %3458 = vmatmul.mubr.bf16.gmra.mrb[0].mxu0 %v2782
      %v3459 = vpop.f32.mrb[0].mxu0
      %v3460 = vadd.f32 %v2413, %v3459
      %v3461 = vpop.f32.mrb[0].mxu0
      %v3462 = vpop.f32.mrb[0].mxu0
      %v3463 = vadd.f32 %v2413, %v3462
      %v3464 = vpop.f32.mrb[0].mxu0
      %3465 = vmatprep.mubr.bf16.mxu0 %v2792
      %3466 = vmatmul.mubr.bf16.gmra.mrb[0].mxu0 %v2791
      %v3467 = vpop.f32.mrb[0].mxu0
      %v3468 = vadd.f32 %v2413, %v3467
      %v3469 = vpop.f32.mrb[0].mxu0
      %v3470 = vpop.f32.mrb[0].mxu0
      %v3471 = vadd.f32 %v2413, %v3470
      %v3472 = vpop.f32.mrb[0].mxu0
      %3473 = vmatprep.mubr.bf16.mxu0 %v2801
      %3474 = vmatmul.mubr.bf16.gmra.mrb[0].mxu0 %v2800
      %v3475 = vpop.f32.mrb[0].mxu0
      %v3476 = vadd.f32 %v2413, %v3475
      %v3477 = vpop.f32.mrb[0].mxu0
      %v3478 = vpop.f32.mrb[0].mxu0
      %v3479 = vadd.f32 %v2413, %v3478
      %v3480 = vpop.f32.mrb[0].mxu0
      %3481 = vmatprep.mubr.bf16.mxu0 %v2810
      %3482 = vmatmul.mubr.bf16.gmra.mrb[0].mxu0 %v2809
      %v3483 = vpop.f32.mrb[0].mxu0
      %v3484 = vadd.f32 %v2413, %v3483
      %v3485 = vpop.f32.mrb[0].mxu0
      %v3486 = vpop.f32.mrb[0].mxu0
      %v3487 = vadd.f32 %v2413, %v3486
      %v3488 = vpop.f32.mrb[0].mxu0
      %3489 = vmatprep.mubr.bf16.mxu0 %v2819
      %3490 = vmatmul.mubr.bf16.gmra.mrb[0].mxu0 %v2818
      %v3491 = vpop.f32.mrb[0].mxu0
      %v3492 = vadd.f32 %v2413, %v3491
      %v3493 = vpop.f32.mrb[0].mxu0
      %v3494 = vpop.f32.mrb[0].mxu0
      %v3495 = vadd.f32 %v2413, %v3494
      %v3496 = vpop.f32.mrb[0].mxu0
      %3497 = vmatprep.mubr.bf16.mxu0 %v2828
      %3498 = vmatmul.mubr.bf16.gmra.mrb[0].mxu0 %v2827
      %v3499 = vpop.f32.mrb[0].mxu0
      %v3500 = vadd.f32 %v2413, %v3499
      %v3501 = vpop.f32.mrb[0].mxu0
      %v3502 = vpop.f32.mrb[0].mxu0
      %v3503 = vadd.f32 %v2413, %v3502
      %v3504 = vpop.f32.mrb[0].mxu0
      %3505 = vmatprep.mubr.bf16.mxu0 %v2837
      %3506 = vmatmul.mubr.bf16.gmra.mrb[0].mxu0 %v2836
      %v3507 = vpop.f32.mrb[0].mxu0
      %v3508 = vadd.f32 %v2413, %v3507
      %v3509 = vpop.f32.mrb[0].mxu0
      %v3510 = vpop.f32.mrb[0].mxu0
      %v3511 = vpop.f32.mrb[0].mxu0
      %3512 = vdwg.mxu0
      %3513 = vmatprep.subr.bf16.mxu0 0
      %3514 = vmatpush1.bf16.msra.mxu0 %v3257
      %3515 = vmatprep.subr.bf16.mxu0 0
      %3516 = vmatpush1.bf16.msra.mxu0 %v3258
      %3517 = vmatprep.subr.bf16.mxu0 0
      %3518 = vmatpush1.bf16.msra.mxu0 %v3259
      %3519 = vmatprep.subr.bf16.mxu0 0
      %3520 = vmatpush1.bf16.msra.mxu0 %v3260
      %3521 = vmatprep.subr.bf16.mxu0 0
      %3522 = vmatpush1.bf16.msra.mxu0 %v3261
      %3523 = vmatprep.subr.bf16.mxu0 0
      %3524 = vmatpush1.bf16.msra.mxu0 %v3262
      %3525 = vmatprep.subr.bf16.mxu0 0
      %3526 = vmatpush1.bf16.msra.mxu0 %v3263
      %3527 = vmatprep.subr.bf16.mxu0 0
      %3528 = vmatpush1.bf16.msra.mxu0 %v3264
      %3529 = vmatprep.subr.bf16.mxu0 0
      %3530 = vmatpush1.bf16.msra.mxu0 %v3265
      %3531 = vmatprep.subr.bf16.mxu0 0
      %3532 = vmatpush1.bf16.msra.mxu0 %v3266
      %3533 = vmatprep.subr.bf16.mxu0 0
      %3534 = vmatpush1.bf16.msra.mxu0 %v3267
      %3535 = vmatprep.subr.bf16.mxu0 0
      %3536 = vmatpush1.bf16.msra.mxu0 %v3268
      %3537 = vmatprep.subr.bf16.mxu0 0
      %3538 = vmatpush1.bf16.msra.mxu0 %v3269
      %3539 = vmatprep.subr.bf16.mxu0 0
      %3540 = vmatpush1.bf16.msra.mxu0 %v3270
      %3541 = vmatprep.subr.bf16.mxu0 0
      %3542 = vmatpush1.bf16.msra.mxu0 %v3271
      %3543 = vmatprep.subr.bf16.mxu0 0
      %3544 = vmatpush1.bf16.msra.mxu0 %v3272
      %3545 = vmatprep.mubr.bf16.mxu0 %v2740
      %3546 = vmatmul.mubr.bf16.gmra.mrb[0].mxu0 %v2739
      %v3547 = vpop.f32.mrb[0].mxu0
      %v3548 = vadd.f32 %v3420, %v3547
      %v3549 = vpop.f32.mrb[0].mxu0
      %v3550 = vpop.f32.mrb[0].mxu0
      %v3551 = vadd.f32 %v3423, %v3550
      %v3552 = vpop.f32.mrb[0].mxu0
      %3553 = vmatprep.mubr.bf16.mxu0 %v2749
      %3554 = vmatmul.mubr.bf16.gmra.mrb[0].mxu0 %v2748
      %v3555 = vpop.f32.mrb[0].mxu0
      %v3556 = vadd.f32 %v3428, %v3555
      %v3557 = vpop.f32.mrb[0].mxu0
      %v3558 = vpop.f32.mrb[0].mxu0
      %v3559 = vadd.f32 %v3431, %v3558
      %v3560 = vpop.f32.mrb[0].mxu0
      %3561 = vmatprep.mubr.bf16.mxu0 %v2758
      %3562 = vmatmul.mubr.bf16.gmra.mrb[0].mxu0 %v2757
      %v3563 = vpop.f32.mrb[0].mxu0
      %v3564 = vadd.f32 %v3436, %v3563
      %v3565 = vpop.f32.mrb[0].mxu0
      %v3566 = vpop.f32.mrb[0].mxu0
      %v3567 = vadd.f32 %v3439, %v3566
      %v3568 = vpop.f32.mrb[0].mxu0
      %3569 = vmatprep.mubr.bf16.mxu0 %v2767
      %3570 = vmatmul.mubr.bf16.gmra.mrb[0].mxu0 %v2766
      %v3571 = vpop.f32.mrb[0].mxu0
      %v3572 = vadd.f32 %v3444, %v3571
      %v3573 = vpop.f32.mrb[0].mxu0
      %v3574 = vpop.f32.mrb[0].mxu0
      %v3575 = vadd.f32 %v3447, %v3574
      %v3576 = vpop.f32.mrb[0].mxu0
      %3577 = vmatprep.mubr.bf16.mxu0 %v2776
      %3578 = vmatmul.mubr.bf16.gmra.mrb[0].mxu0 %v2775
      %v3579 = vpop.f32.mrb[0].mxu0
      %v3580 = vadd.f32 %v3452, %v3579
      %v3581 = vpop.f32.mrb[0].mxu0
      %v3582 = vpop.f32.mrb[0].mxu0
      %v3583 = vadd.f32 %v3455, %v3582
      %v3584 = vpop.f32.mrb[0].mxu0
      %3585 = vmatprep.mubr.bf16.mxu0 %v2785
      %3586 = vmatmul.mubr.bf16.gmra.mrb[0].mxu0 %v2784
      %v3587 = vpop.f32.mrb[0].mxu0
      %v3588 = vadd.f32 %v3460, %v3587
      %v3589 = vpop.f32.mrb[0].mxu0
      %v3590 = vpop.f32.mrb[0].mxu0
      %v3591 = vadd.f32 %v3463, %v3590
      %v3592 = vpop.f32.mrb[0].mxu0
      %3593 = vmatprep.mubr.bf16.mxu0 %v2794
      %3594 = vmatmul.mubr.bf16.gmra.mrb[0].mxu0 %v2793
      %v3595 = vpop.f32.mrb[0].mxu0
      %v3596 = vadd.f32 %v3468, %v3595
      %v3597 = vpop.f32.mrb[0].mxu0
      %v3598 = vpop.f32.mrb[0].mxu0
      %v3599 = vadd.f32 %v3471, %v3598
      %v3600 = vpop.f32.mrb[0].mxu0
      %3601 = vmatprep.mubr.bf16.mxu0 %v2803
      %3602 = vmatmul.mubr.bf16.gmra.mrb[0].mxu0 %v2802
      %v3603 = vpop.f32.mrb[0].mxu0
      %v3604 = vadd.f32 %v3476, %v3603
      %v3605 = vpop.f32.mrb[0].mxu0
      %v3606 = vpop.f32.mrb[0].mxu0
      %v3607 = vadd.f32 %v3479, %v3606
      %v3608 = vpop.f32.mrb[0].mxu0
      %3609 = vmatprep.mubr.bf16.mxu0 %v2812
      %3610 = vmatmul.mubr.bf16.gmra.mrb[0].mxu0 %v2811
      %v3611 = vpop.f32.mrb[0].mxu0
      %v3612 = vadd.f32 %v3484, %v3611
      %v3613 = vpop.f32.mrb[0].mxu0
      %v3614 = vpop.f32.mrb[0].mxu0
      %v3615 = vadd.f32 %v3487, %v3614
      %v3616 = vpop.f32.mrb[0].mxu0
      %3617 = vmatprep.mubr.bf16.mxu0 %v2821
      %3618 = vmatmul.mubr.bf16.gmra.mrb[0].mxu0 %v2820
      %v3619 = vpop.f32.mrb[0].mxu0
      %v3620 = vadd.f32 %v3492, %v3619
      %v3621 = vpop.f32.mrb[0].mxu0
      %v3622 = vpop.f32.mrb[0].mxu0
      %v3623 = vadd.f32 %v3495, %v3622
      %v3624 = vpop.f32.mrb[0].mxu0
      %3625 = vmatprep.mubr.bf16.mxu0 %v2830
      %3626 = vmatmul.mubr.bf16.gmra.mrb[0].mxu0 %v2829
      %v3627 = vpop.f32.mrb[0].mxu0
      %v3628 = vadd.f32 %v3500, %v3627
      %v3629 = vpop.f32.mrb[0].mxu0
      %v3630 = vpop.f32.mrb[0].mxu0
      %v3631 = vadd.f32 %v3503, %v3630
      %v3632 = vpop.f32.mrb[0].mxu0
      %3633 = vmatprep.mubr.bf16.mxu0 %v2839
      %3634 = vmatmul.mubr.bf16.gmra.mrb[0].mxu0 %v2838
      %v3635 = vpop.f32.mrb[0].mxu0
      %v3636 = vadd.f32 %v3508, %v3635
      %v3637 = vpop.f32.mrb[0].mxu0
      %v3638 = vpop.f32.mrb[0].mxu0
      %v3639 = vpop.f32.mrb[0].mxu0
      %3640 = vdwg.mxu0
      %3641 = vmatprep.subr.bf16.mxu0 0
      %3642 = vmatpush1.bf16.msra.mxu0 %v3273
      %3643 = vmatprep.subr.bf16.mxu0 0
      %3644 = vmatpush1.bf16.msra.mxu0 %v3274
      %3645 = vmatprep.subr.bf16.mxu0 0
      %3646 = vmatpush1.bf16.msra.mxu0 %v3275
      %3647 = vmatprep.subr.bf16.mxu0 0
      %3648 = vmatpush1.bf16.msra.mxu0 %v3276
      %3649 = vmatprep.subr.bf16.mxu0 0
      %3650 = vmatpush1.bf16.msra.mxu0 %v3277
      %3651 = vmatprep.subr.bf16.mxu0 0
      %3652 = vmatpush1.bf16.msra.mxu0 %v3278
      %3653 = vmatprep.subr.bf16.mxu0 0
      %3654 = vmatpush1.bf16.msra.mxu0 %v3279
      %3655 = vmatprep.subr.bf16.mxu0 0
      %3656 = vmatpush1.bf16.msra.mxu0 %v3280
      %3657 = vmatprep.subr.bf16.mxu0 0
      %3658 = vmatpush1.bf16.msra.mxu0 %v3281
      %3659 = vmatprep.subr.bf16.mxu0 0
      %3660 = vmatpush1.bf16.msra.mxu0 %v3282
      %3661 = vmatprep.subr.bf16.mxu0 0
      %3662 = vmatpush1.bf16.msra.mxu0 %v3283
      %3663 = vmatprep.subr.bf16.mxu0 0
      %3664 = vmatpush1.bf16.msra.mxu0 %v3284
      %3665 = vmatprep.subr.bf16.mxu0 0
      %3666 = vmatpush1.bf16.msra.mxu0 %v3285
      %3667 = vmatprep.subr.bf16.mxu0 0
      %3668 = vmatpush1.bf16.msra.mxu0 %v3286
      %3669 = vmatprep.subr.bf16.mxu0 0
      %3670 = vmatpush1.bf16.msra.mxu0 %v3287
      %3671 = vmatprep.subr.bf16.mxu0 0
      %3672 = vmatpush1.bf16.msra.mxu0 %v3288
      %3673 = vmatprep.mubr.bf16.mxu0 %v2742
      %3674 = vmatmul.mubr.bf16.gmra.mrb[0].mxu0 %v2741
      %v3675 = vpop.f32.mrb[0].mxu0
      %v3676 = vadd.f32 %v3548, %v3675
      %v3677 = vpop.f32.mrb[0].mxu0
      %v3678 = vpop.f32.mrb[0].mxu0
      %v3679 = vadd.f32 %v3551, %v3678
      %v3680 = vpop.f32.mrb[0].mxu0
      %3681 = vmatprep.mubr.bf16.mxu0 %v2751
      %3682 = vmatmul.mubr.bf16.gmra.mrb[0].mxu0 %v2750
      %v3683 = vpop.f32.mrb[0].mxu0
      %v3684 = vadd.f32 %v3556, %v3683
      %v3685 = vpop.f32.mrb[0].mxu0
      %v3686 = vpop.f32.mrb[0].mxu0
      %v3687 = vadd.f32 %v3559, %v3686
      %v3688 = vpop.f32.mrb[0].mxu0
      %3689 = vmatprep.mubr.bf16.mxu0 %v2760
      %3690 = vmatmul.mubr.bf16.gmra.mrb[0].mxu0 %v2759
      %v3691 = vpop.f32.mrb[0].mxu0
      %v3692 = vadd.f32 %v3564, %v3691
      %v3693 = vpop.f32.mrb[0].mxu0
      %v3694 = vpop.f32.mrb[0].mxu0
      %v3695 = vadd.f32 %v3567, %v3694
      %v3696 = vpop.f32.mrb[0].mxu0
      %3697 = vmatprep.mubr.bf16.mxu0 %v2769
      %3698 = vmatmul.mubr.bf16.gmra.mrb[0].mxu0 %v2768
      %v3699 = vpop.f32.mrb[0].mxu0
      %v3700 = vadd.f32 %v3572, %v3699
      %v3701 = vpop.f32.mrb[0].mxu0
      %v3702 = vpop.f32.mrb[0].mxu0
      %v3703 = vadd.f32 %v3575, %v3702
      %v3704 = vpop.f32.mrb[0].mxu0
      %3705 = vmatprep.mubr.bf16.mxu0 %v2778
      %3706 = vmatmul.mubr.bf16.gmra.mrb[0].mxu0 %v2777
      %v3707 = vpop.f32.mrb[0].mxu0
      %v3708 = vadd.f32 %v3580, %v3707
      %v3709 = vpop.f32.mrb[0].mxu0
      %v3710 = vpop.f32.mrb[0].mxu0
      %v3711 = vadd.f32 %v3583, %v3710
      %v3712 = vpop.f32.mrb[0].mxu0
      %3713 = vmatprep.mubr.bf16.mxu0 %v2787
      %3714 = vmatmul.mubr.bf16.gmra.mrb[0].mxu0 %v2786
      %v3715 = vpop.f32.mrb[0].mxu0
      %v3716 = vadd.f32 %v3588, %v3715
      %v3717 = vpop.f32.mrb[0].mxu0
      %v3718 = vpop.f32.mrb[0].mxu0
      %v3719 = vadd.f32 %v3591, %v3718
      %v3720 = vpop.f32.mrb[0].mxu0
      %3721 = vmatprep.mubr.bf16.mxu0 %v2796
      %3722 = vmatmul.mubr.bf16.gmra.mrb[0].mxu0 %v2795
      %v3723 = vpop.f32.mrb[0].mxu0
      %v3724 = vadd.f32 %v3596, %v3723
      %v3725 = vpop.f32.mrb[0].mxu0
      %v3726 = vpop.f32.mrb[0].mxu0
      %v3727 = vadd.f32 %v3599, %v3726
      %v3728 = vpop.f32.mrb[0].mxu0
      %3729 = vmatprep.mubr.bf16.mxu0 %v2805
      %3730 = vmatmul.mubr.bf16.gmra.mrb[0].mxu0 %v2804
      %v3731 = vpop.f32.mrb[0].mxu0
      %v3732 = vadd.f32 %v3604, %v3731
      %v3733 = vpop.f32.mrb[0].mxu0
      %v3734 = vpop.f32.mrb[0].mxu0
      %v3735 = vadd.f32 %v3607, %v3734
      %v3736 = vpop.f32.mrb[0].mxu0
      %3737 = vmatprep.mubr.bf16.mxu0 %v2814
      %3738 = vmatmul.mubr.bf16.gmra.mrb[0].mxu0 %v2813
      %v3739 = vpop.f32.mrb[0].mxu0
      %v3740 = vadd.f32 %v3612, %v3739
      %v3741 = vpop.f32.mrb[0].mxu0
      %v3742 = vpop.f32.mrb[0].mxu0
      %v3743 = vadd.f32 %v3615, %v3742
      %v3744 = vpop.f32.mrb[0].mxu0
      %3745 = vmatprep.mubr.bf16.mxu0 %v2823
      %3746 = vmatmul.mubr.bf16.gmra.mrb[0].mxu0 %v2822
      %v3747 = vpop.f32.mrb[0].mxu0
      %v3748 = vadd.f32 %v3620, %v3747
      %v3749 = vpop.f32.mrb[0].mxu0
      %v3750 = vpop.f32.mrb[0].mxu0
      %v3751 = vadd.f32 %v3623, %v3750
      %v3752 = vpop.f32.mrb[0].mxu0
      %3753 = vmatprep.mubr.bf16.mxu0 %v2832
      %3754 = vmatmul.mubr.bf16.gmra.mrb[0].mxu0 %v2831
      %v3755 = vpop.f32.mrb[0].mxu0
      %v3756 = vadd.f32 %v3628, %v3755
      %v3757 = vpop.f32.mrb[0].mxu0
      %v3758 = vpop.f32.mrb[0].mxu0
      %v3759 = vadd.f32 %v3631, %v3758
      %v3760 = vpop.f32.mrb[0].mxu0
      %3761 = vmatprep.mubr.bf16.mxu0 %v2841
      %3762 = vmatmul.mubr.bf16.gmra.mrb[0].mxu0 %v2840
      %v3763 = vpop.f32.mrb[0].mxu0
      %v3764 = vadd.f32 %v3636, %v3763
      %v3765 = vpop.f32.mrb[0].mxu0
      %v3766 = vpop.f32.mrb[0].mxu0
      %v3767 = vpop.f32.mrb[0].mxu0
      %3768 = vdwg.mxu0
      %3769 = vmatprep.subr.bf16.mxu0 0
      %3770 = vmatpush1.bf16.msra.mxu0 %v3289
      %3771 = vmatprep.subr.bf16.mxu0 0
      %3772 = vmatpush1.bf16.msra.mxu0 %v3290
      %3773 = vmatprep.subr.bf16.mxu0 0
      %3774 = vmatpush1.bf16.msra.mxu0 %v3291
      %3775 = vmatprep.subr.bf16.mxu0 0
      %3776 = vmatpush1.bf16.msra.mxu0 %v3292
      %3777 = vmatprep.subr.bf16.mxu0 0
      %3778 = vmatpush1.bf16.msra.mxu0 %v3293
      %3779 = vmatprep.subr.bf16.mxu0 0
      %3780 = vmatpush1.bf16.msra.mxu0 %v3294
      %3781 = vmatprep.subr.bf16.mxu0 0
      %3782 = vmatpush1.bf16.msra.mxu0 %v3295
      %3783 = vmatprep.subr.bf16.mxu0 0
      %3784 = vmatpush1.bf16.msra.mxu0 %v3296
      %3785 = vmatprep.subr.bf16.mxu0 0
      %3786 = vmatpush1.bf16.msra.mxu0 %v3297
      %3787 = vmatprep.subr.bf16.mxu0 0
      %3788 = vmatpush1.bf16.msra.mxu0 %v3298
      %3789 = vmatprep.subr.bf16.mxu0 0
      %3790 = vmatpush1.bf16.msra.mxu0 %v3299
      %3791 = vmatprep.subr.bf16.mxu0 0
      %3792 = vmatpush1.bf16.msra.mxu0 %v3300
      %3793 = vmatprep.subr.bf16.mxu0 0
      %3794 = vmatpush1.bf16.msra.mxu0 %v3301
      %3795 = vmatprep.subr.bf16.mxu0 0
      %3796 = vmatpush1.bf16.msra.mxu0 %v3302
      %3797 = vmatprep.subr.bf16.mxu0 0
      %3798 = vmatpush1.bf16.msra.mxu0 %v3303
      %3799 = vmatprep.subr.bf16.mxu0 0
      %3800 = vmatpush1.bf16.msra.mxu0 %v3304
      %3801 = vmatprep.mubr.bf16.mxu0 %v2744
      %3802 = vmatmul.mubr.bf16.gmra.mrb[0].mxu0 %v2743
      %v3803 = vpop.f32.mrb[0].mxu0
      %v3804 = vadd.f32 %v3676, %v3803
      %v3805 = vpop.f32.mrb[0].mxu0
      %v3806 = vpop.f32.mrb[0].mxu0
      %v3807 = vadd.f32 %v3679, %v3806
      %v3808 = vpop.f32.mrb[0].mxu0
      %3809 = vmatprep.mubr.bf16.mxu0 %v2753
      %3810 = vmatmul.mubr.bf16.gmra.mrb[0].mxu0 %v2752
      %v3811 = vpop.f32.mrb[0].mxu0
      %v3812 = vadd.f32 %v3684, %v3811
      %v3813 = vpop.f32.mrb[0].mxu0
      %v3814 = vpop.f32.mrb[0].mxu0
      %v3815 = vadd.f32 %v3687, %v3814
      %v3816 = vpop.f32.mrb[0].mxu0
      %3817 = vmatprep.mubr.bf16.mxu0 %v2762
      %3818 = vmatmul.mubr.bf16.gmra.mrb[0].mxu0 %v2761
      %v3819 = vpop.f32.mrb[0].mxu0
      %v3820 = vadd.f32 %v3692, %v3819
      %v3821 = vpop.f32.mrb[0].mxu0
      %v3822 = vpop.f32.mrb[0].mxu0
      %v3823 = vadd.f32 %v3695, %v3822
      %v3824 = vpop.f32.mrb[0].mxu0
      %3825 = vmatprep.mubr.bf16.mxu0 %v2771
      %3826 = vmatmul.mubr.bf16.gmra.mrb[0].mxu0 %v2770
      %v3827 = vpop.f32.mrb[0].mxu0
      %v3828 = vadd.f32 %v3700, %v3827
      %v3829 = vpop.f32.mrb[0].mxu0
      %v3830 = vpop.f32.mrb[0].mxu0
      %v3831 = vadd.f32 %v3703, %v3830
      %v3832 = vpop.f32.mrb[0].mxu0
      %3833 = vmatprep.mubr.bf16.mxu0 %v2780
      %3834 = vmatmul.mubr.bf16.gmra.mrb[0].mxu0 %v2779
      %v3835 = vpop.f32.mrb[0].mxu0
      %v3836 = vadd.f32 %v3708, %v3835
      %v3837 = vpop.f32.mrb[0].mxu0
      %v3838 = vpop.f32.mrb[0].mxu0
      %v3839 = vadd.f32 %v3711, %v3838
      %v3840 = vpop.f32.mrb[0].mxu0
      %3841 = vmatprep.mubr.bf16.mxu0 %v2789
      %3842 = vmatmul.mubr.bf16.gmra.mrb[0].mxu0 %v2788
      %v3843 = vpop.f32.mrb[0].mxu0
      %v3844 = vadd.f32 %v3716, %v3843
      %v3845 = vpop.f32.mrb[0].mxu0
      %v3846 = vpop.f32.mrb[0].mxu0
      %v3847 = vadd.f32 %v3719, %v3846
      %v3848 = vpop.f32.mrb[0].mxu0
      %3849 = vmatprep.mubr.bf16.mxu0 %v2798
      %3850 = vmatmul.mubr.bf16.gmra.mrb[0].mxu0 %v2797
      %v3851 = vpop.f32.mrb[0].mxu0
      %v3852 = vadd.f32 %v3724, %v3851
      %v3853 = vpop.f32.mrb[0].mxu0
      %v3854 = vpop.f32.mrb[0].mxu0
      %v3855 = vadd.f32 %v3727, %v3854
      %v3856 = vpop.f32.mrb[0].mxu0
      %3857 = vmatprep.mubr.bf16.mxu0 %v2807
      %3858 = vmatmul.mubr.bf16.gmra.mrb[0].mxu0 %v2806
      %v3859 = vpop.f32.mrb[0].mxu0
      %v3860 = vadd.f32 %v3732, %v3859
      %v3861 = vpop.f32.mrb[0].mxu0
      %v3862 = vpop.f32.mrb[0].mxu0
      %v3863 = vadd.f32 %v3735, %v3862
      %v3864 = vpop.f32.mrb[0].mxu0
      %3865 = vmatprep.mubr.bf16.mxu0 %v2816
      %3866 = vmatmul.mubr.bf16.gmra.mrb[0].mxu0 %v2815
      %v3867 = vpop.f32.mrb[0].mxu0
      %v3868 = vadd.f32 %v3740, %v3867
      %v3869 = vpop.f32.mrb[0].mxu0
      %v3870 = vpop.f32.mrb[0].mxu0
      %v3871 = vadd.f32 %v3743, %v3870
      %v3872 = vpop.f32.mrb[0].mxu0
      %3873 = vmatprep.mubr.bf16.mxu0 %v2825
      %3874 = vmatmul.mubr.bf16.gmra.mrb[0].mxu0 %v2824
      %v3875 = vpop.f32.mrb[0].mxu0
      %v3876 = vadd.f32 %v3748, %v3875
      %v3877 = vpop.f32.mrb[0].mxu0
      %v3878 = vpop.f32.mrb[0].mxu0
      %v3879 = vadd.f32 %v3751, %v3878
      %v3880 = vpop.f32.mrb[0].mxu0
      %3881 = vmatprep.mubr.bf16.mxu0 %v2834
      %3882 = vmatmul.mubr.bf16.gmra.mrb[0].mxu0 %v2833
      %v3883 = vpop.f32.mrb[0].mxu0
      %v3884 = vadd.f32 %v3756, %v3883
      %v3885 = vpop.f32.mrb[0].mxu0
      %v3886 = vpop.f32.mrb[0].mxu0
      %v3887 = vadd.f32 %v3759, %v3886
      %v3888 = vpop.f32.mrb[0].mxu0
      %3889 = vmatprep.mubr.bf16.mxu0 %v2843
      %3890 = vmatmul.mubr.bf16.gmra.mrb[0].mxu0 %v2842
      %v3891 = vpop.f32.mrb[0].mxu0
      %v3892 = vadd.f32 %v3764, %v3891
      %v3893 = vpop.f32.mrb[0].mxu0
      %v3894 = vpop.f32.mrb[0].mxu0
      %v3895 = vpop.f32.mrb[0].mxu0
      %3896 = vdwg.mxu0
      %3897 = vmatprep.subr.bf16.mxu0 0
      %3898 = vmatpush1.bf16.msra.mxu0 %v3305
      %3899 = vmatprep.subr.bf16.mxu0 0
      %3900 = vmatpush1.bf16.msra.mxu0 %v3306
      %3901 = vmatprep.subr.bf16.mxu0 0
      %3902 = vmatpush1.bf16.msra.mxu0 %v3307
      %3903 = vmatprep.subr.bf16.mxu0 0
      %3904 = vmatpush1.bf16.msra.mxu0 %v3308
      %3905 = vmatprep.subr.bf16.mxu0 0
      %3906 = vmatpush1.bf16.msra.mxu0 %v3309
      %3907 = vmatprep.subr.bf16.mxu0 0
      %3908 = vmatpush1.bf16.msra.mxu0 %v3310
      %3909 = vmatprep.subr.bf16.mxu0 0
      %3910 = vmatpush1.bf16.msra.mxu0 %v3311
      %3911 = vmatprep.subr.bf16.mxu0 0
      %3912 = vmatpush1.bf16.msra.mxu0 %v3312
      %3913 = vmatprep.subr.bf16.mxu0 0
      %3914 = vmatpush1.bf16.msra.mxu0 0
      %3915 = vmatprep.subr.bf16.mxu0 0
      %3916 = vmatpush1.bf16.msra.mxu0 0
      %3917 = vmatprep.subr.bf16.mxu0 0
      %3918 = vmatpush1.bf16.msra.mxu0 0
      %3919 = vmatprep.subr.bf16.mxu0 0
      %3920 = vmatpush1.bf16.msra.mxu0 0
      %3921 = vmatprep.subr.bf16.mxu0 0
      %3922 = vmatpush1.bf16.msra.mxu0 0
      %3923 = vmatprep.subr.bf16.mxu0 0
      %3924 = vmatpush1.bf16.msra.mxu0 0
      %3925 = vmatprep.subr.bf16.mxu0 0
      %3926 = vmatpush1.bf16.msra.mxu0 0
      %3927 = vmatprep.subr.bf16.mxu0 0
      %3928 = vmatpush1.bf16.msra.mxu0 0
      %3929 = vmatprep.mubr.bf16.mxu0 0
      %3930 = vmatmul.mubr.bf16.gmra.mrb[0].mxu0 %v2745
      %v3931 = vpop.f32.mrb[0].mxu0
      %v3932 = vadd.f32 %v3804, %v3931
      %v3933 = vpop.f32.mrb[0].mxu0
      %v3934 = vpop.f32.mrb[0].mxu0
      %v3935 = vadd.f32 %v3807, %v3934
      %v3936 = vpop.f32.mrb[0].mxu0
      %3937 = vmatprep.mubr.bf16.mxu0 0
      %3938 = vmatmul.mubr.bf16.gmra.mrb[0].mxu0 %v2754
      %v3939 = vpop.f32.mrb[0].mxu0
      %v3940 = vadd.f32 %v3812, %v3939
      %v3941 = vpop.f32.mrb[0].mxu0
      %v3942 = vpop.f32.mrb[0].mxu0
      %v3943 = vadd.f32 %v3815, %v3942
      %v3944 = vpop.f32.mrb[0].mxu0
      %3945 = vmatprep.mubr.bf16.mxu0 0
      %3946 = vmatmul.mubr.bf16.gmra.mrb[0].mxu0 %v2763
      %v3947 = vpop.f32.mrb[0].mxu0
      %v3948 = vadd.f32 %v3820, %v3947
      %v3949 = vpop.f32.mrb[0].mxu0
      %v3950 = vpop.f32.mrb[0].mxu0
      %v3951 = vadd.f32 %v3823, %v3950
      %v3952 = vpop.f32.mrb[0].mxu0
      %3953 = vmatprep.mubr.bf16.mxu0 0
      %3954 = vmatmul.mubr.bf16.gmra.mrb[0].mxu0 %v2772
      %v3955 = vpop.f32.mrb[0].mxu0
      %v3956 = vadd.f32 %v3828, %v3955
      %v3957 = vpop.f32.mrb[0].mxu0
      %v3958 = vpop.f32.mrb[0].mxu0
      %v3959 = vadd.f32 %v3831, %v3958
      %v3960 = vpop.f32.mrb[0].mxu0
      %3961 = vmatprep.mubr.bf16.mxu0 0
      %3962 = vmatmul.mubr.bf16.gmra.mrb[0].mxu0 %v2781
      %v3963 = vpop.f32.mrb[0].mxu0
      %v3964 = vadd.f32 %v3836, %v3963
      %v3965 = vpop.f32.mrb[0].mxu0
      %v3966 = vpop.f32.mrb[0].mxu0
      %v3967 = vadd.f32 %v3839, %v3966
      %v3968 = vpop.f32.mrb[0].mxu0
      %3969 = vmatprep.mubr.bf16.mxu0 0
      %3970 = vmatmul.mubr.bf16.gmra.mrb[0].mxu0 %v2790
      %v3971 = vpop.f32.mrb[0].mxu0
      %v3972 = vadd.f32 %v3844, %v3971
      %v3973 = vpop.f32.mrb[0].mxu0
      %v3974 = vpop.f32.mrb[0].mxu0
      %v3975 = vadd.f32 %v3847, %v3974
      %v3976 = vpop.f32.mrb[0].mxu0
      %3977 = vmatprep.mubr.bf16.mxu0 0
      %3978 = vmatmul.mubr.bf16.gmra.mrb[0].mxu0 %v2799
      %v3979 = vpop.f32.mrb[0].mxu0
      %v3980 = vadd.f32 %v3852, %v3979
      %v3981 = vpop.f32.mrb[0].mxu0
      %v3982 = vpop.f32.mrb[0].mxu0
      %v3983 = vadd.f32 %v3855, %v3982
      %v3984 = vpop.f32.mrb[0].mxu0
      %3985 = vmatprep.mubr.bf16.mxu0 0
      %3986 = vmatmul.mubr.bf16.gmra.mrb[0].mxu0 %v2808
      %v3987 = vpop.f32.mrb[0].mxu0
      %v3988 = vadd.f32 %v3860, %v3987
      %v3989 = vpop.f32.mrb[0].mxu0
      %v3990 = vpop.f32.mrb[0].mxu0
      %v3991 = vadd.f32 %v3863, %v3990
      %v3992 = vpop.f32.mrb[0].mxu0
      %3993 = vmatprep.mubr.bf16.mxu0 0
      %3994 = vmatmul.mubr.bf16.gmra.mrb[0].mxu0 %v2817
      %v3995 = vpop.f32.mrb[0].mxu0
      %v3996 = vadd.f32 %v3868, %v3995
      %v3997 = vpop.f32.mrb[0].mxu0
      %v3998 = vpop.f32.mrb[0].mxu0
      %v3999 = vadd.f32 %v3871, %v3998
      %v4000 = vpop.f32.mrb[0].mxu0
      %4001 = vmatprep.mubr.bf16.mxu0 0
      %4002 = vmatmul.mubr.bf16.gmra.mrb[0].mxu0 %v2826
      %v4003 = vpop.f32.mrb[0].mxu0
      %v4004 = vadd.f32 %v3876, %v4003
      %v4005 = vpop.f32.mrb[0].mxu0
      %v4006 = vpop.f32.mrb[0].mxu0
      %v4007 = vadd.f32 %v3879, %v4006
      %v4008 = vpop.f32.mrb[0].mxu0
      %4009 = vmatprep.mubr.bf16.mxu0 0
      %4010 = vmatmul.mubr.bf16.gmra.mrb[0].mxu0 %v2835
      %v4011 = vpop.f32.mrb[0].mxu0
      %v4012 = vadd.f32 %v3884, %v4011
      %v4013 = vpop.f32.mrb[0].mxu0
      %v4014 = vpop.f32.mrb[0].mxu0
      %v4015 = vadd.f32 %v3887, %v4014
      %v4016 = vpop.f32.mrb[0].mxu0
      %4017 = vmatprep.mubr.bf16.mxu0 0
      %4018 = vmatmul.mubr.bf16.gmra.mrb[0].mxu0 %v2844
      %v4019 = vpop.f32.mrb[0].mxu0
      %v4020 = vadd.f32 %v3892, %v4019
      %v4021 = vpop.f32.mrb[0].mxu0
      %v4022 = vpop.f32.mrb[0].mxu0
      %v4023 = vpop.f32.mrb[0].mxu0
      %4024 = vdwg.mxu0
      %v4025 = vld [vmem:[%s8] sm:$0xff]
      %v4026 = vld [vmem:[%s8 + $0x8] sm:$0xff]
      %v4027 = vld [vmem:[%s8 + $0x10] sm:$0xff]
      %v4028 = vld [vmem:[%s8 + $0x18] sm:$0xff]
      %v4029 = vld [vmem:[%s8 + $0x20] sm:$0xff]
      %v4030 = vld [vmem:[%s8 + $0x28] sm:$0xff]
      %v4031 = vld [vmem:[%s8 + $0x30] sm:$0xff]
      %v4032 = vld [vmem:[%s8 + $0x38] sm:$0xff]
      %v4033 = vld [vmem:[%s8 + $0x40] sm:$0xff]
      %v4034 = vld [vmem:[%s8 + $0x48] sm:$0xff]
      %v4035 = vld [vmem:[%s8 + $0x50] sm:$0xff]
      %v4036 = vld [vmem:[%s8 + $0x58] sm:$0xff]
      %v4037 = vld [vmem:[%s8 + $0x60] sm:$0xff]
      %v4038 = vld [vmem:[%s8 + $0x68] sm:$0xff]
      %v4039 = vld [vmem:[%s8 + $0x70] sm:$0xff]
      %v4040 = vld [vmem:[%s8 + $0x78] sm:$0xff]
      %v4041 = vld [vmem:[%s8 + $0x80] sm:$0xff]
      %v4042 = vld [vmem:[%s8 + $0x88] sm:$0xff]
      %v4043 = vld [vmem:[%s8 + $0x90] sm:$0xff]
      %v4044 = vld [vmem:[%s8 + $0x98] sm:$0xff]
      %v4045 = vld [vmem:[%s8 + $0xa0] sm:$0xff]
      %v4046 = vld [vmem:[%s8 + $0xa8] sm:$0xff]
      %v4047 = vld [vmem:[%s8 + $0xb0] sm:$0x3]
      %4049 = vset.pattern.permute.xlu0 0
      %4050 = vperm.xlu0 %4049, %v4025
      %v4051 = vpop.permute.xlu0 %4050
      %4054 = vset.pattern.permute.xlu0 0
      %4055 = vperm.xlu0 %4054, %v4026
      %v4056 = vpop.permute.xlu0 %4055
      %4059 = vset.pattern.permute.xlu0 0
      %4060 = vperm.xlu0 %4059, %v4027
      %v4061 = vpop.permute.xlu0 %4060
      %4064 = vset.pattern.permute.xlu0 0
      %4065 = vperm.xlu0 %4064, %v4028
      %v4066 = vpop.permute.xlu0 %4065
      %4069 = vset.pattern.permute.xlu0 0
      %4070 = vperm.xlu0 %4069, %v4029
      %v4071 = vpop.permute.xlu0 %4070
      %4074 = vset.pattern.permute.xlu0 0
      %4075 = vperm.xlu0 %4074, %v4030
      %v4076 = vpop.permute.xlu0 %4075
      %4079 = vset.pattern.permute.xlu0 0
      %4080 = vperm.xlu0 %4079, %v4031
      %v4081 = vpop.permute.xlu0 %4080
      %4084 = vset.pattern.permute.xlu0 0
      %4085 = vperm.xlu0 %4084, %v4032
      %v4086 = vpop.permute.xlu0 %4085
      %4089 = vset.pattern.permute.xlu0 0
      %4090 = vperm.xlu0 %4089, %v4033
      %v4091 = vpop.permute.xlu0 %4090
      %4094 = vset.pattern.permute.xlu0 0
      %4095 = vperm.xlu0 %4094, %v4034
      %v4096 = vpop.permute.xlu0 %4095
      %4099 = vset.pattern.permute.xlu0 0
      %4100 = vperm.xlu0 %4099, %v4035
      %v4101 = vpop.permute.xlu0 %4100
      %4104 = vset.pattern.permute.xlu0 0
      %4105 = vperm.xlu0 %4104, %v4036
      %v4106 = vpop.permute.xlu0 %4105
      %4109 = vset.pattern.permute.xlu0 0
      %4110 = vperm.xlu0 %4109, %v4037
      %v4111 = vpop.permute.xlu0 %4110
      %4114 = vset.pattern.permute.xlu0 0
      %4115 = vperm.xlu0 %4114, %v4038
      %v4116 = vpop.permute.xlu0 %4115
      %4119 = vset.pattern.permute.xlu0 0
      %4120 = vperm.xlu0 %4119, %v4039
      %v4121 = vpop.permute.xlu0 %4120
      %4124 = vset.pattern.permute.xlu0 0
      %4125 = vperm.xlu0 %4124, %v4040
      %v4126 = vpop.permute.xlu0 %4125
      %4129 = vset.pattern.permute.xlu0 0
      %4130 = vperm.xlu0 %4129, %v4041
      %v4131 = vpop.permute.xlu0 %4130
      %4134 = vset.pattern.permute.xlu0 0
      %4135 = vperm.xlu0 %4134, %v4042
      %v4136 = vpop.permute.xlu0 %4135
      %4139 = vset.pattern.permute.xlu0 0
      %4140 = vperm.xlu0 %4139, %v4043
      %v4141 = vpop.permute.xlu0 %4140
      %4144 = vset.pattern.permute.xlu0 0
      %4145 = vperm.xlu0 %4144, %v4044
      %v4146 = vpop.permute.xlu0 %4145
      %4149 = vset.pattern.permute.xlu0 0
      %4150 = vperm.xlu0 %4149, %v4045
      %v4151 = vpop.permute.xlu0 %4150
      %4154 = vset.pattern.permute.xlu0 0
      %4155 = vperm.xlu0 %4154, %v4046
      %v4156 = vpop.permute.xlu0 %4155
      %4159 = vset.pattern.permute.xlu0 0
      %4160 = vperm.xlu0 %4159, %v4047
      %v4161 = vpop.permute.xlu0 %4160
      %v4163 = vmul.f32 %v3932, %v4051
      %v4164 = vmul.f32 %v3935, %v4056
      %v4165 = vmul.f32 %v3940, %v4061
      %v4166 = vmul.f32 %v3943, %v4066
      %v4167 = vmul.f32 %v3948, %v4071
      %v4168 = vmul.f32 %v3951, %v4076
      %v4169 = vmul.f32 %v3956, %v4081
      %v4170 = vmul.f32 %v3959, %v4086
      %v4171 = vmul.f32 %v3964, %v4091
      %v4172 = vmul.f32 %v3967, %v4096
      %v4173 = vmul.f32 %v3972, %v4101
      %v4174 = vmul.f32 %v3975, %v4106
      %v4175 = vmul.f32 %v3980, %v4111
      %v4176 = vmul.f32 %v3983, %v4116
      %v4177 = vmul.f32 %v3988, %v4121
      %v4178 = vmul.f32 %v3991, %v4126
      %v4179 = vmul.f32 %v3996, %v4131
      %v4180 = vmul.f32 %v3999, %v4136
      %v4181 = vmul.f32 %v4004, %v4141
      %v4182 = vmul.f32 %v4007, %v4146
      %v4183 = vmul.f32 %v4012, %v4151
      %v4184 = vmul.f32 %v4015, %v4156
      %v4185 = vmul.f32 %v4020, %v4161
      %4186 = vst [vmem:[#allocation3 + $0x1] sm:$0xff] %v4163
      %4187 = vst [vmem:[#allocation3 + $0x9] sm:$0xff] %v4164
      %4188 = vst [vmem:[#allocation3 + $0x11] sm:$0xff] %v4165
      %4189 = vst [vmem:[#allocation3 + $0x19] sm:$0xff] %v4166
      %4190 = vst [vmem:[#allocation3 + $0x21] sm:$0xff] %v4167
      %4191 = vst [vmem:[#allocation3 + $0x29] sm:$0xff] %v4168
      %4192 = vst [vmem:[#allocation3 + $0x31] sm:$0xff] %v4169
      %4193 = vst [vmem:[#allocation3 + $0x39] sm:$0xff] %v4170
      %4194 = vst [vmem:[#allocation3 + $0x41] sm:$0xff] %v4171
      %4195 = vst [vmem:[#allocation3 + $0x49] sm:$0xff] %v4172
      %4196 = vst [vmem:[#allocation3 + $0x51] sm:$0xff] %v4173
      %4197 = vst [vmem:[#allocation3 + $0x59] sm:$0xff] %v4174
      %4198 = vst [vmem:[#allocation3 + $0x61] sm:$0xff] %v4175
      %4199 = vst [vmem:[#allocation3 + $0x69] sm:$0xff] %v4176
      %4200 = vst [vmem:[#allocation3 + $0x71] sm:$0xff] %v4177
      %4201 = vst [vmem:[#allocation3 + $0x79] sm:$0xff] %v4178
      %4202 = vst [vmem:[#allocation3 + $0x81] sm:$0xff] %v4179
      %4203 = vst [vmem:[#allocation3 + $0x89] sm:$0xff] %v4180
      %4204 = vst [vmem:[#allocation3 + $0x91] sm:$0xff] %v4181
      %4205 = vst [vmem:[#allocation3 + $0x99] sm:$0xff] %v4182
      %4206 = vst [vmem:[#allocation3 + $0xa1] sm:$0xff] %v4183
      %4207 = vst [vmem:[#allocation3 + $0xa9] sm:$0xff] %v4184
      %4208 = vst [vmem:[#allocation3 + $0xb1] sm:$0x3] %v4185
      %4209 = vst [vmem:[#allocation3] sm:$0x1] 0.0
      %4210 = vst [vmem:[#allocation3 + $0xb3] sm:$0xff] 0.0
      %4211 = vst [vmem:[#allocation3 + $0xbb] sm:$0x1] 0.0
      // Predicated region
      $region65: #{triple_conv_pallas.1} parent=55 // pred_check
        %p4212 = pneg %p880
      $region66: #{triple_conv_pallas.1} parent=55 // pred_check_branch
        %4214 = sbr.rel (%p4212) target = $region68
      $region67: #{triple_conv_pallas.1} parent=55 // pred_region
        %4215 = vst [vmem:[#allocation3] sm:$0xff] 0.0
        %4216 = vst [vmem:[#allocation3 + $0x8] sm:$0xff] 0.0
        %4217 = vst [vmem:[#allocation3 + $0x10] sm:$0x3] 0.0
      $region68: #{triple_conv_pallas.1} parent=55 // pred_fallthru
        _
      // Predicated region
      $region69: #{triple_conv_pallas.1} parent=55 // pred_check
        %p4218 = pneg %p889
      $region70: #{triple_conv_pallas.1} parent=55 // pred_check_branch
        %4220 = sbr.rel (%p4218) target = $region72
      $region71: #{triple_conv_pallas.1} parent=55 // pred_region
        %4221 = vst [vmem:[#allocation3 + $0xa2] sm:$0xff] 0.0
        %4222 = vst [vmem:[#allocation3 + $0xaa] sm:$0xff] 0.0
        %4223 = vst [vmem:[#allocation3 + $0xb2] sm:$0x3] 0.0
      $region72: #{triple_conv_pallas.1} parent=55 // pred_fallthru
        _
      %v4224 = vld [vmem:[#allocation3] sm:$0xff]
      %v4225 = vld [vmem:[#allocation3 + $0x8] sm:$0xff]
      %v4226 = vld [vmem:[#allocation3 + $0x10] sm:$0xff]
      %v4227 = vld [vmem:[#allocation3 + $0x18] sm:$0xff]
      %v4228 = vld [vmem:[#allocation3 + $0x20] sm:$0xff]
      %v4229 = vld [vmem:[#allocation3 + $0x28] sm:$0xff]
      %v4230 = vld [vmem:[#allocation3 + $0x30] sm:$0xff]
      %v4231 = vld [vmem:[#allocation3 + $0x38] sm:$0xff]
      %v4232 = vld [vmem:[#allocation3 + $0x40] sm:$0xff]
      %v4233 = vld [vmem:[#allocation3 + $0x48] sm:$0xff]
      %v4234 = vld [vmem:[#allocation3 + $0x50] sm:$0xff]
      %v4235 = vld [vmem:[#allocation3 + $0x58] sm:$0xff]
      %v4236 = vld [vmem:[#allocation3 + $0x60] sm:$0xff]
      %v4237 = vld [vmem:[#allocation3 + $0x68] sm:$0xff]
      %v4238 = vld [vmem:[#allocation3 + $0x70] sm:$0xff]
      %v4239 = vld [vmem:[#allocation3 + $0x78] sm:$0xff]
      %v4240 = vld [vmem:[#allocation3 + $0x80] sm:$0xff]
      %v4241 = vld [vmem:[#allocation3 + $0x88] sm:$0xff]
      %v4242 = vpack.c.bf16 %v4225, %v4224
      %v4243 = vpack.c.bf16 %v4227, %v4226
      %v4244 = vpack.c.bf16 %v4229, %v4228
      %v4245 = vpack.c.bf16 %v4231, %v4230
      %v4246 = vpack.c.bf16 %v4233, %v4232
      %v4247 = vpack.c.bf16 %v4235, %v4234
      %v4248 = vpack.c.bf16 %v4237, %v4236
      %v4249 = vpack.c.bf16 %v4239, %v4238
      %v4250 = vpack.c.bf16 %v4241, %v4240
      %v4260 = vunpack.c.l.b16 %v4242
      %v4261 = vunpack.c.h.b16 %v4242
      %v4262 = vunpack.c.l.b16 %v4243
      %v4263 = vunpack.c.h.b16 %v4243
      %v4264 = vunpack.c.l.b16 %v4244
      %v4265 = vunpack.c.h.b16 %v4244
      %v4266 = vunpack.c.l.b16 %v4245
      %v4267 = vunpack.c.h.b16 %v4245
      %v4268 = vunpack.c.l.b16 %v4246
      %v4269 = vunpack.c.h.b16 %v4246
      %v4270 = vunpack.c.l.b16 %v4247
      %v4271 = vunpack.c.h.b16 %v4247
      %v4272 = vunpack.c.l.b16 %v4248
      %v4273 = vunpack.c.h.b16 %v4248
      %v4274 = vunpack.c.l.b16 %v4249
      %v4275 = vunpack.c.h.b16 %v4249
      %v4276 = vunpack.c.l.b16 %v4250
      %v4277 = vunpack.c.h.b16 %v4250
      %v4278 = vpack.c.b16 %v4260, %v4260
      %v4279 = vpack.c.b16 %v4261, %v4261
      %v4280 = vpack.c.b16 %v4262, %v4262
      %v4281 = vpack.c.b16 %v4263, %v4263
      %v4282 = vpack.c.b16 %v4264, %v4264
      %v4283 = vpack.c.b16 %v4265, %v4265
      %v4284 = vpack.c.b16 %v4266, %v4266
      %v4285 = vpack.c.b16 %v4267, %v4267
      %v4286 = vpack.c.b16 %v4268, %v4268
      %v4287 = vpack.c.b16 %v4269, %v4269
      %v4288 = vpack.c.b16 %v4270, %v4270
      %v4289 = vpack.c.b16 %v4271, %v4271
      %v4290 = vpack.c.b16 %v4272, %v4272
      %v4291 = vpack.c.b16 %v4273, %v4273
      %v4292 = vpack.c.b16 %v4274, %v4274
      %v4293 = vpack.c.b16 %v4275, %v4275
      %v4294 = vpack.c.b16 %v4276, %v4276
      %v4295 = vpack.c.b16 %v4277, %v4277
      %4314 = vst [vmem:[#allocation4] sm:$0xf] %v4278
      %4315 = vst [vmem:[#allocation4 + $0x24] sm:$0xf] %v4279
      %4316 = vst [vmem:[#allocation4 + $0x48] sm:$0xf] %v4280
      %4317 = vst [vmem:[#allocation4 + $0x6c] sm:$0xf] %v4281
      %4318 = vst [vmem:[#allocation4 + $0x90] sm:$0xf] %v4282
      %4319 = vst [vmem:[#allocation4 + $0xb4] sm:$0xf] %v4283
      %4320 = vst [vmem:[#allocation4 + $0xd8] sm:$0xf] %v4284
      %4321 = vst [vmem:[#allocation4 + $0xfc] sm:$0xf] %v4285
      %4322 = vst [vmem:[#allocation4 + $0x120] sm:$0xf] %v4286
      %4323 = vst [vmem:[#allocation4 + $0x144] sm:$0xf] %v4287
      %4324 = vst [vmem:[#allocation4 + $0x168] sm:$0xf] %v4288
      %4325 = vst [vmem:[#allocation4 + $0x18c] sm:$0xf] %v4289
      %4326 = vst [vmem:[#allocation4 + $0x1b0] sm:$0xf] %v4290
      %4327 = vst [vmem:[#allocation4 + $0x1d4] sm:$0xf] %v4291
      %4328 = vst [vmem:[#allocation4 + $0x1f8] sm:$0xf] %v4292
      %4329 = vst [vmem:[#allocation4 + $0x21c] sm:$0xf] %v4293
      %4330 = vst [vmem:[#allocation4 + $0x240] sm:$0xf] %v4294
      %4331 = vst [vmem:[#allocation4 + $0x264] sm:$0xf] %v4295
      %v4332 = vld [vmem:[#allocation3 + $0x1] sm:$0xff]
      %v4333 = vld [vmem:[#allocation3 + $0x9] sm:$0xff]
      %v4334 = vld [vmem:[#allocation3 + $0x11] sm:$0xff]
      %v4335 = vld [vmem:[#allocation3 + $0x19] sm:$0xff]
      %v4336 = vld [vmem:[#allocation3 + $0x21] sm:$0xff]
      %v4337 = vld [vmem:[#allocation3 + $0x29] sm:$0xff]
      %v4338 = vld [vmem:[#allocation3 + $0x31] sm:$0xff]
      %v4339 = vld [vmem:[#allocation3 + $0x39] sm:$0xff]
      %v4340 = vld [vmem:[#allocation3 + $0x41] sm:$0xff]
      %v4341 = vld [vmem:[#allocation3 + $0x49] sm:$0xff]
      %v4342 = vld [vmem:[#allocation3 + $0x51] sm:$0xff]
      %v4343 = vld [vmem:[#allocation3 + $0x59] sm:$0xff]
      %v4344 = vld [vmem:[#allocation3 + $0x61] sm:$0xff]
      %v4345 = vld [vmem:[#allocation3 + $0x69] sm:$0xff]
      %v4346 = vld [vmem:[#allocation3 + $0x71] sm:$0xff]
      %v4347 = vld [vmem:[#allocation3 + $0x79] sm:$0xff]
      %v4348 = vld [vmem:[#allocation3 + $0x81] sm:$0xff]
      %v4349 = vld [vmem:[#allocation3 + $0x89] sm:$0xff]
      %v4350 = vpack.c.bf16 %v4333, %v4332
      %v4351 = vpack.c.bf16 %v4335, %v4334
      %v4352 = vpack.c.bf16 %v4337, %v4336
      %v4353 = vpack.c.bf16 %v4339, %v4338
      %v4354 = vpack.c.bf16 %v4341, %v4340
      %v4355 = vpack.c.bf16 %v4343, %v4342
      %v4356 = vpack.c.bf16 %v4345, %v4344
      %v4357 = vpack.c.bf16 %v4347, %v4346
      %v4358 = vpack.c.bf16 %v4349, %v4348
      %v4368 = vunpack.c.l.b16 %v4350
      %v4369 = vunpack.c.h.b16 %v4350
      %v4370 = vunpack.c.l.b16 %v4351
      %v4371 = vunpack.c.h.b16 %v4351
      %v4372 = vunpack.c.l.b16 %v4352
      %v4373 = vunpack.c.h.b16 %v4352
      %v4374 = vunpack.c.l.b16 %v4353
      %v4375 = vunpack.c.h.b16 %v4353
      %v4376 = vunpack.c.l.b16 %v4354
      %v4377 = vunpack.c.h.b16 %v4354
      %v4378 = vunpack.c.l.b16 %v4355
      %v4379 = vunpack.c.h.b16 %v4355
      %v4380 = vunpack.c.l.b16 %v4356
      %v4381 = vunpack.c.h.b16 %v4356
      %v4382 = vunpack.c.l.b16 %v4357
      %v4383 = vunpack.c.h.b16 %v4357
      %v4384 = vunpack.c.l.b16 %v4358
      %v4385 = vunpack.c.h.b16 %v4358
      %v4386 = vpack.c.b16 %v4368, %v4368
      %v4387 = vpack.c.b16 %v4369, %v4369
      %v4388 = vpack.c.b16 %v4370, %v4370
      %v4389 = vpack.c.b16 %v4371, %v4371
      %v4390 = vpack.c.b16 %v4372, %v4372
      %v4391 = vpack.c.b16 %v4373, %v4373
      %v4392 = vpack.c.b16 %v4374, %v4374
      %v4393 = vpack.c.b16 %v4375, %v4375
      %v4394 = vpack.c.b16 %v4376, %v4376
      %v4395 = vpack.c.b16 %v4377, %v4377
      %v4396 = vpack.c.b16 %v4378, %v4378
      %v4397 = vpack.c.b16 %v4379, %v4379
      %v4398 = vpack.c.b16 %v4380, %v4380
      %v4399 = vpack.c.b16 %v4381, %v4381
      %v4400 = vpack.c.b16 %v4382, %v4382
      %v4401 = vpack.c.b16 %v4383, %v4383
      %v4402 = vpack.c.b16 %v4384, %v4384
      %v4403 = vpack.c.b16 %v4385, %v4385
      %4422 = vst [vmem:[#allocation4 + $0x4] sm:$0xf] %v4386
      %4423 = vst [vmem:[#allocation4 + $0x28] sm:$0xf] %v4387
      %4424 = vst [vmem:[#allocation4 + $0x4c] sm:$0xf] %v4388
      %4425 = vst [vmem:[#allocation4 + $0x70] sm:$0xf] %v4389
      %4426 = vst [vmem:[#allocation4 + $0x94] sm:$0xf] %v4390
      %4427 = vst [vmem:[#allocation4 + $0xb8] sm:$0xf] %v4391
      %4428 = vst [vmem:[#allocation4 + $0xdc] sm:$0xf] %v4392
      %4429 = vst [vmem:[#allocation4 + $0x100] sm:$0xf] %v4393
      %4430 = vst [vmem:[#allocation4 + $0x124] sm:$0xf] %v4394
      %4431 = vst [vmem:[#allocation4 + $0x148] sm:$0xf] %v4395
      %4432 = vst [vmem:[#allocation4 + $0x16c] sm:$0xf] %v4396
      %4433 = vst [vmem:[#allocation4 + $0x190] sm:$0xf] %v4397
      %4434 = vst [vmem:[#allocation4 + $0x1b4] sm:$0xf] %v4398
      %4435 = vst [vmem:[#allocation4 + $0x1d8] sm:$0xf] %v4399
      %4436 = vst [vmem:[#allocation4 + $0x1fc] sm:$0xf] %v4400
      %4437 = vst [vmem:[#allocation4 + $0x220] sm:$0xf] %v4401
      %4438 = vst [vmem:[#allocation4 + $0x244] sm:$0xf] %v4402
      %4439 = vst [vmem:[#allocation4 + $0x268] sm:$0xf] %v4403
      %v4440 = vld [vmem:[#allocation3 + $0x2] sm:$0xff]
      %v4441 = vld [vmem:[#allocation3 + $0xa] sm:$0xff]
      %v4442 = vld [vmem:[#allocation3 + $0x12] sm:$0xff]
      %v4443 = vld [vmem:[#allocation3 + $0x1a] sm:$0xff]
      %v4444 = vld [vmem:[#allocation3 + $0x22] sm:$0xff]
      %v4445 = vld [vmem:[#allocation3 + $0x2a] sm:$0xff]
      %v4446 = vld [vmem:[#allocation3 + $0x32] sm:$0xff]
      %v4447 = vld [vmem:[#allocation3 + $0x3a] sm:$0xff]
      %v4448 = vld [vmem:[#allocation3 + $0x42] sm:$0xff]
      %v4449 = vld [vmem:[#allocation3 + $0x4a] sm:$0xff]
      %v4450 = vld [vmem:[#allocation3 + $0x52] sm:$0xff]
      %v4451 = vld [vmem:[#allocation3 + $0x5a] sm:$0xff]
      %v4452 = vld [vmem:[#allocation3 + $0x62] sm:$0xff]
      %v4453 = vld [vmem:[#allocation3 + $0x6a] sm:$0xff]
      %v4454 = vld [vmem:[#allocation3 + $0x72] sm:$0xff]
      %v4455 = vld [vmem:[#allocation3 + $0x7a] sm:$0xff]
      %v4456 = vld [vmem:[#allocation3 + $0x82] sm:$0xff]
      %v4457 = vld [vmem:[#allocation3 + $0x8a] sm:$0xff]
      %v4458 = vpack.c.bf16 %v4441, %v4440
      %v4459 = vpack.c.bf16 %v4443, %v4442
      %v4460 = vpack.c.bf16 %v4445, %v4444
      %v4461 = vpack.c.bf16 %v4447, %v4446
      %v4462 = vpack.c.bf16 %v4449, %v4448
      %v4463 = vpack.c.bf16 %v4451, %v4450
      %v4464 = vpack.c.bf16 %v4453, %v4452
      %v4465 = vpack.c.bf16 %v4455, %v4454
      %v4466 = vpack.c.bf16 %v4457, %v4456
      %v4476 = vunpack.c.l.b16 %v4458
      %v4477 = vunpack.c.h.b16 %v4458
      %v4478 = vunpack.c.l.b16 %v4459
      %v4479 = vunpack.c.h.b16 %v4459
      %v4480 = vunpack.c.l.b16 %v4460
      %v4481 = vunpack.c.h.b16 %v4460
      %v4482 = vunpack.c.l.b16 %v4461
      %v4483 = vunpack.c.h.b16 %v4461
      %v4484 = vunpack.c.l.b16 %v4462
      %v4485 = vunpack.c.h.b16 %v4462
      %v4486 = vunpack.c.l.b16 %v4463
      %v4487 = vunpack.c.h.b16 %v4463
      %v4488 = vunpack.c.l.b16 %v4464
      %v4489 = vunpack.c.h.b16 %v4464
      %v4490 = vunpack.c.l.b16 %v4465
      %v4491 = vunpack.c.h.b16 %v4465
      %v4492 = vunpack.c.l.b16 %v4466
      %v4493 = vunpack.c.h.b16 %v4466
      %v4494 = vpack.c.b16 %v4476, %v4476
      %v4495 = vpack.c.b16 %v4477, %v4477
      %v4496 = vpack.c.b16 %v4478, %v4478
      %v4497 = vpack.c.b16 %v4479, %v4479
      %v4498 = vpack.c.b16 %v4480, %v4480
      %v4499 = vpack.c.b16 %v4481, %v4481
      %v4500 = vpack.c.b16 %v4482, %v4482
      %v4501 = vpack.c.b16 %v4483, %v4483
      %v4502 = vpack.c.b16 %v4484, %v4484
      %v4503 = vpack.c.b16 %v4485, %v4485
      %v4504 = vpack.c.b16 %v4486, %v4486
      %v4505 = vpack.c.b16 %v4487, %v4487
      %v4506 = vpack.c.b16 %v4488, %v4488
      %v4507 = vpack.c.b16 %v4489, %v4489
      %v4508 = vpack.c.b16 %v4490, %v4490
      %v4509 = vpack.c.b16 %v4491, %v4491
      %v4510 = vpack.c.b16 %v4492, %v4492
      %v4511 = vpack.c.b16 %v4493, %v4493
      %4530 = vst [vmem:[#allocation4 + $0x8] sm:$0xf] %v4494
      %4531 = vst [vmem:[#allocation4 + $0x2c] sm:$0xf] %v4495
      %4532 = vst [vmem:[#allocation4 + $0x50] sm:$0xf] %v4496
      %4533 = vst [vmem:[#allocation4 + $0x74] sm:$0xf] %v4497
      %4534 = vst [vmem:[#allocation4 + $0x98] sm:$0xf] %v4498
      %4535 = vst [vmem:[#allocation4 + $0xbc] sm:$0xf] %v4499
      %4536 = vst [vmem:[#allocation4 + $0xe0] sm:$0xf] %v4500
      %4537 = vst [vmem:[#allocation4 + $0x104] sm:$0xf] %v4501
      %4538 = vst [vmem:[#allocation4 + $0x128] sm:$0xf] %v4502
      %4539 = vst [vmem:[#allocation4 + $0x14c] sm:$0xf] %v4503
      %4540 = vst [vmem:[#allocation4 + $0x170] sm:$0xf] %v4504
      %4541 = vst [vmem:[#allocation4 + $0x194] sm:$0xf] %v4505
      %4542 = vst [vmem:[#allocation4 + $0x1b8] sm:$0xf] %v4506
      %4543 = vst [vmem:[#allocation4 + $0x1dc] sm:$0xf] %v4507
      %4544 = vst [vmem:[#allocation4 + $0x200] sm:$0xf] %v4508
      %4545 = vst [vmem:[#allocation4 + $0x224] sm:$0xf] %v4509
      %4546 = vst [vmem:[#allocation4 + $0x248] sm:$0xf] %v4510
      %4547 = vst [vmem:[#allocation4 + $0x26c] sm:$0xf] %v4511
      %v4548 = vld [vmem:[#allocation3 + $0x12] sm:$0xff]
      %v4549 = vld [vmem:[#allocation3 + $0x1a] sm:$0xff]
      %v4550 = vld [vmem:[#allocation3 + $0x22] sm:$0xff]
      %v4551 = vld [vmem:[#allocation3 + $0x2a] sm:$0xff]
      %v4552 = vld [vmem:[#allocation3 + $0x32] sm:$0xff]
      %v4553 = vld [vmem:[#allocation3 + $0x3a] sm:$0xff]
      %v4554 = vld [vmem:[#allocation3 + $0x42] sm:$0xff]
      %v4555 = vld [vmem:[#allocation3 + $0x4a] sm:$0xff]
      %v4556 = vld [vmem:[#allocation3 + $0x52] sm:$0xff]
      %v4557 = vld [vmem:[#allocation3 + $0x5a] sm:$0xff]
      %v4558 = vld [vmem:[#allocation3 + $0x62] sm:$0xff]
      %v4559 = vld [vmem:[#allocation3 + $0x6a] sm:$0xff]
      %v4560 = vld [vmem:[#allocation3 + $0x72] sm:$0xff]
      %v4561 = vld [vmem:[#allocation3 + $0x7a] sm:$0xff]
      %v4562 = vld [vmem:[#allocation3 + $0x82] sm:$0xff]
      %v4563 = vld [vmem:[#allocation3 + $0x8a] sm:$0xff]
      %v4564 = vld [vmem:[#allocation3 + $0x92] sm:$0xff]
      %v4565 = vld [vmem:[#allocation3 + $0x9a] sm:$0xff]
      %v4566 = vpack.c.bf16 %v4549, %v4548
      %v4567 = vpack.c.bf16 %v4551, %v4550
      %v4568 = vpack.c.bf16 %v4553, %v4552
      %v4569 = vpack.c.bf16 %v4555, %v4554
      %v4570 = vpack.c.bf16 %v4557, %v4556
      %v4571 = vpack.c.bf16 %v4559, %v4558
      %v4572 = vpack.c.bf16 %v4561, %v4560
      %v4573 = vpack.c.bf16 %v4563, %v4562
      %v4574 = vpack.c.bf16 %v4565, %v4564
      %v4584 = vunpack.c.l.b16 %v4566
      %v4585 = vunpack.c.h.b16 %v4566
      %v4586 = vunpack.c.l.b16 %v4567
      %v4587 = vunpack.c.h.b16 %v4567
      %v4588 = vunpack.c.l.b16 %v4568
      %v4589 = vunpack.c.h.b16 %v4568
      %v4590 = vunpack.c.l.b16 %v4569
      %v4591 = vunpack.c.h.b16 %v4569
      %v4592 = vunpack.c.l.b16 %v4570
      %v4593 = vunpack.c.h.b16 %v4570
      %v4594 = vunpack.c.l.b16 %v4571
      %v4595 = vunpack.c.h.b16 %v4571
      %v4596 = vunpack.c.l.b16 %v4572
      %v4597 = vunpack.c.h.b16 %v4572
      %v4598 = vunpack.c.l.b16 %v4573
      %v4599 = vunpack.c.h.b16 %v4573
      %v4600 = vunpack.c.l.b16 %v4574
      %v4601 = vunpack.c.h.b16 %v4574
      %v4602 = vpack.c.b16 %v4584, %v4584
      %v4603 = vpack.c.b16 %v4585, %v4585
      %v4604 = vpack.c.b16 %v4586, %v4586
      %v4605 = vpack.c.b16 %v4587, %v4587
      %v4606 = vpack.c.b16 %v4588, %v4588
      %v4607 = vpack.c.b16 %v4589, %v4589
      %v4608 = vpack.c.b16 %v4590, %v4590
      %v4609 = vpack.c.b16 %v4591, %v4591
      %v4610 = vpack.c.b16 %v4592, %v4592
      %v4611 = vpack.c.b16 %v4593, %v4593
      %v4612 = vpack.c.b16 %v4594, %v4594
      %v4613 = vpack.c.b16 %v4595, %v4595
      %v4614 = vpack.c.b16 %v4596, %v4596
      %v4615 = vpack.c.b16 %v4597, %v4597
      %v4616 = vpack.c.b16 %v4598, %v4598
      %v4617 = vpack.c.b16 %v4599, %v4599
      %v4618 = vpack.c.b16 %v4600, %v4600
      %v4619 = vpack.c.b16 %v4601, %v4601
      %4638 = vst [vmem:[#allocation4 + $0xc] sm:$0xf] %v4602
      %4639 = vst [vmem:[#allocation4 + $0x30] sm:$0xf] %v4603
      %4640 = vst [vmem:[#allocation4 + $0x54] sm:$0xf] %v4604
      %4641 = vst [vmem:[#allocation4 + $0x78] sm:$0xf] %v4605
      %4642 = vst [vmem:[#allocation4 + $0x9c] sm:$0xf] %v4606
      %4643 = vst [vmem:[#allocation4 + $0xc0] sm:$0xf] %v4607
      %4644 = vst [vmem:[#allocation4 + $0xe4] sm:$0xf] %v4608
      %4645 = vst [vmem:[#allocation4 + $0x108] sm:$0xf] %v4609
      %4646 = vst [vmem:[#allocation4 + $0x12c] sm:$0xf] %v4610
      %4647 = vst [vmem:[#allocation4 + $0x150] sm:$0xf] %v4611
      %4648 = vst [vmem:[#allocation4 + $0x174] sm:$0xf] %v4612
      %4649 = vst [vmem:[#allocation4 + $0x198] sm:$0xf] %v4613
      %4650 = vst [vmem:[#allocation4 + $0x1bc] sm:$0xf] %v4614
      %4651 = vst [vmem:[#allocation4 + $0x1e0] sm:$0xf] %v4615
      %4652 = vst [vmem:[#allocation4 + $0x204] sm:$0xf] %v4616
      %4653 = vst [vmem:[#allocation4 + $0x228] sm:$0xf] %v4617
      %4654 = vst [vmem:[#allocation4 + $0x24c] sm:$0xf] %v4618
      %4655 = vst [vmem:[#allocation4 + $0x270] sm:$0xf] %v4619
      %v4656 = vld [vmem:[#allocation3 + $0x13] sm:$0xff]
      %v4657 = vld [vmem:[#allocation3 + $0x1b] sm:$0xff]
      %v4658 = vld [vmem:[#allocation3 + $0x23] sm:$0xff]
      %v4659 = vld [vmem:[#allocation3 + $0x2b] sm:$0xff]
      %v4660 = vld [vmem:[#allocation3 + $0x33] sm:$0xff]
      %v4661 = vld [vmem:[#allocation3 + $0x3b] sm:$0xff]
      %v4662 = vld [vmem:[#allocation3 + $0x43] sm:$0xff]
      %v4663 = vld [vmem:[#allocation3 + $0x4b] sm:$0xff]
      %v4664 = vld [vmem:[#allocation3 + $0x53] sm:$0xff]
      %v4665 = vld [vmem:[#allocation3 + $0x5b] sm:$0xff]
      %v4666 = vld [vmem:[#allocation3 + $0x63] sm:$0xff]
      %v4667 = vld [vmem:[#allocation3 + $0x6b] sm:$0xff]
      %v4668 = vld [vmem:[#allocation3 + $0x73] sm:$0xff]
      %v4669 = vld [vmem:[#allocation3 + $0x7b] sm:$0xff]
      %v4670 = vld [vmem:[#allocation3 + $0x83] sm:$0xff]
      %v4671 = vld [vmem:[#allocation3 + $0x8b] sm:$0xff]
      %v4672 = vld [vmem:[#allocation3 + $0x93] sm:$0xff]
      %v4673 = vld [vmem:[#allocation3 + $0x9b] sm:$0xff]
      %v4674 = vpack.c.bf16 %v4657, %v4656
      %v4675 = vpack.c.bf16 %v4659, %v4658
      %v4676 = vpack.c.bf16 %v4661, %v4660
      %v4677 = vpack.c.bf16 %v4663, %v4662
      %v4678 = vpack.c.bf16 %v4665, %v4664
      %v4679 = vpack.c.bf16 %v4667, %v4666
      %v4680 = vpack.c.bf16 %v4669, %v4668
      %v4681 = vpack.c.bf16 %v4671, %v4670
      %v4682 = vpack.c.bf16 %v4673, %v4672
      %v4692 = vunpack.c.l.b16 %v4674
      %v4693 = vunpack.c.h.b16 %v4674
      %v4694 = vunpack.c.l.b16 %v4675
      %v4695 = vunpack.c.h.b16 %v4675
      %v4696 = vunpack.c.l.b16 %v4676
      %v4697 = vunpack.c.h.b16 %v4676
      %v4698 = vunpack.c.l.b16 %v4677
      %v4699 = vunpack.c.h.b16 %v4677
      %v4700 = vunpack.c.l.b16 %v4678
      %v4701 = vunpack.c.h.b16 %v4678
      %v4702 = vunpack.c.l.b16 %v4679
      %v4703 = vunpack.c.h.b16 %v4679
      %v4704 = vunpack.c.l.b16 %v4680
      %v4705 = vunpack.c.h.b16 %v4680
      %v4706 = vunpack.c.l.b16 %v4681
      %v4707 = vunpack.c.h.b16 %v4681
      %v4708 = vunpack.c.l.b16 %v4682
      %v4709 = vunpack.c.h.b16 %v4682
      %v4710 = vpack.c.b16 %v4692, %v4692
      %v4711 = vpack.c.b16 %v4693, %v4693
      %v4712 = vpack.c.b16 %v4694, %v4694
      %v4713 = vpack.c.b16 %v4695, %v4695
      %v4714 = vpack.c.b16 %v4696, %v4696
      %v4715 = vpack.c.b16 %v4697, %v4697
      %v4716 = vpack.c.b16 %v4698, %v4698
      %v4717 = vpack.c.b16 %v4699, %v4699
      %v4718 = vpack.c.b16 %v4700, %v4700
      %v4719 = vpack.c.b16 %v4701, %v4701
      %v4720 = vpack.c.b16 %v4702, %v4702
      %v4721 = vpack.c.b16 %v4703, %v4703
      %v4722 = vpack.c.b16 %v4704, %v4704
      %v4723 = vpack.c.b16 %v4705, %v4705
      %v4724 = vpack.c.b16 %v4706, %v4706
      %v4725 = vpack.c.b16 %v4707, %v4707
      %v4726 = vpack.c.b16 %v4708, %v4708
      %v4727 = vpack.c.b16 %v4709, %v4709
      %4746 = vst [vmem:[#allocation4 + $0x10] sm:$0xf] %v4710
      %4747 = vst [vmem:[#allocation4 + $0x34] sm:$0xf] %v4711
      %4748 = vst [vmem:[#allocation4 + $0x58] sm:$0xf] %v4712
      %4749 = vst [vmem:[#allocation4 + $0x7c] sm:$0xf] %v4713
      %4750 = vst [vmem:[#allocation4 + $0xa0] sm:$0xf] %v4714
      %4751 = vst [vmem:[#allocation4 + $0xc4] sm:$0xf] %v4715
      %4752 = vst [vmem:[#allocation4 + $0xe8] sm:$0xf] %v4716
      %4753 = vst [vmem:[#allocation4 + $0x10c] sm:$0xf] %v4717
      %4754 = vst [vmem:[#allocation4 + $0x130] sm:$0xf] %v4718
      %4755 = vst [vmem:[#allocation4 + $0x154] sm:$0xf] %v4719
      %4756 = vst [vmem:[#allocation4 + $0x178] sm:$0xf] %v4720
      %4757 = vst [vmem:[#allocation4 + $0x19c] sm:$0xf] %v4721
      %4758 = vst [vmem:[#allocation4 + $0x1c0] sm:$0xf] %v4722
      %4759 = vst [vmem:[#allocation4 + $0x1e4] sm:$0xf] %v4723
      %4760 = vst [vmem:[#allocation4 + $0x208] sm:$0xf] %v4724
      %4761 = vst [vmem:[#allocation4 + $0x22c] sm:$0xf] %v4725
      %4762 = vst [vmem:[#allocation4 + $0x250] sm:$0xf] %v4726
      %4763 = vst [vmem:[#allocation4 + $0x274] sm:$0xf] %v4727
      %v4764 = vld [vmem:[#allocation3 + $0x14] sm:$0xff]
      %v4765 = vld [vmem:[#allocation3 + $0x1c] sm:$0xff]
      %v4766 = vld [vmem:[#allocation3 + $0x24] sm:$0xff]
      %v4767 = vld [vmem:[#allocation3 + $0x2c] sm:$0xff]
      %v4768 = vld [vmem:[#allocation3 + $0x34] sm:$0xff]
      %v4769 = vld [vmem:[#allocation3 + $0x3c] sm:$0xff]
      %v4770 = vld [vmem:[#allocation3 + $0x44] sm:$0xff]
      %v4771 = vld [vmem:[#allocation3 + $0x4c] sm:$0xff]
      %v4772 = vld [vmem:[#allocation3 + $0x54] sm:$0xff]
      %v4773 = vld [vmem:[#allocation3 + $0x5c] sm:$0xff]
      %v4774 = vld [vmem:[#allocation3 + $0x64] sm:$0xff]
      %v4775 = vld [vmem:[#allocation3 + $0x6c] sm:$0xff]
      %v4776 = vld [vmem:[#allocation3 + $0x74] sm:$0xff]
      %v4777 = vld [vmem:[#allocation3 + $0x7c] sm:$0xff]
      %v4778 = vld [vmem:[#allocation3 + $0x84] sm:$0xff]
      %v4779 = vld [vmem:[#allocation3 + $0x8c] sm:$0xff]
      %v4780 = vld [vmem:[#allocation3 + $0x94] sm:$0xff]
      %v4781 = vld [vmem:[#allocation3 + $0x9c] sm:$0xff]
      %v4782 = vpack.c.bf16 %v4765, %v4764
      %v4783 = vpack.c.bf16 %v4767, %v4766
      %v4784 = vpack.c.bf16 %v4769, %v4768
      %v4785 = vpack.c.bf16 %v4771, %v4770
      %v4786 = vpack.c.bf16 %v4773, %v4772
      %v4787 = vpack.c.bf16 %v4775, %v4774
      %v4788 = vpack.c.bf16 %v4777, %v4776
      %v4789 = vpack.c.bf16 %v4779, %v4778
      %v4790 = vpack.c.bf16 %v4781, %v4780
      %v4800 = vunpack.c.l.b16 %v4782
      %v4801 = vunpack.c.h.b16 %v4782
      %v4802 = vunpack.c.l.b16 %v4783
      %v4803 = vunpack.c.h.b16 %v4783
      %v4804 = vunpack.c.l.b16 %v4784
      %v4805 = vunpack.c.h.b16 %v4784
      %v4806 = vunpack.c.l.b16 %v4785
      %v4807 = vunpack.c.h.b16 %v4785
      %v4808 = vunpack.c.l.b16 %v4786
      %v4809 = vunpack.c.h.b16 %v4786
      %v4810 = vunpack.c.l.b16 %v4787
      %v4811 = vunpack.c.h.b16 %v4787
      %v4812 = vunpack.c.l.b16 %v4788
      %v4813 = vunpack.c.h.b16 %v4788
      %v4814 = vunpack.c.l.b16 %v4789
      %v4815 = vunpack.c.h.b16 %v4789
      %v4816 = vunpack.c.l.b16 %v4790
      %v4817 = vunpack.c.h.b16 %v4790
      %v4818 = vpack.c.b16 %v4800, %v4800
      %v4819 = vpack.c.b16 %v4801, %v4801
      %v4820 = vpack.c.b16 %v4802, %v4802
      %v4821 = vpack.c.b16 %v4803, %v4803
      %v4822 = vpack.c.b16 %v4804, %v4804
      %v4823 = vpack.c.b16 %v4805, %v4805
      %v4824 = vpack.c.b16 %v4806, %v4806
      %v4825 = vpack.c.b16 %v4807, %v4807
      %v4826 = vpack.c.b16 %v4808, %v4808
      %v4827 = vpack.c.b16 %v4809, %v4809
      %v4828 = vpack.c.b16 %v4810, %v4810
      %v4829 = vpack.c.b16 %v4811, %v4811
      %v4830 = vpack.c.b16 %v4812, %v4812
      %v4831 = vpack.c.b16 %v4813, %v4813
      %v4832 = vpack.c.b16 %v4814, %v4814
      %v4833 = vpack.c.b16 %v4815, %v4815
      %v4834 = vpack.c.b16 %v4816, %v4816
      %v4835 = vpack.c.b16 %v4817, %v4817
      %4854 = vst [vmem:[#allocation4 + $0x14] sm:$0xf] %v4818
      %4855 = vst [vmem:[#allocation4 + $0x38] sm:$0xf] %v4819
      %4856 = vst [vmem:[#allocation4 + $0x5c] sm:$0xf] %v4820
      %4857 = vst [vmem:[#allocation4 + $0x80] sm:$0xf] %v4821
      %4858 = vst [vmem:[#allocation4 + $0xa4] sm:$0xf] %v4822
      %4859 = vst [vmem:[#allocation4 + $0xc8] sm:$0xf] %v4823
      %4860 = vst [vmem:[#allocation4 + $0xec] sm:$0xf] %v4824
      %4861 = vst [vmem:[#allocation4 + $0x110] sm:$0xf] %v4825
      %4862 = vst [vmem:[#allocation4 + $0x134] sm:$0xf] %v4826
      %4863 = vst [vmem:[#allocation4 + $0x158] sm:$0xf] %v4827
      %4864 = vst [vmem:[#allocation4 + $0x17c] sm:$0xf] %v4828
      %4865 = vst [vmem:[#allocation4 + $0x1a0] sm:$0xf] %v4829
      %4866 = vst [vmem:[#allocation4 + $0x1c4] sm:$0xf] %v4830
      %4867 = vst [vmem:[#allocation4 + $0x1e8] sm:$0xf] %v4831
      %4868 = vst [vmem:[#allocation4 + $0x20c] sm:$0xf] %v4832
      %4869 = vst [vmem:[#allocation4 + $0x230] sm:$0xf] %v4833
      %4870 = vst [vmem:[#allocation4 + $0x254] sm:$0xf] %v4834
      %4871 = vst [vmem:[#allocation4 + $0x278] sm:$0xf] %v4835
      %v4872 = vld [vmem:[#allocation3 + $0x24] sm:$0xff]
      %v4873 = vld [vmem:[#allocation3 + $0x2c] sm:$0xff]
      %v4874 = vld [vmem:[#allocation3 + $0x34] sm:$0xff]
      %v4875 = vld [vmem:[#allocation3 + $0x3c] sm:$0xff]
      %v4876 = vld [vmem:[#allocation3 + $0x44] sm:$0xff]
      %v4877 = vld [vmem:[#allocation3 + $0x4c] sm:$0xff]
      %v4878 = vld [vmem:[#allocation3 + $0x54] sm:$0xff]
      %v4879 = vld [vmem:[#allocation3 + $0x5c] sm:$0xff]
      %v4880 = vld [vmem:[#allocation3 + $0x64] sm:$0xff]
      %v4881 = vld [vmem:[#allocation3 + $0x6c] sm:$0xff]
      %v4882 = vld [vmem:[#allocation3 + $0x74] sm:$0xff]
      %v4883 = vld [vmem:[#allocation3 + $0x7c] sm:$0xff]
      %v4884 = vld [vmem:[#allocation3 + $0x84] sm:$0xff]
      %v4885 = vld [vmem:[#allocation3 + $0x8c] sm:$0xff]
      %v4886 = vld [vmem:[#allocation3 + $0x94] sm:$0xff]
      %v4887 = vld [vmem:[#allocation3 + $0x9c] sm:$0xff]
      %v4888 = vld [vmem:[#allocation3 + $0xa4] sm:$0xff]
      %v4889 = vld [vmem:[#allocation3 + $0xac] sm:$0xff]
      %v4890 = vpack.c.bf16 %v4873, %v4872
      %v4891 = vpack.c.bf16 %v4875, %v4874
      %v4892 = vpack.c.bf16 %v4877, %v4876
      %v4893 = vpack.c.bf16 %v4879, %v4878
      %v4894 = vpack.c.bf16 %v4881, %v4880
      %v4895 = vpack.c.bf16 %v4883, %v4882
      %v4896 = vpack.c.bf16 %v4885, %v4884
      %v4897 = vpack.c.bf16 %v4887, %v4886
      %v4898 = vpack.c.bf16 %v4889, %v4888
      %v4908 = vunpack.c.l.b16 %v4890
      %v4909 = vunpack.c.h.b16 %v4890
      %v4910 = vunpack.c.l.b16 %v4891
      %v4911 = vunpack.c.h.b16 %v4891
      %v4912 = vunpack.c.l.b16 %v4892
      %v4913 = vunpack.c.h.b16 %v4892
      %v4914 = vunpack.c.l.b16 %v4893
      %v4915 = vunpack.c.h.b16 %v4893
      %v4916 = vunpack.c.l.b16 %v4894
      %v4917 = vunpack.c.h.b16 %v4894
      %v4918 = vunpack.c.l.b16 %v4895
      %v4919 = vunpack.c.h.b16 %v4895
      %v4920 = vunpack.c.l.b16 %v4896
      %v4921 = vunpack.c.h.b16 %v4896
      %v4922 = vunpack.c.l.b16 %v4897
      %v4923 = vunpack.c.h.b16 %v4897
      %v4924 = vunpack.c.l.b16 %v4898
      %v4925 = vunpack.c.h.b16 %v4898
      %v4926 = vpack.c.b16 %v4908, %v4908
      %v4927 = vpack.c.b16 %v4909, %v4909
      %v4928 = vpack.c.b16 %v4910, %v4910
      %v4929 = vpack.c.b16 %v4911, %v4911
      %v4930 = vpack.c.b16 %v4912, %v4912
      %v4931 = vpack.c.b16 %v4913, %v4913
      %v4932 = vpack.c.b16 %v4914, %v4914
      %v4933 = vpack.c.b16 %v4915, %v4915
      %v4934 = vpack.c.b16 %v4916, %v4916
      %v4935 = vpack.c.b16 %v4917, %v4917
      %v4936 = vpack.c.b16 %v4918, %v4918
      %v4937 = vpack.c.b16 %v4919, %v4919
      %v4938 = vpack.c.b16 %v4920, %v4920
      %v4939 = vpack.c.b16 %v4921, %v4921
      %v4940 = vpack.c.b16 %v4922, %v4922
      %v4941 = vpack.c.b16 %v4923, %v4923
      %v4942 = vpack.c.b16 %v4924, %v4924
      %v4943 = vpack.c.b16 %v4925, %v4925
      %4962 = vst [vmem:[#allocation4 + $0x18] sm:$0xf] %v4926
      %4963 = vst [vmem:[#allocation4 + $0x3c] sm:$0xf] %v4927
      %4964 = vst [vmem:[#allocation4 + $0x60] sm:$0xf] %v4928
      %4965 = vst [vmem:[#allocation4 + $0x84] sm:$0xf] %v4929
      %4966 = vst [vmem:[#allocation4 + $0xa8] sm:$0xf] %v4930
      %4967 = vst [vmem:[#allocation4 + $0xcc] sm:$0xf] %v4931
      %4968 = vst [vmem:[#allocation4 + $0xf0] sm:$0xf] %v4932
      %4969 = vst [vmem:[#allocation4 + $0x114] sm:$0xf] %v4933
      %4970 = vst [vmem:[#allocation4 + $0x138] sm:$0xf] %v4934
      %4971 = vst [vmem:[#allocation4 + $0x15c] sm:$0xf] %v4935
      %4972 = vst [vmem:[#allocation4 + $0x180] sm:$0xf] %v4936
      %4973 = vst [vmem:[#allocation4 + $0x1a4] sm:$0xf] %v4937
      %4974 = vst [vmem:[#allocation4 + $0x1c8] sm:$0xf] %v4938
      %4975 = vst [vmem:[#allocation4 + $0x1ec] sm:$0xf] %v4939
      %4976 = vst [vmem:[#allocation4 + $0x210] sm:$0xf] %v4940
      %4977 = vst [vmem:[#allocation4 + $0x234] sm:$0xf] %v4941
      %4978 = vst [vmem:[#allocation4 + $0x258] sm:$0xf] %v4942
      %4979 = vst [vmem:[#allocation4 + $0x27c] sm:$0xf] %v4943
      %v4980 = vld [vmem:[#allocation3 + $0x25] sm:$0xff]
      %v4981 = vld [vmem:[#allocation3 + $0x2d] sm:$0xff]
      %v4982 = vld [vmem:[#allocation3 + $0x35] sm:$0xff]
      %v4983 = vld [vmem:[#allocation3 + $0x3d] sm:$0xff]
      %v4984 = vld [vmem:[#allocation3 + $0x45] sm:$0xff]
      %v4985 = vld [vmem:[#allocation3 + $0x4d] sm:$0xff]
      %v4986 = vld [vmem:[#allocation3 + $0x55] sm:$0xff]
      %v4987 = vld [vmem:[#allocation3 + $0x5d] sm:$0xff]
      %v4988 = vld [vmem:[#allocation3 + $0x65] sm:$0xff]
      %v4989 = vld [vmem:[#allocation3 + $0x6d] sm:$0xff]
      %v4990 = vld [vmem:[#allocation3 + $0x75] sm:$0xff]
      %v4991 = vld [vmem:[#allocation3 + $0x7d] sm:$0xff]
      %v4992 = vld [vmem:[#allocation3 + $0x85] sm:$0xff]
      %v4993 = vld [vmem:[#allocation3 + $0x8d] sm:$0xff]
      %v4994 = vld [vmem:[#allocation3 + $0x95] sm:$0xff]
      %v4995 = vld [vmem:[#allocation3 + $0x9d] sm:$0xff]
      %v4996 = vld [vmem:[#allocation3 + $0xa5] sm:$0xff]
      %v4997 = vld [vmem:[#allocation3 + $0xad] sm:$0xff]
      %v4998 = vpack.c.bf16 %v4981, %v4980
      %v4999 = vpack.c.bf16 %v4983, %v4982
      %v5000 = vpack.c.bf16 %v4985, %v4984
      %v5001 = vpack.c.bf16 %v4987, %v4986
      %v5002 = vpack.c.bf16 %v4989, %v4988
      %v5003 = vpack.c.bf16 %v4991, %v4990
      %v5004 = vpack.c.bf16 %v4993, %v4992
      %v5005 = vpack.c.bf16 %v4995, %v4994
      %v5006 = vpack.c.bf16 %v4997, %v4996
      %v5016 = vunpack.c.l.b16 %v4998
      %v5017 = vunpack.c.h.b16 %v4998
      %v5018 = vunpack.c.l.b16 %v4999
      %v5019 = vunpack.c.h.b16 %v4999
      %v5020 = vunpack.c.l.b16 %v5000
      %v5021 = vunpack.c.h.b16 %v5000
      %v5022 = vunpack.c.l.b16 %v5001
      %v5023 = vunpack.c.h.b16 %v5001
      %v5024 = vunpack.c.l.b16 %v5002
      %v5025 = vunpack.c.h.b16 %v5002
      %v5026 = vunpack.c.l.b16 %v5003
      %v5027 = vunpack.c.h.b16 %v5003
      %v5028 = vunpack.c.l.b16 %v5004
      %v5029 = vunpack.c.h.b16 %v5004
      %v5030 = vunpack.c.l.b16 %v5005
      %v5031 = vunpack.c.h.b16 %v5005
      %v5032 = vunpack.c.l.b16 %v5006
      %v5033 = vunpack.c.h.b16 %v5006
      %v5034 = vpack.c.b16 %v5016, %v5016
      %v5035 = vpack.c.b16 %v5017, %v5017
      %v5036 = vpack.c.b16 %v5018, %v5018
      %v5037 = vpack.c.b16 %v5019, %v5019
      %v5038 = vpack.c.b16 %v5020, %v5020
      %v5039 = vpack.c.b16 %v5021, %v5021
      %v5040 = vpack.c.b16 %v5022, %v5022
      %v5041 = vpack.c.b16 %v5023, %v5023
      %v5042 = vpack.c.b16 %v5024, %v5024
      %v5043 = vpack.c.b16 %v5025, %v5025
      %v5044 = vpack.c.b16 %v5026, %v5026
      %v5045 = vpack.c.b16 %v5027, %v5027
      %v5046 = vpack.c.b16 %v5028, %v5028
      %v5047 = vpack.c.b16 %v5029, %v5029
      %v5048 = vpack.c.b16 %v5030, %v5030
      %v5049 = vpack.c.b16 %v5031, %v5031
      %v5050 = vpack.c.b16 %v5032, %v5032
      %v5051 = vpack.c.b16 %v5033, %v5033
      %5070 = vst [vmem:[#allocation4 + $0x1c] sm:$0xf] %v5034
      %5071 = vst [vmem:[#allocation4 + $0x40] sm:$0xf] %v5035
      %5072 = vst [vmem:[#allocation4 + $0x64] sm:$0xf] %v5036
      %5073 = vst [vmem:[#allocation4 + $0x88] sm:$0xf] %v5037
      %5074 = vst [vmem:[#allocation4 + $0xac] sm:$0xf] %v5038
      %5075 = vst [vmem:[#allocation4 + $0xd0] sm:$0xf] %v5039
      %5076 = vst [vmem:[#allocation4 + $0xf4] sm:$0xf] %v5040
      %5077 = vst [vmem:[#allocation4 + $0x118] sm:$0xf] %v5041
      %5078 = vst [vmem:[#allocation4 + $0x13c] sm:$0xf] %v5042
      %5079 = vst [vmem:[#allocation4 + $0x160] sm:$0xf] %v5043
      %5080 = vst [vmem:[#allocation4 + $0x184] sm:$0xf] %v5044
      %5081 = vst [vmem:[#allocation4 + $0x1a8] sm:$0xf] %v5045
      %5082 = vst [vmem:[#allocation4 + $0x1cc] sm:$0xf] %v5046
      %5083 = vst [vmem:[#allocation4 + $0x1f0] sm:$0xf] %v5047
      %5084 = vst [vmem:[#allocation4 + $0x214] sm:$0xf] %v5048
      %5085 = vst [vmem:[#allocation4 + $0x238] sm:$0xf] %v5049
      %5086 = vst [vmem:[#allocation4 + $0x25c] sm:$0xf] %v5050
      %5087 = vst [vmem:[#allocation4 + $0x280] sm:$0xf] %v5051
      %v5088 = vld [vmem:[#allocation3 + $0x26] sm:$0xff]
      %v5089 = vld [vmem:[#allocation3 + $0x2e] sm:$0xff]
      %v5090 = vld [vmem:[#allocation3 + $0x36] sm:$0xff]
      %v5091 = vld [vmem:[#allocation3 + $0x3e] sm:$0xff]
      %v5092 = vld [vmem:[#allocation3 + $0x46] sm:$0xff]
      %v5093 = vld [vmem:[#allocation3 + $0x4e] sm:$0xff]
      %v5094 = vld [vmem:[#allocation3 + $0x56] sm:$0xff]
      %v5095 = vld [vmem:[#allocation3 + $0x5e] sm:$0xff]
      %v5096 = vld [vmem:[#allocation3 + $0x66] sm:$0xff]
      %v5097 = vld [vmem:[#allocation3 + $0x6e] sm:$0xff]
      %v5098 = vld [vmem:[#allocation3 + $0x76] sm:$0xff]
      %v5099 = vld [vmem:[#allocation3 + $0x7e] sm:$0xff]
      %v5100 = vld [vmem:[#allocation3 + $0x86] sm:$0xff]
      %v5101 = vld [vmem:[#allocation3 + $0x8e] sm:$0xff]
      %v5102 = vld [vmem:[#allocation3 + $0x96] sm:$0xff]
      %v5103 = vld [vmem:[#allocation3 + $0x9e] sm:$0xff]
      %v5104 = vld [vmem:[#allocation3 + $0xa6] sm:$0xff]
      %v5105 = vld [vmem:[#allocation3 + $0xae] sm:$0xff]
      %v5106 = vpack.c.bf16 %v5089, %v5088
      %v5107 = vpack.c.bf16 %v5091, %v5090
      %v5108 = vpack.c.bf16 %v5093, %v5092
      %v5109 = vpack.c.bf16 %v5095, %v5094
      %v5110 = vpack.c.bf16 %v5097, %v5096
      %v5111 = vpack.c.bf16 %v5099, %v5098
      %v5112 = vpack.c.bf16 %v5101, %v5100
      %v5113 = vpack.c.bf16 %v5103, %v5102
      %v5114 = vpack.c.bf16 %v5105, %v5104
      %v5124 = vunpack.c.l.b16 %v5106
      %v5125 = vunpack.c.h.b16 %v5106
      %v5126 = vunpack.c.l.b16 %v5107
      %v5127 = vunpack.c.h.b16 %v5107
      %v5128 = vunpack.c.l.b16 %v5108
      %v5129 = vunpack.c.h.b16 %v5108
      %v5130 = vunpack.c.l.b16 %v5109
      %v5131 = vunpack.c.h.b16 %v5109
      %v5132 = vunpack.c.l.b16 %v5110
      %v5133 = vunpack.c.h.b16 %v5110
      %v5134 = vunpack.c.l.b16 %v5111
      %v5135 = vunpack.c.h.b16 %v5111
      %v5136 = vunpack.c.l.b16 %v5112
      %v5137 = vunpack.c.h.b16 %v5112
      %v5138 = vunpack.c.l.b16 %v5113
      %v5139 = vunpack.c.h.b16 %v5113
      %v5140 = vunpack.c.l.b16 %v5114
      %v5141 = vunpack.c.h.b16 %v5114
      %v5142 = vpack.c.b16 %v5124, %v5124
      %v5143 = vpack.c.b16 %v5125, %v5125
      %v5144 = vpack.c.b16 %v5126, %v5126
      %v5145 = vpack.c.b16 %v5127, %v5127
      %v5146 = vpack.c.b16 %v5128, %v5128
      %v5147 = vpack.c.b16 %v5129, %v5129
      %v5148 = vpack.c.b16 %v5130, %v5130
      %v5149 = vpack.c.b16 %v5131, %v5131
      %v5150 = vpack.c.b16 %v5132, %v5132
      %v5151 = vpack.c.b16 %v5133, %v5133
      %v5152 = vpack.c.b16 %v5134, %v5134
      %v5153 = vpack.c.b16 %v5135, %v5135
      %v5154 = vpack.c.b16 %v5136, %v5136
      %v5155 = vpack.c.b16 %v5137, %v5137
      %v5156 = vpack.c.b16 %v5138, %v5138
      %v5157 = vpack.c.b16 %v5139, %v5139
      %v5158 = vpack.c.b16 %v5140, %v5140
      %v5159 = vpack.c.b16 %v5141, %v5141
      %5178 = vst [vmem:[#allocation4 + $0x20] sm:$0xf] %v5142
      %5179 = vst [vmem:[#allocation4 + $0x44] sm:$0xf] %v5143
      %5180 = vst [vmem:[#allocation4 + $0x68] sm:$0xf] %v5144
      %5181 = vst [vmem:[#allocation4 + $0x8c] sm:$0xf] %v5145
      %5182 = vst [vmem:[#allocation4 + $0xb0] sm:$0xf] %v5146
      %5183 = vst [vmem:[#allocation4 + $0xd4] sm:$0xf] %v5147
      %5184 = vst [vmem:[#allocation4 + $0xf8] sm:$0xf] %v5148
      %5185 = vst [vmem:[#allocation4 + $0x11c] sm:$0xf] %v5149
      %5186 = vst [vmem:[#allocation4 + $0x140] sm:$0xf] %v5150
      %5187 = vst [vmem:[#allocation4 + $0x164] sm:$0xf] %v5151
      %5188 = vst [vmem:[#allocation4 + $0x188] sm:$0xf] %v5152
      %5189 = vst [vmem:[#allocation4 + $0x1ac] sm:$0xf] %v5153
      %5190 = vst [vmem:[#allocation4 + $0x1d0] sm:$0xf] %v5154
      %5191 = vst [vmem:[#allocation4 + $0x1f4] sm:$0xf] %v5155
      %5192 = vst [vmem:[#allocation4 + $0x218] sm:$0xf] %v5156
      %5193 = vst [vmem:[#allocation4 + $0x23c] sm:$0xf] %v5157
      %5194 = vst [vmem:[#allocation4 + $0x260] sm:$0xf] %v5158
      %5195 = vst [vmem:[#allocation4 + $0x284] sm:$0xf] %v5159
      %v5196 = vld [vmem:[#allocation4] sm:$0xff]
      %v5197 = vld [vmem:[#allocation4 + $0x8] sm:$0xff]
      %v5198 = vld [vmem:[#allocation4 + $0x10] sm:$0xff]
      %v5199 = vld [vmem:[#allocation4 + $0x18] sm:$0xff]
      %v5200 = vld [vmem:[#allocation4 + $0x20] sm:$0xf]
      %v5201 = vld [vmem:[#allocation4 + $0x24] sm:$0xff]
      %v5202 = vld [vmem:[#allocation4 + $0x2c] sm:$0xff]
      %v5203 = vld [vmem:[#allocation4 + $0x34] sm:$0xff]
      %v5204 = vld [vmem:[#allocation4 + $0x3c] sm:$0xff]
      %v5205 = vld [vmem:[#allocation4 + $0x44] sm:$0xf]
      %v5206 = vld [vmem:[#allocation4 + $0x48] sm:$0xff]
      %v5207 = vld [vmem:[#allocation4 + $0x50] sm:$0xff]
      %v5208 = vld [vmem:[#allocation4 + $0x58] sm:$0xff]
      %v5209 = vld [vmem:[#allocation4 + $0x60] sm:$0xff]
      %v5210 = vld [vmem:[#allocation4 + $0x68] sm:$0xf]
      %v5211 = vld [vmem:[#allocation4 + $0x6c] sm:$0xff]
      %v5212 = vld [vmem:[#allocation4 + $0x74] sm:$0xff]
      %v5213 = vld [vmem:[#allocation4 + $0x7c] sm:$0xff]
      %v5214 = vld [vmem:[#allocation4 + $0x84] sm:$0xff]
      %v5215 = vld [vmem:[#allocation4 + $0x8c] sm:$0xf]
      %v5216 = vld [vmem:[#allocation4 + $0x90] sm:$0xff]
      %v5217 = vld [vmem:[#allocation4 + $0x98] sm:$0xff]
      %v5218 = vld [vmem:[#allocation4 + $0xa0] sm:$0xff]
      %v5219 = vld [vmem:[#allocation4 + $0xa8] sm:$0xff]
      %v5220 = vld [vmem:[#allocation4 + $0xb0] sm:$0xf]
      %v5221 = vld [vmem:[#allocation4 + $0xb4] sm:$0xff]
      %v5222 = vld [vmem:[#allocation4 + $0xbc] sm:$0xff]
      %v5223 = vld [vmem:[#allocation4 + $0xc4] sm:$0xff]
      %v5224 = vld [vmem:[#allocation4 + $0xcc] sm:$0xff]
      %v5225 = vld [vmem:[#allocation4 + $0xd4] sm:$0xf]
      %v5226 = vld [vmem:[#allocation4 + $0xd8] sm:$0xff]
      %v5227 = vld [vmem:[#allocation4 + $0xe0] sm:$0xff]
      %v5228 = vld [vmem:[#allocation4 + $0xe8] sm:$0xff]
      %v5229 = vld [vmem:[#allocation4 + $0xf0] sm:$0xff]
      %v5230 = vld [vmem:[#allocation4 + $0xf8] sm:$0xf]
      %v5231 = vld [vmem:[#allocation4 + $0xfc] sm:$0xff]
      %v5232 = vld [vmem:[#allocation4 + $0x104] sm:$0xff]
      %v5233 = vld [vmem:[#allocation4 + $0x10c] sm:$0xff]
      %v5234 = vld [vmem:[#allocation4 + $0x114] sm:$0xff]
      %v5235 = vld [vmem:[#allocation4 + $0x11c] sm:$0xf]
      %v5236 = vld [vmem:[#allocation4 + $0x120] sm:$0xff]
      %v5237 = vld [vmem:[#allocation4 + $0x128] sm:$0xff]
      %v5238 = vld [vmem:[#allocation4 + $0x130] sm:$0xff]
      %v5239 = vld [vmem:[#allocation4 + $0x138] sm:$0xff]
      %v5240 = vld [vmem:[#allocation4 + $0x140] sm:$0xf]
      %v5241 = vld [vmem:[#allocation4 + $0x144] sm:$0xff]
      %v5242 = vld [vmem:[#allocation4 + $0x14c] sm:$0xff]
      %v5243 = vld [vmem:[#allocation4 + $0x154] sm:$0xff]
      %v5244 = vld [vmem:[#allocation4 + $0x15c] sm:$0xff]
      %v5245 = vld [vmem:[#allocation4 + $0x164] sm:$0xf]
      %v5246 = vld [vmem:[#allocation4 + $0x168] sm:$0xff]
      %v5247 = vld [vmem:[#allocation4 + $0x170] sm:$0xff]
      %v5248 = vld [vmem:[#allocation4 + $0x178] sm:$0xff]
      %v5249 = vld [vmem:[#allocation4 + $0x180] sm:$0xff]
      %v5250 = vld [vmem:[#allocation4 + $0x188] sm:$0xf]
      %v5251 = vld [vmem:[#allocation4 + $0x18c] sm:$0xff]
      %v5252 = vld [vmem:[#allocation4 + $0x194] sm:$0xff]
      %v5253 = vld [vmem:[#allocation4 + $0x19c] sm:$0xff]
      %v5254 = vld [vmem:[#allocation4 + $0x1a4] sm:$0xff]
      %v5255 = vld [vmem:[#allocation4 + $0x1ac] sm:$0xf]
      %v5256 = vld [vmem:[#allocation4 + $0x1b0] sm:$0xff]
      %v5257 = vld [vmem:[#allocation4 + $0x1b8] sm:$0xff]
      %v5258 = vld [vmem:[#allocation4 + $0x1c0] sm:$0xff]
      %v5259 = vld [vmem:[#allocation4 + $0x1c8] sm:$0xff]
      %v5260 = vld [vmem:[#allocation4 + $0x1d0] sm:$0xf]
      %v5261 = vld [vmem:[#allocation4 + $0x1d4] sm:$0xff]
      %v5262 = vld [vmem:[#allocation4 + $0x1dc] sm:$0xff]
      %v5263 = vld [vmem:[#allocation4 + $0x1e4] sm:$0xff]
      %v5264 = vld [vmem:[#allocation4 + $0x1ec] sm:$0xff]
      %v5265 = vld [vmem:[#allocation4 + $0x1f4] sm:$0xf]
      %v5266 = vld [vmem:[#allocation4 + $0x1f8] sm:$0xff]
      %v5267 = vld [vmem:[#allocation4 + $0x200] sm:$0xff]
      %v5268 = vld [vmem:[#allocation4 + $0x208] sm:$0xff]
      %v5269 = vld [vmem:[#allocation4 + $0x210] sm:$0xff]
      %v5270 = vld [vmem:[#allocation4 + $0x218] sm:$0xf]
      %v5271 = vld [vmem:[#allocation4 + $0x21c] sm:$0xff]
      %v5272 = vld [vmem:[#allocation4 + $0x224] sm:$0xff]
      %v5273 = vld [vmem:[#allocation4 + $0x22c] sm:$0xff]
      %v5274 = vld [vmem:[#allocation4 + $0x234] sm:$0xff]
      %v5275 = vld [vmem:[#allocation4 + $0x23c] sm:$0xf]
      %v5276 = vld [vmem:[#allocation4 + $0x240] sm:$0xff]
      %v5277 = vld [vmem:[#allocation4 + $0x248] sm:$0xff]
      %v5278 = vld [vmem:[#allocation4 + $0x250] sm:$0xff]
      %v5279 = vld [vmem:[#allocation4 + $0x258] sm:$0xff]
      %v5280 = vld [vmem:[#allocation4 + $0x260] sm:$0xf]
      %v5281 = vld [vmem:[#allocation4 + $0x264] sm:$0xff]
      %v5282 = vld [vmem:[#allocation4 + $0x26c] sm:$0xff]
      %v5283 = vld [vmem:[#allocation4 + $0x274] sm:$0xff]
      %v5284 = vld [vmem:[#allocation4 + $0x27c] sm:$0xff]
      %v5285 = vld [vmem:[#allocation4 + $0x284] sm:$0xf]
      %v5286 = vld [vmem:[%s5] sm:$0xf]
      %v5287 = vld [vmem:[%s5 + $0x4] sm:$0xf]
      %v5288 = vld [vmem:[%s5 + $0x8] sm:$0xf]
      %v5289 = vld [vmem:[%s5 + $0xc] sm:$0xf]
      %v5290 = vld [vmem:[%s5 + $0x10] sm:$0xf]
      %v5291 = vld [vmem:[%s5 + $0x14] sm:$0xf]
      %v5292 = vld [vmem:[%s5 + $0x18] sm:$0xf]
      %v5293 = vld [vmem:[%s5 + $0x1c] sm:$0xf]
      %v5294 = vld [vmem:[%s5 + $0x20] sm:$0xf]
      %v5295 = vld [vmem:[%s5 + $0x24] sm:$0xf]
      %v5296 = vld [vmem:[%s5 + $0x28] sm:$0xf]
      %v5297 = vld [vmem:[%s5 + $0x2c] sm:$0xf]
      %v5298 = vld [vmem:[%s5 + $0x30] sm:$0xf]
      %v5299 = vld [vmem:[%s5 + $0x34] sm:$0xf]
      %v5300 = vld [vmem:[%s5 + $0x38] sm:$0xf]
      %v5301 = vld [vmem:[%s5 + $0x3c] sm:$0xf]
      %v5302 = vld [vmem:[%s5 + $0x40] sm:$0xf]
      %v5303 = vld [vmem:[%s5 + $0x44] sm:$0xf]
      %v5304 = vld [vmem:[%s5 + $0x48] sm:$0xf]
      %v5305 = vld [vmem:[%s5 + $0x4c] sm:$0xf]
      %v5306 = vld [vmem:[%s5 + $0x50] sm:$0xf]
      %v5307 = vld [vmem:[%s5 + $0x54] sm:$0xf]
      %v5308 = vld [vmem:[%s5 + $0x58] sm:$0xf]
      %v5309 = vld [vmem:[%s5 + $0x5c] sm:$0xf]
      %v5310 = vld [vmem:[%s5 + $0x60] sm:$0xf]
      %v5311 = vld [vmem:[%s5 + $0x64] sm:$0xf]
      %v5312 = vld [vmem:[%s5 + $0x68] sm:$0xf]
      %v5313 = vld [vmem:[%s5 + $0x6c] sm:$0xf]
      %v5314 = vld [vmem:[%s5 + $0x70] sm:$0xf]
      %v5315 = vld [vmem:[%s5 + $0x74] sm:$0xf]
      %v5316 = vld [vmem:[%s5 + $0x78] sm:$0xf]
      %v5317 = vld [vmem:[%s5 + $0x7c] sm:$0xf]
      %v5318 = vld [vmem:[%s5 + $0x80] sm:$0xf]
      %v5319 = vld [vmem:[%s5 + $0x84] sm:$0xf]
      %v5320 = vld [vmem:[%s5 + $0x88] sm:$0xf]
      %v5321 = vld [vmem:[%s5 + $0x8c] sm:$0xf]
      %v5322 = vld [vmem:[%s5 + $0x90] sm:$0xf]
      %v5323 = vld [vmem:[%s5 + $0x94] sm:$0xf]
      %v5324 = vld [vmem:[%s5 + $0x98] sm:$0xf]
      %v5325 = vld [vmem:[%s5 + $0x9c] sm:$0xf]
      %v5326 = vld [vmem:[%s5 + $0xa0] sm:$0xf]
      %v5327 = vld [vmem:[%s5 + $0xa4] sm:$0xf]
      %v5328 = vld [vmem:[%s5 + $0xa8] sm:$0xf]
      %v5329 = vld [vmem:[%s5 + $0xac] sm:$0xf]
      %v5330 = vld [vmem:[%s5 + $0xb0] sm:$0xf]
      %v5331 = vld [vmem:[%s5 + $0xb4] sm:$0xf]
      %v5332 = vld [vmem:[%s5 + $0xb8] sm:$0xf]
      %v5333 = vld [vmem:[%s5 + $0xbc] sm:$0xf]
      %v5334 = vld [vmem:[%s5 + $0xc0] sm:$0xf]
      %v5335 = vld [vmem:[%s5 + $0xc4] sm:$0xf]
      %v5336 = vld [vmem:[%s5 + $0xc8] sm:$0xf]
      %v5337 = vld [vmem:[%s5 + $0xcc] sm:$0xf]
      %v5338 = vld [vmem:[%s5 + $0xd0] sm:$0xf]
      %v5339 = vld [vmem:[%s5 + $0xd4] sm:$0xf]
      %v5340 = vld [vmem:[%s5 + $0xd8] sm:$0xf]
      %v5341 = vld [vmem:[%s5 + $0xdc] sm:$0xf]
      %v5342 = vld [vmem:[%s5 + $0xe0] sm:$0xf]
      %v5343 = vld [vmem:[%s5 + $0xe4] sm:$0xf]
      %v5344 = vld [vmem:[%s5 + $0xe8] sm:$0xf]
      %v5345 = vld [vmem:[%s5 + $0xec] sm:$0xf]
      %v5346 = vld [vmem:[%s5 + $0xf0] sm:$0xf]
      %v5347 = vld [vmem:[%s5 + $0xf4] sm:$0xf]
      %v5348 = vld [vmem:[%s5 + $0xf8] sm:$0xf]
      %v5349 = vld [vmem:[%s5 + $0xfc] sm:$0xf]
      %v5350 = vld [vmem:[%s5 + $0x100] sm:$0xf]
      %v5351 = vld [vmem:[%s5 + $0x104] sm:$0xf]
      %v5352 = vld [vmem:[%s5 + $0x108] sm:$0xf]
      %v5353 = vld [vmem:[%s5 + $0x10c] sm:$0xf]
      %v5354 = vld [vmem:[%s5 + $0x110] sm:$0xf]
      %v5355 = vld [vmem:[%s5 + $0x114] sm:$0xf]
      %v5356 = vld [vmem:[%s5 + $0x118] sm:$0xf]
      %v5357 = vld [vmem:[%s5 + $0x11c] sm:$0xf]
      %v5358 = vld [vmem:[%s5 + $0x120] sm:$0xf]
      %v5359 = vld [vmem:[%s5 + $0x124] sm:$0xf]
      %v5360 = vld [vmem:[%s5 + $0x128] sm:$0xf]
      %v5361 = vld [vmem:[%s5 + $0x12c] sm:$0xf]
      %v5362 = vld [vmem:[%s5 + $0x130] sm:$0xf]
      %v5363 = vld [vmem:[%s5 + $0x134] sm:$0xf]
      %v5364 = vld [vmem:[%s5 + $0x138] sm:$0xf]
      %v5365 = vld [vmem:[%s5 + $0x13c] sm:$0xf]
      %v5366 = vld [vmem:[%s5 + $0x140] sm:$0xf]
      %v5367 = vld [vmem:[%s5 + $0x144] sm:$0xf]
      %v5368 = vld [vmem:[%s5 + $0x148] sm:$0xf]
      %v5369 = vld [vmem:[%s5 + $0x14c] sm:$0xf]
      %v5370 = vld [vmem:[%s5 + $0x150] sm:$0xf]
      %v5371 = vld [vmem:[%s5 + $0x154] sm:$0xf]
      %v5372 = vld [vmem:[%s5 + $0x158] sm:$0xf]
      %v5373 = vld [vmem:[%s5 + $0x15c] sm:$0xf]
      %v5374 = vld [vmem:[%s5 + $0x160] sm:$0xf]
      %v5375 = vld [vmem:[%s5 + $0x164] sm:$0xf]
      %v5376 = vld [vmem:[%s5 + $0x168] sm:$0xf]
      %v5377 = vld [vmem:[%s5 + $0x16c] sm:$0xf]
      %v5378 = vld [vmem:[%s5 + $0x170] sm:$0xf]
      %v5379 = vld [vmem:[%s5 + $0x174] sm:$0xf]
      %v5380 = vld [vmem:[%s5 + $0x178] sm:$0xf]
      %v5381 = vld [vmem:[%s5 + $0x17c] sm:$0xf]
      %v5382 = vld [vmem:[%s5 + $0x180] sm:$0xf]
      %v5383 = vld [vmem:[%s5 + $0x184] sm:$0xf]
      %v5384 = vld [vmem:[%s5 + $0x188] sm:$0xf]
      %v5385 = vld [vmem:[%s5 + $0x18c] sm:$0xf]
      %v5386 = vld [vmem:[%s5 + $0x190] sm:$0xf]
      %v5387 = vld [vmem:[%s5 + $0x194] sm:$0xf]
      %v5388 = vld [vmem:[%s5 + $0x198] sm:$0xf]
      %v5389 = vld [vmem:[%s5 + $0x19c] sm:$0xf]
      %v5390 = vld [vmem:[%s5 + $0x1a0] sm:$0xf]
      %v5391 = vld [vmem:[%s5 + $0x1a4] sm:$0xf]
      %v5392 = vld [vmem:[%s5 + $0x1a8] sm:$0xf]
      %v5393 = vld [vmem:[%s5 + $0x1ac] sm:$0xf]
      %v5394 = vld [vmem:[%s5 + $0x1b0] sm:$0xf]
      %v5395 = vld [vmem:[%s5 + $0x1b4] sm:$0xf]
      %v5396 = vld [vmem:[%s5 + $0x1b8] sm:$0xf]
      %v5397 = vld [vmem:[%s5 + $0x1bc] sm:$0xf]
      %v5398 = vld [vmem:[%s5 + $0x1c0] sm:$0xf]
      %v5399 = vld [vmem:[%s5 + $0x1c4] sm:$0xf]
      %v5400 = vld [vmem:[%s5 + $0x1c8] sm:$0xf]
      %v5401 = vld [vmem:[%s5 + $0x1cc] sm:$0xf]
      %v5402 = vld [vmem:[%s5 + $0x1d0] sm:$0xf]
      %v5403 = vld [vmem:[%s5 + $0x1d4] sm:$0xf]
      %v5404 = vld [vmem:[%s5 + $0x1d8] sm:$0xf]
      %v5405 = vld [vmem:[%s5 + $0x1dc] sm:$0xf]
      %v5406 = vld [vmem:[%s5 + $0x1e0] sm:$0xf]
      %v5407 = vld [vmem:[%s5 + $0x1e4] sm:$0xf]
      %v5408 = vld [vmem:[%s5 + $0x1e8] sm:$0xf]
      %v5409 = vld [vmem:[%s5 + $0x1ec] sm:$0xf]
      %v5410 = vld [vmem:[%s5 + $0x1f0] sm:$0xf]
      %v5411 = vld [vmem:[%s5 + $0x1f4] sm:$0xf]
      %v5412 = vld [vmem:[%s5 + $0x1f8] sm:$0xf]
      %v5413 = vld [vmem:[%s5 + $0x1fc] sm:$0xf]
      %v5414 = vld [vmem:[%s5 + $0x200] sm:$0xf]
      %v5415 = vld [vmem:[%s5 + $0x204] sm:$0xf]
      %v5416 = vld [vmem:[%s5 + $0x208] sm:$0xf]
      %v5417 = vld [vmem:[%s5 + $0x20c] sm:$0xf]
      %v5418 = vld [vmem:[%s5 + $0x210] sm:$0xf]
      %v5419 = vld [vmem:[%s5 + $0x214] sm:$0xf]
      %v5420 = vld [vmem:[%s5 + $0x218] sm:$0xf]
      %v5421 = vld [vmem:[%s5 + $0x21c] sm:$0xf]
      %v5422 = vld [vmem:[%s5 + $0x220] sm:$0xf]
      %v5423 = vld [vmem:[%s5 + $0x224] sm:$0xf]
      %v5424 = vld [vmem:[%s5 + $0x228] sm:$0xf]
      %v5425 = vld [vmem:[%s5 + $0x22c] sm:$0xf]
      %v5426 = vld [vmem:[%s5 + $0x230] sm:$0xf]
      %v5427 = vld [vmem:[%s5 + $0x234] sm:$0xf]
      %v5428 = vld [vmem:[%s5 + $0x238] sm:$0xf]
      %v5429 = vld [vmem:[%s5 + $0x23c] sm:$0xf]
      %v5430 = vld [vmem:[%s6] sm:$0x1]
      %v5432 = vlaneseq
      %v5433 = vshrl.u32 %v5432, 7
      %v5434 = vsub.s32 0, %v5433
      %v5435 = vrot.slane %v5430, %v5434
      %v5527 = vunpack.c.l.b16 %v5196
      %v5528 = vunpack.c.h.b16 %v5196
      %v5529 = vunpack.c.l.b16 %v5197
      %v5530 = vunpack.c.h.b16 %v5197
      %v5531 = vunpack.c.l.b16 %v5198
      %v5532 = vunpack.c.h.b16 %v5198
      %v5533 = vunpack.c.l.b16 %v5199
      %v5534 = vunpack.c.h.b16 %v5199
      %v5535 = vunpack.c.l.b16 %v5200
      %v5536 = vunpack.c.l.b16 %v5201
      %v5537 = vunpack.c.h.b16 %v5201
      %v5538 = vunpack.c.l.b16 %v5202
      %v5539 = vunpack.c.h.b16 %v5202
      %v5540 = vunpack.c.l.b16 %v5203
      %v5541 = vunpack.c.h.b16 %v5203
      %v5542 = vunpack.c.l.b16 %v5204
      %v5543 = vunpack.c.h.b16 %v5204
      %v5544 = vunpack.c.l.b16 %v5205
      %v5545 = vunpack.c.l.b16 %v5206
      %v5546 = vunpack.c.h.b16 %v5206
      %v5547 = vunpack.c.l.b16 %v5207
      %v5548 = vunpack.c.h.b16 %v5207
      %v5549 = vunpack.c.l.b16 %v5208
      %v5550 = vunpack.c.h.b16 %v5208
      %v5551 = vunpack.c.l.b16 %v5209
      %v5552 = vunpack.c.h.b16 %v5209
      %v5553 = vunpack.c.l.b16 %v5210
      %v5554 = vunpack.c.l.b16 %v5211
      %v5555 = vunpack.c.h.b16 %v5211
      %v5556 = vunpack.c.l.b16 %v5212
      %v5557 = vunpack.c.h.b16 %v5212
      %v5558 = vunpack.c.l.b16 %v5213
      %v5559 = vunpack.c.h.b16 %v5213
      %v5560 = vunpack.c.l.b16 %v5214
      %v5561 = vunpack.c.h.b16 %v5214
      %v5562 = vunpack.c.l.b16 %v5215
      %v5563 = vunpack.c.l.b16 %v5216
      %v5564 = vunpack.c.h.b16 %v5216
      %v5565 = vunpack.c.l.b16 %v5217
      %v5566 = vunpack.c.h.b16 %v5217
      %v5567 = vunpack.c.l.b16 %v5218
      %v5568 = vunpack.c.h.b16 %v5218
      %v5569 = vunpack.c.l.b16 %v5219
      %v5570 = vunpack.c.h.b16 %v5219
      %v5571 = vunpack.c.l.b16 %v5220
      %v5572 = vunpack.c.l.b16 %v5221
      %v5573 = vunpack.c.h.b16 %v5221
      %v5574 = vunpack.c.l.b16 %v5222
      %v5575 = vunpack.c.h.b16 %v5222
      %v5576 = vunpack.c.l.b16 %v5223
      %v5577 = vunpack.c.h.b16 %v5223
      %v5578 = vunpack.c.l.b16 %v5224
      %v5579 = vunpack.c.h.b16 %v5224
      %v5580 = vunpack.c.l.b16 %v5225
      %v5581 = vunpack.c.l.b16 %v5226
      %v5582 = vunpack.c.h.b16 %v5226
      %v5583 = vunpack.c.l.b16 %v5227
      %v5584 = vunpack.c.h.b16 %v5227
      %v5585 = vunpack.c.l.b16 %v5228
      %v5586 = vunpack.c.h.b16 %v5228
      %v5587 = vunpack.c.l.b16 %v5229
      %v5588 = vunpack.c.h.b16 %v5229
      %v5589 = vunpack.c.l.b16 %v5230
      %v5590 = vunpack.c.l.b16 %v5231
      %v5591 = vunpack.c.h.b16 %v5231
      %v5592 = vunpack.c.l.b16 %v5232
      %v5593 = vunpack.c.h.b16 %v5232
      %v5594 = vunpack.c.l.b16 %v5233
      %v5595 = vunpack.c.h.b16 %v5233
      %v5596 = vunpack.c.l.b16 %v5234
      %v5597 = vunpack.c.h.b16 %v5234
      %v5598 = vunpack.c.l.b16 %v5235
      %v5599 = vunpack.c.l.b16 %v5236
      %v5600 = vunpack.c.h.b16 %v5236
      %v5601 = vunpack.c.l.b16 %v5237
      %v5602 = vunpack.c.h.b16 %v5237
      %v5603 = vunpack.c.l.b16 %v5238
      %v5604 = vunpack.c.h.b16 %v5238
      %v5605 = vunpack.c.l.b16 %v5239
      %v5606 = vunpack.c.h.b16 %v5239
      %v5607 = vunpack.c.l.b16 %v5240
      %v5608 = vunpack.c.l.b16 %v5241
      %v5609 = vunpack.c.h.b16 %v5241
      %v5610 = vunpack.c.l.b16 %v5242
      %v5611 = vunpack.c.h.b16 %v5242
      %v5612 = vunpack.c.l.b16 %v5243
      %v5613 = vunpack.c.h.b16 %v5243
      %v5614 = vunpack.c.l.b16 %v5244
      %v5615 = vunpack.c.h.b16 %v5244
      %v5616 = vunpack.c.l.b16 %v5245
      %v5617 = vunpack.c.l.b16 %v5246
      %v5618 = vunpack.c.h.b16 %v5246
      %v5619 = vunpack.c.l.b16 %v5247
      %v5620 = vunpack.c.h.b16 %v5247
      %v5621 = vunpack.c.l.b16 %v5248
      %v5622 = vunpack.c.h.b16 %v5248
      %v5623 = vunpack.c.l.b16 %v5249
      %v5624 = vunpack.c.h.b16 %v5249
      %v5625 = vunpack.c.l.b16 %v5250
      %v5626 = vunpack.c.l.b16 %v5251
      %v5627 = vunpack.c.h.b16 %v5251
      %v5628 = vunpack.c.l.b16 %v5252
      %v5629 = vunpack.c.h.b16 %v5252
      %v5630 = vunpack.c.l.b16 %v5253
      %v5631 = vunpack.c.h.b16 %v5253
      %v5632 = vunpack.c.l.b16 %v5254
      %v5633 = vunpack.c.h.b16 %v5254
      %v5634 = vunpack.c.l.b16 %v5255
      %v5635 = vunpack.c.l.b16 %v5256
      %v5636 = vunpack.c.h.b16 %v5256
      %v5637 = vunpack.c.l.b16 %v5257
      %v5638 = vunpack.c.h.b16 %v5257
      %v5639 = vunpack.c.l.b16 %v5258
      %v5640 = vunpack.c.h.b16 %v5258
      %v5641 = vunpack.c.l.b16 %v5259
      %v5642 = vunpack.c.h.b16 %v5259
      %v5643 = vunpack.c.l.b16 %v5260
      %v5644 = vunpack.c.l.b16 %v5261
      %v5645 = vunpack.c.h.b16 %v5261
      %v5646 = vunpack.c.l.b16 %v5262
      %v5647 = vunpack.c.h.b16 %v5262
      %v5648 = vunpack.c.l.b16 %v5263
      %v5649 = vunpack.c.h.b16 %v5263
      %v5650 = vunpack.c.l.b16 %v5264
      %v5651 = vunpack.c.h.b16 %v5264
      %v5652 = vunpack.c.l.b16 %v5265
      %v5653 = vunpack.c.l.b16 %v5266
      %v5654 = vunpack.c.h.b16 %v5266
      %v5655 = vunpack.c.l.b16 %v5267
      %v5656 = vunpack.c.h.b16 %v5267
      %v5657 = vunpack.c.l.b16 %v5268
      %v5658 = vunpack.c.h.b16 %v5268
      %v5659 = vunpack.c.l.b16 %v5269
      %v5660 = vunpack.c.h.b16 %v5269
      %v5661 = vunpack.c.l.b16 %v5270
      %v5662 = vunpack.c.l.b16 %v5271
      %v5663 = vunpack.c.h.b16 %v5271
      %v5664 = vunpack.c.l.b16 %v5272
      %v5665 = vunpack.c.h.b16 %v5272
      %v5666 = vunpack.c.l.b16 %v5273
      %v5667 = vunpack.c.h.b16 %v5273
      %v5668 = vunpack.c.l.b16 %v5274
      %v5669 = vunpack.c.h.b16 %v5274
      %v5670 = vunpack.c.l.b16 %v5275
      %v5671 = vunpack.c.l.b16 %v5276
      %v5672 = vunpack.c.h.b16 %v5276
      %v5673 = vunpack.c.l.b16 %v5277
      %v5674 = vunpack.c.h.b16 %v5277
      %v5675 = vunpack.c.l.b16 %v5278
      %v5676 = vunpack.c.h.b16 %v5278
      %v5677 = vunpack.c.l.b16 %v5279
      %v5678 = vunpack.c.h.b16 %v5279
      %v5679 = vunpack.c.l.b16 %v5280
      %v5680 = vunpack.c.l.b16 %v5281
      %v5681 = vunpack.c.h.b16 %v5281
      %v5682 = vunpack.c.l.b16 %v5282
      %v5683 = vunpack.c.h.b16 %v5282
      %v5684 = vunpack.c.l.b16 %v5283
      %v5685 = vunpack.c.h.b16 %v5283
      %v5686 = vunpack.c.l.b16 %v5284
      %v5687 = vunpack.c.h.b16 %v5284
      %v5688 = vunpack.c.l.b16 %v5285
      %v5689 = vpack.c.b16 %v5536, %v5527
      %v5690 = vpack.c.b16 %v5537, %v5528
      %v5691 = vpack.c.b16 %v5538, %v5529
      %v5692 = vpack.c.b16 %v5539, %v5530
      %v5693 = vpack.c.b16 %v5540, %v5531
      %v5694 = vpack.c.b16 %v5541, %v5532
      %v5695 = vpack.c.b16 %v5542, %v5533
      %v5696 = vpack.c.b16 %v5543, %v5534
      %v5697 = vpack.c.b16 %v5544, %v5535
      %v5698 = vpack.c.b16 %v5554, %v5545
      %v5699 = vpack.c.b16 %v5555, %v5546
      %v5700 = vpack.c.b16 %v5556, %v5547
      %v5701 = vpack.c.b16 %v5557, %v5548
      %v5702 = vpack.c.b16 %v5558, %v5549
      %v5703 = vpack.c.b16 %v5559, %v5550
      %v5704 = vpack.c.b16 %v5560, %v5551
      %v5705 = vpack.c.b16 %v5561, %v5552
      %v5706 = vpack.c.b16 %v5562, %v5553
      %v5707 = vpack.c.b16 %v5572, %v5563
      %v5708 = vpack.c.b16 %v5573, %v5564
      %v5709 = vpack.c.b16 %v5574, %v5565
      %v5710 = vpack.c.b16 %v5575, %v5566
      %v5711 = vpack.c.b16 %v5576, %v5567
      %v5712 = vpack.c.b16 %v5577, %v5568
      %v5713 = vpack.c.b16 %v5578, %v5569
      %v5714 = vpack.c.b16 %v5579, %v5570
      %v5715 = vpack.c.b16 %v5580, %v5571
      %v5716 = vpack.c.b16 %v5590, %v5581
      %v5717 = vpack.c.b16 %v5591, %v5582
      %v5718 = vpack.c.b16 %v5592, %v5583
      %v5719 = vpack.c.b16 %v5593, %v5584
      %v5720 = vpack.c.b16 %v5594, %v5585
      %v5721 = vpack.c.b16 %v5595, %v5586
      %v5722 = vpack.c.b16 %v5596, %v5587
      %v5723 = vpack.c.b16 %v5597, %v5588
      %v5724 = vpack.c.b16 %v5598, %v5589
      %v5725 = vpack.c.b16 %v5608, %v5599
      %v5726 = vpack.c.b16 %v5609, %v5600
      %v5727 = vpack.c.b16 %v5610, %v5601
      %v5728 = vpack.c.b16 %v5611, %v5602
      %v5729 = vpack.c.b16 %v5612, %v5603
      %v5730 = vpack.c.b16 %v5613, %v5604
      %v5731 = vpack.c.b16 %v5614, %v5605
      %v5732 = vpack.c.b16 %v5615, %v5606
      %v5733 = vpack.c.b16 %v5616, %v5607
      %v5734 = vpack.c.b16 %v5626, %v5617
      %v5735 = vpack.c.b16 %v5627, %v5618
      %v5736 = vpack.c.b16 %v5628, %v5619
      %v5737 = vpack.c.b16 %v5629, %v5620
      %v5738 = vpack.c.b16 %v5630, %v5621
      %v5739 = vpack.c.b16 %v5631, %v5622
      %v5740 = vpack.c.b16 %v5632, %v5623
      %v5741 = vpack.c.b16 %v5633, %v5624
      %v5742 = vpack.c.b16 %v5634, %v5625
      %v5743 = vpack.c.b16 %v5644, %v5635
      %v5744 = vpack.c.b16 %v5645, %v5636
      %v5745 = vpack.c.b16 %v5646, %v5637
      %v5746 = vpack.c.b16 %v5647, %v5638
      %v5747 = vpack.c.b16 %v5648, %v5639
      %v5748 = vpack.c.b16 %v5649, %v5640
      %v5749 = vpack.c.b16 %v5650, %v5641
      %v5750 = vpack.c.b16 %v5651, %v5642
      %v5751 = vpack.c.b16 %v5652, %v5643
      %v5752 = vpack.c.b16 %v5662, %v5653
      %v5753 = vpack.c.b16 %v5663, %v5654
      %v5754 = vpack.c.b16 %v5664, %v5655
      %v5755 = vpack.c.b16 %v5665, %v5656
      %v5756 = vpack.c.b16 %v5666, %v5657
      %v5757 = vpack.c.b16 %v5667, %v5658
      %v5758 = vpack.c.b16 %v5668, %v5659
      %v5759 = vpack.c.b16 %v5669, %v5660
      %v5760 = vpack.c.b16 %v5670, %v5661
      %v5761 = vpack.c.b16 %v5680, %v5671
      %v5762 = vpack.c.b16 %v5681, %v5672
      %v5763 = vpack.c.b16 %v5682, %v5673
      %v5764 = vpack.c.b16 %v5683, %v5674
      %v5765 = vpack.c.b16 %v5684, %v5675
      %v5766 = vpack.c.b16 %v5685, %v5676
      %v5767 = vpack.c.b16 %v5686, %v5677
      %v5768 = vpack.c.b16 %v5687, %v5678
      %v5769 = vpack.c.b16 %v5688, %v5679
      %v5995 = vunpack.c.l.b16 %v5286
      %v5996 = vunpack.c.l.b16 %v5287
      %v5997 = vunpack.c.l.b16 %v5288
      %v5998 = vunpack.c.l.b16 %v5289
      %v5999 = vunpack.c.l.b16 %v5290
      %v6000 = vunpack.c.l.b16 %v5291
      %v6001 = vunpack.c.l.b16 %v5292
      %v6002 = vunpack.c.l.b16 %v5293
      %v6003 = vunpack.c.l.b16 %v5294
      %v6004 = vunpack.c.l.b16 %v5295
      %v6005 = vunpack.c.l.b16 %v5296
      %v6006 = vunpack.c.l.b16 %v5297
      %v6007 = vunpack.c.l.b16 %v5298
      %v6008 = vunpack.c.l.b16 %v5299
      %v6009 = vunpack.c.l.b16 %v5300
      %v6010 = vunpack.c.l.b16 %v5301
      %v6011 = vunpack.c.l.b16 %v5302
      %v6012 = vunpack.c.l.b16 %v5303
      %v6013 = vunpack.c.l.b16 %v5304
      %v6014 = vunpack.c.l.b16 %v5305
      %v6015 = vunpack.c.l.b16 %v5306
      %v6016 = vunpack.c.l.b16 %v5307
      %v6017 = vunpack.c.l.b16 %v5308
      %v6018 = vunpack.c.l.b16 %v5309
      %v6019 = vunpack.c.l.b16 %v5310
      %v6020 = vunpack.c.l.b16 %v5311
      %v6021 = vunpack.c.l.b16 %v5312
      %v6022 = vunpack.c.l.b16 %v5313
      %v6023 = vunpack.c.l.b16 %v5314
      %v6024 = vunpack.c.l.b16 %v5315
      %v6025 = vunpack.c.l.b16 %v5316
      %v6026 = vunpack.c.l.b16 %v5317
      %v6027 = vunpack.c.l.b16 %v5318
      %v6028 = vunpack.c.l.b16 %v5319
      %v6029 = vunpack.c.l.b16 %v5320
      %v6030 = vunpack.c.l.b16 %v5321
      %v6031 = vunpack.c.l.b16 %v5322
      %v6032 = vunpack.c.l.b16 %v5323
      %v6033 = vunpack.c.l.b16 %v5324
      %v6034 = vunpack.c.l.b16 %v5325
      %v6035 = vunpack.c.l.b16 %v5326
      %v6036 = vunpack.c.l.b16 %v5327
      %v6037 = vunpack.c.l.b16 %v5328
      %v6038 = vunpack.c.l.b16 %v5329
      %v6039 = vunpack.c.l.b16 %v5330
      %v6040 = vunpack.c.l.b16 %v5331
      %v6041 = vunpack.c.l.b16 %v5332
      %v6042 = vunpack.c.l.b16 %v5333
      %v6043 = vunpack.c.l.b16 %v5334
      %v6044 = vunpack.c.l.b16 %v5335
      %v6045 = vunpack.c.l.b16 %v5336
      %v6046 = vunpack.c.l.b16 %v5337
      %v6047 = vunpack.c.l.b16 %v5338
      %v6048 = vunpack.c.l.b16 %v5339
      %v6049 = vunpack.c.l.b16 %v5340
      %v6050 = vunpack.c.l.b16 %v5341
      %v6051 = vunpack.c.l.b16 %v5342
      %v6052 = vunpack.c.l.b16 %v5343
      %v6053 = vunpack.c.l.b16 %v5344
      %v6054 = vunpack.c.l.b16 %v5345
      %v6055 = vunpack.c.l.b16 %v5346
      %v6056 = vunpack.c.l.b16 %v5347
      %v6057 = vunpack.c.l.b16 %v5348
      %v6058 = vunpack.c.l.b16 %v5349
      %v6059 = vunpack.c.l.b16 %v5350
      %v6060 = vunpack.c.l.b16 %v5351
      %v6061 = vunpack.c.l.b16 %v5352
      %v6062 = vunpack.c.l.b16 %v5353
      %v6063 = vunpack.c.l.b16 %v5354
      %v6064 = vunpack.c.l.b16 %v5355
      %v6065 = vunpack.c.l.b16 %v5356
      %v6066 = vunpack.c.l.b16 %v5357
      %v6067 = vunpack.c.l.b16 %v5358
      %v6068 = vunpack.c.l.b16 %v5359
      %v6069 = vunpack.c.l.b16 %v5360
      %v6070 = vunpack.c.l.b16 %v5361
      %v6071 = vunpack.c.l.b16 %v5362
      %v6072 = vunpack.c.l.b16 %v5363
      %v6073 = vunpack.c.l.b16 %v5364
      %v6074 = vunpack.c.l.b16 %v5365
      %v6075 = vunpack.c.l.b16 %v5366
      %v6076 = vunpack.c.l.b16 %v5367
      %v6077 = vunpack.c.l.b16 %v5368
      %v6078 = vunpack.c.l.b16 %v5369
      %v6079 = vunpack.c.l.b16 %v5370
      %v6080 = vunpack.c.l.b16 %v5371
      %v6081 = vunpack.c.l.b16 %v5372
      %v6082 = vunpack.c.l.b16 %v5373
      %v6083 = vunpack.c.l.b16 %v5374
      %v6084 = vunpack.c.l.b16 %v5375
      %v6085 = vunpack.c.l.b16 %v5376
      %v6086 = vunpack.c.l.b16 %v5377
      %v6087 = vunpack.c.l.b16 %v5378
      %v6088 = vunpack.c.l.b16 %v5379
      %v6089 = vunpack.c.l.b16 %v5380
      %v6090 = vunpack.c.l.b16 %v5381
      %v6091 = vunpack.c.l.b16 %v5382
      %v6092 = vunpack.c.l.b16 %v5383
      %v6093 = vunpack.c.l.b16 %v5384
      %v6094 = vunpack.c.l.b16 %v5385
      %v6095 = vunpack.c.l.b16 %v5386
      %v6096 = vunpack.c.l.b16 %v5387
      %v6097 = vunpack.c.l.b16 %v5388
      %v6098 = vunpack.c.l.b16 %v5389
      %v6099 = vunpack.c.l.b16 %v5390
      %v6100 = vunpack.c.l.b16 %v5391
      %v6101 = vunpack.c.l.b16 %v5392
      %v6102 = vunpack.c.l.b16 %v5393
      %v6103 = vunpack.c.l.b16 %v5394
      %v6104 = vunpack.c.l.b16 %v5395
      %v6105 = vunpack.c.l.b16 %v5396
      %v6106 = vunpack.c.l.b16 %v5397
      %v6107 = vunpack.c.l.b16 %v5398
      %v6108 = vunpack.c.l.b16 %v5399
      %v6109 = vunpack.c.l.b16 %v5400
      %v6110 = vunpack.c.l.b16 %v5401
      %v6111 = vunpack.c.l.b16 %v5402
      %v6112 = vunpack.c.l.b16 %v5403
      %v6113 = vunpack.c.l.b16 %v5404
      %v6114 = vunpack.c.l.b16 %v5405
      %v6115 = vunpack.c.l.b16 %v5406
      %v6116 = vunpack.c.l.b16 %v5407
      %v6117 = vunpack.c.l.b16 %v5408
      %v6118 = vunpack.c.l.b16 %v5409
      %v6119 = vunpack.c.l.b16 %v5410
      %v6120 = vunpack.c.l.b16 %v5411
      %v6121 = vunpack.c.l.b16 %v5412
      %v6122 = vunpack.c.l.b16 %v5413
      %v6123 = vunpack.c.l.b16 %v5414
      %v6124 = vunpack.c.l.b16 %v5415
      %v6125 = vunpack.c.l.b16 %v5416
      %v6126 = vunpack.c.l.b16 %v5417
      %v6127 = vunpack.c.l.b16 %v5418
      %v6128 = vunpack.c.l.b16 %v5419
      %v6129 = vunpack.c.l.b16 %v5420
      %v6130 = vunpack.c.l.b16 %v5421
      %v6131 = vunpack.c.l.b16 %v5422
      %v6132 = vunpack.c.l.b16 %v5423
      %v6133 = vunpack.c.l.b16 %v5424
      %v6134 = vunpack.c.l.b16 %v5425
      %v6135 = vunpack.c.l.b16 %v5426
      %v6136 = vunpack.c.l.b16 %v5427
      %v6137 = vunpack.c.l.b16 %v5428
      %v6138 = vunpack.c.l.b16 %v5429
      %v6139 = vpack.c.b16 %v5996, %v5995
      %v6140 = vpack.c.b16 %v5998, %v5997
      %v6141 = vpack.c.b16 %v6000, %v5999
      %v6142 = vpack.c.b16 %v6002, %v6001
      %v6143 = vpack.c.b16 %v6004, %v6003
      %v6144 = vpack.c.b16 %v6006, %v6005
      %v6145 = vpack.c.b16 %v6008, %v6007
      %v6146 = vpack.c.b16 %v6010, %v6009
      %v6147 = vpack.c.b16 %v6012, %v6011
      %v6148 = vpack.c.b16 %v6014, %v6013
      %v6149 = vpack.c.b16 %v6016, %v6015
      %v6150 = vpack.c.b16 %v6018, %v6017
      %v6151 = vpack.c.b16 %v6020, %v6019
      %v6152 = vpack.c.b16 %v6022, %v6021
      %v6153 = vpack.c.b16 %v6024, %v6023
      %v6154 = vpack.c.b16 %v6026, %v6025
      %v6155 = vpack.c.b16 %v6028, %v6027
      %v6156 = vpack.c.b16 %v6030, %v6029
      %v6157 = vpack.c.b16 %v6032, %v6031
      %v6158 = vpack.c.b16 %v6034, %v6033
      %v6159 = vpack.c.b16 %v6036, %v6035
      %v6160 = vpack.c.b16 %v6038, %v6037
      %v6161 = vpack.c.b16 %v6040, %v6039
      %v6162 = vpack.c.b16 %v6042, %v6041
      %v6163 = vpack.c.b16 %v6044, %v6043
      %v6164 = vpack.c.b16 %v6046, %v6045
      %v6165 = vpack.c.b16 %v6048, %v6047
      %v6166 = vpack.c.b16 %v6050, %v6049
      %v6167 = vpack.c.b16 %v6052, %v6051
      %v6168 = vpack.c.b16 %v6054, %v6053
      %v6169 = vpack.c.b16 %v6056, %v6055
      %v6170 = vpack.c.b16 %v6058, %v6057
      %v6171 = vpack.c.b16 %v6060, %v6059
      %v6172 = vpack.c.b16 %v6062, %v6061
      %v6173 = vpack.c.b16 %v6064, %v6063
      %v6174 = vpack.c.b16 %v6066, %v6065
      %v6175 = vpack.c.b16 %v6068, %v6067
      %v6176 = vpack.c.b16 %v6070, %v6069
      %v6177 = vpack.c.b16 %v6072, %v6071
      %v6178 = vpack.c.b16 %v6074, %v6073
      %v6179 = vpack.c.b16 %v6076, %v6075
      %v6180 = vpack.c.b16 %v6078, %v6077
      %v6181 = vpack.c.b16 %v6080, %v6079
      %v6182 = vpack.c.b16 %v6082, %v6081
      %v6183 = vpack.c.b16 %v6084, %v6083
      %v6184 = vpack.c.b16 %v6086, %v6085
      %v6185 = vpack.c.b16 %v6088, %v6087
      %v6186 = vpack.c.b16 %v6090, %v6089
      %v6187 = vpack.c.b16 %v6092, %v6091
      %v6188 = vpack.c.b16 %v6094, %v6093
      %v6189 = vpack.c.b16 %v6096, %v6095
      %v6190 = vpack.c.b16 %v6098, %v6097
      %v6191 = vpack.c.b16 %v6100, %v6099
      %v6192 = vpack.c.b16 %v6102, %v6101
      %v6193 = vpack.c.b16 %v6104, %v6103
      %v6194 = vpack.c.b16 %v6106, %v6105
      %v6195 = vpack.c.b16 %v6108, %v6107
      %v6196 = vpack.c.b16 %v6110, %v6109
      %v6197 = vpack.c.b16 %v6112, %v6111
      %v6198 = vpack.c.b16 %v6114, %v6113
      %v6199 = vpack.c.b16 %v6116, %v6115
      %v6200 = vpack.c.b16 %v6118, %v6117
      %v6201 = vpack.c.b16 %v6120, %v6119
      %v6202 = vpack.c.b16 %v6122, %v6121
      %v6203 = vpack.c.b16 %v6124, %v6123
      %v6204 = vpack.c.b16 %v6126, %v6125
      %v6205 = vpack.c.b16 %v6128, %v6127
      %v6206 = vpack.c.b16 %v6130, %v6129
      %v6207 = vpack.c.b16 %v6132, %v6131
      %v6208 = vpack.c.b16 %v6134, %v6133
      %v6209 = vpack.c.b16 %v6136, %v6135
      %v6210 = vpack.c.b16 %v6138, %v6137
      %6283 = vmatprep.subr.bf16.mxu0 0
      %6284 = vmatpush1.bf16.msra.mxu0 %v6139
      %6285 = vmatprep.subr.bf16.mxu0 0
      %6286 = vmatpush1.bf16.msra.mxu0 %v6140
      %6287 = vmatprep.subr.bf16.mxu0 0
      %6288 = vmatpush1.bf16.msra.mxu0 %v6141
      %6289 = vmatprep.subr.bf16.mxu0 0
      %6290 = vmatpush1.bf16.msra.mxu0 %v6142
      %6291 = vmatprep.subr.bf16.mxu0 0
      %6292 = vmatpush1.bf16.msra.mxu0 %v6143
      %6293 = vmatprep.subr.bf16.mxu0 0
      %6294 = vmatpush1.bf16.msra.mxu0 %v6144
      %6295 = vmatprep.subr.bf16.mxu0 0
      %6296 = vmatpush1.bf16.msra.mxu0 %v6145
      %6297 = vmatprep.subr.bf16.mxu0 0
      %6298 = vmatpush1.bf16.msra.mxu0 %v6146
      %6299 = vmatprep.subr.bf16.mxu0 0
      %6300 = vmatpush1.bf16.msra.mxu0 %v6147
      %6301 = vmatprep.subr.bf16.mxu0 0
      %6302 = vmatpush1.bf16.msra.mxu0 %v6148
      %6303 = vmatprep.subr.bf16.mxu0 0
      %6304 = vmatpush1.bf16.msra.mxu0 %v6149
      %6305 = vmatprep.subr.bf16.mxu0 0
      %6306 = vmatpush1.bf16.msra.mxu0 %v6150
      %6307 = vmatprep.subr.bf16.mxu0 0
      %6308 = vmatpush1.bf16.msra.mxu0 %v6151
      %6309 = vmatprep.subr.bf16.mxu0 0
      %6310 = vmatpush1.bf16.msra.mxu0 %v6152
      %6311 = vmatprep.subr.bf16.mxu0 0
      %6312 = vmatpush1.bf16.msra.mxu0 %v6153
      %6313 = vmatprep.subr.bf16.mxu0 0
      %6314 = vmatpush1.bf16.msra.mxu0 %v6154
      %6315 = vmatprep.mubr.bf16.mxu0 %v5690
      %6316 = vmatmul.mubr.bf16.gmra.mrb[0].mxu0 %v5689
      %v6317 = vpop.f32.mrb[0].mxu0
      %v6318 = vadd.f32 %v5435, %v6317
      %v6319 = vpop.f32.mrb[0].mxu0
      %v6320 = vpop.f32.mrb[0].mxu0
      %v6321 = vadd.f32 %v5435, %v6320
      %v6322 = vpop.f32.mrb[0].mxu0
      %6323 = vmatprep.mubr.bf16.mxu0 %v5699
      %6324 = vmatmul.mubr.bf16.gmra.mrb[0].mxu0 %v5698
      %v6325 = vpop.f32.mrb[0].mxu0
      %v6326 = vadd.f32 %v5435, %v6325
      %v6327 = vpop.f32.mrb[0].mxu0
      %v6328 = vpop.f32.mrb[0].mxu0
      %v6329 = vadd.f32 %v5435, %v6328
      %v6330 = vpop.f32.mrb[0].mxu0
      %6331 = vmatprep.mubr.bf16.mxu0 %v5708
      %6332 = vmatmul.mubr.bf16.gmra.mrb[0].mxu0 %v5707
      %v6333 = vpop.f32.mrb[0].mxu0
      %v6334 = vadd.f32 %v5435, %v6333
      %v6335 = vpop.f32.mrb[0].mxu0
      %v6336 = vpop.f32.mrb[0].mxu0
      %v6337 = vadd.f32 %v5435, %v6336
      %v6338 = vpop.f32.mrb[0].mxu0
      %6339 = vmatprep.mubr.bf16.mxu0 %v5717
      %6340 = vmatmul.mubr.bf16.gmra.mrb[0].mxu0 %v5716
      %v6341 = vpop.f32.mrb[0].mxu0
      %v6342 = vadd.f32 %v5435, %v6341
      %v6343 = vpop.f32.mrb[0].mxu0
      %v6344 = vpop.f32.mrb[0].mxu0
      %v6345 = vadd.f32 %v5435, %v6344
      %v6346 = vpop.f32.mrb[0].mxu0
      %6347 = vmatprep.mubr.bf16.mxu0 %v5726
      %6348 = vmatmul.mubr.bf16.gmra.mrb[0].mxu0 %v5725
      %v6349 = vpop.f32.mrb[0].mxu0
      %v6350 = vadd.f32 %v5435, %v6349
      %v6351 = vpop.f32.mrb[0].mxu0
      %v6352 = vpop.f32.mrb[0].mxu0
      %v6353 = vadd.f32 %v5435, %v6352
      %v6354 = vpop.f32.mrb[0].mxu0
      %6355 = vmatprep.mubr.bf16.mxu0 %v5735
      %6356 = vmatmul.mubr.bf16.gmra.mrb[0].mxu0 %v5734
      %v6357 = vpop.f32.mrb[0].mxu0
      %v6358 = vadd.f32 %v5435, %v6357
      %v6359 = vpop.f32.mrb[0].mxu0
      %v6360 = vpop.f32.mrb[0].mxu0
      %v6361 = vadd.f32 %v5435, %v6360
      %v6362 = vpop.f32.mrb[0].mxu0
      %6363 = vmatprep.mubr.bf16.mxu0 %v5744
      %6364 = vmatmul.mubr.bf16.gmra.mrb[0].mxu0 %v5743
      %v6365 = vpop.f32.mrb[0].mxu0
      %v6366 = vadd.f32 %v5435, %v6365
      %v6367 = vpop.f32.mrb[0].mxu0
      %v6368 = vpop.f32.mrb[0].mxu0
      %v6369 = vadd.f32 %v5435, %v6368
      %v6370 = vpop.f32.mrb[0].mxu0
      %6371 = vmatprep.mubr.bf16.mxu0 %v5753
      %6372 = vmatmul.mubr.bf16.gmra.mrb[0].mxu0 %v5752
      %v6373 = vpop.f32.mrb[0].mxu0
      %v6374 = vadd.f32 %v5435, %v6373
      %v6375 = vpop.f32.mrb[0].mxu0
      %v6376 = vpop.f32.mrb[0].mxu0
      %v6377 = vadd.f32 %v5435, %v6376
      %v6378 = vpop.f32.mrb[0].mxu0
      %6379 = vmatprep.mubr.bf16.mxu0 %v5762
      %6380 = vmatmul.mubr.bf16.gmra.mrb[0].mxu0 %v5761
      %v6381 = vpop.f32.mrb[0].mxu0
      %v6382 = vadd.f32 %v5435, %v6381
      %v6383 = vpop.f32.mrb[0].mxu0
      %v6384 = vpop.f32.mrb[0].mxu0
      %v6385 = vadd.f32 %v5435, %v6384
      %v6386 = vpop.f32.mrb[0].mxu0
      %6387 = vdwg.mxu0
      %6388 = vmatprep.subr.bf16.mxu0 0
      %6389 = vmatpush1.bf16.msra.mxu0 %v6155
      %6390 = vmatprep.subr.bf16.mxu0 0
      %6391 = vmatpush1.bf16.msra.mxu0 %v6156
      %6392 = vmatprep.subr.bf16.mxu0 0
      %6393 = vmatpush1.bf16.msra.mxu0 %v6157
      %6394 = vmatprep.subr.bf16.mxu0 0
      %6395 = vmatpush1.bf16.msra.mxu0 %v6158
      %6396 = vmatprep.subr.bf16.mxu0 0
      %6397 = vmatpush1.bf16.msra.mxu0 %v6159
      %6398 = vmatprep.subr.bf16.mxu0 0
      %6399 = vmatpush1.bf16.msra.mxu0 %v6160
      %6400 = vmatprep.subr.bf16.mxu0 0
      %6401 = vmatpush1.bf16.msra.mxu0 %v6161
      %6402 = vmatprep.subr.bf16.mxu0 0
      %6403 = vmatpush1.bf16.msra.mxu0 %v6162
      %6404 = vmatprep.subr.bf16.mxu0 0
      %6405 = vmatpush1.bf16.msra.mxu0 %v6163
      %6406 = vmatprep.subr.bf16.mxu0 0
      %6407 = vmatpush1.bf16.msra.mxu0 %v6164
      %6408 = vmatprep.subr.bf16.mxu0 0
      %6409 = vmatpush1.bf16.msra.mxu0 %v6165
      %6410 = vmatprep.subr.bf16.mxu0 0
      %6411 = vmatpush1.bf16.msra.mxu0 %v6166
      %6412 = vmatprep.subr.bf16.mxu0 0
      %6413 = vmatpush1.bf16.msra.mxu0 %v6167
      %6414 = vmatprep.subr.bf16.mxu0 0
      %6415 = vmatpush1.bf16.msra.mxu0 %v6168
      %6416 = vmatprep.subr.bf16.mxu0 0
      %6417 = vmatpush1.bf16.msra.mxu0 %v6169
      %6418 = vmatprep.subr.bf16.mxu0 0
      %6419 = vmatpush1.bf16.msra.mxu0 %v6170
      %6420 = vmatprep.mubr.bf16.mxu0 %v5692
      %6421 = vmatmul.mubr.bf16.gmra.mrb[0].mxu0 %v5691
      %v6422 = vpop.f32.mrb[0].mxu0
      %v6423 = vadd.f32 %v6318, %v6422
      %v6424 = vpop.f32.mrb[0].mxu0
      %v6425 = vpop.f32.mrb[0].mxu0
      %v6426 = vadd.f32 %v6321, %v6425
      %v6427 = vpop.f32.mrb[0].mxu0
      %6428 = vmatprep.mubr.bf16.mxu0 %v5701
      %6429 = vmatmul.mubr.bf16.gmra.mrb[0].mxu0 %v5700
      %v6430 = vpop.f32.mrb[0].mxu0
      %v6431 = vadd.f32 %v6326, %v6430
      %v6432 = vpop.f32.mrb[0].mxu0
      %v6433 = vpop.f32.mrb[0].mxu0
      %v6434 = vadd.f32 %v6329, %v6433
      %v6435 = vpop.f32.mrb[0].mxu0
      %6436 = vmatprep.mubr.bf16.mxu0 %v5710
      %6437 = vmatmul.mubr.bf16.gmra.mrb[0].mxu0 %v5709
      %v6438 = vpop.f32.mrb[0].mxu0
      %v6439 = vadd.f32 %v6334, %v6438
      %v6440 = vpop.f32.mrb[0].mxu0
      %v6441 = vpop.f32.mrb[0].mxu0
      %v6442 = vadd.f32 %v6337, %v6441
      %v6443 = vpop.f32.mrb[0].mxu0
      %6444 = vmatprep.mubr.bf16.mxu0 %v5719
      %6445 = vmatmul.mubr.bf16.gmra.mrb[0].mxu0 %v5718
      %v6446 = vpop.f32.mrb[0].mxu0
      %v6447 = vadd.f32 %v6342, %v6446
      %v6448 = vpop.f32.mrb[0].mxu0
      %v6449 = vpop.f32.mrb[0].mxu0
      %v6450 = vadd.f32 %v6345, %v6449
      %v6451 = vpop.f32.mrb[0].mxu0
      %6452 = vmatprep.mubr.bf16.mxu0 %v5728
      %6453 = vmatmul.mubr.bf16.gmra.mrb[0].mxu0 %v5727
      %v6454 = vpop.f32.mrb[0].mxu0
      %v6455 = vadd.f32 %v6350, %v6454
      %v6456 = vpop.f32.mrb[0].mxu0
      %v6457 = vpop.f32.mrb[0].mxu0
      %v6458 = vadd.f32 %v6353, %v6457
      %v6459 = vpop.f32.mrb[0].mxu0
      %6460 = vmatprep.mubr.bf16.mxu0 %v5737
      %6461 = vmatmul.mubr.bf16.gmra.mrb[0].mxu0 %v5736
      %v6462 = vpop.f32.mrb[0].mxu0
      %v6463 = vadd.f32 %v6358, %v6462
      %v6464 = vpop.f32.mrb[0].mxu0
      %v6465 = vpop.f32.mrb[0].mxu0
      %v6466 = vadd.f32 %v6361, %v6465
      %v6467 = vpop.f32.mrb[0].mxu0
      %6468 = vmatprep.mubr.bf16.mxu0 %v5746
      %6469 = vmatmul.mubr.bf16.gmra.mrb[0].mxu0 %v5745
      %v6470 = vpop.f32.mrb[0].mxu0
      %v6471 = vadd.f32 %v6366, %v6470
      %v6472 = vpop.f32.mrb[0].mxu0
      %v6473 = vpop.f32.mrb[0].mxu0
      %v6474 = vadd.f32 %v6369, %v6473
      %v6475 = vpop.f32.mrb[0].mxu0
      %6476 = vmatprep.mubr.bf16.mxu0 %v5755
      %6477 = vmatmul.mubr.bf16.gmra.mrb[0].mxu0 %v5754
      %v6478 = vpop.f32.mrb[0].mxu0
      %v6479 = vadd.f32 %v6374, %v6478
      %v6480 = vpop.f32.mrb[0].mxu0
      %v6481 = vpop.f32.mrb[0].mxu0
      %v6482 = vadd.f32 %v6377, %v6481
      %v6483 = vpop.f32.mrb[0].mxu0
      %6484 = vmatprep.mubr.bf16.mxu0 %v5764
      %6485 = vmatmul.mubr.bf16.gmra.mrb[0].mxu0 %v5763
      %v6486 = vpop.f32.mrb[0].mxu0
      %v6487 = vadd.f32 %v6382, %v6486
      %v6488 = vpop.f32.mrb[0].mxu0
      %v6489 = vpop.f32.mrb[0].mxu0
      %v6490 = vadd.f32 %v6385, %v6489
      %v6491 = vpop.f32.mrb[0].mxu0
      %6492 = vdwg.mxu0
      %6493 = vmatprep.subr.bf16.mxu0 0
      %6494 = vmatpush1.bf16.msra.mxu0 %v6171
      %6495 = vmatprep.subr.bf16.mxu0 0
      %6496 = vmatpush1.bf16.msra.mxu0 %v6172
      %6497 = vmatprep.subr.bf16.mxu0 0
      %6498 = vmatpush1.bf16.msra.mxu0 %v6173
      %6499 = vmatprep.subr.bf16.mxu0 0
      %6500 = vmatpush1.bf16.msra.mxu0 %v6174
      %6501 = vmatprep.subr.bf16.mxu0 0
      %6502 = vmatpush1.bf16.msra.mxu0 %v6175
      %6503 = vmatprep.subr.bf16.mxu0 0
      %6504 = vmatpush1.bf16.msra.mxu0 %v6176
      %6505 = vmatprep.subr.bf16.mxu0 0
      %6506 = vmatpush1.bf16.msra.mxu0 %v6177
      %6507 = vmatprep.subr.bf16.mxu0 0
      %6508 = vmatpush1.bf16.msra.mxu0 %v6178
      %6509 = vmatprep.subr.bf16.mxu0 0
      %6510 = vmatpush1.bf16.msra.mxu0 %v6179
      %6511 = vmatprep.subr.bf16.mxu0 0
      %6512 = vmatpush1.bf16.msra.mxu0 %v6180
      %6513 = vmatprep.subr.bf16.mxu0 0
      %6514 = vmatpush1.bf16.msra.mxu0 %v6181
      %6515 = vmatprep.subr.bf16.mxu0 0
      %6516 = vmatpush1.bf16.msra.mxu0 %v6182
      %6517 = vmatprep.subr.bf16.mxu0 0
      %6518 = vmatpush1.bf16.msra.mxu0 %v6183
      %6519 = vmatprep.subr.bf16.mxu0 0
      %6520 = vmatpush1.bf16.msra.mxu0 %v6184
      %6521 = vmatprep.subr.bf16.mxu0 0
      %6522 = vmatpush1.bf16.msra.mxu0 %v6185
      %6523 = vmatprep.subr.bf16.mxu0 0
      %6524 = vmatpush1.bf16.msra.mxu0 %v6186
      %6525 = vmatprep.mubr.bf16.mxu0 %v5694
      %6526 = vmatmul.mubr.bf16.gmra.mrb[0].mxu0 %v5693
      %v6527 = vpop.f32.mrb[0].mxu0
      %v6528 = vadd.f32 %v6423, %v6527
      %v6529 = vpop.f32.mrb[0].mxu0
      %v6530 = vpop.f32.mrb[0].mxu0
      %v6531 = vadd.f32 %v6426, %v6530
      %v6532 = vpop.f32.mrb[0].mxu0
      %6533 = vmatprep.mubr.bf16.mxu0 %v5703
      %6534 = vmatmul.mubr.bf16.gmra.mrb[0].mxu0 %v5702
      %v6535 = vpop.f32.mrb[0].mxu0
      %v6536 = vadd.f32 %v6431, %v6535
      %v6537 = vpop.f32.mrb[0].mxu0
      %v6538 = vpop.f32.mrb[0].mxu0
      %v6539 = vadd.f32 %v6434, %v6538
      %v6540 = vpop.f32.mrb[0].mxu0
      %6541 = vmatprep.mubr.bf16.mxu0 %v5712
      %6542 = vmatmul.mubr.bf16.gmra.mrb[0].mxu0 %v5711
      %v6543 = vpop.f32.mrb[0].mxu0
      %v6544 = vadd.f32 %v6439, %v6543
      %v6545 = vpop.f32.mrb[0].mxu0
      %v6546 = vpop.f32.mrb[0].mxu0
      %v6547 = vadd.f32 %v6442, %v6546
      %v6548 = vpop.f32.mrb[0].mxu0
      %6549 = vmatprep.mubr.bf16.mxu0 %v5721
      %6550 = vmatmul.mubr.bf16.gmra.mrb[0].mxu0 %v5720
      %v6551 = vpop.f32.mrb[0].mxu0
      %v6552 = vadd.f32 %v6447, %v6551
      %v6553 = vpop.f32.mrb[0].mxu0
      %v6554 = vpop.f32.mrb[0].mxu0
      %v6555 = vadd.f32 %v6450, %v6554
      %v6556 = vpop.f32.mrb[0].mxu0
      %6557 = vmatprep.mubr.bf16.mxu0 %v5730
      %6558 = vmatmul.mubr.bf16.gmra.mrb[0].mxu0 %v5729
      %v6559 = vpop.f32.mrb[0].mxu0
      %v6560 = vadd.f32 %v6455, %v6559
      %v6561 = vpop.f32.mrb[0].mxu0
      %v6562 = vpop.f32.mrb[0].mxu0
      %v6563 = vadd.f32 %v6458, %v6562
      %v6564 = vpop.f32.mrb[0].mxu0
      %6565 = vmatprep.mubr.bf16.mxu0 %v5739
      %6566 = vmatmul.mubr.bf16.gmra.mrb[0].mxu0 %v5738
      %v6567 = vpop.f32.mrb[0].mxu0
      %v6568 = vadd.f32 %v6463, %v6567
      %v6569 = vpop.f32.mrb[0].mxu0
      %v6570 = vpop.f32.mrb[0].mxu0
      %v6571 = vadd.f32 %v6466, %v6570
      %v6572 = vpop.f32.mrb[0].mxu0
      %6573 = vmatprep.mubr.bf16.mxu0 %v5748
      %6574 = vmatmul.mubr.bf16.gmra.mrb[0].mxu0 %v5747
      %v6575 = vpop.f32.mrb[0].mxu0
      %v6576 = vadd.f32 %v6471, %v6575
      %v6577 = vpop.f32.mrb[0].mxu0
      %v6578 = vpop.f32.mrb[0].mxu0
      %v6579 = vadd.f32 %v6474, %v6578
      %v6580 = vpop.f32.mrb[0].mxu0
      %6581 = vmatprep.mubr.bf16.mxu0 %v5757
      %6582 = vmatmul.mubr.bf16.gmra.mrb[0].mxu0 %v5756
      %v6583 = vpop.f32.mrb[0].mxu0
      %v6584 = vadd.f32 %v6479, %v6583
      %v6585 = vpop.f32.mrb[0].mxu0
      %v6586 = vpop.f32.mrb[0].mxu0
      %v6587 = vadd.f32 %v6482, %v6586
      %v6588 = vpop.f32.mrb[0].mxu0
      %6589 = vmatprep.mubr.bf16.mxu0 %v5766
      %6590 = vmatmul.mubr.bf16.gmra.mrb[0].mxu0 %v5765
      %v6591 = vpop.f32.mrb[0].mxu0
      %v6592 = vadd.f32 %v6487, %v6591
      %v6593 = vpop.f32.mrb[0].mxu0
      %v6594 = vpop.f32.mrb[0].mxu0
      %v6595 = vadd.f32 %v6490, %v6594
      %v6596 = vpop.f32.mrb[0].mxu0
      %6597 = vdwg.mxu0
      %6598 = vmatprep.subr.bf16.mxu0 0
      %6599 = vmatpush1.bf16.msra.mxu0 %v6187
      %6600 = vmatprep.subr.bf16.mxu0 0
      %6601 = vmatpush1.bf16.msra.mxu0 %v6188
      %6602 = vmatprep.subr.bf16.mxu0 0
      %6603 = vmatpush1.bf16.msra.mxu0 %v6189
      %6604 = vmatprep.subr.bf16.mxu0 0
      %6605 = vmatpush1.bf16.msra.mxu0 %v6190
      %6606 = vmatprep.subr.bf16.mxu0 0
      %6607 = vmatpush1.bf16.msra.mxu0 %v6191
      %6608 = vmatprep.subr.bf16.mxu0 0
      %6609 = vmatpush1.bf16.msra.mxu0 %v6192
      %6610 = vmatprep.subr.bf16.mxu0 0
      %6611 = vmatpush1.bf16.msra.mxu0 %v6193
      %6612 = vmatprep.subr.bf16.mxu0 0
      %6613 = vmatpush1.bf16.msra.mxu0 %v6194
      %6614 = vmatprep.subr.bf16.mxu0 0
      %6615 = vmatpush1.bf16.msra.mxu0 %v6195
      %6616 = vmatprep.subr.bf16.mxu0 0
      %6617 = vmatpush1.bf16.msra.mxu0 %v6196
      %6618 = vmatprep.subr.bf16.mxu0 0
      %6619 = vmatpush1.bf16.msra.mxu0 %v6197
      %6620 = vmatprep.subr.bf16.mxu0 0
      %6621 = vmatpush1.bf16.msra.mxu0 %v6198
      %6622 = vmatprep.subr.bf16.mxu0 0
      %6623 = vmatpush1.bf16.msra.mxu0 %v6199
      %6624 = vmatprep.subr.bf16.mxu0 0
      %6625 = vmatpush1.bf16.msra.mxu0 %v6200
      %6626 = vmatprep.subr.bf16.mxu0 0
      %6627 = vmatpush1.bf16.msra.mxu0 %v6201
      %6628 = vmatprep.subr.bf16.mxu0 0
      %6629 = vmatpush1.bf16.msra.mxu0 %v6202
      %6630 = vmatprep.mubr.bf16.mxu0 %v5696
      %6631 = vmatmul.mubr.bf16.gmra.mrb[0].mxu0 %v5695
      %v6632 = vpop.f32.mrb[0].mxu0
      %v6633 = vadd.f32 %v6528, %v6632
      %v6634 = vpop.f32.mrb[0].mxu0
      %v6635 = vpop.f32.mrb[0].mxu0
      %v6636 = vadd.f32 %v6531, %v6635
      %v6637 = vpop.f32.mrb[0].mxu0
      %6638 = vmatprep.mubr.bf16.mxu0 %v5705
      %6639 = vmatmul.mubr.bf16.gmra.mrb[0].mxu0 %v5704
      %v6640 = vpop.f32.mrb[0].mxu0
      %v6641 = vadd.f32 %v6536, %v6640
      %v6642 = vpop.f32.mrb[0].mxu0
      %v6643 = vpop.f32.mrb[0].mxu0
      %v6644 = vadd.f32 %v6539, %v6643
      %v6645 = vpop.f32.mrb[0].mxu0
      %6646 = vmatprep.mubr.bf16.mxu0 %v5714
      %6647 = vmatmul.mubr.bf16.gmra.mrb[0].mxu0 %v5713
      %v6648 = vpop.f32.mrb[0].mxu0
      %v6649 = vadd.f32 %v6544, %v6648
      %v6650 = vpop.f32.mrb[0].mxu0
      %v6651 = vpop.f32.mrb[0].mxu0
      %v6652 = vadd.f32 %v6547, %v6651
      %v6653 = vpop.f32.mrb[0].mxu0
      %6654 = vmatprep.mubr.bf16.mxu0 %v5723
      %6655 = vmatmul.mubr.bf16.gmra.mrb[0].mxu0 %v5722
      %v6656 = vpop.f32.mrb[0].mxu0
      %v6657 = vadd.f32 %v6552, %v6656
      %v6658 = vpop.f32.mrb[0].mxu0
      %v6659 = vpop.f32.mrb[0].mxu0
      %v6660 = vadd.f32 %v6555, %v6659
      %v6661 = vpop.f32.mrb[0].mxu0
      %6662 = vmatprep.mubr.bf16.mxu0 %v5732
      %6663 = vmatmul.mubr.bf16.gmra.mrb[0].mxu0 %v5731
      %v6664 = vpop.f32.mrb[0].mxu0
      %v6665 = vadd.f32 %v6560, %v6664
      %v6666 = vpop.f32.mrb[0].mxu0
      %v6667 = vpop.f32.mrb[0].mxu0
      %v6668 = vadd.f32 %v6563, %v6667
      %v6669 = vpop.f32.mrb[0].mxu0
      %6670 = vmatprep.mubr.bf16.mxu0 %v5741
      %6671 = vmatmul.mubr.bf16.gmra.mrb[0].mxu0 %v5740
      %v6672 = vpop.f32.mrb[0].mxu0
      %v6673 = vadd.f32 %v6568, %v6672
      %v6674 = vpop.f32.mrb[0].mxu0
      %v6675 = vpop.f32.mrb[0].mxu0
      %v6676 = vadd.f32 %v6571, %v6675
      %v6677 = vpop.f32.mrb[0].mxu0
      %6678 = vmatprep.mubr.bf16.mxu0 %v5750
      %6679 = vmatmul.mubr.bf16.gmra.mrb[0].mxu0 %v5749
      %v6680 = vpop.f32.mrb[0].mxu0
      %v6681 = vadd.f32 %v6576, %v6680
      %v6682 = vpop.f32.mrb[0].mxu0
      %v6683 = vpop.f32.mrb[0].mxu0
      %v6684 = vadd.f32 %v6579, %v6683
      %v6685 = vpop.f32.mrb[0].mxu0
      %6686 = vmatprep.mubr.bf16.mxu0 %v5759
      %6687 = vmatmul.mubr.bf16.gmra.mrb[0].mxu0 %v5758
      %v6688 = vpop.f32.mrb[0].mxu0
      %v6689 = vadd.f32 %v6584, %v6688
      %v6690 = vpop.f32.mrb[0].mxu0
      %v6691 = vpop.f32.mrb[0].mxu0
      %v6692 = vadd.f32 %v6587, %v6691
      %v6693 = vpop.f32.mrb[0].mxu0
      %6694 = vmatprep.mubr.bf16.mxu0 %v5768
      %6695 = vmatmul.mubr.bf16.gmra.mrb[0].mxu0 %v5767
      %v6696 = vpop.f32.mrb[0].mxu0
      %v6697 = vadd.f32 %v6592, %v6696
      %v6698 = vpop.f32.mrb[0].mxu0
      %v6699 = vpop.f32.mrb[0].mxu0
      %v6700 = vadd.f32 %v6595, %v6699
      %v6701 = vpop.f32.mrb[0].mxu0
      %6702 = vdwg.mxu0
      %6703 = vmatprep.subr.bf16.mxu0 0
      %6704 = vmatpush1.bf16.msra.mxu0 %v6203
      %6705 = vmatprep.subr.bf16.mxu0 0
      %6706 = vmatpush1.bf16.msra.mxu0 %v6204
      %6707 = vmatprep.subr.bf16.mxu0 0
      %6708 = vmatpush1.bf16.msra.mxu0 %v6205
      %6709 = vmatprep.subr.bf16.mxu0 0
      %6710 = vmatpush1.bf16.msra.mxu0 %v6206
      %6711 = vmatprep.subr.bf16.mxu0 0
      %6712 = vmatpush1.bf16.msra.mxu0 %v6207
      %6713 = vmatprep.subr.bf16.mxu0 0
      %6714 = vmatpush1.bf16.msra.mxu0 %v6208
      %6715 = vmatprep.subr.bf16.mxu0 0
      %6716 = vmatpush1.bf16.msra.mxu0 %v6209
      %6717 = vmatprep.subr.bf16.mxu0 0
      %6718 = vmatpush1.bf16.msra.mxu0 %v6210
      %6719 = vmatprep.subr.bf16.mxu0 0
      %6720 = vmatpush1.bf16.msra.mxu0 0
      %6721 = vmatprep.subr.bf16.mxu0 0
      %6722 = vmatpush1.bf16.msra.mxu0 0
      %6723 = vmatprep.subr.bf16.mxu0 0
      %6724 = vmatpush1.bf16.msra.mxu0 0
      %6725 = vmatprep.subr.bf16.mxu0 0
      %6726 = vmatpush1.bf16.msra.mxu0 0
      %6727 = vmatprep.subr.bf16.mxu0 0
      %6728 = vmatpush1.bf16.msra.mxu0 0
      %6729 = vmatprep.subr.bf16.mxu0 0
      %6730 = vmatpush1.bf16.msra.mxu0 0
      %6731 = vmatprep.subr.bf16.mxu0 0
      %6732 = vmatpush1.bf16.msra.mxu0 0
      %6733 = vmatprep.subr.bf16.mxu0 0
      %6734 = vmatpush1.bf16.msra.mxu0 0
      %6735 = vmatprep.mubr.bf16.mxu0 0
      %6736 = vmatmul.mubr.bf16.gmra.mrb[0].mxu0 %v5697
      %v6737 = vpop.f32.mrb[0].mxu0
      %v6738 = vadd.f32 %v6633, %v6737
      %v6739 = vpop.f32.mrb[0].mxu0
      %v6740 = vpop.f32.mrb[0].mxu0
      %v6741 = vadd.f32 %v6636, %v6740
      %v6742 = vpop.f32.mrb[0].mxu0
      %6743 = vmatprep.mubr.bf16.mxu0 0
      %6744 = vmatmul.mubr.bf16.gmra.mrb[0].mxu0 %v5706
      %v6745 = vpop.f32.mrb[0].mxu0
      %v6746 = vadd.f32 %v6641, %v6745
      %v6747 = vpop.f32.mrb[0].mxu0
      %v6748 = vpop.f32.mrb[0].mxu0
      %v6749 = vadd.f32 %v6644, %v6748
      %v6750 = vpop.f32.mrb[0].mxu0
      %6751 = vmatprep.mubr.bf16.mxu0 0
      %6752 = vmatmul.mubr.bf16.gmra.mrb[0].mxu0 %v5715
      %v6753 = vpop.f32.mrb[0].mxu0
      %v6754 = vadd.f32 %v6649, %v6753
      %v6755 = vpop.f32.mrb[0].mxu0
      %v6756 = vpop.f32.mrb[0].mxu0
      %v6757 = vadd.f32 %v6652, %v6756
      %v6758 = vpop.f32.mrb[0].mxu0
      %6759 = vmatprep.mubr.bf16.mxu0 0
      %6760 = vmatmul.mubr.bf16.gmra.mrb[0].mxu0 %v5724
      %v6761 = vpop.f32.mrb[0].mxu0
      %v6762 = vadd.f32 %v6657, %v6761
      %v6763 = vpop.f32.mrb[0].mxu0
      %v6764 = vpop.f32.mrb[0].mxu0
      %v6765 = vadd.f32 %v6660, %v6764
      %v6766 = vpop.f32.mrb[0].mxu0
      %6767 = vmatprep.mubr.bf16.mxu0 0
      %6768 = vmatmul.mubr.bf16.gmra.mrb[0].mxu0 %v5733
      %v6769 = vpop.f32.mrb[0].mxu0
      %v6770 = vadd.f32 %v6665, %v6769
      %v6771 = vpop.f32.mrb[0].mxu0
      %v6772 = vpop.f32.mrb[0].mxu0
      %v6773 = vadd.f32 %v6668, %v6772
      %v6774 = vpop.f32.mrb[0].mxu0
      %6775 = vmatprep.mubr.bf16.mxu0 0
      %6776 = vmatmul.mubr.bf16.gmra.mrb[0].mxu0 %v5742
      %v6777 = vpop.f32.mrb[0].mxu0
      %v6778 = vadd.f32 %v6673, %v6777
      %v6779 = vpop.f32.mrb[0].mxu0
      %v6780 = vpop.f32.mrb[0].mxu0
      %v6781 = vadd.f32 %v6676, %v6780
      %v6782 = vpop.f32.mrb[0].mxu0
      %6783 = vmatprep.mubr.bf16.mxu0 0
      %6784 = vmatmul.mubr.bf16.gmra.mrb[0].mxu0 %v5751
      %v6785 = vpop.f32.mrb[0].mxu0
      %v6786 = vadd.f32 %v6681, %v6785
      %v6787 = vpop.f32.mrb[0].mxu0
      %v6788 = vpop.f32.mrb[0].mxu0
      %v6789 = vadd.f32 %v6684, %v6788
      %v6790 = vpop.f32.mrb[0].mxu0
      %6791 = vmatprep.mubr.bf16.mxu0 0
      %6792 = vmatmul.mubr.bf16.gmra.mrb[0].mxu0 %v5760
      %v6793 = vpop.f32.mrb[0].mxu0
      %v6794 = vadd.f32 %v6689, %v6793
      %v6795 = vpop.f32.mrb[0].mxu0
      %v6796 = vpop.f32.mrb[0].mxu0
      %v6797 = vadd.f32 %v6692, %v6796
      %v6798 = vpop.f32.mrb[0].mxu0
      %6799 = vmatprep.mubr.bf16.mxu0 0
      %6800 = vmatmul.mubr.bf16.gmra.mrb[0].mxu0 %v5769
      %v6801 = vpop.f32.mrb[0].mxu0
      %v6802 = vadd.f32 %v6697, %v6801
      %v6803 = vpop.f32.mrb[0].mxu0
      %v6804 = vpop.f32.mrb[0].mxu0
      %v6805 = vadd.f32 %v6700, %v6804
      %v6806 = vpop.f32.mrb[0].mxu0
      %6807 = vdwg.mxu0
      %6808 = vst [vmem:[%s368] sm:$0xff] %v6738
      %6809 = vst [vmem:[%s368 + $0x8] sm:$0xff] %v6741
      %6810 = vst [vmem:[%s368 + $0x10] sm:$0xff] %v6746
      %6811 = vst [vmem:[%s368 + $0x18] sm:$0xff] %v6749
      %6812 = vst [vmem:[%s368 + $0x20] sm:$0xff] %v6754
      %6813 = vst [vmem:[%s368 + $0x28] sm:$0xff] %v6757
      %6814 = vst [vmem:[%s368 + $0x30] sm:$0xff] %v6762
      %6815 = vst [vmem:[%s368 + $0x38] sm:$0xff] %v6765
      %6816 = vst [vmem:[%s368 + $0x40] sm:$0xff] %v6770
      %6817 = vst [vmem:[%s368 + $0x48] sm:$0xff] %v6773
      %6818 = vst [vmem:[%s368 + $0x50] sm:$0xff] %v6778
      %6819 = vst [vmem:[%s368 + $0x58] sm:$0xff] %v6781
      %6820 = vst [vmem:[%s368 + $0x60] sm:$0xff] %v6786
      %6821 = vst [vmem:[%s368 + $0x68] sm:$0xff] %v6789
      %6822 = vst [vmem:[%s368 + $0x70] sm:$0xff] %v6794
      %6823 = vst [vmem:[%s368 + $0x78] sm:$0xff] %v6797
      %6824 = vst [vmem:[%s368 + $0x80] sm:$0xff] %v6802
      %6825 = vst [vmem:[%s368 + $0x88] sm:$0xff] %v6805
      %p6826 = scmp.lt.s32.totalorder %s24, 1
      %s6827 = scalar_select %p6826, %s24, 1
      %p6828 = scmp.lt.s32.totalorder %s25, 1
      %s6829 = scalar_select %p6828, %s25, 1
      %s6830 = smul.addr %s6829, 18
      %s6831 = smul.addr %s6827, 36
      %s6832 = sadd.s32 %s6830, %s6831
      %s6833 = smul.addr %s6832, 8
      %s6834 = scalar_lea.vmem %s9, %s6833
      // Predicated region
      $region73: #{triple_conv_pallas.1} parent=55 // pred_check
        %p6835 = pneg %p248
      $region74: #{triple_conv_pallas.1} parent=55 // pred_check_branch
        %6837 = sbr.rel (%p6835) target = $region76
      $region75: #{triple_conv_pallas.1} parent=55 // pred_region
        _
      $region76: #{triple_conv_pallas.1} parent=55 // pred_fallthru
        _
    $region56: #{triple_conv_pallas.1} parent=5 // pred_fallthru
      _
    %p6838 = scmp.le.s32.totalorder 2, %s15
    // Predicated region
    $region77: #{triple_conv_pallas.1} parent=5 // pred_check
      %p6839 = pneg %p6838
    $region78: #{triple_conv_pallas.1} parent=5 // pred_check_branch
      %6841 = sbr.rel (%p6839) target = $region80
    $region79: #{triple_conv_pallas.1} parent=5 // pred_region
      %s6842 = ssub.s32 %s15, 2
      // Predicated region
      $region81: #{triple_conv_pallas.1} parent=79 // pred_check
        %p6843 = pneg %p254
      $region82: #{triple_conv_pallas.1} parent=79 // pred_check_branch
        %6845 = sbr.rel (%p6843) target = $region84
      $region83: #{triple_conv_pallas.1} parent=79 // pred_region
        %p6846 = scmp.lt.s32.totalorder %s26, 1
        %s6847 = scalar_select %p6846, %s26, 1
        %p6848 = scmp.lt.s32.totalorder %s27, 1
        %s6849 = scalar_select %p6848, %s27, 1
        %s6850 = smul.addr %s6849, 18
        %s6851 = smul.addr %s6847, 36
        %s6852 = sadd.s32 %s6850, %s6851
        %s6853 = smul.addr %s6852, 8
        %s6854 = scalar_lea.vmem %s9, %s6853
      $region84: #{triple_conv_pallas.1} parent=79 // pred_fallthru
        _
    $region80: #{triple_conv_pallas.1} parent=5 // pred_fallthru
      _
  $region6: #{triple_conv_pallas.1} parent=0 // loop_footer
    %s19 = sadd.s32 1, %s15
  $region7: #{triple_conv_pallas.1} parent=0 // loop_footer_branch
    %14 = sbr.rel target = $region3
  $region8: #{triple_conv_pallas.1} parent=0 // loop_exit
    _

</llo_original>
